<compile_context>
chip_gen: v7x
topology: tpu7x:2x2x1
jax: 0.10.0
libtpu: 0.0.40
codegen_flags: <defaults>
</compile_context>

<pallas_src>
import functools

import jax
import jax.numpy as jnp
from jax.experimental import pallas as pl
from jax.experimental.pallas import tpu as pltpu


C_IN = 128       # conv5 input channels
C_MID = 64       # conv5 / conv6 output channels
C_OUT = 3        # conv7 real output channels
C_OUT_PAD = 8    # conv7 channels zero-padded 3 -> 8 (sublane dim of the store)


# ---------------------------------------------------------------------------
# In-kernel helpers (operate on VMEM-resident values)
# ---------------------------------------------------------------------------
def _reflect_pad1(t):
    """(H, W, C) -> (H+2, W+2, C); matches nn.ReflectionPad2d((1, 1, 1, 1))."""
    t = jnp.concatenate([t[1:2], t, t[-2:-1]], axis=0)
    t = jnp.concatenate([t[:, 1:2], t, t[:, -2:-1]], axis=1)
    return t


def _upsample2x(t):
    """Nearest-neighbour x2 (UpsamplingNearest2d): out[i, j] = in[i//2, j//2]."""
    h, w, c = t.shape
    t = jnp.broadcast_to(t[:, None], (h, 2, w, c)).reshape(2 * h, w, c)
    t = jnp.broadcast_to(t[:, :, None], (2 * h, w, 2, c)).reshape(2 * h, 2 * w, c)
    return t


def _conv3x3(tpad, w_ref, bias, h, w):
    """Shift-and-add 3x3 conv.

    tpad:  (h+2, w+2, Cin) bf16 reflect-padded activations (in VMEM)
    w_ref: (9, Cin, Cout) bf16 weights, tap index = dy*3 + dx
    bias:  (1, Cout) f32
    Returns (h*w, Cout) f32 (pre-activation).  No im2col buffer is built:
    nine small-K MXU dots accumulate into one f32 value.
    """
    cin = tpad.shape[-1]
    acc = None
    for tap in range(9):
        dy, dx = divmod(tap, 3)
        patch = tpad[dy:dy + h, dx:dx + w, :].reshape(h * w, cin)
        part = jnp.dot(patch, w_ref[tap], preferred_element_type=jnp.float32)
        acc = part if acc is None else acc + part
    return acc + bias                      # bias broadcast once, not per tap


# ---------------------------------------------------------------------------
# Fused decoder kernel: one batch element per grid step
# ---------------------------------------------------------------------------
def _decoder2_kernel(x_ref, w5_ref, b5_ref, w6_ref, b6_ref, w7_ref, b7_ref,
                     o_ref, *, H, W):
    H2, W2 = 2 * H, 2 * W

    x = x_ref[0]                                          # (H, W, 128) bf16

    # reflecPad5 + conv5 + relu5
    y5 = _conv3x3(_reflect_pad1(x), w5_ref, b5_ref[...], H, W)
    y5 = jnp.maximum(y5, 0.0).reshape(H, W, C_MID).astype(jnp.bfloat16)

    # unpool: nearest-neighbour 2x, entirely in VMEM
    u = _upsample2x(y5)                                   # (2H, 2W, 64) bf16

    # reflecPad6 + conv6 + relu6
    y6 = _conv3x3(_reflect_pad1(u), w6_ref, b6_ref[...], H2, W2)
    y6 = jnp.maximum(y6, 0.0).reshape(H2, W2, C_MID).astype(jnp.bfloat16)

    # reflecPad7 + conv7 (no relu); Cout padded 3 -> 8
    y7 = _conv3x3(_reflect_pad1(y6), w7_ref, b7_ref[...], H2, W2)  # (H2*W2, 8)

    # channels -> sublanes so the only HBM store is lane-dense along H2*W2
    o_ref[0] = y7.T                                       # (8, H2*W2) f32


# ---------------------------------------------------------------------------
# Host-side wrappers
# ---------------------------------------------------------------------------
def prepare_params(params):
    """One-time (outside jit) weight prep: OIHW -> (9, Cin, Cout) bf16 (+pad).

    NOTE: b7 must be zero-padded together with w7 so the padded output
    channels stay exactly zero (they are sliced off in the wrapper anyway).
    """
    def prep_w(w_oihw, cout_pad=None):
        cout, cin = w_oihw.shape[0], w_oihw.shape[1]
        w = jnp.transpose(w_oihw, (2, 3, 1, 0)).reshape(9, cin, cout)
        if cout_pad is not None and cout_pad > cout:
            w = jnp.pad(w, ((0, 0), (0, 0), (0, cout_pad - cout)))
        return w.astype(jnp.bfloat16)

    def prep_b(b, cout_pad=None):
        if cout_pad is not None and cout_pad > b.shape[0]:
            b = jnp.pad(b, (0, cout_pad - b.shape[0]))
        return b.reshape(1, -1).astype(jnp.float32)

    return {
        "w5": prep_w(params["w5"]), "b5": prep_b(params["b5"]),
        "w6": prep_w(params["w6"]), "b6": prep_b(params["b6"]),
        "w7": prep_w(params["w7"], C_OUT_PAD),
        "b7": prep_b(params["b7"], C_OUT_PAD),
    }


def _vmem_bytes_estimate(H, W):
    """Rough per-grid-step VMEM footprint (one image + intermediates)."""
    H2, W2 = 2 * H, 2 * W
    est = 0
    est += 2 * H * W * C_IN * 2                     # input block (2x buf, bf16)
    est += (H + 2) * (W + 2) * C_IN * 2             # reflect-padded x
    est += H * W * C_MID * (4 + 2)                  # conv5 f32 acc + y5 bf16
    est += H2 * W2 * C_MID * 2                      # upsampled u (bf16)
    est += (H2 + 2) * (W2 + 2) * C_MID * 2 * 2      # padded u / padded y6
    est += H2 * W2 * C_MID * (4 + 2)                # conv6 f32 acc + y6 bf16
    est += H2 * W2 * C_MID * 2                      # live tap-slice temporary
    est += H2 * W2 * C_OUT_PAD * 4 * 2              # conv7 acc + transposed copy
    est += 2 * H2 * W2 * C_OUT_PAD * 4              # output block (2x buf, f32)
    est += 2 * 9 * (C_IN * C_MID + C_MID * C_MID + C_MID * C_OUT_PAD) * 2
    return est


def _pick_vmem_limit(est_bytes):
    """Explicit scoped-VMEM budget: computed footprint + headroom, capped at
    the chip's physical VMEM (v7x: 64 MiB)."""
    try:
        cap = int(pltpu.get_tpu_info().vmem_capacity_bytes)
    except Exception:
        cap = 64 * 1024 * 1024
    want = max(32 * 1024 * 1024, int(est_bytes * 1.3) + (2 << 20))
    return int(min(want, cap))


@jax.jit
def decoder2_forward(x_nchw, prepared):
    N, C, H, W = x_nchw.shape
    assert C == C_IN, "decoder2 expects 128 input channels"
    assert H >= 2 and W >= 2, "ReflectionPad2d(1) requires H, W >= 2"
    H2, W2 = 2 * H, 2 * W
    M2 = H2 * W2

    # NCHW (PyTorch convention) -> NHWC bf16 for the kernel.
    x = jnp.transpose(x_nchw, (0, 2, 3, 1)).astype(jnp.bfloat16)

    kernel = functools.partial(_decoder2_kernel, H=H, W=W)

    flops = 2 * N * 9 * (H * W * C_IN * C_MID
                         + H2 * W2 * C_MID * C_MID
                         + H2 * W2 * C_MID * C_OUT_PAD)
    bytes_accessed = (
        N * H * W * C_IN * 2
        + 9 * (C_IN * C_MID + C_MID * C_MID + C_MID * C_OUT_PAD) * 2
        + (C_MID + C_MID + C_OUT_PAD) * 4
        + N * M2 * C_OUT_PAD * 4)

    out = pl.pallas_call(
        kernel,
        out_shape=jax.ShapeDtypeStruct((N, C_OUT_PAD, M2), jnp.float32),
        grid_spec=pltpu.PrefetchScalarGridSpec(
            num_scalar_prefetch=0,
            grid=(N,),
            in_specs=[
                pl.BlockSpec((1, H, W, C_IN), lambda n: (n, 0, 0, 0)),
                pl.BlockSpec((9, C_IN, C_MID), lambda n: (0, 0, 0)),
                pl.BlockSpec((1, C_MID), lambda n: (0, 0)),
                pl.BlockSpec((9, C_MID, C_MID), lambda n: (0, 0, 0)),
                pl.BlockSpec((1, C_MID), lambda n: (0, 0)),
                pl.BlockSpec((9, C_MID, C_OUT_PAD), lambda n: (0, 0, 0)),
                pl.BlockSpec((1, C_OUT_PAD), lambda n: (0, 0)),
            ],
            out_specs=pl.BlockSpec((1, C_OUT_PAD, M2), lambda n: (n, 0, 0)),
        ),
        compiler_params=pltpu.CompilerParams(
            dimension_semantics=("parallel",),
            vmem_limit_bytes=_pick_vmem_limit(_vmem_bytes_estimate(H, W))),
        cost_estimate=pl.CostEstimate(flops=flops, transcendentals=0,
                                      bytes_accessed=bytes_accessed),
    )(x, prepared["w5"], prepared["b5"], prepared["w6"], prepared["b6"],
      prepared["w7"], prepared["b7"])

    # (N, 8, H2*W2) -> (N, 8, H2, W2) is a free reshape; slicing the 3 real
    # channels yields NCHW directly (no output-side transpose needed).
    return out.reshape(N, C_OUT_PAD, H2, W2)[:, :C_OUT]


def init_params(key):
    """Deterministic synthetic weights with the decoder2 shapes (PyTorch OIHW)."""
    k5w, k5b, k6w, k6b, k7w, k7b = jax.random.split(key, 6)
    scale = 0.05
    return {
        "w5": scale * jax.random.normal(k5w, (64, 128, 3, 3), jnp.float32),
        "b5": scale * jax.random.normal(k5b, (64,), jnp.float32),
        "w6": scale * jax.random.normal(k6w, (64, 64, 3, 3), jnp.float32),
        "b6": scale * jax.random.normal(k6b, (64,), jnp.float32),
        "w7": scale * jax.random.normal(k7w, (3, 64, 3, 3), jnp.float32),
        "b7": scale * jax.random.normal(k7b, (3,), jnp.float32),
    }


def _ref_forward(x_nchw, params):
    """Pure-JAX f32 reference of decoder2.forward (for a sanity check)."""
    def conv(x, w, b):
        xp = jnp.pad(x, ((0, 0), (0, 0), (1, 1), (1, 1)), mode="reflect")
        y = jax.lax.conv_general_dilated(
            xp, w, window_strides=(1, 1), padding="VALID",
            dimension_numbers=("NCHW", "OIHW", "NCHW"))
        return y + b[None, :, None, None]

    y = jax.nn.relu(conv(x_nchw, params["w5"], params["b5"]))
    y = jnp.repeat(jnp.repeat(y, 2, axis=2), 2, axis=3)
    y = jax.nn.relu(conv(y, params["w6"], params["b6"]))
    return conv(y, params["w7"], params["b7"])


if __name__ == "__main__":
    key = jax.random.PRNGKey(0)
    kx, kp = jax.random.split(key)

    # Small shapes consistent with the module: 128 input channels, 8x8 spatial.
    x = jax.random.normal(kx, (2, C_IN, 8, 8), jnp.float32)   # NCHW
    params = init_params(kp)
    prepared = prepare_params(params)

    out = jax.block_until_ready(decoder2_forward(x, prepared))
    assert out.shape == (2, C_OUT, 16, 16), out.shape

    # Loose tolerance: kernel uses bf16 MXU matmuls with f32 accumulation
    # (error compounds through the three conv layers; fine for style transfer).
    ref = _ref_forward(x, params)
    err = float(jnp.max(jnp.abs(out - ref)))
    assert err < 0.25, err

    print("KERNEL_OK")
</pallas_src>

<mosaic_0001>
module attributes {stable_mosaic.version = 11 : i64} {
  func.func @_decoder2_kernel(%arg0: i32, %arg1: memref<1x8x8x128xbf16, #tpu.memory_space<vmem>>, %arg2: memref<9x128x64xbf16, #tpu.memory_space<vmem>>, %arg3: memref<1x64xf32, #tpu.memory_space<vmem>>, %arg4: memref<9x64x64xbf16, #tpu.memory_space<vmem>>, %arg5: memref<1x64xf32, #tpu.memory_space<vmem>>, %arg6: memref<9x64x8xbf16, #tpu.memory_space<vmem>>, %arg7: memref<1x8xf32, #tpu.memory_space<vmem>>, %arg8: memref<1x8x256xf32, #tpu.memory_space<vmem>>) attributes {dimension_semantics = [#tpu.dimension_semantics<parallel>], iteration_bounds = array<i64: 2>, scalar_prefetch = 0 : i64, scratch_operands = 0 : i64, tpu.core_type = #tpu.core_type<tc>, window_params = [{transform_indices = @transform_0, window_bounds = array<i64: 1, 8, 8, 128>}, {pipeline_mode = #tpu.pipeline_mode<synchronous>, transform_indices = @transform_1, window_bounds = array<i64: 9, 128, 64>}, {pipeline_mode = #tpu.pipeline_mode<synchronous>, transform_indices = @transform_2, window_bounds = array<i64: 1, 64>}, {pipeline_mode = #tpu.pipeline_mode<synchronous>, transform_indices = @transform_3, window_bounds = array<i64: 9, 64, 64>}, {pipeline_mode = #tpu.pipeline_mode<synchronous>, transform_indices = @transform_4, window_bounds = array<i64: 1, 64>}, {pipeline_mode = #tpu.pipeline_mode<synchronous>, transform_indices = @transform_5, window_bounds = array<i64: 9, 64, 8>}, {pipeline_mode = #tpu.pipeline_mode<synchronous>, transform_indices = @transform_6, window_bounds = array<i64: 1, 8>}, {transform_indices = @transform_7, window_bounds = array<i64: 1, 8, 256>}]} {
    %c0 = arith.constant 0 : index
    %c0_0 = arith.constant 0 : index
    %c0_1 = arith.constant 0 : index
    %c0_2 = arith.constant 0 : index
    %0 = vector.load %arg1[%c0, %c0_0, %c0_1, %c0_2] : memref<1x8x8x128xbf16, #tpu.memory_space<vmem>>, vector<1x8x8x128xbf16>
    %1 = vector.shape_cast %0 : vector<1x8x8x128xbf16> to vector<8x8x128xbf16>
    %2 = vector.extract_strided_slice %1 {offsets = [1, 0, 0], sizes = [1, 8, 128], strides = [1, 1, 1]} : vector<8x8x128xbf16> to vector<1x8x128xbf16>
    %3 = vector.extract_strided_slice %1 {offsets = [6, 0, 0], sizes = [1, 8, 128], strides = [1, 1, 1]} : vector<8x8x128xbf16> to vector<1x8x128xbf16>
    %4 = tpu.concatenate %2, %1, %3 in 0 : vector<1x8x128xbf16>, vector<8x8x128xbf16>, vector<1x8x128xbf16> -> vector<10x8x128xbf16>
    %5 = vector.extract_strided_slice %4 {offsets = [0, 1, 0], sizes = [10, 1, 128], strides = [1, 1, 1]} : vector<10x8x128xbf16> to vector<10x1x128xbf16>
    %6 = vector.extract_strided_slice %4 {offsets = [0, 6, 0], sizes = [10, 1, 128], strides = [1, 1, 1]} : vector<10x8x128xbf16> to vector<10x1x128xbf16>
    %7 = tpu.concatenate %5, %4, %6 in 1 : vector<10x1x128xbf16>, vector<10x8x128xbf16>, vector<10x1x128xbf16> -> vector<10x10x128xbf16>
    %c0_3 = arith.constant 0 : index
    %c0_4 = arith.constant 0 : index
    %8 = vector.load %arg3[%c0_3, %c0_4] : memref<1x64xf32, #tpu.memory_space<vmem>>, vector<1x64xf32>
    %9 = vector.extract_strided_slice %7 {offsets = [0, 0, 0], sizes = [8, 8, 128], strides = [1, 1, 1]} : vector<10x10x128xbf16> to vector<8x8x128xbf16>
    %10 = vector.shape_cast %9 : vector<8x8x128xbf16> to vector<64x128xbf16>
    %c0_5 = arith.constant 0 : index
    %c0_6 = arith.constant 0 : index
    %c0_7 = arith.constant 0 : index
    %11 = vector.load %arg2[%c0_5, %c0_6, %c0_7] : memref<9x128x64xbf16, #tpu.memory_space<vmem>>, vector<1x128x64xbf16>
    %12 = vector.shape_cast %11 : vector<1x128x64xbf16> to vector<128x64xbf16>
    %cst = arith.constant dense<0.000000e+00> : vector<64x64xf32>
    %13 = tpu.matmul %10, %12, %cst {dimension_numbers = #tpu.dot_dimension_numbers<[1], [0], [0], [1], [0, 0, 1, 1], [], []>} : vector<64x128xbf16>, vector<128x64xbf16>, vector<64x64xf32> -> vector<64x64xf32>
    %14 = vector.extract_strided_slice %7 {offsets = [0, 1, 0], sizes = [8, 8, 128], strides = [1, 1, 1]} : vector<10x10x128xbf16> to vector<8x8x128xbf16>
    %15 = vector.shape_cast %14 : vector<8x8x128xbf16> to vector<64x128xbf16>
    %c1 = arith.constant 1 : index
    %c0_8 = arith.constant 0 : index
    %c0_9 = arith.constant 0 : index
    %16 = vector.load %arg2[%c1, %c0_8, %c0_9] : memref<9x128x64xbf16, #tpu.memory_space<vmem>>, vector<1x128x64xbf16>
    %17 = vector.shape_cast %16 : vector<1x128x64xbf16> to vector<128x64xbf16>
    %cst_10 = arith.constant dense<0.000000e+00> : vector<64x64xf32>
    %18 = tpu.matmul %15, %17, %cst_10 {dimension_numbers = #tpu.dot_dimension_numbers<[1], [0], [0], [1], [0, 0, 1, 1], [], []>} : vector<64x128xbf16>, vector<128x64xbf16>, vector<64x64xf32> -> vector<64x64xf32>
    %19 = arith.addf %13, %18 : vector<64x64xf32>
    %20 = vector.extract_strided_slice %7 {offsets = [0, 2, 0], sizes = [8, 8, 128], strides = [1, 1, 1]} : vector<10x10x128xbf16> to vector<8x8x128xbf16>
    %21 = vector.shape_cast %20 : vector<8x8x128xbf16> to vector<64x128xbf16>
    %c2 = arith.constant 2 : index
    %c0_11 = arith.constant 0 : index
    %c0_12 = arith.constant 0 : index
    %22 = vector.load %arg2[%c2, %c0_11, %c0_12] : memref<9x128x64xbf16, #tpu.memory_space<vmem>>, vector<1x128x64xbf16>
    %23 = vector.shape_cast %22 : vector<1x128x64xbf16> to vector<128x64xbf16>
    %cst_13 = arith.constant dense<0.000000e+00> : vector<64x64xf32>
    %24 = tpu.matmul %21, %23, %cst_13 {dimension_numbers = #tpu.dot_dimension_numbers<[1], [0], [0], [1], [0, 0, 1, 1], [], []>} : vector<64x128xbf16>, vector<128x64xbf16>, vector<64x64xf32> -> vector<64x64xf32>
    %25 = arith.addf %19, %24 : vector<64x64xf32>
    %26 = vector.extract_strided_slice %7 {offsets = [1, 0, 0], sizes = [8, 8, 128], strides = [1, 1, 1]} : vector<10x10x128xbf16> to vector<8x8x128xbf16>
    %27 = vector.shape_cast %26 : vector<8x8x128xbf16> to vector<64x128xbf16>
    %c3 = arith.constant 3 : index
    %c0_14 = arith.constant 0 : index
    %c0_15 = arith.constant 0 : index
    %28 = vector.load %arg2[%c3, %c0_14, %c0_15] : memref<9x128x64xbf16, #tpu.memory_space<vmem>>, vector<1x128x64xbf16>
    %29 = vector.shape_cast %28 : vector<1x128x64xbf16> to vector<128x64xbf16>
    %cst_16 = arith.constant dense<0.000000e+00> : vector<64x64xf32>
    %30 = tpu.matmul %27, %29, %cst_16 {dimension_numbers = #tpu.dot_dimension_numbers<[1], [0], [0], [1], [0, 0, 1, 1], [], []>} : vector<64x128xbf16>, vector<128x64xbf16>, vector<64x64xf32> -> vector<64x64xf32>
    %31 = arith.addf %25, %30 : vector<64x64xf32>
    %32 = vector.extract_strided_slice %7 {offsets = [1, 1, 0], sizes = [8, 8, 128], strides = [1, 1, 1]} : vector<10x10x128xbf16> to vector<8x8x128xbf16>
    %33 = vector.shape_cast %32 : vector<8x8x128xbf16> to vector<64x128xbf16>
    %c4 = arith.constant 4 : index
    %c0_17 = arith.constant 0 : index
    %c0_18 = arith.constant 0 : index
    %34 = vector.load %arg2[%c4, %c0_17, %c0_18] : memref<9x128x64xbf16, #tpu.memory_space<vmem>>, vector<1x128x64xbf16>
    %35 = vector.shape_cast %34 : vector<1x128x64xbf16> to vector<128x64xbf16>
    %cst_19 = arith.constant dense<0.000000e+00> : vector<64x64xf32>
    %36 = tpu.matmul %33, %35, %cst_19 {dimension_numbers = #tpu.dot_dimension_numbers<[1], [0], [0], [1], [0, 0, 1, 1], [], []>} : vector<64x128xbf16>, vector<128x64xbf16>, vector<64x64xf32> -> vector<64x64xf32>
    %37 = arith.addf %31, %36 : vector<64x64xf32>
    %38 = vector.extract_strided_slice %7 {offsets = [1, 2, 0], sizes = [8, 8, 128], strides = [1, 1, 1]} : vector<10x10x128xbf16> to vector<8x8x128xbf16>
    %39 = vector.shape_cast %38 : vector<8x8x128xbf16> to vector<64x128xbf16>
    %c5 = arith.constant 5 : index
    %c0_20 = arith.constant 0 : index
    %c0_21 = arith.constant 0 : index
    %40 = vector.load %arg2[%c5, %c0_20, %c0_21] : memref<9x128x64xbf16, #tpu.memory_space<vmem>>, vector<1x128x64xbf16>
    %41 = vector.shape_cast %40 : vector<1x128x64xbf16> to vector<128x64xbf16>
    %cst_22 = arith.constant dense<0.000000e+00> : vector<64x64xf32>
    %42 = tpu.matmul %39, %41, %cst_22 {dimension_numbers = #tpu.dot_dimension_numbers<[1], [0], [0], [1], [0, 0, 1, 1], [], []>} : vector<64x128xbf16>, vector<128x64xbf16>, vector<64x64xf32> -> vector<64x64xf32>
    %43 = arith.addf %37, %42 : vector<64x64xf32>
    %44 = vector.extract_strided_slice %7 {offsets = [2, 0, 0], sizes = [8, 8, 128], strides = [1, 1, 1]} : vector<10x10x128xbf16> to vector<8x8x128xbf16>
    %45 = vector.shape_cast %44 : vector<8x8x128xbf16> to vector<64x128xbf16>
    %c6 = arith.constant 6 : index
    %c0_23 = arith.constant 0 : index
    %c0_24 = arith.constant 0 : index
    %46 = vector.load %arg2[%c6, %c0_23, %c0_24] : memref<9x128x64xbf16, #tpu.memory_space<vmem>>, vector<1x128x64xbf16>
    %47 = vector.shape_cast %46 : vector<1x128x64xbf16> to vector<128x64xbf16>
    %cst_25 = arith.constant dense<0.000000e+00> : vector<64x64xf32>
    %48 = tpu.matmul %45, %47, %cst_25 {dimension_numbers = #tpu.dot_dimension_numbers<[1], [0], [0], [1], [0, 0, 1, 1], [], []>} : vector<64x128xbf16>, vector<128x64xbf16>, vector<64x64xf32> -> vector<64x64xf32>
    %49 = arith.addf %43, %48 : vector<64x64xf32>
    %50 = vector.extract_strided_slice %7 {offsets = [2, 1, 0], sizes = [8, 8, 128], strides = [1, 1, 1]} : vector<10x10x128xbf16> to vector<8x8x128xbf16>
    %51 = vector.shape_cast %50 : vector<8x8x128xbf16> to vector<64x128xbf16>
    %c7 = arith.constant 7 : index
    %c0_26 = arith.constant 0 : index
    %c0_27 = arith.constant 0 : index
    %52 = vector.load %arg2[%c7, %c0_26, %c0_27] : memref<9x128x64xbf16, #tpu.memory_space<vmem>>, vector<1x128x64xbf16>
    %53 = vector.shape_cast %52 : vector<1x128x64xbf16> to vector<128x64xbf16>
    %cst_28 = arith.constant dense<0.000000e+00> : vector<64x64xf32>
    %54 = tpu.matmul %51, %53, %cst_28 {dimension_numbers = #tpu.dot_dimension_numbers<[1], [0], [0], [1], [0, 0, 1, 1], [], []>} : vector<64x128xbf16>, vector<128x64xbf16>, vector<64x64xf32> -> vector<64x64xf32>
    %55 = arith.addf %49, %54 : vector<64x64xf32>
    %56 = vector.extract_strided_slice %7 {offsets = [2, 2, 0], sizes = [8, 8, 128], strides = [1, 1, 1]} : vector<10x10x128xbf16> to vector<8x8x128xbf16>
    %57 = vector.shape_cast %56 : vector<8x8x128xbf16> to vector<64x128xbf16>
    %c8 = arith.constant 8 : index
    %c0_29 = arith.constant 0 : index
    %c0_30 = arith.constant 0 : index
    %58 = vector.load %arg2[%c8, %c0_29, %c0_30] : memref<9x128x64xbf16, #tpu.memory_space<vmem>>, vector<1x128x64xbf16>
    %59 = vector.shape_cast %58 : vector<1x128x64xbf16> to vector<128x64xbf16>
    %cst_31 = arith.constant dense<0.000000e+00> : vector<64x64xf32>
    %60 = tpu.matmul %57, %59, %cst_31 {dimension_numbers = #tpu.dot_dimension_numbers<[1], [0], [0], [1], [0, 0, 1, 1], [], []>} : vector<64x128xbf16>, vector<128x64xbf16>, vector<64x64xf32> -> vector<64x64xf32>
    %61 = arith.addf %55, %60 : vector<64x64xf32>
    %62 = vector.broadcast %8 : vector<1x64xf32> to vector<64x64xf32>
    %63 = arith.addf %61, %62 : vector<64x64xf32>
    %cst_32 = arith.constant 0.000000e+00 : f32
    %64 = vector.broadcast %cst_32 : f32 to vector<64x64xf32>
    %65 = arith.maximumf %63, %64 : vector<64x64xf32>
    %66 = vector.shape_cast %65 : vector<64x64xf32> to vector<8x8x64xf32>
    %67 = arith.truncf %66 : vector<8x8x64xf32> to vector<8x8x64xbf16>
    %68 = vector.shape_cast %67 : vector<8x8x64xbf16> to vector<8x1x8x64xbf16>
    %69 = vector.shape_cast %68 : vector<8x1x8x64xbf16> to vector<8x1x8x64xbf16>
    %70 = vector.broadcast %69 : vector<8x1x8x64xbf16> to vector<8x2x8x64xbf16>
    %71 = vector.shape_cast %70 : vector<8x2x8x64xbf16> to vector<16x8x64xbf16>
    %72 = vector.shape_cast %71 : vector<16x8x64xbf16> to vector<16x8x1x64xbf16>
    %73 = vector.shape_cast %72 : vector<16x8x1x64xbf16> to vector<16x8x1x64xbf16>
    %74 = vector.broadcast %73 : vector<16x8x1x64xbf16> to vector<16x8x2x64xbf16>
    %75 = vector.shape_cast %74 : vector<16x8x2x64xbf16> to vector<16x16x64xbf16>
    %76 = vector.extract_strided_slice %75 {offsets = [1, 0, 0], sizes = [1, 16, 64], strides = [1, 1, 1]} : vector<16x16x64xbf16> to vector<1x16x64xbf16>
    %77 = vector.extract_strided_slice %75 {offsets = [14, 0, 0], sizes = [1, 16, 64], strides = [1, 1, 1]} : vector<16x16x64xbf16> to vector<1x16x64xbf16>
    %78 = tpu.concatenate %76, %75, %77 in 0 : vector<1x16x64xbf16>, vector<16x16x64xbf16>, vector<1x16x64xbf16> -> vector<18x16x64xbf16>
    %79 = vector.extract_strided_slice %78 {offsets = [0, 1, 0], sizes = [18, 1, 64], strides = [1, 1, 1]} : vector<18x16x64xbf16> to vector<18x1x64xbf16>
    %80 = vector.extract_strided_slice %78 {offsets = [0, 14, 0], sizes = [18, 1, 64], strides = [1, 1, 1]} : vector<18x16x64xbf16> to vector<18x1x64xbf16>
    %81 = tpu.concatenate %79, %78, %80 in 1 : vector<18x1x64xbf16>, vector<18x16x64xbf16>, vector<18x1x64xbf16> -> vector<18x18x64xbf16>
    %c0_33 = arith.constant 0 : index
    %c0_34 = arith.constant 0 : index
    %82 = vector.load %arg5[%c0_33, %c0_34] : memref<1x64xf32, #tpu.memory_space<vmem>>, vector<1x64xf32>
    %83 = vector.extract_strided_slice %81 {offsets = [0, 0, 0], sizes = [16, 16, 64], strides = [1, 1, 1]} : vector<18x18x64xbf16> to vector<16x16x64xbf16>
    %84 = vector.shape_cast %83 : vector<16x16x64xbf16> to vector<256x64xbf16>
    %c0_35 = arith.constant 0 : index
    %c0_36 = arith.constant 0 : index
    %c0_37 = arith.constant 0 : index
    %85 = vector.load %arg4[%c0_35, %c0_36, %c0_37] : memref<9x64x64xbf16, #tpu.memory_space<vmem>>, vector<1x64x64xbf16>
    %86 = vector.shape_cast %85 : vector<1x64x64xbf16> to vector<64x64xbf16>
    %cst_38 = arith.constant dense<0.000000e+00> : vector<256x64xf32>
    %87 = tpu.matmul %84, %86, %cst_38 {dimension_numbers = #tpu.dot_dimension_numbers<[1], [0], [0], [1], [0, 0, 1, 1], [], []>} : vector<256x64xbf16>, vector<64x64xbf16>, vector<256x64xf32> -> vector<256x64xf32>
    %88 = vector.extract_strided_slice %81 {offsets = [0, 1, 0], sizes = [16, 16, 64], strides = [1, 1, 1]} : vector<18x18x64xbf16> to vector<16x16x64xbf16>
    %89 = vector.shape_cast %88 : vector<16x16x64xbf16> to vector<256x64xbf16>
    %c1_39 = arith.constant 1 : index
    %c0_40 = arith.constant 0 : index
    %c0_41 = arith.constant 0 : index
    %90 = vector.load %arg4[%c1_39, %c0_40, %c0_41] : memref<9x64x64xbf16, #tpu.memory_space<vmem>>, vector<1x64x64xbf16>
    %91 = vector.shape_cast %90 : vector<1x64x64xbf16> to vector<64x64xbf16>
    %cst_42 = arith.constant dense<0.000000e+00> : vector<256x64xf32>
    %92 = tpu.matmul %89, %91, %cst_42 {dimension_numbers = #tpu.dot_dimension_numbers<[1], [0], [0], [1], [0, 0, 1, 1], [], []>} : vector<256x64xbf16>, vector<64x64xbf16>, vector<256x64xf32> -> vector<256x64xf32>
    %93 = arith.addf %87, %92 : vector<256x64xf32>
    %94 = vector.extract_strided_slice %81 {offsets = [0, 2, 0], sizes = [16, 16, 64], strides = [1, 1, 1]} : vector<18x18x64xbf16> to vector<16x16x64xbf16>
    %95 = vector.shape_cast %94 : vector<16x16x64xbf16> to vector<256x64xbf16>
    %c2_43 = arith.constant 2 : index
    %c0_44 = arith.constant 0 : index
    %c0_45 = arith.constant 0 : index
    %96 = vector.load %arg4[%c2_43, %c0_44, %c0_45] : memref<9x64x64xbf16, #tpu.memory_space<vmem>>, vector<1x64x64xbf16>
    %97 = vector.shape_cast %96 : vector<1x64x64xbf16> to vector<64x64xbf16>
    %cst_46 = arith.constant dense<0.000000e+00> : vector<256x64xf32>
    %98 = tpu.matmul %95, %97, %cst_46 {dimension_numbers = #tpu.dot_dimension_numbers<[1], [0], [0], [1], [0, 0, 1, 1], [], []>} : vector<256x64xbf16>, vector<64x64xbf16>, vector<256x64xf32> -> vector<256x64xf32>
    %99 = arith.addf %93, %98 : vector<256x64xf32>
    %100 = vector.extract_strided_slice %81 {offsets = [1, 0, 0], sizes = [16, 16, 64], strides = [1, 1, 1]} : vector<18x18x64xbf16> to vector<16x16x64xbf16>
    %101 = vector.shape_cast %100 : vector<16x16x64xbf16> to vector<256x64xbf16>
    %c3_47 = arith.constant 3 : index
    %c0_48 = arith.constant 0 : index
    %c0_49 = arith.constant 0 : index
    %102 = vector.load %arg4[%c3_47, %c0_48, %c0_49] : memref<9x64x64xbf16, #tpu.memory_space<vmem>>, vector<1x64x64xbf16>
    %103 = vector.shape_cast %102 : vector<1x64x64xbf16> to vector<64x64xbf16>
    %cst_50 = arith.constant dense<0.000000e+00> : vector<256x64xf32>
    %104 = tpu.matmul %101, %103, %cst_50 {dimension_numbers = #tpu.dot_dimension_numbers<[1], [0], [0], [1], [0, 0, 1, 1], [], []>} : vector<256x64xbf16>, vector<64x64xbf16>, vector<256x64xf32> -> vector<256x64xf32>
    %105 = arith.addf %99, %104 : vector<256x64xf32>
    %106 = vector.extract_strided_slice %81 {offsets = [1, 1, 0], sizes = [16, 16, 64], strides = [1, 1, 1]} : vector<18x18x64xbf16> to vector<16x16x64xbf16>
    %107 = vector.shape_cast %106 : vector<16x16x64xbf16> to vector<256x64xbf16>
    %c4_51 = arith.constant 4 : index
    %c0_52 = arith.constant 0 : index
    %c0_53 = arith.constant 0 : index
    %108 = vector.load %arg4[%c4_51, %c0_52, %c0_53] : memref<9x64x64xbf16, #tpu.memory_space<vmem>>, vector<1x64x64xbf16>
    %109 = vector.shape_cast %108 : vector<1x64x64xbf16> to vector<64x64xbf16>
    %cst_54 = arith.constant dense<0.000000e+00> : vector<256x64xf32>
    %110 = tpu.matmul %107, %109, %cst_54 {dimension_numbers = #tpu.dot_dimension_numbers<[1], [0], [0], [1], [0, 0, 1, 1], [], []>} : vector<256x64xbf16>, vector<64x64xbf16>, vector<256x64xf32> -> vector<256x64xf32>
    %111 = arith.addf %105, %110 : vector<256x64xf32>
    %112 = vector.extract_strided_slice %81 {offsets = [1, 2, 0], sizes = [16, 16, 64], strides = [1, 1, 1]} : vector<18x18x64xbf16> to vector<16x16x64xbf16>
    %113 = vector.shape_cast %112 : vector<16x16x64xbf16> to vector<256x64xbf16>
    %c5_55 = arith.constant 5 : index
    %c0_56 = arith.constant 0 : index
    %c0_57 = arith.constant 0 : index
    %114 = vector.load %arg4[%c5_55, %c0_56, %c0_57] : memref<9x64x64xbf16, #tpu.memory_space<vmem>>, vector<1x64x64xbf16>
    %115 = vector.shape_cast %114 : vector<1x64x64xbf16> to vector<64x64xbf16>
    %cst_58 = arith.constant dense<0.000000e+00> : vector<256x64xf32>
    %116 = tpu.matmul %113, %115, %cst_58 {dimension_numbers = #tpu.dot_dimension_numbers<[1], [0], [0], [1], [0, 0, 1, 1], [], []>} : vector<256x64xbf16>, vector<64x64xbf16>, vector<256x64xf32> -> vector<256x64xf32>
    %117 = arith.addf %111, %116 : vector<256x64xf32>
    %118 = vector.extract_strided_slice %81 {offsets = [2, 0, 0], sizes = [16, 16, 64], strides = [1, 1, 1]} : vector<18x18x64xbf16> to vector<16x16x64xbf16>
    %119 = vector.shape_cast %118 : vector<16x16x64xbf16> to vector<256x64xbf16>
    %c6_59 = arith.constant 6 : index
    %c0_60 = arith.constant 0 : index
    %c0_61 = arith.constant 0 : index
    %120 = vector.load %arg4[%c6_59, %c0_60, %c0_61] : memref<9x64x64xbf16, #tpu.memory_space<vmem>>, vector<1x64x64xbf16>
    %121 = vector.shape_cast %120 : vector<1x64x64xbf16> to vector<64x64xbf16>
    %cst_62 = arith.constant dense<0.000000e+00> : vector<256x64xf32>
    %122 = tpu.matmul %119, %121, %cst_62 {dimension_numbers = #tpu.dot_dimension_numbers<[1], [0], [0], [1], [0, 0, 1, 1], [], []>} : vector<256x64xbf16>, vector<64x64xbf16>, vector<256x64xf32> -> vector<256x64xf32>
    %123 = arith.addf %117, %122 : vector<256x64xf32>
    %124 = vector.extract_strided_slice %81 {offsets = [2, 1, 0], sizes = [16, 16, 64], strides = [1, 1, 1]} : vector<18x18x64xbf16> to vector<16x16x64xbf16>
    %125 = vector.shape_cast %124 : vector<16x16x64xbf16> to vector<256x64xbf16>
    %c7_63 = arith.constant 7 : index
    %c0_64 = arith.constant 0 : index
    %c0_65 = arith.constant 0 : index
    %126 = vector.load %arg4[%c7_63, %c0_64, %c0_65] : memref<9x64x64xbf16, #tpu.memory_space<vmem>>, vector<1x64x64xbf16>
    %127 = vector.shape_cast %126 : vector<1x64x64xbf16> to vector<64x64xbf16>
    %cst_66 = arith.constant dense<0.000000e+00> : vector<256x64xf32>
    %128 = tpu.matmul %125, %127, %cst_66 {dimension_numbers = #tpu.dot_dimension_numbers<[1], [0], [0], [1], [0, 0, 1, 1], [], []>} : vector<256x64xbf16>, vector<64x64xbf16>, vector<256x64xf32> -> vector<256x64xf32>
    %129 = arith.addf %123, %128 : vector<256x64xf32>
    %130 = vector.extract_strided_slice %81 {offsets = [2, 2, 0], sizes = [16, 16, 64], strides = [1, 1, 1]} : vector<18x18x64xbf16> to vector<16x16x64xbf16>
    %131 = vector.shape_cast %130 : vector<16x16x64xbf16> to vector<256x64xbf16>
    %c8_67 = arith.constant 8 : index
    %c0_68 = arith.constant 0 : index
    %c0_69 = arith.constant 0 : index
    %132 = vector.load %arg4[%c8_67, %c0_68, %c0_69] : memref<9x64x64xbf16, #tpu.memory_space<vmem>>, vector<1x64x64xbf16>
    %133 = vector.shape_cast %132 : vector<1x64x64xbf16> to vector<64x64xbf16>
    %cst_70 = arith.constant dense<0.000000e+00> : vector<256x64xf32>
    %134 = tpu.matmul %131, %133, %cst_70 {dimension_numbers = #tpu.dot_dimension_numbers<[1], [0], [0], [1], [0, 0, 1, 1], [], []>} : vector<256x64xbf16>, vector<64x64xbf16>, vector<256x64xf32> -> vector<256x64xf32>
    %135 = arith.addf %129, %134 : vector<256x64xf32>
    %136 = vector.broadcast %82 : vector<1x64xf32> to vector<256x64xf32>
    %137 = arith.addf %135, %136 : vector<256x64xf32>
    %cst_71 = arith.constant 0.000000e+00 : f32
    %138 = vector.broadcast %cst_71 : f32 to vector<256x64xf32>
    %139 = arith.maximumf %137, %138 : vector<256x64xf32>
    %140 = vector.shape_cast %139 : vector<256x64xf32> to vector<16x16x64xf32>
    %141 = arith.truncf %140 : vector<16x16x64xf32> to vector<16x16x64xbf16>
    %142 = vector.extract_strided_slice %141 {offsets = [1, 0, 0], sizes = [1, 16, 64], strides = [1, 1, 1]} : vector<16x16x64xbf16> to vector<1x16x64xbf16>
    %143 = vector.extract_strided_slice %141 {offsets = [14, 0, 0], sizes = [1, 16, 64], strides = [1, 1, 1]} : vector<16x16x64xbf16> to vector<1x16x64xbf16>
    %144 = tpu.concatenate %142, %141, %143 in 0 : vector<1x16x64xbf16>, vector<16x16x64xbf16>, vector<1x16x64xbf16> -> vector<18x16x64xbf16>
    %145 = vector.extract_strided_slice %144 {offsets = [0, 1, 0], sizes = [18, 1, 64], strides = [1, 1, 1]} : vector<18x16x64xbf16> to vector<18x1x64xbf16>
    %146 = vector.extract_strided_slice %144 {offsets = [0, 14, 0], sizes = [18, 1, 64], strides = [1, 1, 1]} : vector<18x16x64xbf16> to vector<18x1x64xbf16>
    %147 = tpu.concatenate %145, %144, %146 in 1 : vector<18x1x64xbf16>, vector<18x16x64xbf16>, vector<18x1x64xbf16> -> vector<18x18x64xbf16>
    %c0_72 = arith.constant 0 : index
    %c0_73 = arith.constant 0 : index
    %148 = vector.load %arg7[%c0_72, %c0_73] : memref<1x8xf32, #tpu.memory_space<vmem>>, vector<1x8xf32>
    %149 = vector.extract_strided_slice %147 {offsets = [0, 0, 0], sizes = [16, 16, 64], strides = [1, 1, 1]} : vector<18x18x64xbf16> to vector<16x16x64xbf16>
    %150 = vector.shape_cast %149 : vector<16x16x64xbf16> to vector<256x64xbf16>
    %c0_74 = arith.constant 0 : index
    %c0_75 = arith.constant 0 : index
    %c0_76 = arith.constant 0 : index
    %151 = vector.load %arg6[%c0_74, %c0_75, %c0_76] : memref<9x64x8xbf16, #tpu.memory_space<vmem>>, vector<1x64x8xbf16>
    %152 = vector.shape_cast %151 : vector<1x64x8xbf16> to vector<64x8xbf16>
    %cst_77 = arith.constant dense<0.000000e+00> : vector<256x8xf32>
    %153 = tpu.matmul %150, %152, %cst_77 {dimension_numbers = #tpu.dot_dimension_numbers<[1], [0], [0], [1], [0, 0, 1, 1], [], []>} : vector<256x64xbf16>, vector<64x8xbf16>, vector<256x8xf32> -> vector<256x8xf32>
    %154 = vector.extract_strided_slice %147 {offsets = [0, 1, 0], sizes = [16, 16, 64], strides = [1, 1, 1]} : vector<18x18x64xbf16> to vector<16x16x64xbf16>
    %155 = vector.shape_cast %154 : vector<16x16x64xbf16> to vector<256x64xbf16>
    %c1_78 = arith.constant 1 : index
    %c0_79 = arith.constant 0 : index
    %c0_80 = arith.constant 0 : index
    %156 = vector.load %arg6[%c1_78, %c0_79, %c0_80] : memref<9x64x8xbf16, #tpu.memory_space<vmem>>, vector<1x64x8xbf16>
    %157 = vector.shape_cast %156 : vector<1x64x8xbf16> to vector<64x8xbf16>
    %cst_81 = arith.constant dense<0.000000e+00> : vector<256x8xf32>
    %158 = tpu.matmul %155, %157, %cst_81 {dimension_numbers = #tpu.dot_dimension_numbers<[1], [0], [0], [1], [0, 0, 1, 1], [], []>} : vector<256x64xbf16>, vector<64x8xbf16>, vector<256x8xf32> -> vector<256x8xf32>
    %159 = arith.addf %153, %158 : vector<256x8xf32>
    %160 = vector.extract_strided_slice %147 {offsets = [0, 2, 0], sizes = [16, 16, 64], strides = [1, 1, 1]} : vector<18x18x64xbf16> to vector<16x16x64xbf16>
    %161 = vector.shape_cast %160 : vector<16x16x64xbf16> to vector<256x64xbf16>
    %c2_82 = arith.constant 2 : index
    %c0_83 = arith.constant 0 : index
    %c0_84 = arith.constant 0 : index
    %162 = vector.load %arg6[%c2_82, %c0_83, %c0_84] : memref<9x64x8xbf16, #tpu.memory_space<vmem>>, vector<1x64x8xbf16>
    %163 = vector.shape_cast %162 : vector<1x64x8xbf16> to vector<64x8xbf16>
    %cst_85 = arith.constant dense<0.000000e+00> : vector<256x8xf32>
    %164 = tpu.matmul %161, %163, %cst_85 {dimension_numbers = #tpu.dot_dimension_numbers<[1], [0], [0], [1], [0, 0, 1, 1], [], []>} : vector<256x64xbf16>, vector<64x8xbf16>, vector<256x8xf32> -> vector<256x8xf32>
    %165 = arith.addf %159, %164 : vector<256x8xf32>
    %166 = vector.extract_strided_slice %147 {offsets = [1, 0, 0], sizes = [16, 16, 64], strides = [1, 1, 1]} : vector<18x18x64xbf16> to vector<16x16x64xbf16>
    %167 = vector.shape_cast %166 : vector<16x16x64xbf16> to vector<256x64xbf16>
    %c3_86 = arith.constant 3 : index
    %c0_87 = arith.constant 0 : index
    %c0_88 = arith.constant 0 : index
    %168 = vector.load %arg6[%c3_86, %c0_87, %c0_88] : memref<9x64x8xbf16, #tpu.memory_space<vmem>>, vector<1x64x8xbf16>
    %169 = vector.shape_cast %168 : vector<1x64x8xbf16> to vector<64x8xbf16>
    %cst_89 = arith.constant dense<0.000000e+00> : vector<256x8xf32>
    %170 = tpu.matmul %167, %169, %cst_89 {dimension_numbers = #tpu.dot_dimension_numbers<[1], [0], [0], [1], [0, 0, 1, 1], [], []>} : vector<256x64xbf16>, vector<64x8xbf16>, vector<256x8xf32> -> vector<256x8xf32>
    %171 = arith.addf %165, %170 : vector<256x8xf32>
    %172 = vector.extract_strided_slice %147 {offsets = [1, 1, 0], sizes = [16, 16, 64], strides = [1, 1, 1]} : vector<18x18x64xbf16> to vector<16x16x64xbf16>
    %173 = vector.shape_cast %172 : vector<16x16x64xbf16> to vector<256x64xbf16>
    %c4_90 = arith.constant 4 : index
    %c0_91 = arith.constant 0 : index
    %c0_92 = arith.constant 0 : index
    %174 = vector.load %arg6[%c4_90, %c0_91, %c0_92] : memref<9x64x8xbf16, #tpu.memory_space<vmem>>, vector<1x64x8xbf16>
    %175 = vector.shape_cast %174 : vector<1x64x8xbf16> to vector<64x8xbf16>
    %cst_93 = arith.constant dense<0.000000e+00> : vector<256x8xf32>
    %176 = tpu.matmul %173, %175, %cst_93 {dimension_numbers = #tpu.dot_dimension_numbers<[1], [0], [0], [1], [0, 0, 1, 1], [], []>} : vector<256x64xbf16>, vector<64x8xbf16>, vector<256x8xf32> -> vector<256x8xf32>
    %177 = arith.addf %171, %176 : vector<256x8xf32>
    %178 = vector.extract_strided_slice %147 {offsets = [1, 2, 0], sizes = [16, 16, 64], strides = [1, 1, 1]} : vector<18x18x64xbf16> to vector<16x16x64xbf16>
    %179 = vector.shape_cast %178 : vector<16x16x64xbf16> to vector<256x64xbf16>
    %c5_94 = arith.constant 5 : index
    %c0_95 = arith.constant 0 : index
    %c0_96 = arith.constant 0 : index
    %180 = vector.load %arg6[%c5_94, %c0_95, %c0_96] : memref<9x64x8xbf16, #tpu.memory_space<vmem>>, vector<1x64x8xbf16>
    %181 = vector.shape_cast %180 : vector<1x64x8xbf16> to vector<64x8xbf16>
    %cst_97 = arith.constant dense<0.000000e+00> : vector<256x8xf32>
    %182 = tpu.matmul %179, %181, %cst_97 {dimension_numbers = #tpu.dot_dimension_numbers<[1], [0], [0], [1], [0, 0, 1, 1], [], []>} : vector<256x64xbf16>, vector<64x8xbf16>, vector<256x8xf32> -> vector<256x8xf32>
    %183 = arith.addf %177, %182 : vector<256x8xf32>
    %184 = vector.extract_strided_slice %147 {offsets = [2, 0, 0], sizes = [16, 16, 64], strides = [1, 1, 1]} : vector<18x18x64xbf16> to vector<16x16x64xbf16>
    %185 = vector.shape_cast %184 : vector<16x16x64xbf16> to vector<256x64xbf16>
    %c6_98 = arith.constant 6 : index
    %c0_99 = arith.constant 0 : index
    %c0_100 = arith.constant 0 : index
    %186 = vector.load %arg6[%c6_98, %c0_99, %c0_100] : memref<9x64x8xbf16, #tpu.memory_space<vmem>>, vector<1x64x8xbf16>
    %187 = vector.shape_cast %186 : vector<1x64x8xbf16> to vector<64x8xbf16>
    %cst_101 = arith.constant dense<0.000000e+00> : vector<256x8xf32>
    %188 = tpu.matmul %185, %187, %cst_101 {dimension_numbers = #tpu.dot_dimension_numbers<[1], [0], [0], [1], [0, 0, 1, 1], [], []>} : vector<256x64xbf16>, vector<64x8xbf16>, vector<256x8xf32> -> vector<256x8xf32>
    %189 = arith.addf %183, %188 : vector<256x8xf32>
    %190 = vector.extract_strided_slice %147 {offsets = [2, 1, 0], sizes = [16, 16, 64], strides = [1, 1, 1]} : vector<18x18x64xbf16> to vector<16x16x64xbf16>
    %191 = vector.shape_cast %190 : vector<16x16x64xbf16> to vector<256x64xbf16>
    %c7_102 = arith.constant 7 : index
    %c0_103 = arith.constant 0 : index
    %c0_104 = arith.constant 0 : index
    %192 = vector.load %arg6[%c7_102, %c0_103, %c0_104] : memref<9x64x8xbf16, #tpu.memory_space<vmem>>, vector<1x64x8xbf16>
    %193 = vector.shape_cast %192 : vector<1x64x8xbf16> to vector<64x8xbf16>
    %cst_105 = arith.constant dense<0.000000e+00> : vector<256x8xf32>
    %194 = tpu.matmul %191, %193, %cst_105 {dimension_numbers = #tpu.dot_dimension_numbers<[1], [0], [0], [1], [0, 0, 1, 1], [], []>} : vector<256x64xbf16>, vector<64x8xbf16>, vector<256x8xf32> -> vector<256x8xf32>
    %195 = arith.addf %189, %194 : vector<256x8xf32>
    %196 = vector.extract_strided_slice %147 {offsets = [2, 2, 0], sizes = [16, 16, 64], strides = [1, 1, 1]} : vector<18x18x64xbf16> to vector<16x16x64xbf16>
    %197 = vector.shape_cast %196 : vector<16x16x64xbf16> to vector<256x64xbf16>
    %c8_106 = arith.constant 8 : index
    %c0_107 = arith.constant 0 : index
    %c0_108 = arith.constant 0 : index
    %198 = vector.load %arg6[%c8_106, %c0_107, %c0_108] : memref<9x64x8xbf16, #tpu.memory_space<vmem>>, vector<1x64x8xbf16>
    %199 = vector.shape_cast %198 : vector<1x64x8xbf16> to vector<64x8xbf16>
    %cst_109 = arith.constant dense<0.000000e+00> : vector<256x8xf32>
    %200 = tpu.matmul %197, %199, %cst_109 {dimension_numbers = #tpu.dot_dimension_numbers<[1], [0], [0], [1], [0, 0, 1, 1], [], []>} : vector<256x64xbf16>, vector<64x8xbf16>, vector<256x8xf32> -> vector<256x8xf32>
    %201 = arith.addf %195, %200 : vector<256x8xf32>
    %202 = vector.broadcast %148 : vector<1x8xf32> to vector<256x8xf32>
    %203 = arith.addf %201, %202 : vector<256x8xf32>
    %204 = tpu.transpose %203, [1, 0] : vector<256x8xf32> -> vector<8x256xf32>
    %c0_110 = arith.constant 0 : index
    %c0_111 = arith.constant 0 : index
    %c0_112 = arith.constant 0 : index
    %205 = vector.load %arg8[%c0_110, %c0_111, %c0_112] : memref<1x8x256xf32, #tpu.memory_space<vmem>>, vector<1x8x256xf32>
    %206 = vector.shape_cast %205 : vector<1x8x256xf32> to vector<8x256xf32>
    %207 = vector.shape_cast %204 : vector<8x256xf32> to vector<1x8x256xf32>
    tpu.vector_store %arg8[%c0_110, %c0_111, %c0_112], %207 {strides = array<i32>} : memref<1x8x256xf32, #tpu.memory_space<vmem>>, vector<1x8x256xf32>,
    return
  }
  func.func @transform_0(%arg0: i32) -> (i32, i32, i32, i32) {
    %c0_i32 = arith.constant 0 : i32
    %c0_i32_0 = arith.constant 0 : i32
    %c0_i32_1 = arith.constant 0 : i32
    %c0_i32_2 = arith.constant 0 : i32
    return %arg0, %c0_i32, %c0_i32_0, %c0_i32_1 : i32, i32, i32, i32
  }
  func.func @transform_1(%arg0: i32) -> (i32, i32, i32) {
    %c0_i32 = arith.constant 0 : i32
    %c0_i32_0 = arith.constant 0 : i32
    %c0_i32_1 = arith.constant 0 : i32
    %c0_i32_2 = arith.constant 0 : i32
    return %c0_i32, %c0_i32_0, %c0_i32_1 : i32, i32, i32
  }
  func.func @transform_2(%arg0: i32) -> (i32, i32) {
    %c0_i32 = arith.constant 0 : i32
    %c0_i32_0 = arith.constant 0 : i32
    %c0_i32_1 = arith.constant 0 : i32
    return %c0_i32, %c0_i32_0 : i32, i32
  }
  func.func @transform_3(%arg0: i32) -> (i32, i32, i32) {
    %c0_i32 = arith.constant 0 : i32
    %c0_i32_0 = arith.constant 0 : i32
    %c0_i32_1 = arith.constant 0 : i32
    %c0_i32_2 = arith.constant 0 : i32
    return %c0_i32, %c0_i32_0, %c0_i32_1 : i32, i32, i32
  }
  func.func @transform_4(%arg0: i32) -> (i32, i32) {
    %c0_i32 = arith.constant 0 : i32
    %c0_i32_0 = arith.constant 0 : i32
    %c0_i32_1 = arith.constant 0 : i32
    return %c0_i32, %c0_i32_0 : i32, i32
  }
  func.func @transform_5(%arg0: i32) -> (i32, i32, i32) {
    %c0_i32 = arith.constant 0 : i32
    %c0_i32_0 = arith.constant 0 : i32
    %c0_i32_1 = arith.constant 0 : i32
    %c0_i32_2 = arith.constant 0 : i32
    return %c0_i32, %c0_i32_0, %c0_i32_1 : i32, i32, i32
  }
  func.func @transform_6(%arg0: i32) -> (i32, i32) {
    %c0_i32 = arith.constant 0 : i32
    %c0_i32_0 = arith.constant 0 : i32
    %c0_i32_1 = arith.constant 0 : i32
    return %c0_i32, %c0_i32_0 : i32, i32
  }
  func.func @transform_7(%arg0: i32) -> (i32, i32, i32) {
    %c0_i32 = arith.constant 0 : i32
    %c0_i32_0 = arith.constant 0 : i32
    %c0_i32_1 = arith.constant 0 : i32
    return %arg0, %c0_i32, %c0_i32_0 : i32, i32, i32
  }
}

</mosaic_0001>

<llo_original>
// kernel: decoder2_forward.1
$region0: #{decoder2_forward.1}
  #allocation0 [shape = 'u32[]', space=smem, size = 0x4, offset = 0x4, fixed_abs, tag = 'smem constant byte address 0x4 - core index']
  #allocation1 [shape = 'u32[144,128]{1,0:T(1,128)}', space=vmem, size = 0x12000, scoped, tag = 'internal scratch']
  %s0 = inlined_call_operand.vmem [shape: bf16[2,8,8,128], index: 0, kind: input, shape index: {}]
  %s1 = inlined_call_operand.vmem [shape: bf16[9,128,64], index: 1, kind: input, shape index: {}]
  %s2 = inlined_call_operand.vmem [shape: f32[1,64], index: 2, kind: input, shape index: {}]
  %s3 = inlined_call_operand.vmem [shape: bf16[9,64,64], index: 3, kind: input, shape index: {}]
  %s4 = inlined_call_operand.vmem [shape: f32[1,64], index: 4, kind: input, shape index: {}]
  %s5 = inlined_call_operand.vmem [shape: bf16[9,64,8], index: 5, kind: input, shape index: {}]
  %s6 = inlined_call_operand.vmem [shape: f32[1,8], index: 6, kind: input, shape index: {}]
  %s7 = inlined_call_operand.vmem [shape: f32[2,8,256], index: 7, kind: output, shape index: {}]
  %s8 = sld [smem:[#allocation0]]
  $region61: #{decoder2_forward.1} parent=0
    _
  %s10 = ssub.s32 1, %s8
  %s11 = scalar_select 0, %s10, %s8
  loop: start=0, step=1, limit=4
  $region2: #{decoder2_forward.1} parent=0 // loop_pre_header
    _
  $region3: #{decoder2_forward.1} parent=0 // loop_header
    %s13 = sphi 0, %s17
    %p14 = scmp.ge.s32.totalorder %s13, 4
    %s23 = sphi 0, %s25
    %s26 = sphi 0, %s23
    %s27 = sphi 0, %s26
    %s43 = sphi 0, %s27
    %s47 = sphi 0, %s47
    %s49 = sphi 0, %s47
    %s50 = sphi 0, %s49
    %s64 = sphi 0, %s50
    %s68 = sphi 0, %s68
    %s70 = sphi 0, %s68
    %s71 = sphi 0, %s70
    %s85 = sphi 0, %s71
    %s89 = sphi 0, %s89
    %s91 = sphi 0, %s89
    %s92 = sphi 0, %s91
    %s106 = sphi 0, %s92
    %s110 = sphi 0, %s110
    %s112 = sphi 0, %s110
    %s113 = sphi 0, %s112
    %s127 = sphi 0, %s113
    %s131 = sphi 0, %s131
    %s133 = sphi 0, %s131
    %s134 = sphi 0, %s133
    %s148 = sphi 0, %s134
    %s152 = sphi 0, %s152
    %s154 = sphi 0, %s152
    %s155 = sphi 0, %s154
    %s169 = sphi 0, %s155
    %s175 = sphi 0, %s177
    %s178 = sphi 0, %s175
    %s179 = sphi 0, %s178
    %s195 = sphi 0, %s179
  $region4: #{decoder2_forward.1} parent=0 // loop_header_branch
    %16 = sbr.rel (%p14) target = $region8
  $region5: #{decoder2_forward.1} parent=0 // loop_body
    %s18 = ssub.s32 %s13, 1
    %s19 = ssub.s32 %s13, 2
    %s20 = sadd.s32 %s13, 1
    %s21 = ssub.s32 %s13, %s20
    %p22 = scmp.eq.s32.totalorder %s21, 0
    %s24 = sadd.s32 %s23, 1
    %s25 = scalar_select %p22, %s23, %s24
    %p28 = pneg %p22
    %p29 = scmp.eq.s32.totalorder %s13, 1
    %p30 = por %p28, %p29
    %p31 = scmp.ne.s32.totalorder %s23, %s26
    %p32 = scmp.eq.s32.totalorder %s13, 0
    %p33 = por %p31, %p32
    %p34 = scmp.ne.s32.totalorder %s23, %s26
    %p35 = scmp.eq.s32.totalorder %s18, 1
    %p36 = por %p34, %p35
    %p37 = scmp.ne.s32.totalorder %s26, %s27
    %p38 = scmp.eq.s32.totalorder %s18, 0
    %p39 = por %p37, %p38
    %p40 = scmp.ne.s32.totalorder %s26, %s27
    %p41 = scmp.eq.s32.totalorder %s19, 1
    %p42 = por %p40, %p41
    %p44 = scmp.ne.s32.totalorder %s27, %s43
    %p45 = scmp.eq.s32.totalorder %s19, 0
    %p46 = por %p44, %p45
    %s48 = sadd.s32 %s47, 1
    %p51 = scmp.eq.s32.totalorder %s13, 1
    %p52 = scmp.ne.s32.totalorder %s47, %s49
    %p53 = scmp.eq.s32.totalorder %s13, 0
    %p54 = por %p52, %p53
    %p55 = scmp.ne.s32.totalorder %s47, %s49
    %p56 = scmp.eq.s32.totalorder %s18, 1
    %p57 = por %p55, %p56
    %p58 = scmp.ne.s32.totalorder %s49, %s50
    %p59 = scmp.eq.s32.totalorder %s18, 0
    %p60 = por %p58, %p59
    %p61 = scmp.ne.s32.totalorder %s49, %s50
    %p62 = scmp.eq.s32.totalorder %s19, 1
    %p63 = por %p61, %p62
    %p65 = scmp.ne.s32.totalorder %s50, %s64
    %p66 = scmp.eq.s32.totalorder %s19, 0
    %p67 = por %p65, %p66
    %s69 = sadd.s32 %s68, 1
    %p72 = scmp.eq.s32.totalorder %s13, 1
    %p73 = scmp.ne.s32.totalorder %s68, %s70
    %p74 = scmp.eq.s32.totalorder %s13, 0
    %p75 = por %p73, %p74
    %p76 = scmp.ne.s32.totalorder %s68, %s70
    %p77 = scmp.eq.s32.totalorder %s18, 1
    %p78 = por %p76, %p77
    %p79 = scmp.ne.s32.totalorder %s70, %s71
    %p80 = scmp.eq.s32.totalorder %s18, 0
    %p81 = por %p79, %p80
    %p82 = scmp.ne.s32.totalorder %s70, %s71
    %p83 = scmp.eq.s32.totalorder %s19, 1
    %p84 = por %p82, %p83
    %p86 = scmp.ne.s32.totalorder %s71, %s85
    %p87 = scmp.eq.s32.totalorder %s19, 0
    %p88 = por %p86, %p87
    %s90 = sadd.s32 %s89, 1
    %p93 = scmp.eq.s32.totalorder %s13, 1
    %p94 = scmp.ne.s32.totalorder %s89, %s91
    %p95 = scmp.eq.s32.totalorder %s13, 0
    %p96 = por %p94, %p95
    %p97 = scmp.ne.s32.totalorder %s89, %s91
    %p98 = scmp.eq.s32.totalorder %s18, 1
    %p99 = por %p97, %p98
    %p100 = scmp.ne.s32.totalorder %s91, %s92
    %p101 = scmp.eq.s32.totalorder %s18, 0
    %p102 = por %p100, %p101
    %p103 = scmp.ne.s32.totalorder %s91, %s92
    %p104 = scmp.eq.s32.totalorder %s19, 1
    %p105 = por %p103, %p104
    %p107 = scmp.ne.s32.totalorder %s92, %s106
    %p108 = scmp.eq.s32.totalorder %s19, 0
    %p109 = por %p107, %p108
    %s111 = sadd.s32 %s110, 1
    %p114 = scmp.eq.s32.totalorder %s13, 1
    %p115 = scmp.ne.s32.totalorder %s110, %s112
    %p116 = scmp.eq.s32.totalorder %s13, 0
    %p117 = por %p115, %p116
    %p118 = scmp.ne.s32.totalorder %s110, %s112
    %p119 = scmp.eq.s32.totalorder %s18, 1
    %p120 = por %p118, %p119
    %p121 = scmp.ne.s32.totalorder %s112, %s113
    %p122 = scmp.eq.s32.totalorder %s18, 0
    %p123 = por %p121, %p122
    %p124 = scmp.ne.s32.totalorder %s112, %s113
    %p125 = scmp.eq.s32.totalorder %s19, 1
    %p126 = por %p124, %p125
    %p128 = scmp.ne.s32.totalorder %s113, %s127
    %p129 = scmp.eq.s32.totalorder %s19, 0
    %p130 = por %p128, %p129
    %s132 = sadd.s32 %s131, 1
    %p135 = scmp.eq.s32.totalorder %s13, 1
    %p136 = scmp.ne.s32.totalorder %s131, %s133
    %p137 = scmp.eq.s32.totalorder %s13, 0
    %p138 = por %p136, %p137
    %p139 = scmp.ne.s32.totalorder %s131, %s133
    %p140 = scmp.eq.s32.totalorder %s18, 1
    %p141 = por %p139, %p140
    %p142 = scmp.ne.s32.totalorder %s133, %s134
    %p143 = scmp.eq.s32.totalorder %s18, 0
    %p144 = por %p142, %p143
    %p145 = scmp.ne.s32.totalorder %s133, %s134
    %p146 = scmp.eq.s32.totalorder %s19, 1
    %p147 = por %p145, %p146
    %p149 = scmp.ne.s32.totalorder %s134, %s148
    %p150 = scmp.eq.s32.totalorder %s19, 0
    %p151 = por %p149, %p150
    %s153 = sadd.s32 %s152, 1
    %p156 = scmp.eq.s32.totalorder %s13, 1
    %p157 = scmp.ne.s32.totalorder %s152, %s154
    %p158 = scmp.eq.s32.totalorder %s13, 0
    %p159 = por %p157, %p158
    %p160 = scmp.ne.s32.totalorder %s152, %s154
    %p161 = scmp.eq.s32.totalorder %s18, 1
    %p162 = por %p160, %p161
    %p163 = scmp.ne.s32.totalorder %s154, %s155
    %p164 = scmp.eq.s32.totalorder %s18, 0
    %p165 = por %p163, %p164
    %p166 = scmp.ne.s32.totalorder %s154, %s155
    %p167 = scmp.eq.s32.totalorder %s19, 1
    %p168 = por %p166, %p167
    %p170 = scmp.ne.s32.totalorder %s155, %s169
    %p171 = scmp.eq.s32.totalorder %s19, 0
    %p172 = por %p170, %p171
    %s173 = ssub.s32 %s13, %s20
    %p174 = scmp.eq.s32.totalorder %s173, 0
    %s176 = sadd.s32 %s175, 1
    %s177 = scalar_select %p174, %s175, %s176
    %p180 = pneg %p174
    %p181 = scmp.eq.s32.totalorder %s13, 1
    %p182 = por %p180, %p181
    %p183 = scmp.ne.s32.totalorder %s175, %s178
    %p184 = scmp.eq.s32.totalorder %s13, 0
    %p185 = por %p183, %p184
    %p186 = scmp.ne.s32.totalorder %s175, %s178
    %p187 = scmp.eq.s32.totalorder %s18, 1
    %p188 = por %p186, %p187
    %p189 = scmp.ne.s32.totalorder %s178, %s179
    %p190 = scmp.eq.s32.totalorder %s18, 0
    %p191 = por %p189, %p190
    %p192 = scmp.ne.s32.totalorder %s178, %s179
    %p193 = scmp.eq.s32.totalorder %s19, 1
    %p194 = por %p192, %p193
    %p196 = scmp.ne.s32.totalorder %s179, %s195
    %p197 = scmp.eq.s32.totalorder %s19, 0
    %p198 = por %p196, %p197
    %p199 = scmp.le.s32.totalorder 1, %s13
    %p200 = scmp.lt.s32.totalorder %s13, 3
    %p201 = pnand %p199, %p200
    %p202 = pneg %p201
    // Predicated region
    $region9: #{decoder2_forward.1} parent=5 // pred_check
      _
    $region10: #{decoder2_forward.1} parent=5 // pred_check_branch
      %204 = sbr.rel (%p201) target = $region12
    $region11: #{decoder2_forward.1} parent=5 // pred_region
      %s205 = ssub.s32 %s13, 1
      // Predicated region
      $region13: #{decoder2_forward.1} parent=11 // pred_check
        %p206 = pneg %p60
      $region14: #{decoder2_forward.1} parent=11 // pred_check_branch
        %208 = sbr.rel (%p206) target = $region16
      $region15: #{decoder2_forward.1} parent=11 // pred_region
        _
      $region16: #{decoder2_forward.1} parent=11 // pred_fallthru
        _
      // Predicated region
      $region17: #{decoder2_forward.1} parent=11 // pred_check
        %p209 = pneg %p81
      $region18: #{decoder2_forward.1} parent=11 // pred_check_branch
        %211 = sbr.rel (%p209) target = $region20
      $region19: #{decoder2_forward.1} parent=11 // pred_region
        _
      $region20: #{decoder2_forward.1} parent=11 // pred_fallthru
        _
      // Predicated region
      $region21: #{decoder2_forward.1} parent=11 // pred_check
        %p212 = pneg %p102
      $region22: #{decoder2_forward.1} parent=11 // pred_check_branch
        %214 = sbr.rel (%p212) target = $region24
      $region23: #{decoder2_forward.1} parent=11 // pred_region
        _
      $region24: #{decoder2_forward.1} parent=11 // pred_fallthru
        _
      // Predicated region
      $region25: #{decoder2_forward.1} parent=11 // pred_check
        %p215 = pneg %p123
      $region26: #{decoder2_forward.1} parent=11 // pred_check_branch
        %217 = sbr.rel (%p215) target = $region28
      $region27: #{decoder2_forward.1} parent=11 // pred_region
        _
      $region28: #{decoder2_forward.1} parent=11 // pred_fallthru
        _
      // Predicated region
      $region29: #{decoder2_forward.1} parent=11 // pred_check
        %p218 = pneg %p144
      $region30: #{decoder2_forward.1} parent=11 // pred_check_branch
        %220 = sbr.rel (%p218) target = $region32
      $region31: #{decoder2_forward.1} parent=11 // pred_region
        _
      $region32: #{decoder2_forward.1} parent=11 // pred_fallthru
        _
      // Predicated region
      $region33: #{decoder2_forward.1} parent=11 // pred_check
        %p221 = pneg %p165
      $region34: #{decoder2_forward.1} parent=11 // pred_check_branch
        %223 = sbr.rel (%p221) target = $region36
      $region35: #{decoder2_forward.1} parent=11 // pred_region
        _
      $region36: #{decoder2_forward.1} parent=11 // pred_fallthru
        _
    $region12: #{decoder2_forward.1} parent=5 // pred_fallthru
      _
    %p224 = scmp.lt.s32.totalorder %s13, 2
    // Predicated region
    $region37: #{decoder2_forward.1} parent=5 // pred_check
      %p225 = pneg %p224
    $region38: #{decoder2_forward.1} parent=5 // pred_check_branch
      %227 = sbr.rel (%p225) target = $region40
    $region39: #{decoder2_forward.1} parent=5 // pred_region
      // Predicated region
      $region41: #{decoder2_forward.1} parent=39 // pred_check
        %p228 = pneg %p33
      $region42: #{decoder2_forward.1} parent=39 // pred_check_branch
        %230 = sbr.rel (%p228) target = $region44
      $region43: #{decoder2_forward.1} parent=39 // pred_region
        %p231 = scmp.lt.s32.totalorder %s13, 1
        %s232 = scalar_select %p231, %s13, 1
        %s233 = smul.addr %s232, 8
        %s234 = smul.addr %s233, 4
        %s235 = scalar_lea.vmem %s0, %s234
      $region44: #{decoder2_forward.1} parent=39 // pred_fallthru
        _
    $region40: #{decoder2_forward.1} parent=5 // pred_fallthru
      _
    %p236 = scmp.le.s32.totalorder 1, %s13
    %p237 = scmp.lt.s32.totalorder %s13, 3
    %p238 = pnand %p236, %p237
    %p239 = pneg %p238
    // Predicated region
    $region45: #{decoder2_forward.1} parent=5 // pred_check
      _
    $region46: #{decoder2_forward.1} parent=5 // pred_check_branch
      %241 = sbr.rel (%p238) target = $region48
    $region47: #{decoder2_forward.1} parent=5 // pred_region
      %s242 = ssub.s32 %s13, 1
      %p243 = scmp.lt.s32.totalorder %s18, 1
      %s244 = scalar_select %p243, %s18, 1
      %s245 = smul.addr %s244, 8
      %s246 = smul.addr %s245, 4
      %s247 = scalar_lea.vmem %s0, %s246
      %p248 = pneg %p39
      %p249 = pneg %p36
      %p250 = pneg %p60
      %p251 = pneg %p57
      %p252 = pneg %p81
      %p253 = pneg %p78
      %p254 = pneg %p102
      %p255 = pneg %p99
      %p256 = pneg %p123
      %p257 = pneg %p120
      %p258 = pneg %p144
      %p259 = pneg %p141
      %p260 = pneg %p165
      %p261 = pneg %p162
      %p262 = pneg %p191
      %p263 = pneg %p188
      %p264 = scmp.lt.s32.totalorder %s18, 1
      %s265 = scalar_select %p264, %s18, 1
      %s266 = smul.addr %s265, 2
      %s267 = smul.addr %s266, 8
      %s268 = scalar_lea.vmem %s7, %s267
      %p269 = scmp.lt.s32.totalorder %s18, 1
      %s270 = scalar_select %p269, %s18, 1
      %s271 = smul.addr %s270, 8
      %s272 = smul.addr %s271, 4
      %s273 = scalar_lea.vmem %s0, %s272
      %p274 = scmp.lt.s32.totalorder %s18, 1
      %s275 = scalar_select %p274, %s18, 1
      %s276 = smul.addr %s275, 2
      %s277 = smul.addr %s276, 8
      %s278 = scalar_lea.vmem %s7, %s277
      %v280 = vld [vmem:[%s273] sm:$0xf]
      %v281 = vld [vmem:[%s273 + $0x4] sm:$0xf]
      %v282 = vld [vmem:[%s273 + $0x8] sm:$0xf]
      %v283 = vld [vmem:[%s273 + $0xc] sm:$0xf]
      %v284 = vld [vmem:[%s273 + $0x10] sm:$0xf]
      %v285 = vld [vmem:[%s273 + $0x14] sm:$0xf]
      %v286 = vld [vmem:[%s273 + $0x18] sm:$0xf]
      %v287 = vld [vmem:[%s273 + $0x1c] sm:$0xf]
      %v296 = vunpack.c.l.b16 %v281
      %v297 = vunpack.c.l.b16 %v280
      %v298 = vunpack.c.l.b16 %v282
      %v299 = vunpack.c.l.b16 %v283
      %v300 = vunpack.c.l.b16 %v284
      %v301 = vunpack.c.l.b16 %v285
      %v302 = vunpack.c.l.b16 %v286
      %v303 = vunpack.c.l.b16 %v287
      %v304 = vpack.c.b16 %v296, %v296
      %v305 = vpack.c.b16 %v297, %v297
      %v306 = vpack.c.b16 %v298, %v298
      %v307 = vpack.c.b16 %v299, %v299
      %v308 = vpack.c.b16 %v300, %v300
      %v309 = vpack.c.b16 %v301, %v301
      %v310 = vpack.c.b16 %v302, %v302
      %v311 = vpack.c.b16 %v303, %v303
      %v313 = vshrl.u32 %v304, 16
      %v316 = vshrl.u32 %v305, 16
      %v319 = vshrl.u32 %v306, 16
      %v322 = vshrl.u32 %v307, 16
      %v325 = vshrl.u32 %v308, 16
      %v328 = vshrl.u32 %v309, 16
      %v331 = vshrl.u32 %v310, 16
      %v334 = vshrl.u32 %v311, 16
      %v344 = vrot.slane %v313, 7
      %v345 = vshll.u32 %v304, 16
      %v347 = vor.u32 %v344, %v345
      %v348 = vrot.slane %v316, 7
      %v349 = vshll.u32 %v305, 16
      %v351 = vor.u32 %v348, %v349
      %v352 = vrot.slane %v319, 7
      %v353 = vshll.u32 %v306, 16
      %v355 = vor.u32 %v352, %v353
      %v356 = vrot.slane %v322, 7
      %v357 = vshll.u32 %v307, 16
      %v359 = vor.u32 %v356, %v357
      %v360 = vrot.slane %v325, 7
      %v361 = vshll.u32 %v308, 16
      %v363 = vor.u32 %v360, %v361
      %v364 = vrot.slane %v328, 7
      %v365 = vshll.u32 %v309, 16
      %v367 = vor.u32 %v364, %v365
      %v368 = vrot.slane %v331, 7
      %v369 = vshll.u32 %v310, 16
      %v371 = vor.u32 %v368, %v369
      %v372 = vrot.slane %v334, 7
      %v373 = vshll.u32 %v311, 16
      %v375 = vor.u32 %v372, %v373
      %v384 = vrot.slane %v345, 7
      %v385 = vrot.slane %v349, 7
      %v386 = vrot.slane %v353, 7
      %v387 = vrot.slane %v357, 7
      %v388 = vrot.slane %v361, 7
      %v389 = vrot.slane %v365, 7
      %v390 = vrot.slane %v369, 7
      %v391 = vrot.slane %v373, 7
      %vm400 = vcmask 1040384
      %vm401 = vsmask.f32 256
      %vm402 = vmand %vm400, %vm401
      %v403 = vsel %vm402, %v313, %v347
      %v404 = vsel %vm402, %v316, %v351
      %v405 = vsel %vm402, %v319, %v355
      %v406 = vsel %vm402, %v322, %v359
      %v407 = vsel %vm402, %v325, %v363
      %v408 = vsel %vm402, %v328, %v367
      %v409 = vsel %vm402, %v331, %v371
      %v410 = vsel %vm402, %v334, %v375
      %vm411 = vcmask 1044480
      %vm412 = vsmask.f32 4352
      %vm413 = vmand %vm411, %vm412
      %v414 = vsel %vm413, %v403, %v384
      %v415 = vsel %vm413, %v404, %v385
      %v416 = vsel %vm413, %v405, %v386
      %v417 = vsel %vm413, %v406, %v387
      %v418 = vsel %vm413, %v407, %v388
      %v419 = vsel %vm413, %v408, %v389
      %v420 = vsel %vm413, %v409, %v390
      %v421 = vsel %vm413, %v410, %v391
      %v422 = vld [vmem:[%s2] sm:$0x1]
      %v423 = vld [vmem:[%s1] sm:$0xf]
      %v424 = vld [vmem:[%s1 + $0x4] sm:$0xf]
      %v425 = vld [vmem:[%s1 + $0x8] sm:$0xf]
      %v426 = vld [vmem:[%s1 + $0xc] sm:$0xf]
      %v427 = vld [vmem:[%s1 + $0x10] sm:$0xf]
      %v428 = vld [vmem:[%s1 + $0x14] sm:$0xf]
      %v429 = vld [vmem:[%s1 + $0x18] sm:$0xf]
      %v430 = vld [vmem:[%s1 + $0x1c] sm:$0xf]
      %v431 = vld [vmem:[%s1 + $0x20] sm:$0xf]
      %v432 = vld [vmem:[%s1 + $0x24] sm:$0xf]
      %v433 = vld [vmem:[%s1 + $0x28] sm:$0xf]
      %v434 = vld [vmem:[%s1 + $0x2c] sm:$0xf]
      %v435 = vld [vmem:[%s1 + $0x30] sm:$0xf]
      %v436 = vld [vmem:[%s1 + $0x34] sm:$0xf]
      %v437 = vld [vmem:[%s1 + $0x38] sm:$0xf]
      %v438 = vld [vmem:[%s1 + $0x3c] sm:$0xf]
      %v446 = vunpack.c.l.b16 %v414
      %v447 = vunpack.c.h.b16 %v414
      %v448 = vunpack.c.l.b16 %v415
      %v449 = vunpack.c.h.b16 %v415
      %v450 = vunpack.c.l.b16 %v416
      %v451 = vunpack.c.h.b16 %v416
      %v452 = vunpack.c.l.b16 %v417
      %v453 = vunpack.c.h.b16 %v417
      %v454 = vunpack.c.l.b16 %v418
      %v455 = vunpack.c.h.b16 %v418
      %v456 = vunpack.c.l.b16 %v419
      %v457 = vunpack.c.h.b16 %v419
      %v458 = vunpack.c.l.b16 %v420
      %v459 = vunpack.c.h.b16 %v420
      %v460 = vpack.c.b16 %v446, %v446
      %v461 = vpack.c.b16 %v447, %v447
      %v462 = vpack.c.b16 %v448, %v448
      %v463 = vpack.c.b16 %v449, %v449
      %v464 = vpack.c.b16 %v450, %v450
      %v465 = vpack.c.b16 %v451, %v451
      %v466 = vpack.c.b16 %v452, %v452
      %v467 = vpack.c.b16 %v453, %v453
      %v468 = vpack.c.b16 %v454, %v454
      %v469 = vpack.c.b16 %v455, %v455
      %v470 = vpack.c.b16 %v456, %v456
      %v471 = vpack.c.b16 %v457, %v457
      %v472 = vpack.c.b16 %v458, %v458
      %v473 = vpack.c.b16 %v459, %v459
      %vm474 = vsmask.f32 3328
      %vm475 = vsmask.f32 7440
      %vm476 = vmor %vm474, %vm475
      %v478 = vshrl.u32 %v460, 16
      %v480 = vrot.slane %v478, 4
      %v481 = vshll.u32 %v460, 16
      %v483 = vrot.slane %v481, 5
      %v484 = vor.u32 %v480, %v483
      %v485 = vrot.slane %v484, 4
      %v487 = vshll.u32 %v461, 16
      %v489 = vrot.slane %v487, 5
      %v490 = vsel %vm476, %v485, %v489
      %v492 = vshrl.u32 %v462, 16
      %v494 = vrot.slane %v492, 4
      %v495 = vshll.u32 %v462, 16
      %v497 = vrot.slane %v495, 5
      %v498 = vor.u32 %v494, %v497
      %v499 = vrot.slane %v498, 4
      %v501 = vshll.u32 %v463, 16
      %v503 = vrot.slane %v501, 5
      %v504 = vsel %vm476, %v499, %v503
      %v506 = vshrl.u32 %v464, 16
      %v508 = vrot.slane %v506, 4
      %v509 = vshll.u32 %v464, 16
      %v511 = vrot.slane %v509, 5
      %v512 = vor.u32 %v508, %v511
      %v513 = vrot.slane %v512, 4
      %v515 = vshll.u32 %v465, 16
      %v517 = vrot.slane %v515, 5
      %v518 = vsel %vm476, %v513, %v517
      %v520 = vshrl.u32 %v466, 16
      %v522 = vrot.slane %v520, 4
      %v523 = vshll.u32 %v466, 16
      %v525 = vrot.slane %v523, 5
      %v526 = vor.u32 %v522, %v525
      %v527 = vrot.slane %v526, 4
      %v529 = vshll.u32 %v467, 16
      %v531 = vrot.slane %v529, 5
      %v532 = vsel %vm476, %v527, %v531
      %v534 = vshrl.u32 %v468, 16
      %v536 = vrot.slane %v534, 4
      %v537 = vshll.u32 %v468, 16
      %v539 = vrot.slane %v537, 5
      %v540 = vor.u32 %v536, %v539
      %v541 = vrot.slane %v540, 4
      %v543 = vshll.u32 %v469, 16
      %v545 = vrot.slane %v543, 5
      %v546 = vsel %vm476, %v541, %v545
      %v548 = vshrl.u32 %v470, 16
      %v550 = vrot.slane %v548, 4
      %v551 = vshll.u32 %v470, 16
      %v553 = vrot.slane %v551, 5
      %v554 = vor.u32 %v550, %v553
      %v555 = vrot.slane %v554, 4
      %v557 = vshll.u32 %v471, 16
      %v559 = vrot.slane %v557, 5
      %v560 = vsel %vm476, %v555, %v559
      %v562 = vshrl.u32 %v472, 16
      %v564 = vrot.slane %v562, 4
      %v565 = vshll.u32 %v472, 16
      %v567 = vrot.slane %v565, 5
      %v568 = vor.u32 %v564, %v567
      %v569 = vrot.slane %v568, 4
      %v571 = vshll.u32 %v473, 16
      %v573 = vrot.slane %v571, 5
      %v574 = vsel %vm476, %v569, %v573
      %s575 = scalar_lea.vmem %s1, 64
      %v576 = vld [vmem:[%s575] sm:$0xf]
      %v577 = vld [vmem:[%s575 + $0x4] sm:$0xf]
      %v578 = vld [vmem:[%s575 + $0x8] sm:$0xf]
      %v579 = vld [vmem:[%s575 + $0xc] sm:$0xf]
      %v580 = vld [vmem:[%s575 + $0x10] sm:$0xf]
      %v581 = vld [vmem:[%s575 + $0x14] sm:$0xf]
      %v582 = vld [vmem:[%s575 + $0x18] sm:$0xf]
      %v583 = vld [vmem:[%s575 + $0x1c] sm:$0xf]
      %v584 = vld [vmem:[%s575 + $0x20] sm:$0xf]
      %v585 = vld [vmem:[%s575 + $0x24] sm:$0xf]
      %v586 = vld [vmem:[%s575 + $0x28] sm:$0xf]
      %v587 = vld [vmem:[%s575 + $0x2c] sm:$0xf]
      %v588 = vld [vmem:[%s575 + $0x30] sm:$0xf]
      %v589 = vld [vmem:[%s575 + $0x34] sm:$0xf]
      %v590 = vld [vmem:[%s575 + $0x38] sm:$0xf]
      %v591 = vld [vmem:[%s575 + $0x3c] sm:$0xf]
      %v592 = vunpack.c.l.b16 %v490
      %v593 = vunpack.c.l.b16 %v504
      %v594 = vunpack.c.l.b16 %v518
      %v595 = vunpack.c.l.b16 %v532
      %v596 = vunpack.c.l.b16 %v546
      %v597 = vunpack.c.l.b16 %v560
      %v598 = vunpack.c.l.b16 %v574
      %v599 = vpack.c.b16 %v593, %v592
      %v600 = vpack.c.b16 %v594, %v592
      %v601 = vpack.c.b16 %v596, %v595
      %v602 = vpack.c.b16 %v598, %v597
      %v623 = vunpack.c.l.b16 %v576
      %v624 = vunpack.c.l.b16 %v577
      %v625 = vunpack.c.l.b16 %v578
      %v626 = vunpack.c.l.b16 %v579
      %v627 = vunpack.c.l.b16 %v580
      %v628 = vunpack.c.l.b16 %v581
      %v629 = vunpack.c.l.b16 %v582
      %v630 = vunpack.c.l.b16 %v583
      %v631 = vunpack.c.l.b16 %v584
      %v632 = vunpack.c.l.b16 %v585
      %v633 = vunpack.c.l.b16 %v586
      %v634 = vunpack.c.l.b16 %v587
      %v635 = vunpack.c.l.b16 %v588
      %v636 = vunpack.c.l.b16 %v589
      %v637 = vunpack.c.l.b16 %v590
      %v638 = vunpack.c.l.b16 %v591
      %v639 = vpack.c.b16 %v624, %v623
      %v640 = vpack.c.b16 %v626, %v625
      %v641 = vpack.c.b16 %v628, %v627
      %v642 = vpack.c.b16 %v630, %v629
      %v643 = vpack.c.b16 %v632, %v631
      %v644 = vpack.c.b16 %v634, %v633
      %v645 = vpack.c.b16 %v636, %v635
      %v646 = vpack.c.b16 %v638, %v637
      %655 = vmatprep.subr.bf16.mxu0 0
      %656 = vmatpush1.bf16.msra.mxu0 %v639
      %657 = vmatprep.subr.bf16.mxu0 0
      %658 = vmatpush1.bf16.msra.mxu0 %v640
      %659 = vmatprep.subr.bf16.mxu0 0
      %660 = vmatpush1.bf16.msra.mxu0 %v641
      %661 = vmatprep.subr.bf16.mxu0 0
      %662 = vmatpush1.bf16.msra.mxu0 %v642
      %663 = vmatprep.subr.bf16.mxu0 0
      %664 = vmatpush1.bf16.msra.mxu0 %v643
      %665 = vmatprep.subr.bf16.mxu0 0
      %666 = vmatpush1.bf16.msra.mxu0 %v644
      %667 = vmatprep.subr.bf16.mxu0 0
      %668 = vmatpush1.bf16.msra.mxu0 %v645
      %669 = vmatprep.subr.bf16.mxu0 0
      %670 = vmatpush1.bf16.msra.mxu0 %v646
      %671 = vmatprep.subr.bf16.mxu0 0
      %672 = vmatpush1.bf16.msra.mxu0 0
      %673 = vmatprep.subr.bf16.mxu0 0
      %674 = vmatpush1.bf16.msra.mxu0 0
      %675 = vmatprep.subr.bf16.mxu0 0
      %676 = vmatpush1.bf16.msra.mxu0 0
      %677 = vmatprep.subr.bf16.mxu0 0
      %678 = vmatpush1.bf16.msra.mxu0 0
      %679 = vmatprep.subr.bf16.mxu0 0
      %680 = vmatpush1.bf16.msra.mxu0 0
      %681 = vmatprep.subr.bf16.mxu0 0
      %682 = vmatpush1.bf16.msra.mxu0 0
      %683 = vmatprep.subr.bf16.mxu0 0
      %684 = vmatpush1.bf16.msra.mxu0 0
      %685 = vmatprep.subr.bf16.mxu0 0
      %686 = vmatpush1.bf16.msra.mxu0 0
      %687 = vmatprep.mubr.bf16.mxu0 0
      %688 = vmatmul.mubr.bf16.gmra.mrb[0].mxu0 %v599
      %v689 = vpop.f32.mrb[0].mxu0
      %v690 = vadd.f32 0.0, %v689
      %v691 = vpop.f32.mrb[0].mxu0
      %v692 = vpop.f32.mrb[0].mxu0
      %v693 = vadd.f32 0.0, %v692
      %v694 = vpop.f32.mrb[0].mxu0
      %695 = vmatprep.mubr.bf16.mxu0 0
      %696 = vmatmul.mubr.bf16.gmra.mrb[0].mxu0 %v600
      %v697 = vpop.f32.mrb[0].mxu0
      %v698 = vadd.f32 0.0, %v697
      %v699 = vpop.f32.mrb[0].mxu0
      %v700 = vpop.f32.mrb[0].mxu0
      %v701 = vadd.f32 0.0, %v700
      %v702 = vpop.f32.mrb[0].mxu0
      %703 = vmatprep.mubr.bf16.mxu0 0
      %704 = vmatmul.mubr.bf16.gmra.mrb[0].mxu0 %v601
      %v705 = vpop.f32.mrb[0].mxu0
      %v706 = vadd.f32 0.0, %v705
      %v707 = vpop.f32.mrb[0].mxu0
      %v708 = vpop.f32.mrb[0].mxu0
      %v709 = vadd.f32 0.0, %v708
      %v710 = vpop.f32.mrb[0].mxu0
      %711 = vmatprep.mubr.bf16.mxu0 0
      %712 = vmatmul.mubr.bf16.gmra.mrb[0].mxu0 %v602
      %v713 = vpop.f32.mrb[0].mxu0
      %v714 = vadd.f32 0.0, %v713
      %v715 = vpop.f32.mrb[0].mxu0
      %v716 = vpop.f32.mrb[0].mxu0
      %v717 = vadd.f32 0.0, %v716
      %v718 = vpop.f32.mrb[0].mxu0
      %719 = vdwg.mxu0
      %v720 = vpack.c.b16 %v448, %v446
      %v721 = vpack.c.b16 %v450, %v446
      %v722 = vpack.c.b16 %v454, %v452
      %v723 = vpack.c.b16 %v458, %v456
      %v744 = vunpack.c.l.b16 %v423
      %v745 = vunpack.c.l.b16 %v424
      %v746 = vunpack.c.l.b16 %v425
      %v747 = vunpack.c.l.b16 %v426
      %v748 = vunpack.c.l.b16 %v427
      %v749 = vunpack.c.l.b16 %v428
      %v750 = vunpack.c.l.b16 %v429
      %v751 = vunpack.c.l.b16 %v430
      %v752 = vunpack.c.l.b16 %v431
      %v753 = vunpack.c.l.b16 %v432
      %v754 = vunpack.c.l.b16 %v433
      %v755 = vunpack.c.l.b16 %v434
      %v756 = vunpack.c.l.b16 %v435
      %v757 = vunpack.c.l.b16 %v436
      %v758 = vunpack.c.l.b16 %v437
      %v759 = vunpack.c.l.b16 %v438
      %v760 = vpack.c.b16 %v745, %v744
      %v761 = vpack.c.b16 %v747, %v746
      %v762 = vpack.c.b16 %v749, %v748
      %v763 = vpack.c.b16 %v751, %v750
      %v764 = vpack.c.b16 %v753, %v752
      %v765 = vpack.c.b16 %v755, %v754
      %v766 = vpack.c.b16 %v757, %v756
      %v767 = vpack.c.b16 %v759, %v758
      %776 = vmatprep.subr.bf16.mxu0 0
      %777 = vmatpush1.bf16.msra.mxu0 %v760
      %778 = vmatprep.subr.bf16.mxu0 0
      %779 = vmatpush1.bf16.msra.mxu0 %v761
      %780 = vmatprep.subr.bf16.mxu0 0
      %781 = vmatpush1.bf16.msra.mxu0 %v762
      %782 = vmatprep.subr.bf16.mxu0 0
      %783 = vmatpush1.bf16.msra.mxu0 %v763
      %784 = vmatprep.subr.bf16.mxu0 0
      %785 = vmatpush1.bf16.msra.mxu0 %v764
      %786 = vmatprep.subr.bf16.mxu0 0
      %787 = vmatpush1.bf16.msra.mxu0 %v765
      %788 = vmatprep.subr.bf16.mxu0 0
      %789 = vmatpush1.bf16.msra.mxu0 %v766
      %790 = vmatprep.subr.bf16.mxu0 0
      %791 = vmatpush1.bf16.msra.mxu0 %v767
      %792 = vmatprep.subr.bf16.mxu0 0
      %793 = vmatpush1.bf16.msra.mxu0 0
      %794 = vmatprep.subr.bf16.mxu0 0
      %795 = vmatpush1.bf16.msra.mxu0 0
      %796 = vmatprep.subr.bf16.mxu0 0
      %797 = vmatpush1.bf16.msra.mxu0 0
      %798 = vmatprep.subr.bf16.mxu0 0
      %799 = vmatpush1.bf16.msra.mxu0 0
      %800 = vmatprep.subr.bf16.mxu0 0
      %801 = vmatpush1.bf16.msra.mxu0 0
      %802 = vmatprep.subr.bf16.mxu0 0
      %803 = vmatpush1.bf16.msra.mxu0 0
      %804 = vmatprep.subr.bf16.mxu0 0
      %805 = vmatpush1.bf16.msra.mxu0 0
      %806 = vmatprep.subr.bf16.mxu0 0
      %807 = vmatpush1.bf16.msra.mxu0 0
      %808 = vmatprep.mubr.bf16.mxu0 0
      %809 = vmatmul.mubr.bf16.gmra.mrb[0].mxu0 %v720
      %v810 = vpop.f32.mrb[0].mxu0
      %v811 = vadd.f32 %v690, %v810
      %v812 = vpop.f32.mrb[0].mxu0
      %v813 = vpop.f32.mrb[0].mxu0
      %v814 = vadd.f32 %v693, %v813
      %v815 = vpop.f32.mrb[0].mxu0
      %816 = vmatprep.mubr.bf16.mxu0 0
      %817 = vmatmul.mubr.bf16.gmra.mrb[0].mxu0 %v721
      %v818 = vpop.f32.mrb[0].mxu0
      %v819 = vadd.f32 %v698, %v818
      %v820 = vpop.f32.mrb[0].mxu0
      %v821 = vpop.f32.mrb[0].mxu0
      %v822 = vadd.f32 %v701, %v821
      %v823 = vpop.f32.mrb[0].mxu0
      %824 = vmatprep.mubr.bf16.mxu0 0
      %825 = vmatmul.mubr.bf16.gmra.mrb[0].mxu0 %v722
      %v826 = vpop.f32.mrb[0].mxu0
      %v827 = vadd.f32 %v706, %v826
      %v828 = vpop.f32.mrb[0].mxu0
      %v829 = vpop.f32.mrb[0].mxu0
      %v830 = vadd.f32 %v709, %v829
      %v831 = vpop.f32.mrb[0].mxu0
      %832 = vmatprep.mubr.bf16.mxu0 0
      %833 = vmatmul.mubr.bf16.gmra.mrb[0].mxu0 %v723
      %v834 = vpop.f32.mrb[0].mxu0
      %v835 = vadd.f32 %v714, %v834
      %v836 = vpop.f32.mrb[0].mxu0
      %v837 = vpop.f32.mrb[0].mxu0
      %v838 = vadd.f32 %v717, %v837
      %v839 = vpop.f32.mrb[0].mxu0
      %840 = vdwg.mxu0
      %vm841 = vcmask 1042432
      %vm842 = vcmask 1046532
      %vm843 = vmor %vm841, %vm842
      %v844 = vrot.slane %v460, 5
      %v845 = vrot.slane %v844, 4
      %v846 = vrot.slane %v461, 5
      %v847 = vsel %vm843, %v845, %v846
      %v848 = vrot.slane %v462, 5
      %v849 = vrot.slane %v848, 4
      %v850 = vrot.slane %v463, 5
      %v851 = vsel %vm843, %v849, %v850
      %v852 = vrot.slane %v464, 5
      %v853 = vrot.slane %v852, 4
      %v854 = vrot.slane %v465, 5
      %v855 = vsel %vm843, %v853, %v854
      %v856 = vrot.slane %v466, 5
      %v857 = vrot.slane %v856, 4
      %v858 = vrot.slane %v467, 5
      %v859 = vsel %vm843, %v857, %v858
      %v860 = vrot.slane %v468, 5
      %v861 = vrot.slane %v860, 4
      %v862 = vrot.slane %v469, 5
      %v863 = vsel %vm843, %v861, %v862
      %v864 = vrot.slane %v470, 5
      %v865 = vrot.slane %v864, 4
      %v866 = vrot.slane %v471, 5
      %v867 = vsel %vm843, %v865, %v866
      %v868 = vrot.slane %v472, 5
      %v869 = vrot.slane %v868, 4
      %v870 = vrot.slane %v473, 5
      %v871 = vsel %vm843, %v869, %v870
      %s872 = scalar_lea.vmem %s1, 128
      %v873 = vld [vmem:[%s872] sm:$0xf]
      %v874 = vld [vmem:[%s872 + $0x4] sm:$0xf]
      %v875 = vld [vmem:[%s872 + $0x8] sm:$0xf]
      %v876 = vld [vmem:[%s872 + $0xc] sm:$0xf]
      %v877 = vld [vmem:[%s872 + $0x10] sm:$0xf]
      %v878 = vld [vmem:[%s872 + $0x14] sm:$0xf]
      %v879 = vld [vmem:[%s872 + $0x18] sm:$0xf]
      %v880 = vld [vmem:[%s872 + $0x1c] sm:$0xf]
      %v881 = vld [vmem:[%s872 + $0x20] sm:$0xf]
      %v882 = vld [vmem:[%s872 + $0x24] sm:$0xf]
      %v883 = vld [vmem:[%s872 + $0x28] sm:$0xf]
      %v884 = vld [vmem:[%s872 + $0x2c] sm:$0xf]
      %v885 = vld [vmem:[%s872 + $0x30] sm:$0xf]
      %v886 = vld [vmem:[%s872 + $0x34] sm:$0xf]
      %v887 = vld [vmem:[%s872 + $0x38] sm:$0xf]
      %v888 = vld [vmem:[%s872 + $0x3c] sm:$0xf]
      %v889 = vunpack.c.l.b16 %v847
      %v890 = vunpack.c.l.b16 %v851
      %v891 = vunpack.c.l.b16 %v855
      %v892 = vunpack.c.l.b16 %v859
      %v893 = vunpack.c.l.b16 %v863
      %v894 = vunpack.c.l.b16 %v867
      %v895 = vunpack.c.l.b16 %v871
      %v896 = vpack.c.b16 %v890, %v889
      %v897 = vpack.c.b16 %v891, %v889
      %v898 = vpack.c.b16 %v893, %v892
      %v899 = vpack.c.b16 %v895, %v894
      %v920 = vunpack.c.l.b16 %v873
      %v921 = vunpack.c.l.b16 %v874
      %v922 = vunpack.c.l.b16 %v875
      %v923 = vunpack.c.l.b16 %v876
      %v924 = vunpack.c.l.b16 %v877
      %v925 = vunpack.c.l.b16 %v878
      %v926 = vunpack.c.l.b16 %v879
      %v927 = vunpack.c.l.b16 %v880
      %v928 = vunpack.c.l.b16 %v881
      %v929 = vunpack.c.l.b16 %v882
      %v930 = vunpack.c.l.b16 %v883
      %v931 = vunpack.c.l.b16 %v884
      %v932 = vunpack.c.l.b16 %v885
      %v933 = vunpack.c.l.b16 %v886
      %v934 = vunpack.c.l.b16 %v887
      %v935 = vunpack.c.l.b16 %v888
      %v936 = vpack.c.b16 %v921, %v920
      %v937 = vpack.c.b16 %v923, %v922
      %v938 = vpack.c.b16 %v925, %v924
      %v939 = vpack.c.b16 %v927, %v926
      %v940 = vpack.c.b16 %v929, %v928
      %v941 = vpack.c.b16 %v931, %v930
      %v942 = vpack.c.b16 %v933, %v932
      %v943 = vpack.c.b16 %v935, %v934
      %952 = vmatprep.subr.bf16.mxu0 0
      %953 = vmatpush1.bf16.msra.mxu0 %v936
      %954 = vmatprep.subr.bf16.mxu0 0
      %955 = vmatpush1.bf16.msra.mxu0 %v937
      %956 = vmatprep.subr.bf16.mxu0 0
      %957 = vmatpush1.bf16.msra.mxu0 %v938
      %958 = vmatprep.subr.bf16.mxu0 0
      %959 = vmatpush1.bf16.msra.mxu0 %v939
      %960 = vmatprep.subr.bf16.mxu0 0
      %961 = vmatpush1.bf16.msra.mxu0 %v940
      %962 = vmatprep.subr.bf16.mxu0 0
      %963 = vmatpush1.bf16.msra.mxu0 %v941
      %964 = vmatprep.subr.bf16.mxu0 0
      %965 = vmatpush1.bf16.msra.mxu0 %v942
      %966 = vmatprep.subr.bf16.mxu0 0
      %967 = vmatpush1.bf16.msra.mxu0 %v943
      %968 = vmatprep.subr.bf16.mxu0 0
      %969 = vmatpush1.bf16.msra.mxu0 0
      %970 = vmatprep.subr.bf16.mxu0 0
      %971 = vmatpush1.bf16.msra.mxu0 0
      %972 = vmatprep.subr.bf16.mxu0 0
      %973 = vmatpush1.bf16.msra.mxu0 0
      %974 = vmatprep.subr.bf16.mxu0 0
      %975 = vmatpush1.bf16.msra.mxu0 0
      %976 = vmatprep.subr.bf16.mxu0 0
      %977 = vmatpush1.bf16.msra.mxu0 0
      %978 = vmatprep.subr.bf16.mxu0 0
      %979 = vmatpush1.bf16.msra.mxu0 0
      %980 = vmatprep.subr.bf16.mxu0 0
      %981 = vmatpush1.bf16.msra.mxu0 0
      %982 = vmatprep.subr.bf16.mxu0 0
      %983 = vmatpush1.bf16.msra.mxu0 0
      %984 = vmatprep.mubr.bf16.mxu0 0
      %985 = vmatmul.mubr.bf16.gmra.mrb[0].mxu0 %v896
      %v986 = vpop.f32.mrb[0].mxu0
      %v987 = vadd.f32 0.0, %v986
      %v988 = vpop.f32.mrb[0].mxu0
      %v989 = vpop.f32.mrb[0].mxu0
      %v990 = vadd.f32 0.0, %v989
      %v991 = vpop.f32.mrb[0].mxu0
      %992 = vmatprep.mubr.bf16.mxu0 0
      %993 = vmatmul.mubr.bf16.gmra.mrb[0].mxu0 %v897
      %v994 = vpop.f32.mrb[0].mxu0
      %v995 = vadd.f32 0.0, %v994
      %v996 = vpop.f32.mrb[0].mxu0
      %v997 = vpop.f32.mrb[0].mxu0
      %v998 = vadd.f32 0.0, %v997
      %v999 = vpop.f32.mrb[0].mxu0
      %1000 = vmatprep.mubr.bf16.mxu0 0
      %1001 = vmatmul.mubr.bf16.gmra.mrb[0].mxu0 %v898
      %v1002 = vpop.f32.mrb[0].mxu0
      %v1003 = vadd.f32 0.0, %v1002
      %v1004 = vpop.f32.mrb[0].mxu0
      %v1005 = vpop.f32.mrb[0].mxu0
      %v1006 = vadd.f32 0.0, %v1005
      %v1007 = vpop.f32.mrb[0].mxu0
      %1008 = vmatprep.mubr.bf16.mxu0 0
      %1009 = vmatmul.mubr.bf16.gmra.mrb[0].mxu0 %v899
      %v1010 = vpop.f32.mrb[0].mxu0
      %v1011 = vadd.f32 0.0, %v1010
      %v1012 = vpop.f32.mrb[0].mxu0
      %v1013 = vpop.f32.mrb[0].mxu0
      %v1014 = vadd.f32 0.0, %v1013
      %v1015 = vpop.f32.mrb[0].mxu0
      %1016 = vdwg.mxu0
      %v1017 = vadd.f32 %v811, %v987
      %v1018 = vadd.f32 %v814, %v990
      %v1019 = vadd.f32 %v819, %v995
      %v1020 = vadd.f32 %v822, %v998
      %v1021 = vadd.f32 %v827, %v1003
      %v1022 = vadd.f32 %v830, %v1006
      %v1023 = vadd.f32 %v835, %v1011
      %v1024 = vadd.f32 %v838, %v1014
      %s1025 = scalar_lea.vmem %s1, 192
      %v1026 = vld [vmem:[%s1025] sm:$0xf]
      %v1027 = vld [vmem:[%s1025 + $0x4] sm:$0xf]
      %v1028 = vld [vmem:[%s1025 + $0x8] sm:$0xf]
      %v1029 = vld [vmem:[%s1025 + $0xc] sm:$0xf]
      %v1030 = vld [vmem:[%s1025 + $0x10] sm:$0xf]
      %v1031 = vld [vmem:[%s1025 + $0x14] sm:$0xf]
      %v1032 = vld [vmem:[%s1025 + $0x18] sm:$0xf]
      %v1033 = vld [vmem:[%s1025 + $0x1c] sm:$0xf]
      %v1034 = vld [vmem:[%s1025 + $0x20] sm:$0xf]
      %v1035 = vld [vmem:[%s1025 + $0x24] sm:$0xf]
      %v1036 = vld [vmem:[%s1025 + $0x28] sm:$0xf]
      %v1037 = vld [vmem:[%s1025 + $0x2c] sm:$0xf]
      %v1038 = vld [vmem:[%s1025 + $0x30] sm:$0xf]
      %v1039 = vld [vmem:[%s1025 + $0x34] sm:$0xf]
      %v1040 = vld [vmem:[%s1025 + $0x38] sm:$0xf]
      %v1041 = vld [vmem:[%s1025 + $0x3c] sm:$0xf]
      %v1043 = vunpack.c.l.b16 %v421
      %v1044 = vpack.c.b16 %v446, %v448
      %v1045 = vpack.c.b16 %v452, %v450
      %v1046 = vpack.c.b16 %v456, %v454
      %v1047 = vpack.c.b16 %v1043, %v458
      %v1068 = vunpack.c.l.b16 %v1026
      %v1069 = vunpack.c.l.b16 %v1027
      %v1070 = vunpack.c.l.b16 %v1028
      %v1071 = vunpack.c.l.b16 %v1029
      %v1072 = vunpack.c.l.b16 %v1030
      %v1073 = vunpack.c.l.b16 %v1031
      %v1074 = vunpack.c.l.b16 %v1032
      %v1075 = vunpack.c.l.b16 %v1033
      %v1076 = vunpack.c.l.b16 %v1034
      %v1077 = vunpack.c.l.b16 %v1035
      %v1078 = vunpack.c.l.b16 %v1036
      %v1079 = vunpack.c.l.b16 %v1037
      %v1080 = vunpack.c.l.b16 %v1038
      %v1081 = vunpack.c.l.b16 %v1039
      %v1082 = vunpack.c.l.b16 %v1040
      %v1083 = vunpack.c.l.b16 %v1041
      %v1084 = vpack.c.b16 %v1069, %v1068
      %v1085 = vpack.c.b16 %v1071, %v1070
      %v1086 = vpack.c.b16 %v1073, %v1072
      %v1087 = vpack.c.b16 %v1075, %v1074
      %v1088 = vpack.c.b16 %v1077, %v1076
      %v1089 = vpack.c.b16 %v1079, %v1078
      %v1090 = vpack.c.b16 %v1081, %v1080
      %v1091 = vpack.c.b16 %v1083, %v1082
      %1100 = vmatprep.subr.bf16.mxu0 0
      %1101 = vmatpush1.bf16.msra.mxu0 %v1084
      %1102 = vmatprep.subr.bf16.mxu0 0
      %1103 = vmatpush1.bf16.msra.mxu0 %v1085
      %1104 = vmatprep.subr.bf16.mxu0 0
      %1105 = vmatpush1.bf16.msra.mxu0 %v1086
      %1106 = vmatprep.subr.bf16.mxu0 0
      %1107 = vmatpush1.bf16.msra.mxu0 %v1087
      %1108 = vmatprep.subr.bf16.mxu0 0
      %1109 = vmatpush1.bf16.msra.mxu0 %v1088
      %1110 = vmatprep.subr.bf16.mxu0 0
      %1111 = vmatpush1.bf16.msra.mxu0 %v1089
      %1112 = vmatprep.subr.bf16.mxu0 0
      %1113 = vmatpush1.bf16.msra.mxu0 %v1090
      %1114 = vmatprep.subr.bf16.mxu0 0
      %1115 = vmatpush1.bf16.msra.mxu0 %v1091
      %1116 = vmatprep.subr.bf16.mxu0 0
      %1117 = vmatpush1.bf16.msra.mxu0 0
      %1118 = vmatprep.subr.bf16.mxu0 0
      %1119 = vmatpush1.bf16.msra.mxu0 0
      %1120 = vmatprep.subr.bf16.mxu0 0
      %1121 = vmatpush1.bf16.msra.mxu0 0
      %1122 = vmatprep.subr.bf16.mxu0 0
      %1123 = vmatpush1.bf16.msra.mxu0 0
      %1124 = vmatprep.subr.bf16.mxu0 0
      %1125 = vmatpush1.bf16.msra.mxu0 0
      %1126 = vmatprep.subr.bf16.mxu0 0
      %1127 = vmatpush1.bf16.msra.mxu0 0
      %1128 = vmatprep.subr.bf16.mxu0 0
      %1129 = vmatpush1.bf16.msra.mxu0 0
      %1130 = vmatprep.subr.bf16.mxu0 0
      %1131 = vmatpush1.bf16.msra.mxu0 0
      %1132 = vmatprep.mubr.bf16.mxu0 0
      %1133 = vmatmul.mubr.bf16.gmra.mrb[0].mxu0 %v1044
      %v1134 = vpop.f32.mrb[0].mxu0
      %v1135 = vadd.f32 0.0, %v1134
      %v1136 = vpop.f32.mrb[0].mxu0
      %v1137 = vpop.f32.mrb[0].mxu0
      %v1138 = vadd.f32 0.0, %v1137
      %v1139 = vpop.f32.mrb[0].mxu0
      %1140 = vmatprep.mubr.bf16.mxu0 0
      %1141 = vmatmul.mubr.bf16.gmra.mrb[0].mxu0 %v1045
      %v1142 = vpop.f32.mrb[0].mxu0
      %v1143 = vadd.f32 0.0, %v1142
      %v1144 = vpop.f32.mrb[0].mxu0
      %v1145 = vpop.f32.mrb[0].mxu0
      %v1146 = vadd.f32 0.0, %v1145
      %v1147 = vpop.f32.mrb[0].mxu0
      %1148 = vmatprep.mubr.bf16.mxu0 0
      %1149 = vmatmul.mubr.bf16.gmra.mrb[0].mxu0 %v1046
      %v1150 = vpop.f32.mrb[0].mxu0
      %v1151 = vadd.f32 0.0, %v1150
      %v1152 = vpop.f32.mrb[0].mxu0
      %v1153 = vpop.f32.mrb[0].mxu0
      %v1154 = vadd.f32 0.0, %v1153
      %v1155 = vpop.f32.mrb[0].mxu0
      %1156 = vmatprep.mubr.bf16.mxu0 0
      %1157 = vmatmul.mubr.bf16.gmra.mrb[0].mxu0 %v1047
      %v1158 = vpop.f32.mrb[0].mxu0
      %v1159 = vadd.f32 0.0, %v1158
      %v1160 = vpop.f32.mrb[0].mxu0
      %v1161 = vpop.f32.mrb[0].mxu0
      %v1162 = vadd.f32 0.0, %v1161
      %v1163 = vpop.f32.mrb[0].mxu0
      %1164 = vdwg.mxu0
      %v1165 = vadd.f32 %v1017, %v1135
      %v1166 = vadd.f32 %v1018, %v1138
      %v1167 = vadd.f32 %v1019, %v1143
      %v1168 = vadd.f32 %v1020, %v1146
      %v1169 = vadd.f32 %v1021, %v1151
      %v1170 = vadd.f32 %v1022, %v1154
      %v1171 = vadd.f32 %v1023, %v1159
      %v1172 = vadd.f32 %v1024, %v1162
      %v1173 = vunpack.c.h.b16 %v421
      %v1174 = vpack.c.b16 %v1043, %v1043
      %v1175 = vpack.c.b16 %v1173, %v1173
      %v1177 = vshrl.u32 %v1174, 16
      %v1179 = vrot.slane %v1177, 4
      %v1180 = vshll.u32 %v1174, 16
      %v1182 = vrot.slane %v1180, 5
      %v1183 = vor.u32 %v1179, %v1182
      %v1184 = vrot.slane %v1183, 4
      %v1186 = vshll.u32 %v1175, 16
      %v1188 = vrot.slane %v1186, 5
      %v1189 = vsel %vm476, %v1184, %v1188
      %s1190 = scalar_lea.vmem %s1, 256
      %v1191 = vld [vmem:[%s1190] sm:$0xf]
      %v1192 = vld [vmem:[%s1190 + $0x4] sm:$0xf]
      %v1193 = vld [vmem:[%s1190 + $0x8] sm:$0xf]
      %v1194 = vld [vmem:[%s1190 + $0xc] sm:$0xf]
      %v1195 = vld [vmem:[%s1190 + $0x10] sm:$0xf]
      %v1196 = vld [vmem:[%s1190 + $0x14] sm:$0xf]
      %v1197 = vld [vmem:[%s1190 + $0x18] sm:$0xf]
      %v1198 = vld [vmem:[%s1190 + $0x1c] sm:$0xf]
      %v1199 = vld [vmem:[%s1190 + $0x20] sm:$0xf]
      %v1200 = vld [vmem:[%s1190 + $0x24] sm:$0xf]
      %v1201 = vld [vmem:[%s1190 + $0x28] sm:$0xf]
      %v1202 = vld [vmem:[%s1190 + $0x2c] sm:$0xf]
      %v1203 = vld [vmem:[%s1190 + $0x30] sm:$0xf]
      %v1204 = vld [vmem:[%s1190 + $0x34] sm:$0xf]
      %v1205 = vld [vmem:[%s1190 + $0x38] sm:$0xf]
      %v1206 = vld [vmem:[%s1190 + $0x3c] sm:$0xf]
      %v1207 = vunpack.c.l.b16 %v1189
      %v1208 = vpack.c.b16 %v592, %v593
      %v1209 = vpack.c.b16 %v595, %v594
      %v1210 = vpack.c.b16 %v597, %v596
      %v1211 = vpack.c.b16 %v1207, %v598
      %v1232 = vunpack.c.l.b16 %v1191
      %v1233 = vunpack.c.l.b16 %v1192
      %v1234 = vunpack.c.l.b16 %v1193
      %v1235 = vunpack.c.l.b16 %v1194
      %v1236 = vunpack.c.l.b16 %v1195
      %v1237 = vunpack.c.l.b16 %v1196
      %v1238 = vunpack.c.l.b16 %v1197
      %v1239 = vunpack.c.l.b16 %v1198
      %v1240 = vunpack.c.l.b16 %v1199
      %v1241 = vunpack.c.l.b16 %v1200
      %v1242 = vunpack.c.l.b16 %v1201
      %v1243 = vunpack.c.l.b16 %v1202
      %v1244 = vunpack.c.l.b16 %v1203
      %v1245 = vunpack.c.l.b16 %v1204
      %v1246 = vunpack.c.l.b16 %v1205
      %v1247 = vunpack.c.l.b16 %v1206
      %v1248 = vpack.c.b16 %v1233, %v1232
      %v1249 = vpack.c.b16 %v1235, %v1234
      %v1250 = vpack.c.b16 %v1237, %v1236
      %v1251 = vpack.c.b16 %v1239, %v1238
      %v1252 = vpack.c.b16 %v1241, %v1240
      %v1253 = vpack.c.b16 %v1243, %v1242
      %v1254 = vpack.c.b16 %v1245, %v1244
      %v1255 = vpack.c.b16 %v1247, %v1246
      %1264 = vmatprep.subr.bf16.mxu0 0
      %1265 = vmatpush1.bf16.msra.mxu0 %v1248
      %1266 = vmatprep.subr.bf16.mxu0 0
      %1267 = vmatpush1.bf16.msra.mxu0 %v1249
      %1268 = vmatprep.subr.bf16.mxu0 0
      %1269 = vmatpush1.bf16.msra.mxu0 %v1250
      %1270 = vmatprep.subr.bf16.mxu0 0
      %1271 = vmatpush1.bf16.msra.mxu0 %v1251
      %1272 = vmatprep.subr.bf16.mxu0 0
      %1273 = vmatpush1.bf16.msra.mxu0 %v1252
      %1274 = vmatprep.subr.bf16.mxu0 0
      %1275 = vmatpush1.bf16.msra.mxu0 %v1253
      %1276 = vmatprep.subr.bf16.mxu0 0
      %1277 = vmatpush1.bf16.msra.mxu0 %v1254
      %1278 = vmatprep.subr.bf16.mxu0 0
      %1279 = vmatpush1.bf16.msra.mxu0 %v1255
      %1280 = vmatprep.subr.bf16.mxu0 0
      %1281 = vmatpush1.bf16.msra.mxu0 0
      %1282 = vmatprep.subr.bf16.mxu0 0
      %1283 = vmatpush1.bf16.msra.mxu0 0
      %1284 = vmatprep.subr.bf16.mxu0 0
      %1285 = vmatpush1.bf16.msra.mxu0 0
      %1286 = vmatprep.subr.bf16.mxu0 0
      %1287 = vmatpush1.bf16.msra.mxu0 0
      %1288 = vmatprep.subr.bf16.mxu0 0
      %1289 = vmatpush1.bf16.msra.mxu0 0
      %1290 = vmatprep.subr.bf16.mxu0 0
      %1291 = vmatpush1.bf16.msra.mxu0 0
      %1292 = vmatprep.subr.bf16.mxu0 0
      %1293 = vmatpush1.bf16.msra.mxu0 0
      %1294 = vmatprep.subr.bf16.mxu0 0
      %1295 = vmatpush1.bf16.msra.mxu0 0
      %1296 = vmatprep.mubr.bf16.mxu0 0
      %1297 = vmatmul.mubr.bf16.gmra.mrb[0].mxu0 %v1208
      %v1298 = vpop.f32.mrb[0].mxu0
      %v1299 = vadd.f32 0.0, %v1298
      %v1300 = vpop.f32.mrb[0].mxu0
      %v1301 = vpop.f32.mrb[0].mxu0
      %v1302 = vadd.f32 0.0, %v1301
      %v1303 = vpop.f32.mrb[0].mxu0
      %1304 = vmatprep.mubr.bf16.mxu0 0
      %1305 = vmatmul.mubr.bf16.gmra.mrb[0].mxu0 %v1209
      %v1306 = vpop.f32.mrb[0].mxu0
      %v1307 = vadd.f32 0.0, %v1306
      %v1308 = vpop.f32.mrb[0].mxu0
      %v1309 = vpop.f32.mrb[0].mxu0
      %v1310 = vadd.f32 0.0, %v1309
      %v1311 = vpop.f32.mrb[0].mxu0
      %1312 = vmatprep.mubr.bf16.mxu0 0
      %1313 = vmatmul.mubr.bf16.gmra.mrb[0].mxu0 %v1210
      %v1314 = vpop.f32.mrb[0].mxu0
      %v1315 = vadd.f32 0.0, %v1314
      %v1316 = vpop.f32.mrb[0].mxu0
      %v1317 = vpop.f32.mrb[0].mxu0
      %v1318 = vadd.f32 0.0, %v1317
      %v1319 = vpop.f32.mrb[0].mxu0
      %1320 = vmatprep.mubr.bf16.mxu0 0
      %1321 = vmatmul.mubr.bf16.gmra.mrb[0].mxu0 %v1211
      %v1322 = vpop.f32.mrb[0].mxu0
      %v1323 = vadd.f32 0.0, %v1322
      %v1324 = vpop.f32.mrb[0].mxu0
      %v1325 = vpop.f32.mrb[0].mxu0
      %v1326 = vadd.f32 0.0, %v1325
      %v1327 = vpop.f32.mrb[0].mxu0
      %1328 = vdwg.mxu0
      %v1329 = vadd.f32 %v1165, %v1299
      %v1330 = vadd.f32 %v1166, %v1302
      %v1331 = vadd.f32 %v1167, %v1307
      %v1332 = vadd.f32 %v1168, %v1310
      %v1333 = vadd.f32 %v1169, %v1315
      %v1334 = vadd.f32 %v1170, %v1318
      %v1335 = vadd.f32 %v1171, %v1323
      %v1336 = vadd.f32 %v1172, %v1326
      %v1337 = vrot.slane %v1174, 5
      %v1338 = vrot.slane %v1337, 4
      %v1339 = vrot.slane %v1175, 5
      %v1340 = vsel %vm843, %v1338, %v1339
      %s1341 = scalar_lea.vmem %s1, 320
      %v1342 = vld [vmem:[%s1341] sm:$0xf]
      %v1343 = vld [vmem:[%s1341 + $0x4] sm:$0xf]
      %v1344 = vld [vmem:[%s1341 + $0x8] sm:$0xf]
      %v1345 = vld [vmem:[%s1341 + $0xc] sm:$0xf]
      %v1346 = vld [vmem:[%s1341 + $0x10] sm:$0xf]
      %v1347 = vld [vmem:[%s1341 + $0x14] sm:$0xf]
      %v1348 = vld [vmem:[%s1341 + $0x18] sm:$0xf]
      %v1349 = vld [vmem:[%s1341 + $0x1c] sm:$0xf]
      %v1350 = vld [vmem:[%s1341 + $0x20] sm:$0xf]
      %v1351 = vld [vmem:[%s1341 + $0x24] sm:$0xf]
      %v1352 = vld [vmem:[%s1341 + $0x28] sm:$0xf]
      %v1353 = vld [vmem:[%s1341 + $0x2c] sm:$0xf]
      %v1354 = vld [vmem:[%s1341 + $0x30] sm:$0xf]
      %v1355 = vld [vmem:[%s1341 + $0x34] sm:$0xf]
      %v1356 = vld [vmem:[%s1341 + $0x38] sm:$0xf]
      %v1357 = vld [vmem:[%s1341 + $0x3c] sm:$0xf]
      %v1358 = vunpack.c.l.b16 %v1340
      %v1359 = vpack.c.b16 %v889, %v890
      %v1360 = vpack.c.b16 %v892, %v891
      %v1361 = vpack.c.b16 %v894, %v893
      %v1362 = vpack.c.b16 %v1358, %v895
      %v1383 = vunpack.c.l.b16 %v1342
      %v1384 = vunpack.c.l.b16 %v1343
      %v1385 = vunpack.c.l.b16 %v1344
      %v1386 = vunpack.c.l.b16 %v1345
      %v1387 = vunpack.c.l.b16 %v1346
      %v1388 = vunpack.c.l.b16 %v1347
      %v1389 = vunpack.c.l.b16 %v1348
      %v1390 = vunpack.c.l.b16 %v1349
      %v1391 = vunpack.c.l.b16 %v1350
      %v1392 = vunpack.c.l.b16 %v1351
      %v1393 = vunpack.c.l.b16 %v1352
      %v1394 = vunpack.c.l.b16 %v1353
      %v1395 = vunpack.c.l.b16 %v1354
      %v1396 = vunpack.c.l.b16 %v1355
      %v1397 = vunpack.c.l.b16 %v1356
      %v1398 = vunpack.c.l.b16 %v1357
      %v1399 = vpack.c.b16 %v1384, %v1383
      %v1400 = vpack.c.b16 %v1386, %v1385
      %v1401 = vpack.c.b16 %v1388, %v1387
      %v1402 = vpack.c.b16 %v1390, %v1389
      %v1403 = vpack.c.b16 %v1392, %v1391
      %v1404 = vpack.c.b16 %v1394, %v1393
      %v1405 = vpack.c.b16 %v1396, %v1395
      %v1406 = vpack.c.b16 %v1398, %v1397
      %1415 = vmatprep.subr.bf16.mxu0 0
      %1416 = vmatpush1.bf16.msra.mxu0 %v1399
      %1417 = vmatprep.subr.bf16.mxu0 0
      %1418 = vmatpush1.bf16.msra.mxu0 %v1400
      %1419 = vmatprep.subr.bf16.mxu0 0
      %1420 = vmatpush1.bf16.msra.mxu0 %v1401
      %1421 = vmatprep.subr.bf16.mxu0 0
      %1422 = vmatpush1.bf16.msra.mxu0 %v1402
      %1423 = vmatprep.subr.bf16.mxu0 0
      %1424 = vmatpush1.bf16.msra.mxu0 %v1403
      %1425 = vmatprep.subr.bf16.mxu0 0
      %1426 = vmatpush1.bf16.msra.mxu0 %v1404
      %1427 = vmatprep.subr.bf16.mxu0 0
      %1428 = vmatpush1.bf16.msra.mxu0 %v1405
      %1429 = vmatprep.subr.bf16.mxu0 0
      %1430 = vmatpush1.bf16.msra.mxu0 %v1406
      %1431 = vmatprep.subr.bf16.mxu0 0
      %1432 = vmatpush1.bf16.msra.mxu0 0
      %1433 = vmatprep.subr.bf16.mxu0 0
      %1434 = vmatpush1.bf16.msra.mxu0 0
      %1435 = vmatprep.subr.bf16.mxu0 0
      %1436 = vmatpush1.bf16.msra.mxu0 0
      %1437 = vmatprep.subr.bf16.mxu0 0
      %1438 = vmatpush1.bf16.msra.mxu0 0
      %1439 = vmatprep.subr.bf16.mxu0 0
      %1440 = vmatpush1.bf16.msra.mxu0 0
      %1441 = vmatprep.subr.bf16.mxu0 0
      %1442 = vmatpush1.bf16.msra.mxu0 0
      %1443 = vmatprep.subr.bf16.mxu0 0
      %1444 = vmatpush1.bf16.msra.mxu0 0
      %1445 = vmatprep.subr.bf16.mxu0 0
      %1446 = vmatpush1.bf16.msra.mxu0 0
      %1447 = vmatprep.mubr.bf16.mxu0 0
      %1448 = vmatmul.mubr.bf16.gmra.mrb[0].mxu0 %v1359
      %v1449 = vpop.f32.mrb[0].mxu0
      %v1450 = vadd.f32 0.0, %v1449
      %v1451 = vpop.f32.mrb[0].mxu0
      %v1452 = vpop.f32.mrb[0].mxu0
      %v1453 = vadd.f32 0.0, %v1452
      %v1454 = vpop.f32.mrb[0].mxu0
      %1455 = vmatprep.mubr.bf16.mxu0 0
      %1456 = vmatmul.mubr.bf16.gmra.mrb[0].mxu0 %v1360
      %v1457 = vpop.f32.mrb[0].mxu0
      %v1458 = vadd.f32 0.0, %v1457
      %v1459 = vpop.f32.mrb[0].mxu0
      %v1460 = vpop.f32.mrb[0].mxu0
      %v1461 = vadd.f32 0.0, %v1460
      %v1462 = vpop.f32.mrb[0].mxu0
      %1463 = vmatprep.mubr.bf16.mxu0 0
      %1464 = vmatmul.mubr.bf16.gmra.mrb[0].mxu0 %v1361
      %v1465 = vpop.f32.mrb[0].mxu0
      %v1466 = vadd.f32 0.0, %v1465
      %v1467 = vpop.f32.mrb[0].mxu0
      %v1468 = vpop.f32.mrb[0].mxu0
      %v1469 = vadd.f32 0.0, %v1468
      %v1470 = vpop.f32.mrb[0].mxu0
      %1471 = vmatprep.mubr.bf16.mxu0 0
      %1472 = vmatmul.mubr.bf16.gmra.mrb[0].mxu0 %v1362
      %v1473 = vpop.f32.mrb[0].mxu0
      %v1474 = vadd.f32 0.0, %v1473
      %v1475 = vpop.f32.mrb[0].mxu0
      %v1476 = vpop.f32.mrb[0].mxu0
      %v1477 = vadd.f32 0.0, %v1476
      %v1478 = vpop.f32.mrb[0].mxu0
      %1479 = vdwg.mxu0
      %v1480 = vadd.f32 %v1329, %v1450
      %v1481 = vadd.f32 %v1330, %v1453
      %v1482 = vadd.f32 %v1331, %v1458
      %v1483 = vadd.f32 %v1332, %v1461
      %v1484 = vadd.f32 %v1333, %v1466
      %v1485 = vadd.f32 %v1334, %v1469
      %v1486 = vadd.f32 %v1335, %v1474
      %v1487 = vadd.f32 %v1336, %v1477
      %s1488 = scalar_lea.vmem %s1, 384
      %v1489 = vld [vmem:[%s1488] sm:$0xf]
      %v1490 = vld [vmem:[%s1488 + $0x4] sm:$0xf]
      %v1491 = vld [vmem:[%s1488 + $0x8] sm:$0xf]
      %v1492 = vld [vmem:[%s1488 + $0xc] sm:$0xf]
      %v1493 = vld [vmem:[%s1488 + $0x10] sm:$0xf]
      %v1494 = vld [vmem:[%s1488 + $0x14] sm:$0xf]
      %v1495 = vld [vmem:[%s1488 + $0x18] sm:$0xf]
      %v1496 = vld [vmem:[%s1488 + $0x1c] sm:$0xf]
      %v1497 = vld [vmem:[%s1488 + $0x20] sm:$0xf]
      %v1498 = vld [vmem:[%s1488 + $0x24] sm:$0xf]
      %v1499 = vld [vmem:[%s1488 + $0x28] sm:$0xf]
      %v1500 = vld [vmem:[%s1488 + $0x2c] sm:$0xf]
      %v1501 = vld [vmem:[%s1488 + $0x30] sm:$0xf]
      %v1502 = vld [vmem:[%s1488 + $0x34] sm:$0xf]
      %v1503 = vld [vmem:[%s1488 + $0x38] sm:$0xf]
      %v1504 = vld [vmem:[%s1488 + $0x3c] sm:$0xf]
      %v1505 = vpack.c.b16 %v458, %v1043
      %v1523 = vunpack.c.l.b16 %v1489
      %v1524 = vunpack.c.l.b16 %v1490
      %v1525 = vunpack.c.l.b16 %v1491
      %v1526 = vunpack.c.l.b16 %v1492
      %v1527 = vunpack.c.l.b16 %v1493
      %v1528 = vunpack.c.l.b16 %v1494
      %v1529 = vunpack.c.l.b16 %v1495
      %v1530 = vunpack.c.l.b16 %v1496
      %v1531 = vunpack.c.l.b16 %v1497
      %v1532 = vunpack.c.l.b16 %v1498
      %v1533 = vunpack.c.l.b16 %v1499
      %v1534 = vunpack.c.l.b16 %v1500
      %v1535 = vunpack.c.l.b16 %v1501
      %v1536 = vunpack.c.l.b16 %v1502
      %v1537 = vunpack.c.l.b16 %v1503
      %v1538 = vunpack.c.l.b16 %v1504
      %v1539 = vpack.c.b16 %v1524, %v1523
      %v1540 = vpack.c.b16 %v1526, %v1525
      %v1541 = vpack.c.b16 %v1528, %v1527
      %v1542 = vpack.c.b16 %v1530, %v1529
      %v1543 = vpack.c.b16 %v1532, %v1531
      %v1544 = vpack.c.b16 %v1534, %v1533
      %v1545 = vpack.c.b16 %v1536, %v1535
      %v1546 = vpack.c.b16 %v1538, %v1537
      %1555 = vmatprep.subr.bf16.mxu0 0
      %1556 = vmatpush1.bf16.msra.mxu0 %v1539
      %1557 = vmatprep.subr.bf16.mxu0 0
      %1558 = vmatpush1.bf16.msra.mxu0 %v1540
      %1559 = vmatprep.subr.bf16.mxu0 0
      %1560 = vmatpush1.bf16.msra.mxu0 %v1541
      %1561 = vmatprep.subr.bf16.mxu0 0
      %1562 = vmatpush1.bf16.msra.mxu0 %v1542
      %1563 = vmatprep.subr.bf16.mxu0 0
      %1564 = vmatpush1.bf16.msra.mxu0 %v1543
      %1565 = vmatprep.subr.bf16.mxu0 0
      %1566 = vmatpush1.bf16.msra.mxu0 %v1544
      %1567 = vmatprep.subr.bf16.mxu0 0
      %1568 = vmatpush1.bf16.msra.mxu0 %v1545
      %1569 = vmatprep.subr.bf16.mxu0 0
      %1570 = vmatpush1.bf16.msra.mxu0 %v1546
      %1571 = vmatprep.subr.bf16.mxu0 0
      %1572 = vmatpush1.bf16.msra.mxu0 0
      %1573 = vmatprep.subr.bf16.mxu0 0
      %1574 = vmatpush1.bf16.msra.mxu0 0
      %1575 = vmatprep.subr.bf16.mxu0 0
      %1576 = vmatpush1.bf16.msra.mxu0 0
      %1577 = vmatprep.subr.bf16.mxu0 0
      %1578 = vmatpush1.bf16.msra.mxu0 0
      %1579 = vmatprep.subr.bf16.mxu0 0
      %1580 = vmatpush1.bf16.msra.mxu0 0
      %1581 = vmatprep.subr.bf16.mxu0 0
      %1582 = vmatpush1.bf16.msra.mxu0 0
      %1583 = vmatprep.subr.bf16.mxu0 0
      %1584 = vmatpush1.bf16.msra.mxu0 0
      %1585 = vmatprep.subr.bf16.mxu0 0
      %1586 = vmatpush1.bf16.msra.mxu0 0
      %1587 = vmatprep.mubr.bf16.mxu0 0
      %1588 = vmatmul.mubr.bf16.gmra.mrb[0].mxu0 %v721
      %v1589 = vpop.f32.mrb[0].mxu0
      %v1590 = vadd.f32 0.0, %v1589
      %v1591 = vpop.f32.mrb[0].mxu0
      %v1592 = vpop.f32.mrb[0].mxu0
      %v1593 = vadd.f32 0.0, %v1592
      %v1594 = vpop.f32.mrb[0].mxu0
      %1595 = vmatprep.mubr.bf16.mxu0 0
      %1596 = vmatmul.mubr.bf16.gmra.mrb[0].mxu0 %v722
      %v1597 = vpop.f32.mrb[0].mxu0
      %v1598 = vadd.f32 0.0, %v1597
      %v1599 = vpop.f32.mrb[0].mxu0
      %v1600 = vpop.f32.mrb[0].mxu0
      %v1601 = vadd.f32 0.0, %v1600
      %v1602 = vpop.f32.mrb[0].mxu0
      %1603 = vmatprep.mubr.bf16.mxu0 0
      %1604 = vmatmul.mubr.bf16.gmra.mrb[0].mxu0 %v723
      %v1605 = vpop.f32.mrb[0].mxu0
      %v1606 = vadd.f32 0.0, %v1605
      %v1607 = vpop.f32.mrb[0].mxu0
      %v1608 = vpop.f32.mrb[0].mxu0
      %v1609 = vadd.f32 0.0, %v1608
      %v1610 = vpop.f32.mrb[0].mxu0
      %1611 = vmatprep.mubr.bf16.mxu0 0
      %1612 = vmatmul.mubr.bf16.gmra.mrb[0].mxu0 %v1505
      %v1613 = vpop.f32.mrb[0].mxu0
      %v1614 = vadd.f32 0.0, %v1613
      %v1615 = vpop.f32.mrb[0].mxu0
      %v1616 = vpop.f32.mrb[0].mxu0
      %v1617 = vadd.f32 0.0, %v1616
      %v1618 = vpop.f32.mrb[0].mxu0
      %1619 = vdwg.mxu0
      %v1620 = vadd.f32 %v1480, %v1590
      %v1621 = vadd.f32 %v1481, %v1593
      %v1622 = vadd.f32 %v1482, %v1598
      %v1623 = vadd.f32 %v1483, %v1601
      %v1624 = vadd.f32 %v1484, %v1606
      %v1625 = vadd.f32 %v1485, %v1609
      %v1626 = vadd.f32 %v1486, %v1614
      %v1627 = vadd.f32 %v1487, %v1617
      %s1628 = scalar_lea.vmem %s1, 448
      %v1629 = vld [vmem:[%s1628] sm:$0xf]
      %v1630 = vld [vmem:[%s1628 + $0x4] sm:$0xf]
      %v1631 = vld [vmem:[%s1628 + $0x8] sm:$0xf]
      %v1632 = vld [vmem:[%s1628 + $0xc] sm:$0xf]
      %v1633 = vld [vmem:[%s1628 + $0x10] sm:$0xf]
      %v1634 = vld [vmem:[%s1628 + $0x14] sm:$0xf]
      %v1635 = vld [vmem:[%s1628 + $0x18] sm:$0xf]
      %v1636 = vld [vmem:[%s1628 + $0x1c] sm:$0xf]
      %v1637 = vld [vmem:[%s1628 + $0x20] sm:$0xf]
      %v1638 = vld [vmem:[%s1628 + $0x24] sm:$0xf]
      %v1639 = vld [vmem:[%s1628 + $0x28] sm:$0xf]
      %v1640 = vld [vmem:[%s1628 + $0x2c] sm:$0xf]
      %v1641 = vld [vmem:[%s1628 + $0x30] sm:$0xf]
      %v1642 = vld [vmem:[%s1628 + $0x34] sm:$0xf]
      %v1643 = vld [vmem:[%s1628 + $0x38] sm:$0xf]
      %v1644 = vld [vmem:[%s1628 + $0x3c] sm:$0xf]
      %v1645 = vpack.c.b16 %v598, %v1207
      %v1663 = vunpack.c.l.b16 %v1629
      %v1664 = vunpack.c.l.b16 %v1630
      %v1665 = vunpack.c.l.b16 %v1631
      %v1666 = vunpack.c.l.b16 %v1632
      %v1667 = vunpack.c.l.b16 %v1633
      %v1668 = vunpack.c.l.b16 %v1634
      %v1669 = vunpack.c.l.b16 %v1635
      %v1670 = vunpack.c.l.b16 %v1636
      %v1671 = vunpack.c.l.b16 %v1637
      %v1672 = vunpack.c.l.b16 %v1638
      %v1673 = vunpack.c.l.b16 %v1639
      %v1674 = vunpack.c.l.b16 %v1640
      %v1675 = vunpack.c.l.b16 %v1641
      %v1676 = vunpack.c.l.b16 %v1642
      %v1677 = vunpack.c.l.b16 %v1643
      %v1678 = vunpack.c.l.b16 %v1644
      %v1679 = vpack.c.b16 %v1664, %v1663
      %v1680 = vpack.c.b16 %v1666, %v1665
      %v1681 = vpack.c.b16 %v1668, %v1667
      %v1682 = vpack.c.b16 %v1670, %v1669
      %v1683 = vpack.c.b16 %v1672, %v1671
      %v1684 = vpack.c.b16 %v1674, %v1673
      %v1685 = vpack.c.b16 %v1676, %v1675
      %v1686 = vpack.c.b16 %v1678, %v1677
      %1695 = vmatprep.subr.bf16.mxu0 0
      %1696 = vmatpush1.bf16.msra.mxu0 %v1679
      %1697 = vmatprep.subr.bf16.mxu0 0
      %1698 = vmatpush1.bf16.msra.mxu0 %v1680
      %1699 = vmatprep.subr.bf16.mxu0 0
      %1700 = vmatpush1.bf16.msra.mxu0 %v1681
      %1701 = vmatprep.subr.bf16.mxu0 0
      %1702 = vmatpush1.bf16.msra.mxu0 %v1682
      %1703 = vmatprep.subr.bf16.mxu0 0
      %1704 = vmatpush1.bf16.msra.mxu0 %v1683
      %1705 = vmatprep.subr.bf16.mxu0 0
      %1706 = vmatpush1.bf16.msra.mxu0 %v1684
      %1707 = vmatprep.subr.bf16.mxu0 0
      %1708 = vmatpush1.bf16.msra.mxu0 %v1685
      %1709 = vmatprep.subr.bf16.mxu0 0
      %1710 = vmatpush1.bf16.msra.mxu0 %v1686
      %1711 = vmatprep.subr.bf16.mxu0 0
      %1712 = vmatpush1.bf16.msra.mxu0 0
      %1713 = vmatprep.subr.bf16.mxu0 0
      %1714 = vmatpush1.bf16.msra.mxu0 0
      %1715 = vmatprep.subr.bf16.mxu0 0
      %1716 = vmatpush1.bf16.msra.mxu0 0
      %1717 = vmatprep.subr.bf16.mxu0 0
      %1718 = vmatpush1.bf16.msra.mxu0 0
      %1719 = vmatprep.subr.bf16.mxu0 0
      %1720 = vmatpush1.bf16.msra.mxu0 0
      %1721 = vmatprep.subr.bf16.mxu0 0
      %1722 = vmatpush1.bf16.msra.mxu0 0
      %1723 = vmatprep.subr.bf16.mxu0 0
      %1724 = vmatpush1.bf16.msra.mxu0 0
      %1725 = vmatprep.subr.bf16.mxu0 0
      %1726 = vmatpush1.bf16.msra.mxu0 0
      %1727 = vmatprep.mubr.bf16.mxu0 0
      %1728 = vmatmul.mubr.bf16.gmra.mrb[0].mxu0 %v600
      %v1729 = vpop.f32.mrb[0].mxu0
      %v1730 = vadd.f32 0.0, %v1729
      %v1731 = vpop.f32.mrb[0].mxu0
      %v1732 = vpop.f32.mrb[0].mxu0
      %v1733 = vadd.f32 0.0, %v1732
      %v1734 = vpop.f32.mrb[0].mxu0
      %1735 = vmatprep.mubr.bf16.mxu0 0
      %1736 = vmatmul.mubr.bf16.gmra.mrb[0].mxu0 %v601
      %v1737 = vpop.f32.mrb[0].mxu0
      %v1738 = vadd.f32 0.0, %v1737
      %v1739 = vpop.f32.mrb[0].mxu0
      %v1740 = vpop.f32.mrb[0].mxu0
      %v1741 = vadd.f32 0.0, %v1740
      %v1742 = vpop.f32.mrb[0].mxu0
      %1743 = vmatprep.mubr.bf16.mxu0 0
      %1744 = vmatmul.mubr.bf16.gmra.mrb[0].mxu0 %v602
      %v1745 = vpop.f32.mrb[0].mxu0
      %v1746 = vadd.f32 0.0, %v1745
      %v1747 = vpop.f32.mrb[0].mxu0
      %v1748 = vpop.f32.mrb[0].mxu0
      %v1749 = vadd.f32 0.0, %v1748
      %v1750 = vpop.f32.mrb[0].mxu0
      %1751 = vmatprep.mubr.bf16.mxu0 0
      %1752 = vmatmul.mubr.bf16.gmra.mrb[0].mxu0 %v1645
      %v1753 = vpop.f32.mrb[0].mxu0
      %v1754 = vadd.f32 0.0, %v1753
      %v1755 = vpop.f32.mrb[0].mxu0
      %v1756 = vpop.f32.mrb[0].mxu0
      %v1757 = vadd.f32 0.0, %v1756
      %v1758 = vpop.f32.mrb[0].mxu0
      %1759 = vdwg.mxu0
      %v1760 = vadd.f32 %v1620, %v1730
      %v1761 = vadd.f32 %v1621, %v1733
      %v1762 = vadd.f32 %v1622, %v1738
      %v1763 = vadd.f32 %v1623, %v1741
      %v1764 = vadd.f32 %v1624, %v1746
      %v1765 = vadd.f32 %v1625, %v1749
      %v1766 = vadd.f32 %v1626, %v1754
      %v1767 = vadd.f32 %v1627, %v1757
      %s1768 = scalar_lea.vmem %s1, 512
      %v1769 = vld [vmem:[%s1768] sm:$0xf]
      %v1770 = vld [vmem:[%s1768 + $0x4] sm:$0xf]
      %v1771 = vld [vmem:[%s1768 + $0x8] sm:$0xf]
      %v1772 = vld [vmem:[%s1768 + $0xc] sm:$0xf]
      %v1773 = vld [vmem:[%s1768 + $0x10] sm:$0xf]
      %v1774 = vld [vmem:[%s1768 + $0x14] sm:$0xf]
      %v1775 = vld [vmem:[%s1768 + $0x18] sm:$0xf]
      %v1776 = vld [vmem:[%s1768 + $0x1c] sm:$0xf]
      %v1777 = vld [vmem:[%s1768 + $0x20] sm:$0xf]
      %v1778 = vld [vmem:[%s1768 + $0x24] sm:$0xf]
      %v1779 = vld [vmem:[%s1768 + $0x28] sm:$0xf]
      %v1780 = vld [vmem:[%s1768 + $0x2c] sm:$0xf]
      %v1781 = vld [vmem:[%s1768 + $0x30] sm:$0xf]
      %v1782 = vld [vmem:[%s1768 + $0x34] sm:$0xf]
      %v1783 = vld [vmem:[%s1768 + $0x38] sm:$0xf]
      %v1784 = vld [vmem:[%s1768 + $0x3c] sm:$0xf]
      %v1785 = vpack.c.b16 %v895, %v1358
      %v1803 = vunpack.c.l.b16 %v1769
      %v1804 = vunpack.c.l.b16 %v1770
      %v1805 = vunpack.c.l.b16 %v1771
      %v1806 = vunpack.c.l.b16 %v1772
      %v1807 = vunpack.c.l.b16 %v1773
      %v1808 = vunpack.c.l.b16 %v1774
      %v1809 = vunpack.c.l.b16 %v1775
      %v1810 = vunpack.c.l.b16 %v1776
      %v1811 = vunpack.c.l.b16 %v1777
      %v1812 = vunpack.c.l.b16 %v1778
      %v1813 = vunpack.c.l.b16 %v1779
      %v1814 = vunpack.c.l.b16 %v1780
      %v1815 = vunpack.c.l.b16 %v1781
      %v1816 = vunpack.c.l.b16 %v1782
      %v1817 = vunpack.c.l.b16 %v1783
      %v1818 = vunpack.c.l.b16 %v1784
      %v1819 = vpack.c.b16 %v1804, %v1803
      %v1820 = vpack.c.b16 %v1806, %v1805
      %v1821 = vpack.c.b16 %v1808, %v1807
      %v1822 = vpack.c.b16 %v1810, %v1809
      %v1823 = vpack.c.b16 %v1812, %v1811
      %v1824 = vpack.c.b16 %v1814, %v1813
      %v1825 = vpack.c.b16 %v1816, %v1815
      %v1826 = vpack.c.b16 %v1818, %v1817
      %1835 = vmatprep.subr.bf16.mxu0 0
      %1836 = vmatpush1.bf16.msra.mxu0 %v1819
      %1837 = vmatprep.subr.bf16.mxu0 0
      %1838 = vmatpush1.bf16.msra.mxu0 %v1820
      %1839 = vmatprep.subr.bf16.mxu0 0
      %1840 = vmatpush1.bf16.msra.mxu0 %v1821
      %1841 = vmatprep.subr.bf16.mxu0 0
      %1842 = vmatpush1.bf16.msra.mxu0 %v1822
      %1843 = vmatprep.subr.bf16.mxu0 0
      %1844 = vmatpush1.bf16.msra.mxu0 %v1823
      %1845 = vmatprep.subr.bf16.mxu0 0
      %1846 = vmatpush1.bf16.msra.mxu0 %v1824
      %1847 = vmatprep.subr.bf16.mxu0 0
      %1848 = vmatpush1.bf16.msra.mxu0 %v1825
      %1849 = vmatprep.subr.bf16.mxu0 0
      %1850 = vmatpush1.bf16.msra.mxu0 %v1826
      %1851 = vmatprep.subr.bf16.mxu0 0
      %1852 = vmatpush1.bf16.msra.mxu0 0
      %1853 = vmatprep.subr.bf16.mxu0 0
      %1854 = vmatpush1.bf16.msra.mxu0 0
      %1855 = vmatprep.subr.bf16.mxu0 0
      %1856 = vmatpush1.bf16.msra.mxu0 0
      %1857 = vmatprep.subr.bf16.mxu0 0
      %1858 = vmatpush1.bf16.msra.mxu0 0
      %1859 = vmatprep.subr.bf16.mxu0 0
      %1860 = vmatpush1.bf16.msra.mxu0 0
      %1861 = vmatprep.subr.bf16.mxu0 0
      %1862 = vmatpush1.bf16.msra.mxu0 0
      %1863 = vmatprep.subr.bf16.mxu0 0
      %1864 = vmatpush1.bf16.msra.mxu0 0
      %1865 = vmatprep.subr.bf16.mxu0 0
      %1866 = vmatpush1.bf16.msra.mxu0 0
      %1867 = vmatprep.mubr.bf16.mxu0 0
      %1868 = vmatmul.mubr.bf16.gmra.mrb[0].mxu0 %v897
      %v1869 = vpop.f32.mrb[0].mxu0
      %v1870 = vadd.f32 0.0, %v1869
      %v1871 = vpop.f32.mrb[0].mxu0
      %v1872 = vpop.f32.mrb[0].mxu0
      %v1873 = vadd.f32 0.0, %v1872
      %v1874 = vpop.f32.mrb[0].mxu0
      %1875 = vmatprep.mubr.bf16.mxu0 0
      %1876 = vmatmul.mubr.bf16.gmra.mrb[0].mxu0 %v898
      %v1877 = vpop.f32.mrb[0].mxu0
      %v1878 = vadd.f32 0.0, %v1877
      %v1879 = vpop.f32.mrb[0].mxu0
      %v1880 = vpop.f32.mrb[0].mxu0
      %v1881 = vadd.f32 0.0, %v1880
      %v1882 = vpop.f32.mrb[0].mxu0
      %1883 = vmatprep.mubr.bf16.mxu0 0
      %1884 = vmatmul.mubr.bf16.gmra.mrb[0].mxu0 %v899
      %v1885 = vpop.f32.mrb[0].mxu0
      %v1886 = vadd.f32 0.0, %v1885
      %v1887 = vpop.f32.mrb[0].mxu0
      %v1888 = vpop.f32.mrb[0].mxu0
      %v1889 = vadd.f32 0.0, %v1888
      %v1890 = vpop.f32.mrb[0].mxu0
      %1891 = vmatprep.mubr.bf16.mxu0 0
      %1892 = vmatmul.mubr.bf16.gmra.mrb[0].mxu0 %v1785
      %v1893 = vpop.f32.mrb[0].mxu0
      %v1894 = vadd.f32 0.0, %v1893
      %v1895 = vpop.f32.mrb[0].mxu0
      %v1896 = vpop.f32.mrb[0].mxu0
      %v1897 = vadd.f32 0.0, %v1896
      %v1898 = vpop.f32.mrb[0].mxu0
      %1899 = vdwg.mxu0
      %v1900 = vadd.f32 %v1760, %v1870
      %v1901 = vadd.f32 %v1761, %v1873
      %v1902 = vadd.f32 %v1762, %v1878
      %v1903 = vadd.f32 %v1763, %v1881
      %v1904 = vadd.f32 %v1764, %v1886
      %v1905 = vadd.f32 %v1765, %v1889
      %v1906 = vadd.f32 %v1766, %v1894
      %v1907 = vadd.f32 %v1767, %v1897
      %v1909 = vlaneseq
      %v1910 = vshrl.u32 %v1909, 7
      %v1911 = vsub.s32 0, %v1910
      %v1912 = vrot.slane %v422, %v1911
      %v1914 = vadd.f32 %v1900, %v1912
      %v1915 = vadd.f32 %v1901, %v1912
      %v1916 = vadd.f32 %v1902, %v1912
      %v1917 = vadd.f32 %v1903, %v1912
      %v1918 = vadd.f32 %v1904, %v1912
      %v1919 = vadd.f32 %v1905, %v1912
      %v1920 = vadd.f32 %v1906, %v1912
      %v1921 = vadd.f32 %v1907, %v1912
      %v1922 = vmax.f32 %v1914, 0.0
      %v1923 = vmax.f32 %v1915, 0.0
      %v1924 = vmax.f32 %v1916, 0.0
      %v1925 = vmax.f32 %v1917, 0.0
      %v1926 = vmax.f32 %v1918, 0.0
      %v1927 = vmax.f32 %v1919, 0.0
      %v1928 = vmax.f32 %v1920, 0.0
      %v1929 = vmax.f32 %v1921, 0.0
      %v1930 = vpack.c.bf16 %v1922, %v1922
      %v1931 = vpack.c.bf16 %v1923, %v1923
      %v1932 = vpack.c.bf16 %v1924, %v1924
      %v1933 = vpack.c.bf16 %v1925, %v1925
      %v1934 = vpack.c.bf16 %v1926, %v1926
      %v1935 = vpack.c.bf16 %v1927, %v1927
      %v1936 = vpack.c.bf16 %v1928, %v1928
      %v1937 = vpack.c.bf16 %v1929, %v1929
      %v1947 = vunpack.c.l.s4 1966171168
      %v1948 = vunpack.c.0.s8 %v1947
      %v1949 = vlaneseq
      %v1950 = vshrl.u32 %v1949, 7
      %v1951 = vsub.s32 %v1948, %v1950
      %v1952 = vrot.slane %v1930, %v1951
      %v1953 = vcombine.high %v1952, %v1952
      %v1955 = vunpack.c.l.s4 1966171168
      %v1956 = vunpack.c.0.s8 %v1955
      %v1957 = vlaneseq
      %v1958 = vshrl.u32 %v1957, 7
      %v1959 = vsub.s32 %v1956, %v1958
      %v1960 = vrot.slane %v1952, %v1959
      %v1962 = vunpack.c.l.s4 1966171168
      %v1963 = vunpack.c.0.s8 %v1962
      %v1964 = vlaneseq
      %v1965 = vshrl.u32 %v1964, 7
      %v1966 = vsub.s32 %v1963, %v1965
      %v1967 = vrot.slane %v1953, %v1966
      %v1968 = vcombine.high %v1960, %v1960
      %v1969 = vcombine.high %v1967, %v1967
      %v1971 = vunpack.c.l.s4 1966171168
      %v1972 = vunpack.c.0.s8 %v1971
      %v1973 = vlaneseq
      %v1974 = vshrl.u32 %v1973, 7
      %v1975 = vsub.s32 %v1972, %v1974
      %v1976 = vrot.slane %v1931, %v1975
      %v1977 = vcombine.high %v1976, %v1976
      %v1979 = vunpack.c.l.s4 1966171168
      %v1980 = vunpack.c.0.s8 %v1979
      %v1981 = vlaneseq
      %v1982 = vshrl.u32 %v1981, 7
      %v1983 = vsub.s32 %v1980, %v1982
      %v1984 = vrot.slane %v1976, %v1983
      %v1986 = vunpack.c.l.s4 1966171168
      %v1987 = vunpack.c.0.s8 %v1986
      %v1988 = vlaneseq
      %v1989 = vshrl.u32 %v1988, 7
      %v1990 = vsub.s32 %v1987, %v1989
      %v1991 = vrot.slane %v1977, %v1990
      %v1992 = vcombine.high %v1984, %v1984
      %v1993 = vcombine.high %v1991, %v1991
      %v1995 = vunpack.c.l.s4 1966171168
      %v1996 = vunpack.c.0.s8 %v1995
      %v1997 = vlaneseq
      %v1998 = vshrl.u32 %v1997, 7
      %v1999 = vsub.s32 %v1996, %v1998
      %v2000 = vrot.slane %v1932, %v1999
      %v2001 = vcombine.high %v2000, %v2000
      %v2003 = vunpack.c.l.s4 1966171168
      %v2004 = vunpack.c.0.s8 %v2003
      %v2005 = vlaneseq
      %v2006 = vshrl.u32 %v2005, 7
      %v2007 = vsub.s32 %v2004, %v2006
      %v2008 = vrot.slane %v2000, %v2007
      %v2010 = vunpack.c.l.s4 1966171168
      %v2011 = vunpack.c.0.s8 %v2010
      %v2012 = vlaneseq
      %v2013 = vshrl.u32 %v2012, 7
      %v2014 = vsub.s32 %v2011, %v2013
      %v2015 = vrot.slane %v2001, %v2014
      %v2016 = vcombine.high %v2008, %v2008
      %v2017 = vcombine.high %v2015, %v2015
      %v2019 = vunpack.c.l.s4 1966171168
      %v2020 = vunpack.c.0.s8 %v2019
      %v2021 = vlaneseq
      %v2022 = vshrl.u32 %v2021, 7
      %v2023 = vsub.s32 %v2020, %v2022
      %v2024 = vrot.slane %v1933, %v2023
      %v2025 = vcombine.high %v2024, %v2024
      %v2027 = vunpack.c.l.s4 1966171168
      %v2028 = vunpack.c.0.s8 %v2027
      %v2029 = vlaneseq
      %v2030 = vshrl.u32 %v2029, 7
      %v2031 = vsub.s32 %v2028, %v2030
      %v2032 = vrot.slane %v2024, %v2031
      %v2034 = vunpack.c.l.s4 1966171168
      %v2035 = vunpack.c.0.s8 %v2034
      %v2036 = vlaneseq
      %v2037 = vshrl.u32 %v2036, 7
      %v2038 = vsub.s32 %v2035, %v2037
      %v2039 = vrot.slane %v2025, %v2038
      %v2040 = vcombine.high %v2032, %v2032
      %v2041 = vcombine.high %v2039, %v2039
      %v2043 = vunpack.c.l.s4 1966171168
      %v2044 = vunpack.c.0.s8 %v2043
      %v2045 = vlaneseq
      %v2046 = vshrl.u32 %v2045, 7
      %v2047 = vsub.s32 %v2044, %v2046
      %v2048 = vrot.slane %v1934, %v2047
      %v2049 = vcombine.high %v2048, %v2048
      %v2051 = vunpack.c.l.s4 1966171168
      %v2052 = vunpack.c.0.s8 %v2051
      %v2053 = vlaneseq
      %v2054 = vshrl.u32 %v2053, 7
      %v2055 = vsub.s32 %v2052, %v2054
      %v2056 = vrot.slane %v2048, %v2055
      %v2058 = vunpack.c.l.s4 1966171168
      %v2059 = vunpack.c.0.s8 %v2058
      %v2060 = vlaneseq
      %v2061 = vshrl.u32 %v2060, 7
      %v2062 = vsub.s32 %v2059, %v2061
      %v2063 = vrot.slane %v2049, %v2062
      %v2064 = vcombine.high %v2056, %v2056
      %v2065 = vcombine.high %v2063, %v2063
      %v2067 = vunpack.c.l.s4 1966171168
      %v2068 = vunpack.c.0.s8 %v2067
      %v2069 = vlaneseq
      %v2070 = vshrl.u32 %v2069, 7
      %v2071 = vsub.s32 %v2068, %v2070
      %v2072 = vrot.slane %v1935, %v2071
      %v2073 = vcombine.high %v2072, %v2072
      %v2075 = vunpack.c.l.s4 1966171168
      %v2076 = vunpack.c.0.s8 %v2075
      %v2077 = vlaneseq
      %v2078 = vshrl.u32 %v2077, 7
      %v2079 = vsub.s32 %v2076, %v2078
      %v2080 = vrot.slane %v2072, %v2079
      %v2082 = vunpack.c.l.s4 1966171168
      %v2083 = vunpack.c.0.s8 %v2082
      %v2084 = vlaneseq
      %v2085 = vshrl.u32 %v2084, 7
      %v2086 = vsub.s32 %v2083, %v2085
      %v2087 = vrot.slane %v2073, %v2086
      %v2088 = vcombine.high %v2080, %v2080
      %v2089 = vcombine.high %v2087, %v2087
      %v2091 = vunpack.c.l.s4 1966171168
      %v2092 = vunpack.c.0.s8 %v2091
      %v2093 = vlaneseq
      %v2094 = vshrl.u32 %v2093, 7
      %v2095 = vsub.s32 %v2092, %v2094
      %v2096 = vrot.slane %v1936, %v2095
      %v2097 = vcombine.high %v2096, %v2096
      %v2099 = vunpack.c.l.s4 1966171168
      %v2100 = vunpack.c.0.s8 %v2099
      %v2101 = vlaneseq
      %v2102 = vshrl.u32 %v2101, 7
      %v2103 = vsub.s32 %v2100, %v2102
      %v2104 = vrot.slane %v2096, %v2103
      %v2106 = vunpack.c.l.s4 1966171168
      %v2107 = vunpack.c.0.s8 %v2106
      %v2108 = vlaneseq
      %v2109 = vshrl.u32 %v2108, 7
      %v2110 = vsub.s32 %v2107, %v2109
      %v2111 = vrot.slane %v2097, %v2110
      %v2112 = vcombine.high %v2104, %v2104
      %v2113 = vcombine.high %v2111, %v2111
      %v2115 = vunpack.c.l.s4 1966171168
      %v2116 = vunpack.c.0.s8 %v2115
      %v2117 = vlaneseq
      %v2118 = vshrl.u32 %v2117, 7
      %v2119 = vsub.s32 %v2116, %v2118
      %v2120 = vrot.slane %v1937, %v2119
      %v2121 = vcombine.high %v2120, %v2120
      %v2123 = vunpack.c.l.s4 1966171168
      %v2124 = vunpack.c.0.s8 %v2123
      %v2125 = vlaneseq
      %v2126 = vshrl.u32 %v2125, 7
      %v2127 = vsub.s32 %v2124, %v2126
      %v2128 = vrot.slane %v2120, %v2127
      %v2130 = vunpack.c.l.s4 1966171168
      %v2131 = vunpack.c.0.s8 %v2130
      %v2132 = vlaneseq
      %v2133 = vshrl.u32 %v2132, 7
      %v2134 = vsub.s32 %v2131, %v2133
      %v2135 = vrot.slane %v2121, %v2134
      %v2136 = vcombine.high %v2128, %v2128
      %v2137 = vcombine.high %v2135, %v2135
      %v2138 = vunpack.i.l.s16 %v1960
      %v2139 = vunpack.i.h.s16 %v1960
      %v2140 = vunpack.i.l.s16 %v1967
      %v2141 = vunpack.i.h.s16 %v1967
      %v2142 = vunpack.i.l.s16 %v1968
      %v2143 = vunpack.i.h.s16 %v1968
      %v2144 = vunpack.i.l.s16 %v1969
      %v2145 = vunpack.i.h.s16 %v1969
      %v2146 = vunpack.i.l.s16 %v1984
      %v2147 = vunpack.i.h.s16 %v1984
      %v2148 = vunpack.i.l.s16 %v1991
      %v2149 = vunpack.i.h.s16 %v1991
      %v2150 = vunpack.i.l.s16 %v1992
      %v2151 = vunpack.i.h.s16 %v1992
      %v2152 = vunpack.i.l.s16 %v1993
      %v2153 = vunpack.i.h.s16 %v1993
      %v2154 = vunpack.i.l.s16 %v2008
      %v2155 = vunpack.i.h.s16 %v2008
      %v2156 = vunpack.i.l.s16 %v2015
      %v2157 = vunpack.i.h.s16 %v2015
      %v2158 = vunpack.i.l.s16 %v2016
      %v2159 = vunpack.i.h.s16 %v2016
      %v2160 = vunpack.i.l.s16 %v2017
      %v2161 = vunpack.i.h.s16 %v2017
      %v2162 = vunpack.i.l.s16 %v2032
      %v2163 = vunpack.i.h.s16 %v2032
      %v2164 = vunpack.i.l.s16 %v2039
      %v2165 = vunpack.i.h.s16 %v2039
      %v2166 = vunpack.i.l.s16 %v2040
      %v2167 = vunpack.i.h.s16 %v2040
      %v2168 = vunpack.i.l.s16 %v2041
      %v2169 = vunpack.i.h.s16 %v2041
      %v2170 = vunpack.i.l.s16 %v2056
      %v2171 = vunpack.i.h.s16 %v2056
      %v2172 = vunpack.i.l.s16 %v2063
      %v2173 = vunpack.i.h.s16 %v2063
      %v2174 = vunpack.i.l.s16 %v2064
      %v2175 = vunpack.i.h.s16 %v2064
      %v2176 = vunpack.i.l.s16 %v2065
      %v2177 = vunpack.i.h.s16 %v2065
      %v2178 = vunpack.i.l.s16 %v2080
      %v2179 = vunpack.i.h.s16 %v2080
      %v2180 = vunpack.i.l.s16 %v2087
      %v2181 = vunpack.i.h.s16 %v2087
      %v2182 = vunpack.i.l.s16 %v2088
      %v2183 = vunpack.i.h.s16 %v2088
      %v2184 = vunpack.i.l.s16 %v2089
      %v2185 = vunpack.i.h.s16 %v2089
      %v2186 = vunpack.i.l.s16 %v2104
      %v2187 = vunpack.i.h.s16 %v2104
      %v2188 = vunpack.i.l.s16 %v2111
      %v2189 = vunpack.i.h.s16 %v2111
      %v2190 = vunpack.i.l.s16 %v2112
      %v2191 = vunpack.i.h.s16 %v2112
      %v2192 = vunpack.i.l.s16 %v2113
      %v2193 = vunpack.i.h.s16 %v2113
      %v2194 = vunpack.i.l.s16 %v2128
      %v2195 = vunpack.i.h.s16 %v2128
      %v2196 = vunpack.i.l.s16 %v2135
      %v2197 = vunpack.i.h.s16 %v2135
      %v2198 = vunpack.i.l.s16 %v2136
      %v2199 = vunpack.i.h.s16 %v2136
      %v2200 = vunpack.i.l.s16 %v2137
      %v2201 = vunpack.i.h.s16 %v2137
      %v2202 = vpack.i.b16 %v2138, %v2138
      %v2203 = vpack.i.b16 %v2139, %v2139
      %v2204 = vpack.i.b16 %v2140, %v2140
      %v2205 = vpack.i.b16 %v2141, %v2141
      %v2206 = vpack.i.b16 %v2142, %v2142
      %v2207 = vpack.i.b16 %v2143, %v2143
      %v2208 = vpack.i.b16 %v2144, %v2144
      %v2209 = vpack.i.b16 %v2145, %v2145
      %v2210 = vpack.i.b16 %v2146, %v2146
      %v2211 = vpack.i.b16 %v2147, %v2147
      %v2212 = vpack.i.b16 %v2148, %v2148
      %v2213 = vpack.i.b16 %v2149, %v2149
      %v2214 = vpack.i.b16 %v2150, %v2150
      %v2215 = vpack.i.b16 %v2151, %v2151
      %v2216 = vpack.i.b16 %v2152, %v2152
      %v2217 = vpack.i.b16 %v2153, %v2153
      %v2218 = vpack.i.b16 %v2154, %v2154
      %v2219 = vpack.i.b16 %v2155, %v2155
      %v2220 = vpack.i.b16 %v2156, %v2156
      %v2221 = vpack.i.b16 %v2157, %v2157
      %v2222 = vpack.i.b16 %v2158, %v2158
      %v2223 = vpack.i.b16 %v2159, %v2159
      %v2224 = vpack.i.b16 %v2160, %v2160
      %v2225 = vpack.i.b16 %v2161, %v2161
      %v2226 = vpack.i.b16 %v2162, %v2162
      %v2227 = vpack.i.b16 %v2163, %v2163
      %v2228 = vpack.i.b16 %v2164, %v2164
      %v2229 = vpack.i.b16 %v2165, %v2165
      %v2230 = vpack.i.b16 %v2166, %v2166
      %v2231 = vpack.i.b16 %v2167, %v2167
      %v2232 = vpack.i.b16 %v2168, %v2168
      %v2233 = vpack.i.b16 %v2169, %v2169
      %v2234 = vpack.i.b16 %v2170, %v2170
      %v2235 = vpack.i.b16 %v2171, %v2171
      %v2236 = vpack.i.b16 %v2172, %v2172
      %v2237 = vpack.i.b16 %v2173, %v2173
      %v2238 = vpack.i.b16 %v2174, %v2174
      %v2239 = vpack.i.b16 %v2175, %v2175
      %v2240 = vpack.i.b16 %v2176, %v2176
      %v2241 = vpack.i.b16 %v2177, %v2177
      %v2242 = vpack.i.b16 %v2178, %v2178
      %v2243 = vpack.i.b16 %v2179, %v2179
      %v2244 = vpack.i.b16 %v2180, %v2180
      %v2245 = vpack.i.b16 %v2181, %v2181
      %v2246 = vpack.i.b16 %v2182, %v2182
      %v2247 = vpack.i.b16 %v2183, %v2183
      %v2248 = vpack.i.b16 %v2184, %v2184
      %v2249 = vpack.i.b16 %v2185, %v2185
      %v2250 = vpack.i.b16 %v2186, %v2186
      %v2251 = vpack.i.b16 %v2187, %v2187
      %v2252 = vpack.i.b16 %v2188, %v2188
      %v2253 = vpack.i.b16 %v2189, %v2189
      %v2254 = vpack.i.b16 %v2190, %v2190
      %v2255 = vpack.i.b16 %v2191, %v2191
      %v2256 = vpack.i.b16 %v2192, %v2192
      %v2257 = vpack.i.b16 %v2193, %v2193
      %v2258 = vpack.i.b16 %v2194, %v2194
      %v2259 = vpack.i.b16 %v2195, %v2195
      %v2260 = vpack.i.b16 %v2196, %v2196
      %v2261 = vpack.i.b16 %v2197, %v2197
      %v2262 = vpack.i.b16 %v2198, %v2198
      %v2263 = vpack.i.b16 %v2199, %v2199
      %v2264 = vpack.i.b16 %v2200, %v2200
      %v2265 = vpack.i.b16 %v2201, %v2201
      %v2266 = vlaneseq
      %v2267 = vshrl.u32 %v2266, 7
      %v2268 = vsub.s32 0, %v2267
      %v2269 = vrot.slane %v2202, %v2268
      %v2270 = vlaneseq
      %v2271 = vshrl.u32 %v2270, 7
      %v2272 = vsub.s32 0, %v2271
      %v2273 = vrot.slane %v2203, %v2272
      %v2274 = vlaneseq
      %v2275 = vshrl.u32 %v2274, 7
      %v2276 = vsub.s32 0, %v2275
      %v2277 = vrot.slane %v2204, %v2276
      %v2278 = vlaneseq
      %v2279 = vshrl.u32 %v2278, 7
      %v2280 = vsub.s32 0, %v2279
      %v2281 = vrot.slane %v2205, %v2280
      %v2282 = vlaneseq
      %v2283 = vshrl.u32 %v2282, 7
      %v2284 = vsub.s32 0, %v2283
      %v2285 = vrot.slane %v2206, %v2284
      %v2286 = vlaneseq
      %v2287 = vshrl.u32 %v2286, 7
      %v2288 = vsub.s32 0, %v2287
      %v2289 = vrot.slane %v2207, %v2288
      %v2290 = vlaneseq
      %v2291 = vshrl.u32 %v2290, 7
      %v2292 = vsub.s32 0, %v2291
      %v2293 = vrot.slane %v2208, %v2292
      %v2294 = vlaneseq
      %v2295 = vshrl.u32 %v2294, 7
      %v2296 = vsub.s32 0, %v2295
      %v2297 = vrot.slane %v2209, %v2296
      %v2298 = vlaneseq
      %v2299 = vshrl.u32 %v2298, 7
      %v2300 = vsub.s32 0, %v2299
      %v2301 = vrot.slane %v2210, %v2300
      %v2302 = vlaneseq
      %v2303 = vshrl.u32 %v2302, 7
      %v2304 = vsub.s32 0, %v2303
      %v2305 = vrot.slane %v2211, %v2304
      %v2306 = vlaneseq
      %v2307 = vshrl.u32 %v2306, 7
      %v2308 = vsub.s32 0, %v2307
      %v2309 = vrot.slane %v2212, %v2308
      %v2310 = vlaneseq
      %v2311 = vshrl.u32 %v2310, 7
      %v2312 = vsub.s32 0, %v2311
      %v2313 = vrot.slane %v2213, %v2312
      %v2314 = vlaneseq
      %v2315 = vshrl.u32 %v2314, 7
      %v2316 = vsub.s32 0, %v2315
      %v2317 = vrot.slane %v2214, %v2316
      %v2318 = vlaneseq
      %v2319 = vshrl.u32 %v2318, 7
      %v2320 = vsub.s32 0, %v2319
      %v2321 = vrot.slane %v2215, %v2320
      %v2322 = vlaneseq
      %v2323 = vshrl.u32 %v2322, 7
      %v2324 = vsub.s32 0, %v2323
      %v2325 = vrot.slane %v2216, %v2324
      %v2326 = vlaneseq
      %v2327 = vshrl.u32 %v2326, 7
      %v2328 = vsub.s32 0, %v2327
      %v2329 = vrot.slane %v2217, %v2328
      %v2330 = vlaneseq
      %v2331 = vshrl.u32 %v2330, 7
      %v2332 = vsub.s32 0, %v2331
      %v2333 = vrot.slane %v2218, %v2332
      %v2334 = vlaneseq
      %v2335 = vshrl.u32 %v2334, 7
      %v2336 = vsub.s32 0, %v2335
      %v2337 = vrot.slane %v2219, %v2336
      %v2338 = vlaneseq
      %v2339 = vshrl.u32 %v2338, 7
      %v2340 = vsub.s32 0, %v2339
      %v2341 = vrot.slane %v2220, %v2340
      %v2342 = vlaneseq
      %v2343 = vshrl.u32 %v2342, 7
      %v2344 = vsub.s32 0, %v2343
      %v2345 = vrot.slane %v2221, %v2344
      %v2346 = vlaneseq
      %v2347 = vshrl.u32 %v2346, 7
      %v2348 = vsub.s32 0, %v2347
      %v2349 = vrot.slane %v2222, %v2348
      %v2350 = vlaneseq
      %v2351 = vshrl.u32 %v2350, 7
      %v2352 = vsub.s32 0, %v2351
      %v2353 = vrot.slane %v2223, %v2352
      %v2354 = vlaneseq
      %v2355 = vshrl.u32 %v2354, 7
      %v2356 = vsub.s32 0, %v2355
      %v2357 = vrot.slane %v2224, %v2356
      %v2358 = vlaneseq
      %v2359 = vshrl.u32 %v2358, 7
      %v2360 = vsub.s32 0, %v2359
      %v2361 = vrot.slane %v2225, %v2360
      %v2362 = vlaneseq
      %v2363 = vshrl.u32 %v2362, 7
      %v2364 = vsub.s32 0, %v2363
      %v2365 = vrot.slane %v2226, %v2364
      %v2366 = vlaneseq
      %v2367 = vshrl.u32 %v2366, 7
      %v2368 = vsub.s32 0, %v2367
      %v2369 = vrot.slane %v2227, %v2368
      %v2370 = vlaneseq
      %v2371 = vshrl.u32 %v2370, 7
      %v2372 = vsub.s32 0, %v2371
      %v2373 = vrot.slane %v2228, %v2372
      %v2374 = vlaneseq
      %v2375 = vshrl.u32 %v2374, 7
      %v2376 = vsub.s32 0, %v2375
      %v2377 = vrot.slane %v2229, %v2376
      %v2378 = vlaneseq
      %v2379 = vshrl.u32 %v2378, 7
      %v2380 = vsub.s32 0, %v2379
      %v2381 = vrot.slane %v2230, %v2380
      %v2382 = vlaneseq
      %v2383 = vshrl.u32 %v2382, 7
      %v2384 = vsub.s32 0, %v2383
      %v2385 = vrot.slane %v2231, %v2384
      %v2386 = vlaneseq
      %v2387 = vshrl.u32 %v2386, 7
      %v2388 = vsub.s32 0, %v2387
      %v2389 = vrot.slane %v2232, %v2388
      %v2390 = vlaneseq
      %v2391 = vshrl.u32 %v2390, 7
      %v2392 = vsub.s32 0, %v2391
      %v2393 = vrot.slane %v2233, %v2392
      %v2394 = vlaneseq
      %v2395 = vshrl.u32 %v2394, 7
      %v2396 = vsub.s32 0, %v2395
      %v2397 = vrot.slane %v2234, %v2396
      %v2398 = vlaneseq
      %v2399 = vshrl.u32 %v2398, 7
      %v2400 = vsub.s32 0, %v2399
      %v2401 = vrot.slane %v2235, %v2400
      %v2402 = vlaneseq
      %v2403 = vshrl.u32 %v2402, 7
      %v2404 = vsub.s32 0, %v2403
      %v2405 = vrot.slane %v2236, %v2404
      %v2406 = vlaneseq
      %v2407 = vshrl.u32 %v2406, 7
      %v2408 = vsub.s32 0, %v2407
      %v2409 = vrot.slane %v2237, %v2408
      %v2410 = vlaneseq
      %v2411 = vshrl.u32 %v2410, 7
      %v2412 = vsub.s32 0, %v2411
      %v2413 = vrot.slane %v2238, %v2412
      %v2414 = vlaneseq
      %v2415 = vshrl.u32 %v2414, 7
      %v2416 = vsub.s32 0, %v2415
      %v2417 = vrot.slane %v2239, %v2416
      %v2418 = vlaneseq
      %v2419 = vshrl.u32 %v2418, 7
      %v2420 = vsub.s32 0, %v2419
      %v2421 = vrot.slane %v2240, %v2420
      %v2422 = vlaneseq
      %v2423 = vshrl.u32 %v2422, 7
      %v2424 = vsub.s32 0, %v2423
      %v2425 = vrot.slane %v2241, %v2424
      %v2426 = vlaneseq
      %v2427 = vshrl.u32 %v2426, 7
      %v2428 = vsub.s32 0, %v2427
      %v2429 = vrot.slane %v2242, %v2428
      %v2430 = vlaneseq
      %v2431 = vshrl.u32 %v2430, 7
      %v2432 = vsub.s32 0, %v2431
      %v2433 = vrot.slane %v2243, %v2432
      %v2434 = vlaneseq
      %v2435 = vshrl.u32 %v2434, 7
      %v2436 = vsub.s32 0, %v2435
      %v2437 = vrot.slane %v2244, %v2436
      %v2438 = vlaneseq
      %v2439 = vshrl.u32 %v2438, 7
      %v2440 = vsub.s32 0, %v2439
      %v2441 = vrot.slane %v2245, %v2440
      %v2442 = vlaneseq
      %v2443 = vshrl.u32 %v2442, 7
      %v2444 = vsub.s32 0, %v2443
      %v2445 = vrot.slane %v2246, %v2444
      %v2446 = vlaneseq
      %v2447 = vshrl.u32 %v2446, 7
      %v2448 = vsub.s32 0, %v2447
      %v2449 = vrot.slane %v2247, %v2448
      %v2450 = vlaneseq
      %v2451 = vshrl.u32 %v2450, 7
      %v2452 = vsub.s32 0, %v2451
      %v2453 = vrot.slane %v2248, %v2452
      %v2454 = vlaneseq
      %v2455 = vshrl.u32 %v2454, 7
      %v2456 = vsub.s32 0, %v2455
      %v2457 = vrot.slane %v2249, %v2456
      %v2458 = vlaneseq
      %v2459 = vshrl.u32 %v2458, 7
      %v2460 = vsub.s32 0, %v2459
      %v2461 = vrot.slane %v2250, %v2460
      %v2462 = vlaneseq
      %v2463 = vshrl.u32 %v2462, 7
      %v2464 = vsub.s32 0, %v2463
      %v2465 = vrot.slane %v2251, %v2464
      %v2466 = vlaneseq
      %v2467 = vshrl.u32 %v2466, 7
      %v2468 = vsub.s32 0, %v2467
      %v2469 = vrot.slane %v2252, %v2468
      %v2470 = vlaneseq
      %v2471 = vshrl.u32 %v2470, 7
      %v2472 = vsub.s32 0, %v2471
      %v2473 = vrot.slane %v2253, %v2472
      %v2474 = vlaneseq
      %v2475 = vshrl.u32 %v2474, 7
      %v2476 = vsub.s32 0, %v2475
      %v2477 = vrot.slane %v2254, %v2476
      %v2478 = vlaneseq
      %v2479 = vshrl.u32 %v2478, 7
      %v2480 = vsub.s32 0, %v2479
      %v2481 = vrot.slane %v2255, %v2480
      %v2482 = vlaneseq
      %v2483 = vshrl.u32 %v2482, 7
      %v2484 = vsub.s32 0, %v2483
      %v2485 = vrot.slane %v2256, %v2484
      %v2486 = vlaneseq
      %v2487 = vshrl.u32 %v2486, 7
      %v2488 = vsub.s32 0, %v2487
      %v2489 = vrot.slane %v2257, %v2488
      %v2490 = vlaneseq
      %v2491 = vshrl.u32 %v2490, 7
      %v2492 = vsub.s32 0, %v2491
      %v2493 = vrot.slane %v2258, %v2492
      %v2494 = vlaneseq
      %v2495 = vshrl.u32 %v2494, 7
      %v2496 = vsub.s32 0, %v2495
      %v2497 = vrot.slane %v2259, %v2496
      %v2498 = vlaneseq
      %v2499 = vshrl.u32 %v2498, 7
      %v2500 = vsub.s32 0, %v2499
      %v2501 = vrot.slane %v2260, %v2500
      %v2502 = vlaneseq
      %v2503 = vshrl.u32 %v2502, 7
      %v2504 = vsub.s32 0, %v2503
      %v2505 = vrot.slane %v2261, %v2504
      %v2506 = vlaneseq
      %v2507 = vshrl.u32 %v2506, 7
      %v2508 = vsub.s32 0, %v2507
      %v2509 = vrot.slane %v2262, %v2508
      %v2510 = vlaneseq
      %v2511 = vshrl.u32 %v2510, 7
      %v2512 = vsub.s32 0, %v2511
      %v2513 = vrot.slane %v2263, %v2512
      %v2514 = vlaneseq
      %v2515 = vshrl.u32 %v2514, 7
      %v2516 = vsub.s32 0, %v2515
      %v2517 = vrot.slane %v2264, %v2516
      %v2518 = vlaneseq
      %v2519 = vshrl.u32 %v2518, 7
      %v2520 = vsub.s32 0, %v2519
      %v2521 = vrot.slane %v2265, %v2520
      %v2523 = vpack.i.b16 %v2269, %v2269
      %v2525 = vlaneseq
      %v2526 = vshrl.u32 %v2525, 7
      %v2527 = vsub.s32 0, %v2526
      %v2528 = vrot.slane %v2523, %v2527
      %v2530 = vpack.i.b16 %v2273, %v2273
      %v2532 = vlaneseq
      %v2533 = vshrl.u32 %v2532, 7
      %v2534 = vsub.s32 0, %v2533
      %v2535 = vrot.slane %v2530, %v2534
      %v2537 = vpack.i.b16 %v2277, %v2277
      %v2539 = vlaneseq
      %v2540 = vshrl.u32 %v2539, 7
      %v2541 = vsub.s32 0, %v2540
      %v2542 = vrot.slane %v2537, %v2541
      %v2544 = vpack.i.b16 %v2281, %v2281
      %v2546 = vlaneseq
      %v2547 = vshrl.u32 %v2546, 7
      %v2548 = vsub.s32 0, %v2547
      %v2549 = vrot.slane %v2544, %v2548
      %v2551 = vpack.i.b16 %v2285, %v2285
      %v2553 = vlaneseq
      %v2554 = vshrl.u32 %v2553, 7
      %v2555 = vsub.s32 0, %v2554
      %v2556 = vrot.slane %v2551, %v2555
      %v2558 = vpack.i.b16 %v2289, %v2289
      %v2560 = vlaneseq
      %v2561 = vshrl.u32 %v2560, 7
      %v2562 = vsub.s32 0, %v2561
      %v2563 = vrot.slane %v2558, %v2562
      %v2565 = vpack.i.b16 %v2293, %v2293
      %v2567 = vlaneseq
      %v2568 = vshrl.u32 %v2567, 7
      %v2569 = vsub.s32 0, %v2568
      %v2570 = vrot.slane %v2565, %v2569
      %v2572 = vpack.i.b16 %v2297, %v2297
      %v2574 = vlaneseq
      %v2575 = vshrl.u32 %v2574, 7
      %v2576 = vsub.s32 0, %v2575
      %v2577 = vrot.slane %v2572, %v2576
      %v2579 = vpack.i.b16 %v2301, %v2301
      %v2581 = vlaneseq
      %v2582 = vshrl.u32 %v2581, 7
      %v2583 = vsub.s32 0, %v2582
      %v2584 = vrot.slane %v2579, %v2583
      %v2586 = vpack.i.b16 %v2305, %v2305
      %v2588 = vlaneseq
      %v2589 = vshrl.u32 %v2588, 7
      %v2590 = vsub.s32 0, %v2589
      %v2591 = vrot.slane %v2586, %v2590
      %v2593 = vpack.i.b16 %v2309, %v2309
      %v2595 = vlaneseq
      %v2596 = vshrl.u32 %v2595, 7
      %v2597 = vsub.s32 0, %v2596
      %v2598 = vrot.slane %v2593, %v2597
      %v2600 = vpack.i.b16 %v2313, %v2313
      %v2602 = vlaneseq
      %v2603 = vshrl.u32 %v2602, 7
      %v2604 = vsub.s32 0, %v2603
      %v2605 = vrot.slane %v2600, %v2604
      %v2607 = vpack.i.b16 %v2317, %v2317
      %v2609 = vlaneseq
      %v2610 = vshrl.u32 %v2609, 7
      %v2611 = vsub.s32 0, %v2610
      %v2612 = vrot.slane %v2607, %v2611
      %v2614 = vpack.i.b16 %v2321, %v2321
      %v2616 = vlaneseq
      %v2617 = vshrl.u32 %v2616, 7
      %v2618 = vsub.s32 0, %v2617
      %v2619 = vrot.slane %v2614, %v2618
      %v2621 = vpack.i.b16 %v2325, %v2325
      %v2623 = vlaneseq
      %v2624 = vshrl.u32 %v2623, 7
      %v2625 = vsub.s32 0, %v2624
      %v2626 = vrot.slane %v2621, %v2625
      %v2628 = vpack.i.b16 %v2329, %v2329
      %v2630 = vlaneseq
      %v2631 = vshrl.u32 %v2630, 7
      %v2632 = vsub.s32 0, %v2631
      %v2633 = vrot.slane %v2628, %v2632
      %v2635 = vpack.i.b16 %v2333, %v2333
      %v2637 = vlaneseq
      %v2638 = vshrl.u32 %v2637, 7
      %v2639 = vsub.s32 0, %v2638
      %v2640 = vrot.slane %v2635, %v2639
      %v2642 = vpack.i.b16 %v2337, %v2337
      %v2644 = vlaneseq
      %v2645 = vshrl.u32 %v2644, 7
      %v2646 = vsub.s32 0, %v2645
      %v2647 = vrot.slane %v2642, %v2646
      %v2649 = vpack.i.b16 %v2341, %v2341
      %v2651 = vlaneseq
      %v2652 = vshrl.u32 %v2651, 7
      %v2653 = vsub.s32 0, %v2652
      %v2654 = vrot.slane %v2649, %v2653
      %v2656 = vpack.i.b16 %v2345, %v2345
      %v2658 = vlaneseq
      %v2659 = vshrl.u32 %v2658, 7
      %v2660 = vsub.s32 0, %v2659
      %v2661 = vrot.slane %v2656, %v2660
      %v2663 = vpack.i.b16 %v2349, %v2349
      %v2665 = vlaneseq
      %v2666 = vshrl.u32 %v2665, 7
      %v2667 = vsub.s32 0, %v2666
      %v2668 = vrot.slane %v2663, %v2667
      %v2670 = vpack.i.b16 %v2353, %v2353
      %v2672 = vlaneseq
      %v2673 = vshrl.u32 %v2672, 7
      %v2674 = vsub.s32 0, %v2673
      %v2675 = vrot.slane %v2670, %v2674
      %v2677 = vpack.i.b16 %v2357, %v2357
      %v2679 = vlaneseq
      %v2680 = vshrl.u32 %v2679, 7
      %v2681 = vsub.s32 0, %v2680
      %v2682 = vrot.slane %v2677, %v2681
      %v2684 = vpack.i.b16 %v2361, %v2361
      %v2686 = vlaneseq
      %v2687 = vshrl.u32 %v2686, 7
      %v2688 = vsub.s32 0, %v2687
      %v2689 = vrot.slane %v2684, %v2688
      %v2691 = vpack.i.b16 %v2365, %v2365
      %v2693 = vlaneseq
      %v2694 = vshrl.u32 %v2693, 7
      %v2695 = vsub.s32 0, %v2694
      %v2696 = vrot.slane %v2691, %v2695
      %v2698 = vpack.i.b16 %v2369, %v2369
      %v2700 = vlaneseq
      %v2701 = vshrl.u32 %v2700, 7
      %v2702 = vsub.s32 0, %v2701
      %v2703 = vrot.slane %v2698, %v2702
      %v2705 = vpack.i.b16 %v2373, %v2373
      %v2707 = vlaneseq
      %v2708 = vshrl.u32 %v2707, 7
      %v2709 = vsub.s32 0, %v2708
      %v2710 = vrot.slane %v2705, %v2709
      %v2712 = vpack.i.b16 %v2377, %v2377
      %v2714 = vlaneseq
      %v2715 = vshrl.u32 %v2714, 7
      %v2716 = vsub.s32 0, %v2715
      %v2717 = vrot.slane %v2712, %v2716
      %v2719 = vpack.i.b16 %v2381, %v2381
      %v2721 = vlaneseq
      %v2722 = vshrl.u32 %v2721, 7
      %v2723 = vsub.s32 0, %v2722
      %v2724 = vrot.slane %v2719, %v2723
      %v2726 = vpack.i.b16 %v2385, %v2385
      %v2728 = vlaneseq
      %v2729 = vshrl.u32 %v2728, 7
      %v2730 = vsub.s32 0, %v2729
      %v2731 = vrot.slane %v2726, %v2730
      %v2733 = vpack.i.b16 %v2389, %v2389
      %v2735 = vlaneseq
      %v2736 = vshrl.u32 %v2735, 7
      %v2737 = vsub.s32 0, %v2736
      %v2738 = vrot.slane %v2733, %v2737
      %v2740 = vpack.i.b16 %v2393, %v2393
      %v2742 = vlaneseq
      %v2743 = vshrl.u32 %v2742, 7
      %v2744 = vsub.s32 0, %v2743
      %v2745 = vrot.slane %v2740, %v2744
      %v2747 = vpack.i.b16 %v2397, %v2397
      %v2749 = vlaneseq
      %v2750 = vshrl.u32 %v2749, 7
      %v2751 = vsub.s32 0, %v2750
      %v2752 = vrot.slane %v2747, %v2751
      %v2754 = vpack.i.b16 %v2401, %v2401
      %v2756 = vlaneseq
      %v2757 = vshrl.u32 %v2756, 7
      %v2758 = vsub.s32 0, %v2757
      %v2759 = vrot.slane %v2754, %v2758
      %v2761 = vpack.i.b16 %v2405, %v2405
      %v2763 = vlaneseq
      %v2764 = vshrl.u32 %v2763, 7
      %v2765 = vsub.s32 0, %v2764
      %v2766 = vrot.slane %v2761, %v2765
      %v2768 = vpack.i.b16 %v2409, %v2409
      %v2770 = vlaneseq
      %v2771 = vshrl.u32 %v2770, 7
      %v2772 = vsub.s32 0, %v2771
      %v2773 = vrot.slane %v2768, %v2772
      %v2775 = vpack.i.b16 %v2413, %v2413
      %v2777 = vlaneseq
      %v2778 = vshrl.u32 %v2777, 7
      %v2779 = vsub.s32 0, %v2778
      %v2780 = vrot.slane %v2775, %v2779
      %v2782 = vpack.i.b16 %v2417, %v2417
      %v2784 = vlaneseq
      %v2785 = vshrl.u32 %v2784, 7
      %v2786 = vsub.s32 0, %v2785
      %v2787 = vrot.slane %v2782, %v2786
      %v2789 = vpack.i.b16 %v2421, %v2421
      %v2791 = vlaneseq
      %v2792 = vshrl.u32 %v2791, 7
      %v2793 = vsub.s32 0, %v2792
      %v2794 = vrot.slane %v2789, %v2793
      %v2796 = vpack.i.b16 %v2425, %v2425
      %v2798 = vlaneseq
      %v2799 = vshrl.u32 %v2798, 7
      %v2800 = vsub.s32 0, %v2799
      %v2801 = vrot.slane %v2796, %v2800
      %v2803 = vpack.i.b16 %v2429, %v2429
      %v2805 = vlaneseq
      %v2806 = vshrl.u32 %v2805, 7
      %v2807 = vsub.s32 0, %v2806
      %v2808 = vrot.slane %v2803, %v2807
      %v2810 = vpack.i.b16 %v2433, %v2433
      %v2812 = vlaneseq
      %v2813 = vshrl.u32 %v2812, 7
      %v2814 = vsub.s32 0, %v2813
      %v2815 = vrot.slane %v2810, %v2814
      %v2817 = vpack.i.b16 %v2437, %v2437
      %v2819 = vlaneseq
      %v2820 = vshrl.u32 %v2819, 7
      %v2821 = vsub.s32 0, %v2820
      %v2822 = vrot.slane %v2817, %v2821
      %v2824 = vpack.i.b16 %v2441, %v2441
      %v2826 = vlaneseq
      %v2827 = vshrl.u32 %v2826, 7
      %v2828 = vsub.s32 0, %v2827
      %v2829 = vrot.slane %v2824, %v2828
      %v2831 = vpack.i.b16 %v2445, %v2445
      %v2833 = vlaneseq
      %v2834 = vshrl.u32 %v2833, 7
      %v2835 = vsub.s32 0, %v2834
      %v2836 = vrot.slane %v2831, %v2835
      %v2838 = vpack.i.b16 %v2449, %v2449
      %v2840 = vlaneseq
      %v2841 = vshrl.u32 %v2840, 7
      %v2842 = vsub.s32 0, %v2841
      %v2843 = vrot.slane %v2838, %v2842
      %v2845 = vpack.i.b16 %v2453, %v2453
      %v2847 = vlaneseq
      %v2848 = vshrl.u32 %v2847, 7
      %v2849 = vsub.s32 0, %v2848
      %v2850 = vrot.slane %v2845, %v2849
      %v2852 = vpack.i.b16 %v2457, %v2457
      %v2854 = vlaneseq
      %v2855 = vshrl.u32 %v2854, 7
      %v2856 = vsub.s32 0, %v2855
      %v2857 = vrot.slane %v2852, %v2856
      %v2859 = vpack.i.b16 %v2461, %v2461
      %v2861 = vlaneseq
      %v2862 = vshrl.u32 %v2861, 7
      %v2863 = vsub.s32 0, %v2862
      %v2864 = vrot.slane %v2859, %v2863
      %v2866 = vpack.i.b16 %v2465, %v2465
      %v2868 = vlaneseq
      %v2869 = vshrl.u32 %v2868, 7
      %v2870 = vsub.s32 0, %v2869
      %v2871 = vrot.slane %v2866, %v2870
      %v2873 = vpack.i.b16 %v2469, %v2469
      %v2875 = vlaneseq
      %v2876 = vshrl.u32 %v2875, 7
      %v2877 = vsub.s32 0, %v2876
      %v2878 = vrot.slane %v2873, %v2877
      %v2880 = vpack.i.b16 %v2473, %v2473
      %v2882 = vlaneseq
      %v2883 = vshrl.u32 %v2882, 7
      %v2884 = vsub.s32 0, %v2883
      %v2885 = vrot.slane %v2880, %v2884
      %v2887 = vpack.i.b16 %v2477, %v2477
      %v2889 = vlaneseq
      %v2890 = vshrl.u32 %v2889, 7
      %v2891 = vsub.s32 0, %v2890
      %v2892 = vrot.slane %v2887, %v2891
      %v2894 = vpack.i.b16 %v2481, %v2481
      %v2896 = vlaneseq
      %v2897 = vshrl.u32 %v2896, 7
      %v2898 = vsub.s32 0, %v2897
      %v2899 = vrot.slane %v2894, %v2898
      %v2901 = vpack.i.b16 %v2485, %v2485
      %v2903 = vlaneseq
      %v2904 = vshrl.u32 %v2903, 7
      %v2905 = vsub.s32 0, %v2904
      %v2906 = vrot.slane %v2901, %v2905
      %v2908 = vpack.i.b16 %v2489, %v2489
      %v2910 = vlaneseq
      %v2911 = vshrl.u32 %v2910, 7
      %v2912 = vsub.s32 0, %v2911
      %v2913 = vrot.slane %v2908, %v2912
      %v2915 = vpack.i.b16 %v2493, %v2493
      %v2917 = vlaneseq
      %v2918 = vshrl.u32 %v2917, 7
      %v2919 = vsub.s32 0, %v2918
      %v2920 = vrot.slane %v2915, %v2919
      %v2922 = vpack.i.b16 %v2497, %v2497
      %v2924 = vlaneseq
      %v2925 = vshrl.u32 %v2924, 7
      %v2926 = vsub.s32 0, %v2925
      %v2927 = vrot.slane %v2922, %v2926
      %v2929 = vpack.i.b16 %v2501, %v2501
      %v2931 = vlaneseq
      %v2932 = vshrl.u32 %v2931, 7
      %v2933 = vsub.s32 0, %v2932
      %v2934 = vrot.slane %v2929, %v2933
      %v2936 = vpack.i.b16 %v2505, %v2505
      %v2938 = vlaneseq
      %v2939 = vshrl.u32 %v2938, 7
      %v2940 = vsub.s32 0, %v2939
      %v2941 = vrot.slane %v2936, %v2940
      %v2943 = vpack.i.b16 %v2509, %v2509
      %v2945 = vlaneseq
      %v2946 = vshrl.u32 %v2945, 7
      %v2947 = vsub.s32 0, %v2946
      %v2948 = vrot.slane %v2943, %v2947
      %v2950 = vpack.i.b16 %v2513, %v2513
      %v2952 = vlaneseq
      %v2953 = vshrl.u32 %v2952, 7
      %v2954 = vsub.s32 0, %v2953
      %v2955 = vrot.slane %v2950, %v2954
      %v2957 = vpack.i.b16 %v2517, %v2517
      %v2959 = vlaneseq
      %v2960 = vshrl.u32 %v2959, 7
      %v2961 = vsub.s32 0, %v2960
      %v2962 = vrot.slane %v2957, %v2961
      %v2964 = vpack.i.b16 %v2521, %v2521
      %v2966 = vlaneseq
      %v2967 = vshrl.u32 %v2966, 7
      %v2968 = vsub.s32 0, %v2967
      %v2969 = vrot.slane %v2964, %v2968
      %v2979 = vunpack.c.l.s4 1966171168
      %v2980 = vunpack.c.0.s8 %v2979
      %v2981 = vlaneseq
      %v2982 = vshrl.u32 %v2981, 7
      %v2983 = vsub.s32 %v2980, %v2982
      %v2984 = vrot.slane %v2528, %v2983
      %v2986 = vunpack.c.l.s4 1966171168
      %v2987 = vunpack.c.0.s8 %v2986
      %v2988 = vlaneseq
      %v2989 = vshrl.u32 %v2988, 7
      %v2990 = vsub.s32 %v2987, %v2989
      %v2991 = vrot.slane %v2984, %v2990
      %v2993 = vunpack.c.l.s4 1966171168
      %v2994 = vunpack.c.0.s8 %v2993
      %v2995 = vlaneseq
      %v2996 = vshrl.u32 %v2995, 7
      %v2997 = vsub.s32 %v2994, %v2996
      %v2998 = vrot.slane %v2584, %v2997
      %v3000 = vunpack.c.l.s4 1966171168
      %v3001 = vunpack.c.0.s8 %v3000
      %v3002 = vlaneseq
      %v3003 = vshrl.u32 %v3002, 7
      %v3004 = vsub.s32 %v3001, %v3003
      %v3005 = vrot.slane %v2998, %v3004
      %v3007 = vunpack.c.l.s4 1966171168
      %v3008 = vunpack.c.0.s8 %v3007
      %v3009 = vlaneseq
      %v3010 = vshrl.u32 %v3009, 7
      %v3011 = vsub.s32 %v3008, %v3010
      %v3012 = vrot.slane %v2640, %v3011
      %v3014 = vunpack.c.l.s4 1966171168
      %v3015 = vunpack.c.0.s8 %v3014
      %v3016 = vlaneseq
      %v3017 = vshrl.u32 %v3016, 7
      %v3018 = vsub.s32 %v3015, %v3017
      %v3019 = vrot.slane %v3012, %v3018
      %v3021 = vunpack.c.l.s4 1966171168
      %v3022 = vunpack.c.0.s8 %v3021
      %v3023 = vlaneseq
      %v3024 = vshrl.u32 %v3023, 7
      %v3025 = vsub.s32 %v3022, %v3024
      %v3026 = vrot.slane %v2696, %v3025
      %v3028 = vunpack.c.l.s4 1966171168
      %v3029 = vunpack.c.0.s8 %v3028
      %v3030 = vlaneseq
      %v3031 = vshrl.u32 %v3030, 7
      %v3032 = vsub.s32 %v3029, %v3031
      %v3033 = vrot.slane %v3026, %v3032
      %v3035 = vunpack.c.l.s4 1966171168
      %v3036 = vunpack.c.0.s8 %v3035
      %v3037 = vlaneseq
      %v3038 = vshrl.u32 %v3037, 7
      %v3039 = vsub.s32 %v3036, %v3038
      %v3040 = vrot.slane %v2752, %v3039
      %v3042 = vunpack.c.l.s4 1966171168
      %v3043 = vunpack.c.0.s8 %v3042
      %v3044 = vlaneseq
      %v3045 = vshrl.u32 %v3044, 7
      %v3046 = vsub.s32 %v3043, %v3045
      %v3047 = vrot.slane %v3040, %v3046
      %v3049 = vunpack.c.l.s4 1966171168
      %v3050 = vunpack.c.0.s8 %v3049
      %v3051 = vlaneseq
      %v3052 = vshrl.u32 %v3051, 7
      %v3053 = vsub.s32 %v3050, %v3052
      %v3054 = vrot.slane %v2808, %v3053
      %v3056 = vunpack.c.l.s4 1966171168
      %v3057 = vunpack.c.0.s8 %v3056
      %v3058 = vlaneseq
      %v3059 = vshrl.u32 %v3058, 7
      %v3060 = vsub.s32 %v3057, %v3059
      %v3061 = vrot.slane %v3054, %v3060
      %v3063 = vunpack.c.l.s4 1966171168
      %v3064 = vunpack.c.0.s8 %v3063
      %v3065 = vlaneseq
      %v3066 = vshrl.u32 %v3065, 7
      %v3067 = vsub.s32 %v3064, %v3066
      %v3068 = vrot.slane %v2864, %v3067
      %v3070 = vunpack.c.l.s4 1966171168
      %v3071 = vunpack.c.0.s8 %v3070
      %v3072 = vlaneseq
      %v3073 = vshrl.u32 %v3072, 7
      %v3074 = vsub.s32 %v3071, %v3073
      %v3075 = vrot.slane %v3068, %v3074
      %v3077 = vunpack.c.l.s4 1966171168
      %v3078 = vunpack.c.0.s8 %v3077
      %v3079 = vlaneseq
      %v3080 = vshrl.u32 %v3079, 7
      %v3081 = vsub.s32 %v3078, %v3080
      %v3082 = vrot.slane %v2920, %v3081
      %v3084 = vunpack.c.l.s4 1966171168
      %v3085 = vunpack.c.0.s8 %v3084
      %v3086 = vlaneseq
      %v3087 = vshrl.u32 %v3086, 7
      %v3088 = vsub.s32 %v3085, %v3087
      %v3089 = vrot.slane %v3082, %v3088
      %v3091 = vshrl.u32 %v2991, 16
      %v3094 = vshrl.u32 %v3005, 16
      %v3097 = vshrl.u32 %v3019, 16
      %v3100 = vshrl.u32 %v3033, 16
      %v3103 = vshrl.u32 %v3047, 16
      %v3106 = vshrl.u32 %v3061, 16
      %v3109 = vshrl.u32 %v3075, 16
      %v3112 = vshrl.u32 %v3089, 16
      %v3178 = vcombine.low %v2528, %v2535
      %v3179 = vcombine.low %v2542, %v2549
      %v3180 = vcombine.low %v2556, %v2563
      %v3181 = vcombine.low %v2570, %v2577
      %v3183 = vunpack.c.l.s4 1966171168
      %v3184 = vunpack.c.0.s8 %v3183
      %v3185 = vlaneseq
      %v3186 = vshrl.u32 %v3185, 7
      %v3187 = vsub.s32 %v3184, %v3186
      %v3188 = vrot.slane %v3178, %v3187
      %v3190 = vunpack.c.l.s4 1966171168
      %v3191 = vunpack.c.0.s8 %v3190
      %v3192 = vlaneseq
      %v3193 = vshrl.u32 %v3192, 7
      %v3194 = vsub.s32 %v3191, %v3193
      %v3195 = vrot.slane %v3179, %v3194
      %v3197 = vunpack.c.l.s4 1966171168
      %v3198 = vunpack.c.0.s8 %v3197
      %v3199 = vlaneseq
      %v3200 = vshrl.u32 %v3199, 7
      %v3201 = vsub.s32 %v3198, %v3200
      %v3202 = vrot.slane %v3180, %v3201
      %v3204 = vunpack.c.l.s4 1966171168
      %v3205 = vunpack.c.0.s8 %v3204
      %v3206 = vlaneseq
      %v3207 = vshrl.u32 %v3206, 7
      %v3208 = vsub.s32 %v3205, %v3207
      %v3209 = vrot.slane %v3181, %v3208
      %v3210 = vcombine.low %v3188, %v3195
      %v3211 = vcombine.low %v3202, %v3209
      %v3213 = vunpack.c.l.s4 1966171168
      %v3214 = vunpack.c.0.s8 %v3213
      %v3215 = vlaneseq
      %v3216 = vshrl.u32 %v3215, 7
      %v3217 = vsub.s32 %v3214, %v3216
      %v3218 = vrot.slane %v3210, %v3217
      %v3220 = vunpack.c.l.s4 1966171168
      %v3221 = vunpack.c.0.s8 %v3220
      %v3222 = vlaneseq
      %v3223 = vshrl.u32 %v3222, 7
      %v3224 = vsub.s32 %v3221, %v3223
      %v3225 = vrot.slane %v3211, %v3224
      %v3226 = vcombine.low %v3218, %v3225
      %v3227 = vcombine.low %v2584, %v2591
      %v3228 = vcombine.low %v2598, %v2605
      %v3229 = vcombine.low %v2612, %v2619
      %v3230 = vcombine.low %v2626, %v2633
      %v3232 = vunpack.c.l.s4 1966171168
      %v3233 = vunpack.c.0.s8 %v3232
      %v3234 = vlaneseq
      %v3235 = vshrl.u32 %v3234, 7
      %v3236 = vsub.s32 %v3233, %v3235
      %v3237 = vrot.slane %v3227, %v3236
      %v3239 = vunpack.c.l.s4 1966171168
      %v3240 = vunpack.c.0.s8 %v3239
      %v3241 = vlaneseq
      %v3242 = vshrl.u32 %v3241, 7
      %v3243 = vsub.s32 %v3240, %v3242
      %v3244 = vrot.slane %v3228, %v3243
      %v3246 = vunpack.c.l.s4 1966171168
      %v3247 = vunpack.c.0.s8 %v3246
      %v3248 = vlaneseq
      %v3249 = vshrl.u32 %v3248, 7
      %v3250 = vsub.s32 %v3247, %v3249
      %v3251 = vrot.slane %v3229, %v3250
      %v3253 = vunpack.c.l.s4 1966171168
      %v3254 = vunpack.c.0.s8 %v3253
      %v3255 = vlaneseq
      %v3256 = vshrl.u32 %v3255, 7
      %v3257 = vsub.s32 %v3254, %v3256
      %v3258 = vrot.slane %v3230, %v3257
      %v3259 = vcombine.low %v3237, %v3244
      %v3260 = vcombine.low %v3251, %v3258
      %v3262 = vunpack.c.l.s4 1966171168
      %v3263 = vunpack.c.0.s8 %v3262
      %v3264 = vlaneseq
      %v3265 = vshrl.u32 %v3264, 7
      %v3266 = vsub.s32 %v3263, %v3265
      %v3267 = vrot.slane %v3259, %v3266
      %v3269 = vunpack.c.l.s4 1966171168
      %v3270 = vunpack.c.0.s8 %v3269
      %v3271 = vlaneseq
      %v3272 = vshrl.u32 %v3271, 7
      %v3273 = vsub.s32 %v3270, %v3272
      %v3274 = vrot.slane %v3260, %v3273
      %v3275 = vcombine.low %v3267, %v3274
      %v3276 = vcombine.low %v2640, %v2647
      %v3277 = vcombine.low %v2654, %v2661
      %v3278 = vcombine.low %v2668, %v2675
      %v3279 = vcombine.low %v2682, %v2689
      %v3281 = vunpack.c.l.s4 1966171168
      %v3282 = vunpack.c.0.s8 %v3281
      %v3283 = vlaneseq
      %v3284 = vshrl.u32 %v3283, 7
      %v3285 = vsub.s32 %v3282, %v3284
      %v3286 = vrot.slane %v3276, %v3285
      %v3288 = vunpack.c.l.s4 1966171168
      %v3289 = vunpack.c.0.s8 %v3288
      %v3290 = vlaneseq
      %v3291 = vshrl.u32 %v3290, 7
      %v3292 = vsub.s32 %v3289, %v3291
      %v3293 = vrot.slane %v3277, %v3292
      %v3295 = vunpack.c.l.s4 1966171168
      %v3296 = vunpack.c.0.s8 %v3295
      %v3297 = vlaneseq
      %v3298 = vshrl.u32 %v3297, 7
      %v3299 = vsub.s32 %v3296, %v3298
      %v3300 = vrot.slane %v3278, %v3299
      %v3302 = vunpack.c.l.s4 1966171168
      %v3303 = vunpack.c.0.s8 %v3302
      %v3304 = vlaneseq
      %v3305 = vshrl.u32 %v3304, 7
      %v3306 = vsub.s32 %v3303, %v3305
      %v3307 = vrot.slane %v3279, %v3306
      %v3308 = vcombine.low %v3286, %v3293
      %v3309 = vcombine.low %v3300, %v3307
      %v3311 = vunpack.c.l.s4 1966171168
      %v3312 = vunpack.c.0.s8 %v3311
      %v3313 = vlaneseq
      %v3314 = vshrl.u32 %v3313, 7
      %v3315 = vsub.s32 %v3312, %v3314
      %v3316 = vrot.slane %v3308, %v3315
      %v3318 = vunpack.c.l.s4 1966171168
      %v3319 = vunpack.c.0.s8 %v3318
      %v3320 = vlaneseq
      %v3321 = vshrl.u32 %v3320, 7
      %v3322 = vsub.s32 %v3319, %v3321
      %v3323 = vrot.slane %v3309, %v3322
      %v3324 = vcombine.low %v3316, %v3323
      %v3325 = vcombine.low %v2696, %v2703
      %v3326 = vcombine.low %v2710, %v2717
      %v3327 = vcombine.low %v2724, %v2731
      %v3328 = vcombine.low %v2738, %v2745
      %v3330 = vunpack.c.l.s4 1966171168
      %v3331 = vunpack.c.0.s8 %v3330
      %v3332 = vlaneseq
      %v3333 = vshrl.u32 %v3332, 7
      %v3334 = vsub.s32 %v3331, %v3333
      %v3335 = vrot.slane %v3325, %v3334
      %v3337 = vunpack.c.l.s4 1966171168
      %v3338 = vunpack.c.0.s8 %v3337
      %v3339 = vlaneseq
      %v3340 = vshrl.u32 %v3339, 7
      %v3341 = vsub.s32 %v3338, %v3340
      %v3342 = vrot.slane %v3326, %v3341
      %v3344 = vunpack.c.l.s4 1966171168
      %v3345 = vunpack.c.0.s8 %v3344
      %v3346 = vlaneseq
      %v3347 = vshrl.u32 %v3346, 7
      %v3348 = vsub.s32 %v3345, %v3347
      %v3349 = vrot.slane %v3327, %v3348
      %v3351 = vunpack.c.l.s4 1966171168
      %v3352 = vunpack.c.0.s8 %v3351
      %v3353 = vlaneseq
      %v3354 = vshrl.u32 %v3353, 7
      %v3355 = vsub.s32 %v3352, %v3354
      %v3356 = vrot.slane %v3328, %v3355
      %v3357 = vcombine.low %v3335, %v3342
      %v3358 = vcombine.low %v3349, %v3356
      %v3360 = vunpack.c.l.s4 1966171168
      %v3361 = vunpack.c.0.s8 %v3360
      %v3362 = vlaneseq
      %v3363 = vshrl.u32 %v3362, 7
      %v3364 = vsub.s32 %v3361, %v3363
      %v3365 = vrot.slane %v3357, %v3364
      %v3367 = vunpack.c.l.s4 1966171168
      %v3368 = vunpack.c.0.s8 %v3367
      %v3369 = vlaneseq
      %v3370 = vshrl.u32 %v3369, 7
      %v3371 = vsub.s32 %v3368, %v3370
      %v3372 = vrot.slane %v3358, %v3371
      %v3373 = vcombine.low %v3365, %v3372
      %v3374 = vcombine.low %v2752, %v2759
      %v3375 = vcombine.low %v2766, %v2773
      %v3376 = vcombine.low %v2780, %v2787
      %v3377 = vcombine.low %v2794, %v2801
      %v3379 = vunpack.c.l.s4 1966171168
      %v3380 = vunpack.c.0.s8 %v3379
      %v3381 = vlaneseq
      %v3382 = vshrl.u32 %v3381, 7
      %v3383 = vsub.s32 %v3380, %v3382
      %v3384 = vrot.slane %v3374, %v3383
      %v3386 = vunpack.c.l.s4 1966171168
      %v3387 = vunpack.c.0.s8 %v3386
      %v3388 = vlaneseq
      %v3389 = vshrl.u32 %v3388, 7
      %v3390 = vsub.s32 %v3387, %v3389
      %v3391 = vrot.slane %v3375, %v3390
      %v3393 = vunpack.c.l.s4 1966171168
      %v3394 = vunpack.c.0.s8 %v3393
      %v3395 = vlaneseq
      %v3396 = vshrl.u32 %v3395, 7
      %v3397 = vsub.s32 %v3394, %v3396
      %v3398 = vrot.slane %v3376, %v3397
      %v3400 = vunpack.c.l.s4 1966171168
      %v3401 = vunpack.c.0.s8 %v3400
      %v3402 = vlaneseq
      %v3403 = vshrl.u32 %v3402, 7
      %v3404 = vsub.s32 %v3401, %v3403
      %v3405 = vrot.slane %v3377, %v3404
      %v3406 = vcombine.low %v3384, %v3391
      %v3407 = vcombine.low %v3398, %v3405
      %v3409 = vunpack.c.l.s4 1966171168
      %v3410 = vunpack.c.0.s8 %v3409
      %v3411 = vlaneseq
      %v3412 = vshrl.u32 %v3411, 7
      %v3413 = vsub.s32 %v3410, %v3412
      %v3414 = vrot.slane %v3406, %v3413
      %v3416 = vunpack.c.l.s4 1966171168
      %v3417 = vunpack.c.0.s8 %v3416
      %v3418 = vlaneseq
      %v3419 = vshrl.u32 %v3418, 7
      %v3420 = vsub.s32 %v3417, %v3419
      %v3421 = vrot.slane %v3407, %v3420
      %v3422 = vcombine.low %v3414, %v3421
      %v3423 = vcombine.low %v2808, %v2815
      %v3424 = vcombine.low %v2822, %v2829
      %v3425 = vcombine.low %v2836, %v2843
      %v3426 = vcombine.low %v2850, %v2857
      %v3428 = vunpack.c.l.s4 1966171168
      %v3429 = vunpack.c.0.s8 %v3428
      %v3430 = vlaneseq
      %v3431 = vshrl.u32 %v3430, 7
      %v3432 = vsub.s32 %v3429, %v3431
      %v3433 = vrot.slane %v3423, %v3432
      %v3435 = vunpack.c.l.s4 1966171168
      %v3436 = vunpack.c.0.s8 %v3435
      %v3437 = vlaneseq
      %v3438 = vshrl.u32 %v3437, 7
      %v3439 = vsub.s32 %v3436, %v3438
      %v3440 = vrot.slane %v3424, %v3439
      %v3442 = vunpack.c.l.s4 1966171168
      %v3443 = vunpack.c.0.s8 %v3442
      %v3444 = vlaneseq
      %v3445 = vshrl.u32 %v3444, 7
      %v3446 = vsub.s32 %v3443, %v3445
      %v3447 = vrot.slane %v3425, %v3446
      %v3449 = vunpack.c.l.s4 1966171168
      %v3450 = vunpack.c.0.s8 %v3449
      %v3451 = vlaneseq
      %v3452 = vshrl.u32 %v3451, 7
      %v3453 = vsub.s32 %v3450, %v3452
      %v3454 = vrot.slane %v3426, %v3453
      %v3455 = vcombine.low %v3433, %v3440
      %v3456 = vcombine.low %v3447, %v3454
      %v3458 = vunpack.c.l.s4 1966171168
      %v3459 = vunpack.c.0.s8 %v3458
      %v3460 = vlaneseq
      %v3461 = vshrl.u32 %v3460, 7
      %v3462 = vsub.s32 %v3459, %v3461
      %v3463 = vrot.slane %v3455, %v3462
      %v3465 = vunpack.c.l.s4 1966171168
      %v3466 = vunpack.c.0.s8 %v3465
      %v3467 = vlaneseq
      %v3468 = vshrl.u32 %v3467, 7
      %v3469 = vsub.s32 %v3466, %v3468
      %v3470 = vrot.slane %v3456, %v3469
      %v3471 = vcombine.low %v3463, %v3470
      %v3472 = vcombine.low %v2864, %v2871
      %v3473 = vcombine.low %v2878, %v2885
      %v3474 = vcombine.low %v2892, %v2899
      %v3475 = vcombine.low %v2906, %v2913
      %v3477 = vunpack.c.l.s4 1966171168
      %v3478 = vunpack.c.0.s8 %v3477
      %v3479 = vlaneseq
      %v3480 = vshrl.u32 %v3479, 7
      %v3481 = vsub.s32 %v3478, %v3480
      %v3482 = vrot.slane %v3472, %v3481
      %v3484 = vunpack.c.l.s4 1966171168
      %v3485 = vunpack.c.0.s8 %v3484
      %v3486 = vlaneseq
      %v3487 = vshrl.u32 %v3486, 7
      %v3488 = vsub.s32 %v3485, %v3487
      %v3489 = vrot.slane %v3473, %v3488
      %v3491 = vunpack.c.l.s4 1966171168
      %v3492 = vunpack.c.0.s8 %v3491
      %v3493 = vlaneseq
      %v3494 = vshrl.u32 %v3493, 7
      %v3495 = vsub.s32 %v3492, %v3494
      %v3496 = vrot.slane %v3474, %v3495
      %v3498 = vunpack.c.l.s4 1966171168
      %v3499 = vunpack.c.0.s8 %v3498
      %v3500 = vlaneseq
      %v3501 = vshrl.u32 %v3500, 7
      %v3502 = vsub.s32 %v3499, %v3501
      %v3503 = vrot.slane %v3475, %v3502
      %v3504 = vcombine.low %v3482, %v3489
      %v3505 = vcombine.low %v3496, %v3503
      %v3507 = vunpack.c.l.s4 1966171168
      %v3508 = vunpack.c.0.s8 %v3507
      %v3509 = vlaneseq
      %v3510 = vshrl.u32 %v3509, 7
      %v3511 = vsub.s32 %v3508, %v3510
      %v3512 = vrot.slane %v3504, %v3511
      %v3514 = vunpack.c.l.s4 1966171168
      %v3515 = vunpack.c.0.s8 %v3514
      %v3516 = vlaneseq
      %v3517 = vshrl.u32 %v3516, 7
      %v3518 = vsub.s32 %v3515, %v3517
      %v3519 = vrot.slane %v3505, %v3518
      %v3520 = vcombine.low %v3512, %v3519
      %v3521 = vcombine.low %v2920, %v2927
      %v3522 = vcombine.low %v2934, %v2941
      %v3523 = vcombine.low %v2948, %v2955
      %v3524 = vcombine.low %v2962, %v2969
      %v3526 = vunpack.c.l.s4 1966171168
      %v3527 = vunpack.c.0.s8 %v3526
      %v3528 = vlaneseq
      %v3529 = vshrl.u32 %v3528, 7
      %v3530 = vsub.s32 %v3527, %v3529
      %v3531 = vrot.slane %v3521, %v3530
      %v3533 = vunpack.c.l.s4 1966171168
      %v3534 = vunpack.c.0.s8 %v3533
      %v3535 = vlaneseq
      %v3536 = vshrl.u32 %v3535, 7
      %v3537 = vsub.s32 %v3534, %v3536
      %v3538 = vrot.slane %v3522, %v3537
      %v3540 = vunpack.c.l.s4 1966171168
      %v3541 = vunpack.c.0.s8 %v3540
      %v3542 = vlaneseq
      %v3543 = vshrl.u32 %v3542, 7
      %v3544 = vsub.s32 %v3541, %v3543
      %v3545 = vrot.slane %v3523, %v3544
      %v3547 = vunpack.c.l.s4 1966171168
      %v3548 = vunpack.c.0.s8 %v3547
      %v3549 = vlaneseq
      %v3550 = vshrl.u32 %v3549, 7
      %v3551 = vsub.s32 %v3548, %v3550
      %v3552 = vrot.slane %v3524, %v3551
      %v3553 = vcombine.low %v3531, %v3538
      %v3554 = vcombine.low %v3545, %v3552
      %v3556 = vunpack.c.l.s4 1966171168
      %v3557 = vunpack.c.0.s8 %v3556
      %v3558 = vlaneseq
      %v3559 = vshrl.u32 %v3558, 7
      %v3560 = vsub.s32 %v3557, %v3559
      %v3561 = vrot.slane %v3553, %v3560
      %v3563 = vunpack.c.l.s4 1966171168
      %v3564 = vunpack.c.0.s8 %v3563
      %v3565 = vlaneseq
      %v3566 = vshrl.u32 %v3565, 7
      %v3567 = vsub.s32 %v3564, %v3566
      %v3568 = vrot.slane %v3554, %v3567
      %v3569 = vcombine.low %v3561, %v3568
      %v3571 = vshrl.u32 %v3226, 16
      %v3573 = vrot.slane %v3571, 7
      %v3574 = vshll.u32 %v3226, 16
      %v3576 = vor.u32 %v3573, %v3574
      %v3578 = vshrl.u32 %v3275, 16
      %v3580 = vrot.slane %v3578, 7
      %v3581 = vshll.u32 %v3275, 16
      %v3583 = vor.u32 %v3580, %v3581
      %v3585 = vshrl.u32 %v3324, 16
      %v3587 = vrot.slane %v3585, 7
      %v3588 = vshll.u32 %v3324, 16
      %v3590 = vor.u32 %v3587, %v3588
      %v3592 = vshrl.u32 %v3373, 16
      %v3594 = vrot.slane %v3592, 7
      %v3595 = vshll.u32 %v3373, 16
      %v3597 = vor.u32 %v3594, %v3595
      %v3599 = vshrl.u32 %v3422, 16
      %v3601 = vrot.slane %v3599, 7
      %v3602 = vshll.u32 %v3422, 16
      %v3604 = vor.u32 %v3601, %v3602
      %v3606 = vshrl.u32 %v3471, 16
      %v3608 = vrot.slane %v3606, 7
      %v3609 = vshll.u32 %v3471, 16
      %v3611 = vor.u32 %v3608, %v3609
      %v3613 = vshrl.u32 %v3520, 16
      %v3615 = vrot.slane %v3613, 7
      %v3616 = vshll.u32 %v3520, 16
      %v3618 = vor.u32 %v3615, %v3616
      %v3620 = vshrl.u32 %v3569, 16
      %v3622 = vrot.slane %v3620, 7
      %v3623 = vshll.u32 %v3569, 16
      %v3625 = vor.u32 %v3622, %v3623
      %v3643 = vunpack.c.l.s4 1966171168
      %v3644 = vunpack.c.0.s8 %v3643
      %v3645 = vlaneseq
      %v3646 = vshrl.u32 %v3645, 7
      %v3647 = vsub.s32 %v3644, %v3646
      %v3648 = vrot.slane %v2577, %v3647
      %v3650 = vunpack.c.l.s4 1966171168
      %v3651 = vunpack.c.0.s8 %v3650
      %v3652 = vlaneseq
      %v3653 = vshrl.u32 %v3652, 7
      %v3654 = vsub.s32 %v3651, %v3653
      %v3655 = vrot.slane %v3648, %v3654
      %v3657 = vunpack.c.l.s4 1966171168
      %v3658 = vunpack.c.0.s8 %v3657
      %v3659 = vlaneseq
      %v3660 = vshrl.u32 %v3659, 7
      %v3661 = vsub.s32 %v3658, %v3660
      %v3662 = vrot.slane %v2633, %v3661
      %v3664 = vunpack.c.l.s4 1966171168
      %v3665 = vunpack.c.0.s8 %v3664
      %v3666 = vlaneseq
      %v3667 = vshrl.u32 %v3666, 7
      %v3668 = vsub.s32 %v3665, %v3667
      %v3669 = vrot.slane %v3662, %v3668
      %v3671 = vunpack.c.l.s4 1966171168
      %v3672 = vunpack.c.0.s8 %v3671
      %v3673 = vlaneseq
      %v3674 = vshrl.u32 %v3673, 7
      %v3675 = vsub.s32 %v3672, %v3674
      %v3676 = vrot.slane %v2689, %v3675
      %v3678 = vunpack.c.l.s4 1966171168
      %v3679 = vunpack.c.0.s8 %v3678
      %v3680 = vlaneseq
      %v3681 = vshrl.u32 %v3680, 7
      %v3682 = vsub.s32 %v3679, %v3681
      %v3683 = vrot.slane %v3676, %v3682
      %v3685 = vunpack.c.l.s4 1966171168
      %v3686 = vunpack.c.0.s8 %v3685
      %v3687 = vlaneseq
      %v3688 = vshrl.u32 %v3687, 7
      %v3689 = vsub.s32 %v3686, %v3688
      %v3690 = vrot.slane %v2745, %v3689
      %v3692 = vunpack.c.l.s4 1966171168
      %v3693 = vunpack.c.0.s8 %v3692
      %v3694 = vlaneseq
      %v3695 = vshrl.u32 %v3694, 7
      %v3696 = vsub.s32 %v3693, %v3695
      %v3697 = vrot.slane %v3690, %v3696
      %v3699 = vunpack.c.l.s4 1966171168
      %v3700 = vunpack.c.0.s8 %v3699
      %v3701 = vlaneseq
      %v3702 = vshrl.u32 %v3701, 7
      %v3703 = vsub.s32 %v3700, %v3702
      %v3704 = vrot.slane %v2801, %v3703
      %v3706 = vunpack.c.l.s4 1966171168
      %v3707 = vunpack.c.0.s8 %v3706
      %v3708 = vlaneseq
      %v3709 = vshrl.u32 %v3708, 7
      %v3710 = vsub.s32 %v3707, %v3709
      %v3711 = vrot.slane %v3704, %v3710
      %v3713 = vunpack.c.l.s4 1966171168
      %v3714 = vunpack.c.0.s8 %v3713
      %v3715 = vlaneseq
      %v3716 = vshrl.u32 %v3715, 7
      %v3717 = vsub.s32 %v3714, %v3716
      %v3718 = vrot.slane %v2857, %v3717
      %v3720 = vunpack.c.l.s4 1966171168
      %v3721 = vunpack.c.0.s8 %v3720
      %v3722 = vlaneseq
      %v3723 = vshrl.u32 %v3722, 7
      %v3724 = vsub.s32 %v3721, %v3723
      %v3725 = vrot.slane %v3718, %v3724
      %v3727 = vunpack.c.l.s4 1966171168
      %v3728 = vunpack.c.0.s8 %v3727
      %v3729 = vlaneseq
      %v3730 = vshrl.u32 %v3729, 7
      %v3731 = vsub.s32 %v3728, %v3730
      %v3732 = vrot.slane %v2913, %v3731
      %v3734 = vunpack.c.l.s4 1966171168
      %v3735 = vunpack.c.0.s8 %v3734
      %v3736 = vlaneseq
      %v3737 = vshrl.u32 %v3736, 7
      %v3738 = vsub.s32 %v3735, %v3737
      %v3739 = vrot.slane %v3732, %v3738
      %v3741 = vunpack.c.l.s4 1966171168
      %v3742 = vunpack.c.0.s8 %v3741
      %v3743 = vlaneseq
      %v3744 = vshrl.u32 %v3743, 7
      %v3745 = vsub.s32 %v3742, %v3744
      %v3746 = vrot.slane %v2969, %v3745
      %v3748 = vunpack.c.l.s4 1966171168
      %v3749 = vunpack.c.0.s8 %v3748
      %v3750 = vlaneseq
      %v3751 = vshrl.u32 %v3750, 7
      %v3752 = vsub.s32 %v3749, %v3751
      %v3753 = vrot.slane %v3746, %v3752
      %v3755 = vshll.u32 %v3655, 16
      %v3758 = vshll.u32 %v3669, 16
      %v3761 = vshll.u32 %v3683, 16
      %v3764 = vshll.u32 %v3697, 16
      %v3767 = vshll.u32 %v3711, 16
      %v3770 = vshll.u32 %v3725, 16
      %v3773 = vshll.u32 %v3739, 16
      %v3776 = vshll.u32 %v3753, 16
      %v3786 = vsel %vm402, %v3091, %v3576
      %v3787 = vsel %vm402, %v3094, %v3583
      %v3788 = vsel %vm402, %v3097, %v3590
      %v3789 = vsel %vm402, %v3100, %v3597
      %v3790 = vsel %vm402, %v3103, %v3604
      %v3791 = vsel %vm402, %v3106, %v3611
      %v3792 = vsel %vm402, %v3109, %v3618
      %v3793 = vsel %vm402, %v3112, %v3625
      %v3794 = vsel %vm402, %v3573, %v3755
      %v3795 = vsel %vm402, %v3580, %v3758
      %v3796 = vsel %vm402, %v3587, %v3761
      %v3797 = vsel %vm402, %v3594, %v3764
      %v3798 = vsel %vm402, %v3601, %v3767
      %v3799 = vsel %vm402, %v3608, %v3770
      %v3800 = vsel %vm402, %v3615, %v3773
      %v3801 = vsel %vm402, %v3622, %v3776
      %v3802 = vld [vmem:[%s4] sm:$0x1]
      %v3803 = vld [vmem:[%s3] sm:$0xf]
      %v3804 = vld [vmem:[%s3 + $0x4] sm:$0xf]
      %v3805 = vld [vmem:[%s3 + $0x8] sm:$0xf]
      %v3806 = vld [vmem:[%s3 + $0xc] sm:$0xf]
      %v3807 = vld [vmem:[%s3 + $0x10] sm:$0xf]
      %v3808 = vld [vmem:[%s3 + $0x14] sm:$0xf]
      %v3809 = vld [vmem:[%s3 + $0x18] sm:$0xf]
      %v3810 = vld [vmem:[%s3 + $0x1c] sm:$0xf]
      %vm3811 = vsmask.f32 7424
      %v3813 = vshrl.u32 %v3786, 16
      %v3815 = vshll.u32 %v3786, 16
      %v3817 = vrot.slane %v3815, 1
      %v3818 = vor.u32 %v3813, %v3817
      %v3820 = vshll.u32 %v3794, 16
      %v3822 = vrot.slane %v3820, 1
      %v3823 = vsel %vm3811, %v3818, %v3822
      %v3825 = vshrl.u32 %v3787, 16
      %v3827 = vshll.u32 %v3787, 16
      %v3829 = vrot.slane %v3827, 1
      %v3830 = vor.u32 %v3825, %v3829
      %v3832 = vshll.u32 %v3795, 16
      %v3834 = vrot.slane %v3832, 1
      %v3835 = vsel %vm3811, %v3830, %v3834
      %v3837 = vshrl.u32 %v3788, 16
      %v3839 = vshll.u32 %v3788, 16
      %v3841 = vrot.slane %v3839, 1
      %v3842 = vor.u32 %v3837, %v3841
      %v3844 = vshll.u32 %v3796, 16
      %v3846 = vrot.slane %v3844, 1
      %v3847 = vsel %vm3811, %v3842, %v3846
      %v3849 = vshrl.u32 %v3789, 16
      %v3851 = vshll.u32 %v3789, 16
      %v3853 = vrot.slane %v3851, 1
      %v3854 = vor.u32 %v3849, %v3853
      %v3856 = vshll.u32 %v3797, 16
      %v3858 = vrot.slane %v3856, 1
      %v3859 = vsel %vm3811, %v3854, %v3858
      %v3861 = vshrl.u32 %v3790, 16
      %v3863 = vshll.u32 %v3790, 16
      %v3865 = vrot.slane %v3863, 1
      %v3866 = vor.u32 %v3861, %v3865
      %v3868 = vshll.u32 %v3798, 16
      %v3870 = vrot.slane %v3868, 1
      %v3871 = vsel %vm3811, %v3866, %v3870
      %v3873 = vshrl.u32 %v3791, 16
      %v3875 = vshll.u32 %v3791, 16
      %v3877 = vrot.slane %v3875, 1
      %v3878 = vor.u32 %v3873, %v3877
      %v3880 = vshll.u32 %v3799, 16
      %v3882 = vrot.slane %v3880, 1
      %v3883 = vsel %vm3811, %v3878, %v3882
      %v3885 = vshrl.u32 %v3792, 16
      %v3887 = vshll.u32 %v3792, 16
      %v3889 = vrot.slane %v3887, 1
      %v3890 = vor.u32 %v3885, %v3889
      %v3892 = vshll.u32 %v3800, 16
      %v3894 = vrot.slane %v3892, 1
      %v3895 = vsel %vm3811, %v3890, %v3894
      %v3897 = vshrl.u32 %v3793, 16
      %v3899 = vshll.u32 %v3793, 16
      %v3901 = vrot.slane %v3899, 1
      %v3902 = vor.u32 %v3897, %v3901
      %v3904 = vshll.u32 %v3801, 16
      %v3906 = vrot.slane %v3904, 1
      %v3907 = vsel %vm3811, %v3902, %v3906
      %s3908 = scalar_lea.vmem %s3, 32
      %v3909 = vld [vmem:[%s3908] sm:$0xf]
      %v3910 = vld [vmem:[%s3908 + $0x4] sm:$0xf]
      %v3911 = vld [vmem:[%s3908 + $0x8] sm:$0xf]
      %v3912 = vld [vmem:[%s3908 + $0xc] sm:$0xf]
      %v3913 = vld [vmem:[%s3908 + $0x10] sm:$0xf]
      %v3914 = vld [vmem:[%s3908 + $0x14] sm:$0xf]
      %v3915 = vld [vmem:[%s3908 + $0x18] sm:$0xf]
      %v3916 = vld [vmem:[%s3908 + $0x1c] sm:$0xf]
      %v3925 = vunpack.c.l.b16 %v3909
      %v3926 = vunpack.c.l.b16 %v3910
      %v3927 = vunpack.c.l.b16 %v3911
      %v3928 = vunpack.c.l.b16 %v3912
      %v3929 = vunpack.c.l.b16 %v3913
      %v3930 = vunpack.c.l.b16 %v3914
      %v3931 = vunpack.c.l.b16 %v3915
      %v3932 = vunpack.c.l.b16 %v3916
      %v3933 = vpack.c.b16 %v3926, %v3925
      %v3934 = vpack.c.b16 %v3928, %v3927
      %v3935 = vpack.c.b16 %v3930, %v3929
      %v3936 = vpack.c.b16 %v3932, %v3931
      %vm3941 = vcmask 523264
      %v3943 = vsel %vm3941, %v3823, 0
      %v3946 = vsel %vm3941, %v3835, 0
      %v3949 = vsel %vm3941, %v3847, 0
      %v3952 = vsel %vm3941, %v3859, 0
      %v3955 = vsel %vm3941, %v3871, 0
      %v3958 = vsel %vm3941, %v3883, 0
      %v3961 = vsel %vm3941, %v3895, 0
      %v3964 = vsel %vm3941, %v3907, 0
      %3966 = vmatprep.subr.bf16.mxu0 0
      %3967 = vmatpush1.bf16.msra.mxu0 %v3933
      %3968 = vmatprep.subr.bf16.mxu0 0
      %3969 = vmatpush1.bf16.msra.mxu0 %v3934
      %3970 = vmatprep.subr.bf16.mxu0 0
      %3971 = vmatpush1.bf16.msra.mxu0 %v3935
      %3972 = vmatprep.subr.bf16.mxu0 0
      %3973 = vmatpush1.bf16.msra.mxu0 %v3936
      %3974 = vmatprep.subr.bf16.mxu0 0
      %3975 = vmatpush1.bf16.msra.mxu0 0
      %3976 = vmatprep.subr.bf16.mxu0 0
      %3977 = vmatpush1.bf16.msra.mxu0 0
      %3978 = vmatprep.subr.bf16.mxu0 0
      %3979 = vmatpush1.bf16.msra.mxu0 0
      %3980 = vmatprep.subr.bf16.mxu0 0
      %3981 = vmatpush1.bf16.msra.mxu0 0
      %3982 = vmatprep.subr.bf16.mxu0 0
      %3983 = vmatpush1.bf16.msra.mxu0 0
      %3984 = vmatprep.subr.bf16.mxu0 0
      %3985 = vmatpush1.bf16.msra.mxu0 0
      %3986 = vmatprep.subr.bf16.mxu0 0
      %3987 = vmatpush1.bf16.msra.mxu0 0
      %3988 = vmatprep.subr.bf16.mxu0 0
      %3989 = vmatpush1.bf16.msra.mxu0 0
      %3990 = vmatprep.subr.bf16.mxu0 0
      %3991 = vmatpush1.bf16.msra.mxu0 0
      %3992 = vmatprep.subr.bf16.mxu0 0
      %3993 = vmatpush1.bf16.msra.mxu0 0
      %3994 = vmatprep.subr.bf16.mxu0 0
      %3995 = vmatpush1.bf16.msra.mxu0 0
      %3996 = vmatprep.subr.bf16.mxu0 0
      %3997 = vmatpush1.bf16.msra.mxu0 0
      %3998 = vmatprep.mubr.bf16.mxu0 0
      %3999 = vmatmul.mubr.bf16.gmra.mrb[0].mxu0 %v3943
      %v4000 = vpop.f32.mrb[0].mxu0
      %v4001 = vadd.f32 0.0, %v4000
      %v4002 = vpop.f32.mrb[0].mxu0
      %v4003 = vpop.f32.mrb[0].mxu0
      %v4004 = vadd.f32 0.0, %v4003
      %v4005 = vpop.f32.mrb[0].mxu0
      %4006 = vmatprep.mubr.bf16.mxu0 0
      %4007 = vmatmul.mubr.bf16.gmra.mrb[0].mxu0 %v3943
      %v4008 = vpop.f32.mrb[0].mxu0
      %v4009 = vadd.f32 0.0, %v4008
      %v4010 = vpop.f32.mrb[0].mxu0
      %v4011 = vpop.f32.mrb[0].mxu0
      %v4012 = vadd.f32 0.0, %v4011
      %v4013 = vpop.f32.mrb[0].mxu0
      %4014 = vmatprep.mubr.bf16.mxu0 0
      %4015 = vmatmul.mubr.bf16.gmra.mrb[0].mxu0 %v3943
      %v4016 = vpop.f32.mrb[0].mxu0
      %v4017 = vadd.f32 0.0, %v4016
      %v4018 = vpop.f32.mrb[0].mxu0
      %v4019 = vpop.f32.mrb[0].mxu0
      %v4020 = vadd.f32 0.0, %v4019
      %v4021 = vpop.f32.mrb[0].mxu0
      %4022 = vmatprep.mubr.bf16.mxu0 0
      %4023 = vmatmul.mubr.bf16.gmra.mrb[0].mxu0 %v3946
      %v4024 = vpop.f32.mrb[0].mxu0
      %v4025 = vadd.f32 0.0, %v4024
      %v4026 = vpop.f32.mrb[0].mxu0
      %v4027 = vpop.f32.mrb[0].mxu0
      %v4028 = vadd.f32 0.0, %v4027
      %v4029 = vpop.f32.mrb[0].mxu0
      %4030 = vmatprep.mubr.bf16.mxu0 0
      %4031 = vmatmul.mubr.bf16.gmra.mrb[0].mxu0 %v3946
      %v4032 = vpop.f32.mrb[0].mxu0
      %v4033 = vadd.f32 0.0, %v4032
      %v4034 = vpop.f32.mrb[0].mxu0
      %v4035 = vpop.f32.mrb[0].mxu0
      %v4036 = vadd.f32 0.0, %v4035
      %v4037 = vpop.f32.mrb[0].mxu0
      %4038 = vmatprep.mubr.bf16.mxu0 0
      %4039 = vmatmul.mubr.bf16.gmra.mrb[0].mxu0 %v3949
      %v4040 = vpop.f32.mrb[0].mxu0
      %v4041 = vadd.f32 0.0, %v4040
      %v4042 = vpop.f32.mrb[0].mxu0
      %v4043 = vpop.f32.mrb[0].mxu0
      %v4044 = vadd.f32 0.0, %v4043
      %v4045 = vpop.f32.mrb[0].mxu0
      %4046 = vmatprep.mubr.bf16.mxu0 0
      %4047 = vmatmul.mubr.bf16.gmra.mrb[0].mxu0 %v3949
      %v4048 = vpop.f32.mrb[0].mxu0
      %v4049 = vadd.f32 0.0, %v4048
      %v4050 = vpop.f32.mrb[0].mxu0
      %v4051 = vpop.f32.mrb[0].mxu0
      %v4052 = vadd.f32 0.0, %v4051
      %v4053 = vpop.f32.mrb[0].mxu0
      %4054 = vmatprep.mubr.bf16.mxu0 0
      %4055 = vmatmul.mubr.bf16.gmra.mrb[0].mxu0 %v3952
      %v4056 = vpop.f32.mrb[0].mxu0
      %v4057 = vadd.f32 0.0, %v4056
      %v4058 = vpop.f32.mrb[0].mxu0
      %v4059 = vpop.f32.mrb[0].mxu0
      %v4060 = vadd.f32 0.0, %v4059
      %v4061 = vpop.f32.mrb[0].mxu0
      %4062 = vmatprep.mubr.bf16.mxu0 0
      %4063 = vmatmul.mubr.bf16.gmra.mrb[0].mxu0 %v3952
      %v4064 = vpop.f32.mrb[0].mxu0
      %v4065 = vadd.f32 0.0, %v4064
      %v4066 = vpop.f32.mrb[0].mxu0
      %v4067 = vpop.f32.mrb[0].mxu0
      %v4068 = vadd.f32 0.0, %v4067
      %v4069 = vpop.f32.mrb[0].mxu0
      %4070 = vmatprep.mubr.bf16.mxu0 0
      %4071 = vmatmul.mubr.bf16.gmra.mrb[0].mxu0 %v3955
      %v4072 = vpop.f32.mrb[0].mxu0
      %v4073 = vadd.f32 0.0, %v4072
      %v4074 = vpop.f32.mrb[0].mxu0
      %v4075 = vpop.f32.mrb[0].mxu0
      %v4076 = vadd.f32 0.0, %v4075
      %v4077 = vpop.f32.mrb[0].mxu0
      %4078 = vmatprep.mubr.bf16.mxu0 0
      %4079 = vmatmul.mubr.bf16.gmra.mrb[0].mxu0 %v3955
      %v4080 = vpop.f32.mrb[0].mxu0
      %v4081 = vadd.f32 0.0, %v4080
      %v4082 = vpop.f32.mrb[0].mxu0
      %v4083 = vpop.f32.mrb[0].mxu0
      %v4084 = vadd.f32 0.0, %v4083
      %v4085 = vpop.f32.mrb[0].mxu0
      %4086 = vmatprep.mubr.bf16.mxu0 0
      %4087 = vmatmul.mubr.bf16.gmra.mrb[0].mxu0 %v3958
      %v4088 = vpop.f32.mrb[0].mxu0
      %v4089 = vadd.f32 0.0, %v4088
      %v4090 = vpop.f32.mrb[0].mxu0
      %v4091 = vpop.f32.mrb[0].mxu0
      %v4092 = vadd.f32 0.0, %v4091
      %v4093 = vpop.f32.mrb[0].mxu0
      %4094 = vmatprep.mubr.bf16.mxu0 0
      %4095 = vmatmul.mubr.bf16.gmra.mrb[0].mxu0 %v3958
      %v4096 = vpop.f32.mrb[0].mxu0
      %v4097 = vadd.f32 0.0, %v4096
      %v4098 = vpop.f32.mrb[0].mxu0
      %v4099 = vpop.f32.mrb[0].mxu0
      %v4100 = vadd.f32 0.0, %v4099
      %v4101 = vpop.f32.mrb[0].mxu0
      %4102 = vmatprep.mubr.bf16.mxu0 0
      %4103 = vmatmul.mubr.bf16.gmra.mrb[0].mxu0 %v3961
      %v4104 = vpop.f32.mrb[0].mxu0
      %v4105 = vadd.f32 0.0, %v4104
      %v4106 = vpop.f32.mrb[0].mxu0
      %v4107 = vpop.f32.mrb[0].mxu0
      %v4108 = vadd.f32 0.0, %v4107
      %v4109 = vpop.f32.mrb[0].mxu0
      %4110 = vmatprep.mubr.bf16.mxu0 0
      %4111 = vmatmul.mubr.bf16.gmra.mrb[0].mxu0 %v3961
      %v4112 = vpop.f32.mrb[0].mxu0
      %v4113 = vadd.f32 0.0, %v4112
      %v4114 = vpop.f32.mrb[0].mxu0
      %v4115 = vpop.f32.mrb[0].mxu0
      %v4116 = vadd.f32 0.0, %v4115
      %v4117 = vpop.f32.mrb[0].mxu0
      %4118 = vmatprep.mubr.bf16.mxu0 0
      %4119 = vmatmul.mubr.bf16.gmra.mrb[0].mxu0 %v3964
      %v4120 = vpop.f32.mrb[0].mxu0
      %v4121 = vadd.f32 0.0, %v4120
      %v4122 = vpop.f32.mrb[0].mxu0
      %v4123 = vpop.f32.mrb[0].mxu0
      %v4124 = vadd.f32 0.0, %v4123
      %v4125 = vpop.f32.mrb[0].mxu0
      %4126 = vdwg.mxu0
      %v4135 = vunpack.c.l.b16 %v3803
      %v4136 = vunpack.c.l.b16 %v3804
      %v4137 = vunpack.c.l.b16 %v3805
      %v4138 = vunpack.c.l.b16 %v3806
      %v4139 = vunpack.c.l.b16 %v3807
      %v4140 = vunpack.c.l.b16 %v3808
      %v4141 = vunpack.c.l.b16 %v3809
      %v4142 = vunpack.c.l.b16 %v3810
      %v4143 = vpack.c.b16 %v4136, %v4135
      %v4144 = vpack.c.b16 %v4138, %v4137
      %v4145 = vpack.c.b16 %v4140, %v4139
      %v4146 = vpack.c.b16 %v4142, %v4141
      %v4151 = vsel %vm3941, %v3786, 0
      %v4153 = vsel %vm3941, %v3787, 0
      %v4155 = vsel %vm3941, %v3788, 0
      %v4157 = vsel %vm3941, %v3789, 0
      %v4159 = vsel %vm3941, %v3790, 0
      %v4161 = vsel %vm3941, %v3791, 0
      %v4163 = vsel %vm3941, %v3792, 0
      %v4165 = vsel %vm3941, %v3793, 0
      %4167 = vmatprep.subr.bf16.mxu0 0
      %4168 = vmatpush1.bf16.msra.mxu0 %v4143
      %4169 = vmatprep.subr.bf16.mxu0 0
      %4170 = vmatpush1.bf16.msra.mxu0 %v4144
      %4171 = vmatprep.subr.bf16.mxu0 0
      %4172 = vmatpush1.bf16.msra.mxu0 %v4145
      %4173 = vmatprep.subr.bf16.mxu0 0
      %4174 = vmatpush1.bf16.msra.mxu0 %v4146
      %4175 = vmatprep.subr.bf16.mxu0 0
      %4176 = vmatpush1.bf16.msra.mxu0 0
      %4177 = vmatprep.subr.bf16.mxu0 0
      %4178 = vmatpush1.bf16.msra.mxu0 0
      %4179 = vmatprep.subr.bf16.mxu0 0
      %4180 = vmatpush1.bf16.msra.mxu0 0
      %4181 = vmatprep.subr.bf16.mxu0 0
      %4182 = vmatpush1.bf16.msra.mxu0 0
      %4183 = vmatprep.subr.bf16.mxu0 0
      %4184 = vmatpush1.bf16.msra.mxu0 0
      %4185 = vmatprep.subr.bf16.mxu0 0
      %4186 = vmatpush1.bf16.msra.mxu0 0
      %4187 = vmatprep.subr.bf16.mxu0 0
      %4188 = vmatpush1.bf16.msra.mxu0 0
      %4189 = vmatprep.subr.bf16.mxu0 0
      %4190 = vmatpush1.bf16.msra.mxu0 0
      %4191 = vmatprep.subr.bf16.mxu0 0
      %4192 = vmatpush1.bf16.msra.mxu0 0
      %4193 = vmatprep.subr.bf16.mxu0 0
      %4194 = vmatpush1.bf16.msra.mxu0 0
      %4195 = vmatprep.subr.bf16.mxu0 0
      %4196 = vmatpush1.bf16.msra.mxu0 0
      %4197 = vmatprep.subr.bf16.mxu0 0
      %4198 = vmatpush1.bf16.msra.mxu0 0
      %4199 = vmatprep.mubr.bf16.mxu0 0
      %4200 = vmatmul.mubr.bf16.gmra.mrb[0].mxu0 %v4151
      %v4201 = vpop.f32.mrb[0].mxu0
      %v4202 = vadd.f32 %v4001, %v4201
      %v4203 = vpop.f32.mrb[0].mxu0
      %v4204 = vpop.f32.mrb[0].mxu0
      %v4205 = vadd.f32 %v4004, %v4204
      %v4206 = vpop.f32.mrb[0].mxu0
      %4207 = vmatprep.mubr.bf16.mxu0 0
      %4208 = vmatmul.mubr.bf16.gmra.mrb[0].mxu0 %v4151
      %v4209 = vpop.f32.mrb[0].mxu0
      %v4210 = vadd.f32 %v4009, %v4209
      %v4211 = vpop.f32.mrb[0].mxu0
      %v4212 = vpop.f32.mrb[0].mxu0
      %v4213 = vadd.f32 %v4012, %v4212
      %v4214 = vpop.f32.mrb[0].mxu0
      %4215 = vmatprep.mubr.bf16.mxu0 0
      %4216 = vmatmul.mubr.bf16.gmra.mrb[0].mxu0 %v4151
      %v4217 = vpop.f32.mrb[0].mxu0
      %v4218 = vadd.f32 %v4017, %v4217
      %v4219 = vpop.f32.mrb[0].mxu0
      %v4220 = vpop.f32.mrb[0].mxu0
      %v4221 = vadd.f32 %v4020, %v4220
      %v4222 = vpop.f32.mrb[0].mxu0
      %4223 = vmatprep.mubr.bf16.mxu0 0
      %4224 = vmatmul.mubr.bf16.gmra.mrb[0].mxu0 %v4153
      %v4225 = vpop.f32.mrb[0].mxu0
      %v4226 = vadd.f32 %v4025, %v4225
      %v4227 = vpop.f32.mrb[0].mxu0
      %v4228 = vpop.f32.mrb[0].mxu0
      %v4229 = vadd.f32 %v4028, %v4228
      %v4230 = vpop.f32.mrb[0].mxu0
      %4231 = vmatprep.mubr.bf16.mxu0 0
      %4232 = vmatmul.mubr.bf16.gmra.mrb[0].mxu0 %v4153
      %v4233 = vpop.f32.mrb[0].mxu0
      %v4234 = vadd.f32 %v4033, %v4233
      %v4235 = vpop.f32.mrb[0].mxu0
      %v4236 = vpop.f32.mrb[0].mxu0
      %v4237 = vadd.f32 %v4036, %v4236
      %v4238 = vpop.f32.mrb[0].mxu0
      %4239 = vmatprep.mubr.bf16.mxu0 0
      %4240 = vmatmul.mubr.bf16.gmra.mrb[0].mxu0 %v4155
      %v4241 = vpop.f32.mrb[0].mxu0
      %v4242 = vadd.f32 %v4041, %v4241
      %v4243 = vpop.f32.mrb[0].mxu0
      %v4244 = vpop.f32.mrb[0].mxu0
      %v4245 = vadd.f32 %v4044, %v4244
      %v4246 = vpop.f32.mrb[0].mxu0
      %4247 = vmatprep.mubr.bf16.mxu0 0
      %4248 = vmatmul.mubr.bf16.gmra.mrb[0].mxu0 %v4155
      %v4249 = vpop.f32.mrb[0].mxu0
      %v4250 = vadd.f32 %v4049, %v4249
      %v4251 = vpop.f32.mrb[0].mxu0
      %v4252 = vpop.f32.mrb[0].mxu0
      %v4253 = vadd.f32 %v4052, %v4252
      %v4254 = vpop.f32.mrb[0].mxu0
      %4255 = vmatprep.mubr.bf16.mxu0 0
      %4256 = vmatmul.mubr.bf16.gmra.mrb[0].mxu0 %v4157
      %v4257 = vpop.f32.mrb[0].mxu0
      %v4258 = vadd.f32 %v4057, %v4257
      %v4259 = vpop.f32.mrb[0].mxu0
      %v4260 = vpop.f32.mrb[0].mxu0
      %v4261 = vadd.f32 %v4060, %v4260
      %v4262 = vpop.f32.mrb[0].mxu0
      %4263 = vmatprep.mubr.bf16.mxu0 0
      %4264 = vmatmul.mubr.bf16.gmra.mrb[0].mxu0 %v4157
      %v4265 = vpop.f32.mrb[0].mxu0
      %v4266 = vadd.f32 %v4065, %v4265
      %v4267 = vpop.f32.mrb[0].mxu0
      %v4268 = vpop.f32.mrb[0].mxu0
      %v4269 = vadd.f32 %v4068, %v4268
      %v4270 = vpop.f32.mrb[0].mxu0
      %4271 = vmatprep.mubr.bf16.mxu0 0
      %4272 = vmatmul.mubr.bf16.gmra.mrb[0].mxu0 %v4159
      %v4273 = vpop.f32.mrb[0].mxu0
      %v4274 = vadd.f32 %v4073, %v4273
      %v4275 = vpop.f32.mrb[0].mxu0
      %v4276 = vpop.f32.mrb[0].mxu0
      %v4277 = vadd.f32 %v4076, %v4276
      %v4278 = vpop.f32.mrb[0].mxu0
      %4279 = vmatprep.mubr.bf16.mxu0 0
      %4280 = vmatmul.mubr.bf16.gmra.mrb[0].mxu0 %v4159
      %v4281 = vpop.f32.mrb[0].mxu0
      %v4282 = vadd.f32 %v4081, %v4281
      %v4283 = vpop.f32.mrb[0].mxu0
      %v4284 = vpop.f32.mrb[0].mxu0
      %v4285 = vadd.f32 %v4084, %v4284
      %v4286 = vpop.f32.mrb[0].mxu0
      %4287 = vmatprep.mubr.bf16.mxu0 0
      %4288 = vmatmul.mubr.bf16.gmra.mrb[0].mxu0 %v4161
      %v4289 = vpop.f32.mrb[0].mxu0
      %v4290 = vadd.f32 %v4089, %v4289
      %v4291 = vpop.f32.mrb[0].mxu0
      %v4292 = vpop.f32.mrb[0].mxu0
      %v4293 = vadd.f32 %v4092, %v4292
      %v4294 = vpop.f32.mrb[0].mxu0
      %4295 = vmatprep.mubr.bf16.mxu0 0
      %4296 = vmatmul.mubr.bf16.gmra.mrb[0].mxu0 %v4161
      %v4297 = vpop.f32.mrb[0].mxu0
      %v4298 = vadd.f32 %v4097, %v4297
      %v4299 = vpop.f32.mrb[0].mxu0
      %v4300 = vpop.f32.mrb[0].mxu0
      %v4301 = vadd.f32 %v4100, %v4300
      %v4302 = vpop.f32.mrb[0].mxu0
      %4303 = vmatprep.mubr.bf16.mxu0 0
      %4304 = vmatmul.mubr.bf16.gmra.mrb[0].mxu0 %v4163
      %v4305 = vpop.f32.mrb[0].mxu0
      %v4306 = vadd.f32 %v4105, %v4305
      %v4307 = vpop.f32.mrb[0].mxu0
      %v4308 = vpop.f32.mrb[0].mxu0
      %v4309 = vadd.f32 %v4108, %v4308
      %v4310 = vpop.f32.mrb[0].mxu0
      %4311 = vmatprep.mubr.bf16.mxu0 0
      %4312 = vmatmul.mubr.bf16.gmra.mrb[0].mxu0 %v4163
      %v4313 = vpop.f32.mrb[0].mxu0
      %v4314 = vadd.f32 %v4113, %v4313
      %v4315 = vpop.f32.mrb[0].mxu0
      %v4316 = vpop.f32.mrb[0].mxu0
      %v4317 = vadd.f32 %v4116, %v4316
      %v4318 = vpop.f32.mrb[0].mxu0
      %4319 = vmatprep.mubr.bf16.mxu0 0
      %4320 = vmatmul.mubr.bf16.gmra.mrb[0].mxu0 %v4165
      %v4321 = vpop.f32.mrb[0].mxu0
      %v4322 = vadd.f32 %v4121, %v4321
      %v4323 = vpop.f32.mrb[0].mxu0
      %v4324 = vpop.f32.mrb[0].mxu0
      %v4325 = vadd.f32 %v4124, %v4324
      %v4326 = vpop.f32.mrb[0].mxu0
      %4327 = vdwg.mxu0
      %vm4344 = vcmask 1046528
      %v4345 = vrot.slane %v3786, 1
      %v4346 = vrot.slane %v3794, 1
      %v4347 = vsel %vm4344, %v4345, %v4346
      %v4348 = vrot.slane %v3787, 1
      %v4349 = vrot.slane %v3795, 1
      %v4350 = vsel %vm4344, %v4348, %v4349
      %v4351 = vrot.slane %v3788, 1
      %v4352 = vrot.slane %v3796, 1
      %v4353 = vsel %vm4344, %v4351, %v4352
      %v4354 = vrot.slane %v3789, 1
      %v4355 = vrot.slane %v3797, 1
      %v4356 = vsel %vm4344, %v4354, %v4355
      %v4357 = vrot.slane %v3790, 1
      %v4358 = vrot.slane %v3798, 1
      %v4359 = vsel %vm4344, %v4357, %v4358
      %v4360 = vrot.slane %v3791, 1
      %v4361 = vrot.slane %v3799, 1
      %v4362 = vsel %vm4344, %v4360, %v4361
      %v4363 = vrot.slane %v3792, 1
      %v4364 = vrot.slane %v3800, 1
      %v4365 = vsel %vm4344, %v4363, %v4364
      %v4366 = vrot.slane %v3793, 1
      %v4367 = vrot.slane %v3801, 1
      %v4368 = vsel %vm4344, %v4366, %v4367
      %s4369 = scalar_lea.vmem %s3, 64
      %v4370 = vld [vmem:[%s4369] sm:$0xf]
      %v4371 = vld [vmem:[%s4369 + $0x4] sm:$0xf]
      %v4372 = vld [vmem:[%s4369 + $0x8] sm:$0xf]
      %v4373 = vld [vmem:[%s4369 + $0xc] sm:$0xf]
      %v4374 = vld [vmem:[%s4369 + $0x10] sm:$0xf]
      %v4375 = vld [vmem:[%s4369 + $0x14] sm:$0xf]
      %v4376 = vld [vmem:[%s4369 + $0x18] sm:$0xf]
      %v4377 = vld [vmem:[%s4369 + $0x1c] sm:$0xf]
      %v4386 = vunpack.c.l.b16 %v4370
      %v4387 = vunpack.c.l.b16 %v4371
      %v4388 = vunpack.c.l.b16 %v4372
      %v4389 = vunpack.c.l.b16 %v4373
      %v4390 = vunpack.c.l.b16 %v4374
      %v4391 = vunpack.c.l.b16 %v4375
      %v4392 = vunpack.c.l.b16 %v4376
      %v4393 = vunpack.c.l.b16 %v4377
      %v4394 = vpack.c.b16 %v4387, %v4386
      %v4395 = vpack.c.b16 %v4389, %v4388
      %v4396 = vpack.c.b16 %v4391, %v4390
      %v4397 = vpack.c.b16 %v4393, %v4392
      %v4403 = vsel %vm3941, %v4347, 0
      %v4406 = vsel %vm3941, %v4350, 0
      %v4409 = vsel %vm3941, %v4353, 0
      %v4412 = vsel %vm3941, %v4356, 0
      %v4415 = vsel %vm3941, %v4359, 0
      %v4418 = vsel %vm3941, %v4362, 0
      %v4421 = vsel %vm3941, %v4365, 0
      %v4424 = vsel %vm3941, %v4368, 0
      %4426 = vmatprep.subr.bf16.mxu0 0
      %4427 = vmatpush1.bf16.msra.mxu0 %v4394
      %4428 = vmatprep.subr.bf16.mxu0 0
      %4429 = vmatpush1.bf16.msra.mxu0 %v4395
      %4430 = vmatprep.subr.bf16.mxu0 0
      %4431 = vmatpush1.bf16.msra.mxu0 %v4396
      %4432 = vmatprep.subr.bf16.mxu0 0
      %4433 = vmatpush1.bf16.msra.mxu0 %v4397
      %4434 = vmatprep.subr.bf16.mxu0 0
      %4435 = vmatpush1.bf16.msra.mxu0 0
      %4436 = vmatprep.subr.bf16.mxu0 0
      %4437 = vmatpush1.bf16.msra.mxu0 0
      %4438 = vmatprep.subr.bf16.mxu0 0
      %4439 = vmatpush1.bf16.msra.mxu0 0
      %4440 = vmatprep.subr.bf16.mxu0 0
      %4441 = vmatpush1.bf16.msra.mxu0 0
      %4442 = vmatprep.subr.bf16.mxu0 0
      %4443 = vmatpush1.bf16.msra.mxu0 0
      %4444 = vmatprep.subr.bf16.mxu0 0
      %4445 = vmatpush1.bf16.msra.mxu0 0
      %4446 = vmatprep.subr.bf16.mxu0 0
      %4447 = vmatpush1.bf16.msra.mxu0 0
      %4448 = vmatprep.subr.bf16.mxu0 0
      %4449 = vmatpush1.bf16.msra.mxu0 0
      %4450 = vmatprep.subr.bf16.mxu0 0
      %4451 = vmatpush1.bf16.msra.mxu0 0
      %4452 = vmatprep.subr.bf16.mxu0 0
      %4453 = vmatpush1.bf16.msra.mxu0 0
      %4454 = vmatprep.subr.bf16.mxu0 0
      %4455 = vmatpush1.bf16.msra.mxu0 0
      %4456 = vmatprep.subr.bf16.mxu0 0
      %4457 = vmatpush1.bf16.msra.mxu0 0
      %4458 = vmatprep.mubr.bf16.mxu0 0
      %4459 = vmatmul.mubr.bf16.gmra.mrb[0].mxu0 %v4403
      %v4460 = vpop.f32.mrb[0].mxu0
      %v4461 = vadd.f32 0.0, %v4460
      %v4462 = vpop.f32.mrb[0].mxu0
      %v4463 = vpop.f32.mrb[0].mxu0
      %v4464 = vadd.f32 0.0, %v4463
      %v4465 = vpop.f32.mrb[0].mxu0
      %4466 = vmatprep.mubr.bf16.mxu0 0
      %4467 = vmatmul.mubr.bf16.gmra.mrb[0].mxu0 %v4403
      %v4468 = vpop.f32.mrb[0].mxu0
      %v4469 = vadd.f32 0.0, %v4468
      %v4470 = vpop.f32.mrb[0].mxu0
      %v4471 = vpop.f32.mrb[0].mxu0
      %v4472 = vadd.f32 0.0, %v4471
      %v4473 = vpop.f32.mrb[0].mxu0
      %4474 = vmatprep.mubr.bf16.mxu0 0
      %4475 = vmatmul.mubr.bf16.gmra.mrb[0].mxu0 %v4403
      %v4476 = vpop.f32.mrb[0].mxu0
      %v4477 = vadd.f32 0.0, %v4476
      %v4478 = vpop.f32.mrb[0].mxu0
      %v4479 = vpop.f32.mrb[0].mxu0
      %v4480 = vadd.f32 0.0, %v4479
      %v4481 = vpop.f32.mrb[0].mxu0
      %4482 = vmatprep.mubr.bf16.mxu0 0
      %4483 = vmatmul.mubr.bf16.gmra.mrb[0].mxu0 %v4406
      %v4484 = vpop.f32.mrb[0].mxu0
      %v4485 = vadd.f32 0.0, %v4484
      %v4486 = vpop.f32.mrb[0].mxu0
      %v4487 = vpop.f32.mrb[0].mxu0
      %v4488 = vadd.f32 0.0, %v4487
      %v4489 = vpop.f32.mrb[0].mxu0
      %4490 = vmatprep.mubr.bf16.mxu0 0
      %4491 = vmatmul.mubr.bf16.gmra.mrb[0].mxu0 %v4406
      %v4492 = vpop.f32.mrb[0].mxu0
      %v4493 = vadd.f32 0.0, %v4492
      %v4494 = vpop.f32.mrb[0].mxu0
      %v4495 = vpop.f32.mrb[0].mxu0
      %v4496 = vadd.f32 0.0, %v4495
      %v4497 = vpop.f32.mrb[0].mxu0
      %4498 = vmatprep.mubr.bf16.mxu0 0
      %4499 = vmatmul.mubr.bf16.gmra.mrb[0].mxu0 %v4409
      %v4500 = vpop.f32.mrb[0].mxu0
      %v4501 = vadd.f32 0.0, %v4500
      %v4502 = vpop.f32.mrb[0].mxu0
      %v4503 = vpop.f32.mrb[0].mxu0
      %v4504 = vadd.f32 0.0, %v4503
      %v4505 = vpop.f32.mrb[0].mxu0
      %4506 = vmatprep.mubr.bf16.mxu0 0
      %4507 = vmatmul.mubr.bf16.gmra.mrb[0].mxu0 %v4409
      %v4508 = vpop.f32.mrb[0].mxu0
      %v4509 = vadd.f32 0.0, %v4508
      %v4510 = vpop.f32.mrb[0].mxu0
      %v4511 = vpop.f32.mrb[0].mxu0
      %v4512 = vadd.f32 0.0, %v4511
      %v4513 = vpop.f32.mrb[0].mxu0
      %4514 = vmatprep.mubr.bf16.mxu0 0
      %4515 = vmatmul.mubr.bf16.gmra.mrb[0].mxu0 %v4412
      %v4516 = vpop.f32.mrb[0].mxu0
      %v4517 = vadd.f32 0.0, %v4516
      %v4518 = vpop.f32.mrb[0].mxu0
      %v4519 = vpop.f32.mrb[0].mxu0
      %v4520 = vadd.f32 0.0, %v4519
      %v4521 = vpop.f32.mrb[0].mxu0
      %4522 = vmatprep.mubr.bf16.mxu0 0
      %4523 = vmatmul.mubr.bf16.gmra.mrb[0].mxu0 %v4412
      %v4524 = vpop.f32.mrb[0].mxu0
      %v4525 = vadd.f32 0.0, %v4524
      %v4526 = vpop.f32.mrb[0].mxu0
      %v4527 = vpop.f32.mrb[0].mxu0
      %v4528 = vadd.f32 0.0, %v4527
      %v4529 = vpop.f32.mrb[0].mxu0
      %4530 = vmatprep.mubr.bf16.mxu0 0
      %4531 = vmatmul.mubr.bf16.gmra.mrb[0].mxu0 %v4415
      %v4532 = vpop.f32.mrb[0].mxu0
      %v4533 = vadd.f32 0.0, %v4532
      %v4534 = vpop.f32.mrb[0].mxu0
      %v4535 = vpop.f32.mrb[0].mxu0
      %v4536 = vadd.f32 0.0, %v4535
      %v4537 = vpop.f32.mrb[0].mxu0
      %4538 = vmatprep.mubr.bf16.mxu0 0
      %4539 = vmatmul.mubr.bf16.gmra.mrb[0].mxu0 %v4415
      %v4540 = vpop.f32.mrb[0].mxu0
      %v4541 = vadd.f32 0.0, %v4540
      %v4542 = vpop.f32.mrb[0].mxu0
      %v4543 = vpop.f32.mrb[0].mxu0
      %v4544 = vadd.f32 0.0, %v4543
      %v4545 = vpop.f32.mrb[0].mxu0
      %4546 = vmatprep.mubr.bf16.mxu0 0
      %4547 = vmatmul.mubr.bf16.gmra.mrb[0].mxu0 %v4418
      %v4548 = vpop.f32.mrb[0].mxu0
      %v4549 = vadd.f32 0.0, %v4548
      %v4550 = vpop.f32.mrb[0].mxu0
      %v4551 = vpop.f32.mrb[0].mxu0
      %v4552 = vadd.f32 0.0, %v4551
      %v4553 = vpop.f32.mrb[0].mxu0
      %4554 = vmatprep.mubr.bf16.mxu0 0
      %4555 = vmatmul.mubr.bf16.gmra.mrb[0].mxu0 %v4418
      %v4556 = vpop.f32.mrb[0].mxu0
      %v4557 = vadd.f32 0.0, %v4556
      %v4558 = vpop.f32.mrb[0].mxu0
      %v4559 = vpop.f32.mrb[0].mxu0
      %v4560 = vadd.f32 0.0, %v4559
      %v4561 = vpop.f32.mrb[0].mxu0
      %4562 = vmatprep.mubr.bf16.mxu0 0
      %4563 = vmatmul.mubr.bf16.gmra.mrb[0].mxu0 %v4421
      %v4564 = vpop.f32.mrb[0].mxu0
      %v4565 = vadd.f32 0.0, %v4564
      %v4566 = vpop.f32.mrb[0].mxu0
      %v4567 = vpop.f32.mrb[0].mxu0
      %v4568 = vadd.f32 0.0, %v4567
      %v4569 = vpop.f32.mrb[0].mxu0
      %4570 = vmatprep.mubr.bf16.mxu0 0
      %4571 = vmatmul.mubr.bf16.gmra.mrb[0].mxu0 %v4421
      %v4572 = vpop.f32.mrb[0].mxu0
      %v4573 = vadd.f32 0.0, %v4572
      %v4574 = vpop.f32.mrb[0].mxu0
      %v4575 = vpop.f32.mrb[0].mxu0
      %v4576 = vadd.f32 0.0, %v4575
      %v4577 = vpop.f32.mrb[0].mxu0
      %4578 = vmatprep.mubr.bf16.mxu0 0
      %4579 = vmatmul.mubr.bf16.gmra.mrb[0].mxu0 %v4424
      %v4580 = vpop.f32.mrb[0].mxu0
      %v4581 = vadd.f32 0.0, %v4580
      %v4582 = vpop.f32.mrb[0].mxu0
      %v4583 = vpop.f32.mrb[0].mxu0
      %v4584 = vadd.f32 0.0, %v4583
      %v4585 = vpop.f32.mrb[0].mxu0
      %4586 = vdwg.mxu0
      %v4587 = vadd.f32 %v4202, %v4461
      %v4588 = vadd.f32 %v4205, %v4464
      %v4589 = vadd.f32 %v4210, %v4469
      %v4590 = vadd.f32 %v4213, %v4472
      %v4591 = vadd.f32 %v4218, %v4477
      %v4592 = vadd.f32 %v4221, %v4480
      %v4593 = vadd.f32 %v4226, %v4485
      %v4594 = vadd.f32 %v4229, %v4488
      %v4595 = vadd.f32 %v4234, %v4493
      %v4596 = vadd.f32 %v4237, %v4496
      %v4597 = vadd.f32 %v4242, %v4501
      %v4598 = vadd.f32 %v4245, %v4504
      %v4599 = vadd.f32 %v4250, %v4509
      %v4600 = vadd.f32 %v4253, %v4512
      %v4601 = vadd.f32 %v4258, %v4517
      %v4602 = vadd.f32 %v4261, %v4520
      %v4603 = vadd.f32 %v4266, %v4525
      %v4604 = vadd.f32 %v4269, %v4528
      %v4605 = vadd.f32 %v4274, %v4533
      %v4606 = vadd.f32 %v4277, %v4536
      %v4607 = vadd.f32 %v4282, %v4541
      %v4608 = vadd.f32 %v4285, %v4544
      %v4609 = vadd.f32 %v4290, %v4549
      %v4610 = vadd.f32 %v4293, %v4552
      %v4611 = vadd.f32 %v4298, %v4557
      %v4612 = vadd.f32 %v4301, %v4560
      %v4613 = vadd.f32 %v4306, %v4565
      %v4614 = vadd.f32 %v4309, %v4568
      %v4615 = vadd.f32 %v4314, %v4573
      %v4616 = vadd.f32 %v4317, %v4576
      %v4617 = vadd.f32 %v4322, %v4581
      %v4618 = vadd.f32 %v4325, %v4584
      %s4619 = scalar_lea.vmem %s3, 96
      %v4620 = vld [vmem:[%s4619] sm:$0xf]
      %v4621 = vld [vmem:[%s4619 + $0x4] sm:$0xf]
      %v4622 = vld [vmem:[%s4619 + $0x8] sm:$0xf]
      %v4623 = vld [vmem:[%s4619 + $0xc] sm:$0xf]
      %v4624 = vld [vmem:[%s4619 + $0x10] sm:$0xf]
      %v4625 = vld [vmem:[%s4619 + $0x14] sm:$0xf]
      %v4626 = vld [vmem:[%s4619 + $0x18] sm:$0xf]
      %v4627 = vld [vmem:[%s4619 + $0x1c] sm:$0xf]
      %v4636 = vunpack.c.l.b16 %v4620
      %v4637 = vunpack.c.l.b16 %v4621
      %v4638 = vunpack.c.l.b16 %v4622
      %v4639 = vunpack.c.l.b16 %v4623
      %v4640 = vunpack.c.l.b16 %v4624
      %v4641 = vunpack.c.l.b16 %v4625
      %v4642 = vunpack.c.l.b16 %v4626
      %v4643 = vunpack.c.l.b16 %v4627
      %v4644 = vpack.c.b16 %v4637, %v4636
      %v4645 = vpack.c.b16 %v4639, %v4638
      %v4646 = vpack.c.b16 %v4641, %v4640
      %v4647 = vpack.c.b16 %v4643, %v4642
      %4652 = vmatprep.subr.bf16.mxu0 0
      %4653 = vmatpush1.bf16.msra.mxu0 %v4644
      %4654 = vmatprep.subr.bf16.mxu0 0
      %4655 = vmatpush1.bf16.msra.mxu0 %v4645
      %4656 = vmatprep.subr.bf16.mxu0 0
      %4657 = vmatpush1.bf16.msra.mxu0 %v4646
      %4658 = vmatprep.subr.bf16.mxu0 0
      %4659 = vmatpush1.bf16.msra.mxu0 %v4647
      %4660 = vmatprep.subr.bf16.mxu0 0
      %4661 = vmatpush1.bf16.msra.mxu0 0
      %4662 = vmatprep.subr.bf16.mxu0 0
      %4663 = vmatpush1.bf16.msra.mxu0 0
      %4664 = vmatprep.subr.bf16.mxu0 0
      %4665 = vmatpush1.bf16.msra.mxu0 0
      %4666 = vmatprep.subr.bf16.mxu0 0
      %4667 = vmatpush1.bf16.msra.mxu0 0
      %4668 = vmatprep.subr.bf16.mxu0 0
      %4669 = vmatpush1.bf16.msra.mxu0 0
      %4670 = vmatprep.subr.bf16.mxu0 0
      %4671 = vmatpush1.bf16.msra.mxu0 0
      %4672 = vmatprep.subr.bf16.mxu0 0
      %4673 = vmatpush1.bf16.msra.mxu0 0
      %4674 = vmatprep.subr.bf16.mxu0 0
      %4675 = vmatpush1.bf16.msra.mxu0 0
      %4676 = vmatprep.subr.bf16.mxu0 0
      %4677 = vmatpush1.bf16.msra.mxu0 0
      %4678 = vmatprep.subr.bf16.mxu0 0
      %4679 = vmatpush1.bf16.msra.mxu0 0
      %4680 = vmatprep.subr.bf16.mxu0 0
      %4681 = vmatpush1.bf16.msra.mxu0 0
      %4682 = vmatprep.subr.bf16.mxu0 0
      %4683 = vmatpush1.bf16.msra.mxu0 0
      %4684 = vmatprep.mubr.bf16.mxu0 0
      %4685 = vmatmul.mubr.bf16.gmra.mrb[0].mxu0 %v4151
      %v4686 = vpop.f32.mrb[0].mxu0
      %v4687 = vadd.f32 0.0, %v4686
      %v4688 = vpop.f32.mrb[0].mxu0
      %v4689 = vpop.f32.mrb[0].mxu0
      %v4690 = vadd.f32 0.0, %v4689
      %v4691 = vpop.f32.mrb[0].mxu0
      %4692 = vmatprep.mubr.bf16.mxu0 0
      %4693 = vmatmul.mubr.bf16.gmra.mrb[0].mxu0 %v4151
      %v4694 = vpop.f32.mrb[0].mxu0
      %v4695 = vadd.f32 0.0, %v4694
      %v4696 = vpop.f32.mrb[0].mxu0
      %v4697 = vpop.f32.mrb[0].mxu0
      %v4698 = vadd.f32 0.0, %v4697
      %v4699 = vpop.f32.mrb[0].mxu0
      %4700 = vmatprep.mubr.bf16.mxu0 0
      %4701 = vmatmul.mubr.bf16.gmra.mrb[0].mxu0 %v4153
      %v4702 = vpop.f32.mrb[0].mxu0
      %v4703 = vadd.f32 0.0, %v4702
      %v4704 = vpop.f32.mrb[0].mxu0
      %v4705 = vpop.f32.mrb[0].mxu0
      %v4706 = vadd.f32 0.0, %v4705
      %v4707 = vpop.f32.mrb[0].mxu0
      %4708 = vmatprep.mubr.bf16.mxu0 0
      %4709 = vmatmul.mubr.bf16.gmra.mrb[0].mxu0 %v4153
      %v4710 = vpop.f32.mrb[0].mxu0
      %v4711 = vadd.f32 0.0, %v4710
      %v4712 = vpop.f32.mrb[0].mxu0
      %v4713 = vpop.f32.mrb[0].mxu0
      %v4714 = vadd.f32 0.0, %v4713
      %v4715 = vpop.f32.mrb[0].mxu0
      %4716 = vmatprep.mubr.bf16.mxu0 0
      %4717 = vmatmul.mubr.bf16.gmra.mrb[0].mxu0 %v4155
      %v4718 = vpop.f32.mrb[0].mxu0
      %v4719 = vadd.f32 0.0, %v4718
      %v4720 = vpop.f32.mrb[0].mxu0
      %v4721 = vpop.f32.mrb[0].mxu0
      %v4722 = vadd.f32 0.0, %v4721
      %v4723 = vpop.f32.mrb[0].mxu0
      %4724 = vmatprep.mubr.bf16.mxu0 0
      %4725 = vmatmul.mubr.bf16.gmra.mrb[0].mxu0 %v4155
      %v4726 = vpop.f32.mrb[0].mxu0
      %v4727 = vadd.f32 0.0, %v4726
      %v4728 = vpop.f32.mrb[0].mxu0
      %v4729 = vpop.f32.mrb[0].mxu0
      %v4730 = vadd.f32 0.0, %v4729
      %v4731 = vpop.f32.mrb[0].mxu0
      %4732 = vmatprep.mubr.bf16.mxu0 0
      %4733 = vmatmul.mubr.bf16.gmra.mrb[0].mxu0 %v4157
      %v4734 = vpop.f32.mrb[0].mxu0
      %v4735 = vadd.f32 0.0, %v4734
      %v4736 = vpop.f32.mrb[0].mxu0
      %v4737 = vpop.f32.mrb[0].mxu0
      %v4738 = vadd.f32 0.0, %v4737
      %v4739 = vpop.f32.mrb[0].mxu0
      %4740 = vmatprep.mubr.bf16.mxu0 0
      %4741 = vmatmul.mubr.bf16.gmra.mrb[0].mxu0 %v4157
      %v4742 = vpop.f32.mrb[0].mxu0
      %v4743 = vadd.f32 0.0, %v4742
      %v4744 = vpop.f32.mrb[0].mxu0
      %v4745 = vpop.f32.mrb[0].mxu0
      %v4746 = vadd.f32 0.0, %v4745
      %v4747 = vpop.f32.mrb[0].mxu0
      %4748 = vmatprep.mubr.bf16.mxu0 0
      %4749 = vmatmul.mubr.bf16.gmra.mrb[0].mxu0 %v4159
      %v4750 = vpop.f32.mrb[0].mxu0
      %v4751 = vadd.f32 0.0, %v4750
      %v4752 = vpop.f32.mrb[0].mxu0
      %v4753 = vpop.f32.mrb[0].mxu0
      %v4754 = vadd.f32 0.0, %v4753
      %v4755 = vpop.f32.mrb[0].mxu0
      %4756 = vmatprep.mubr.bf16.mxu0 0
      %4757 = vmatmul.mubr.bf16.gmra.mrb[0].mxu0 %v4159
      %v4758 = vpop.f32.mrb[0].mxu0
      %v4759 = vadd.f32 0.0, %v4758
      %v4760 = vpop.f32.mrb[0].mxu0
      %v4761 = vpop.f32.mrb[0].mxu0
      %v4762 = vadd.f32 0.0, %v4761
      %v4763 = vpop.f32.mrb[0].mxu0
      %4764 = vmatprep.mubr.bf16.mxu0 0
      %4765 = vmatmul.mubr.bf16.gmra.mrb[0].mxu0 %v4161
      %v4766 = vpop.f32.mrb[0].mxu0
      %v4767 = vadd.f32 0.0, %v4766
      %v4768 = vpop.f32.mrb[0].mxu0
      %v4769 = vpop.f32.mrb[0].mxu0
      %v4770 = vadd.f32 0.0, %v4769
      %v4771 = vpop.f32.mrb[0].mxu0
      %4772 = vmatprep.mubr.bf16.mxu0 0
      %4773 = vmatmul.mubr.bf16.gmra.mrb[0].mxu0 %v4161
      %v4774 = vpop.f32.mrb[0].mxu0
      %v4775 = vadd.f32 0.0, %v4774
      %v4776 = vpop.f32.mrb[0].mxu0
      %v4777 = vpop.f32.mrb[0].mxu0
      %v4778 = vadd.f32 0.0, %v4777
      %v4779 = vpop.f32.mrb[0].mxu0
      %4780 = vmatprep.mubr.bf16.mxu0 0
      %4781 = vmatmul.mubr.bf16.gmra.mrb[0].mxu0 %v4163
      %v4782 = vpop.f32.mrb[0].mxu0
      %v4783 = vadd.f32 0.0, %v4782
      %v4784 = vpop.f32.mrb[0].mxu0
      %v4785 = vpop.f32.mrb[0].mxu0
      %v4786 = vadd.f32 0.0, %v4785
      %v4787 = vpop.f32.mrb[0].mxu0
      %4788 = vmatprep.mubr.bf16.mxu0 0
      %4789 = vmatmul.mubr.bf16.gmra.mrb[0].mxu0 %v4163
      %v4790 = vpop.f32.mrb[0].mxu0
      %v4791 = vadd.f32 0.0, %v4790
      %v4792 = vpop.f32.mrb[0].mxu0
      %v4793 = vpop.f32.mrb[0].mxu0
      %v4794 = vadd.f32 0.0, %v4793
      %v4795 = vpop.f32.mrb[0].mxu0
      %4796 = vmatprep.mubr.bf16.mxu0 0
      %4797 = vmatmul.mubr.bf16.gmra.mrb[0].mxu0 %v4165
      %v4798 = vpop.f32.mrb[0].mxu0
      %v4799 = vadd.f32 0.0, %v4798
      %v4800 = vpop.f32.mrb[0].mxu0
      %v4801 = vpop.f32.mrb[0].mxu0
      %v4802 = vadd.f32 0.0, %v4801
      %v4803 = vpop.f32.mrb[0].mxu0
      %4804 = vmatprep.mubr.bf16.mxu0 0
      %4805 = vmatmul.mubr.bf16.gmra.mrb[0].mxu0 %v4165
      %v4806 = vpop.f32.mrb[0].mxu0
      %v4807 = vadd.f32 0.0, %v4806
      %v4808 = vpop.f32.mrb[0].mxu0
      %v4809 = vpop.f32.mrb[0].mxu0
      %v4810 = vadd.f32 0.0, %v4809
      %v4811 = vpop.f32.mrb[0].mxu0
      %4812 = vdwg.mxu0
      %v4813 = vadd.f32 %v4587, %v4687
      %v4814 = vadd.f32 %v4588, %v4690
      %v4815 = vadd.f32 %v4589, %v4695
      %v4816 = vadd.f32 %v4590, %v4698
      %v4817 = vadd.f32 %v4591, %v4703
      %v4818 = vadd.f32 %v4592, %v4706
      %v4819 = vadd.f32 %v4593, %v4711
      %v4820 = vadd.f32 %v4594, %v4714
      %v4821 = vadd.f32 %v4595, %v4719
      %v4822 = vadd.f32 %v4596, %v4722
      %v4823 = vadd.f32 %v4597, %v4727
      %v4824 = vadd.f32 %v4598, %v4730
      %v4825 = vadd.f32 %v4599, %v4735
      %v4826 = vadd.f32 %v4600, %v4738
      %v4827 = vadd.f32 %v4601, %v4743
      %v4828 = vadd.f32 %v4602, %v4746
      %v4829 = vadd.f32 %v4603, %v4751
      %v4830 = vadd.f32 %v4604, %v4754
      %v4831 = vadd.f32 %v4605, %v4759
      %v4832 = vadd.f32 %v4606, %v4762
      %v4833 = vadd.f32 %v4607, %v4767
      %v4834 = vadd.f32 %v4608, %v4770
      %v4835 = vadd.f32 %v4609, %v4775
      %v4836 = vadd.f32 %v4610, %v4778
      %v4837 = vadd.f32 %v4611, %v4783
      %v4838 = vadd.f32 %v4612, %v4786
      %v4839 = vadd.f32 %v4613, %v4791
      %v4840 = vadd.f32 %v4614, %v4794
      %v4841 = vadd.f32 %v4615, %v4799
      %v4842 = vadd.f32 %v4616, %v4802
      %v4843 = vadd.f32 %v4617, %v4807
      %v4844 = vadd.f32 %v4618, %v4810
      %s4845 = scalar_lea.vmem %s3, 128
      %v4846 = vld [vmem:[%s4845] sm:$0xf]
      %v4847 = vld [vmem:[%s4845 + $0x4] sm:$0xf]
      %v4848 = vld [vmem:[%s4845 + $0x8] sm:$0xf]
      %v4849 = vld [vmem:[%s4845 + $0xc] sm:$0xf]
      %v4850 = vld [vmem:[%s4845 + $0x10] sm:$0xf]
      %v4851 = vld [vmem:[%s4845 + $0x14] sm:$0xf]
      %v4852 = vld [vmem:[%s4845 + $0x18] sm:$0xf]
      %v4853 = vld [vmem:[%s4845 + $0x1c] sm:$0xf]
      %v4862 = vunpack.c.l.b16 %v4846
      %v4863 = vunpack.c.l.b16 %v4847
      %v4864 = vunpack.c.l.b16 %v4848
      %v4865 = vunpack.c.l.b16 %v4849
      %v4866 = vunpack.c.l.b16 %v4850
      %v4867 = vunpack.c.l.b16 %v4851
      %v4868 = vunpack.c.l.b16 %v4852
      %v4869 = vunpack.c.l.b16 %v4853
      %v4870 = vpack.c.b16 %v4863, %v4862
      %v4871 = vpack.c.b16 %v4865, %v4864
      %v4872 = vpack.c.b16 %v4867, %v4866
      %v4873 = vpack.c.b16 %v4869, %v4868
      %4878 = vmatprep.subr.bf16.mxu0 0
      %4879 = vmatpush1.bf16.msra.mxu0 %v4870
      %4880 = vmatprep.subr.bf16.mxu0 0
      %4881 = vmatpush1.bf16.msra.mxu0 %v4871
      %4882 = vmatprep.subr.bf16.mxu0 0
      %4883 = vmatpush1.bf16.msra.mxu0 %v4872
      %4884 = vmatprep.subr.bf16.mxu0 0
      %4885 = vmatpush1.bf16.msra.mxu0 %v4873
      %4886 = vmatprep.subr.bf16.mxu0 0
      %4887 = vmatpush1.bf16.msra.mxu0 0
      %4888 = vmatprep.subr.bf16.mxu0 0
      %4889 = vmatpush1.bf16.msra.mxu0 0
      %4890 = vmatprep.subr.bf16.mxu0 0
      %4891 = vmatpush1.bf16.msra.mxu0 0
      %4892 = vmatprep.subr.bf16.mxu0 0
      %4893 = vmatpush1.bf16.msra.mxu0 0
      %4894 = vmatprep.subr.bf16.mxu0 0
      %4895 = vmatpush1.bf16.msra.mxu0 0
      %4896 = vmatprep.subr.bf16.mxu0 0
      %4897 = vmatpush1.bf16.msra.mxu0 0
      %4898 = vmatprep.subr.bf16.mxu0 0
      %4899 = vmatpush1.bf16.msra.mxu0 0
      %4900 = vmatprep.subr.bf16.mxu0 0
      %4901 = vmatpush1.bf16.msra.mxu0 0
      %4902 = vmatprep.subr.bf16.mxu0 0
      %4903 = vmatpush1.bf16.msra.mxu0 0
      %4904 = vmatprep.subr.bf16.mxu0 0
      %4905 = vmatpush1.bf16.msra.mxu0 0
      %4906 = vmatprep.subr.bf16.mxu0 0
      %4907 = vmatpush1.bf16.msra.mxu0 0
      %4908 = vmatprep.subr.bf16.mxu0 0
      %4909 = vmatpush1.bf16.msra.mxu0 0
      %4910 = vmatprep.mubr.bf16.mxu0 0
      %4911 = vmatmul.mubr.bf16.gmra.mrb[0].mxu0 %v3943
      %v4912 = vpop.f32.mrb[0].mxu0
      %v4913 = vadd.f32 0.0, %v4912
      %v4914 = vpop.f32.mrb[0].mxu0
      %v4915 = vpop.f32.mrb[0].mxu0
      %v4916 = vadd.f32 0.0, %v4915
      %v4917 = vpop.f32.mrb[0].mxu0
      %4918 = vmatprep.mubr.bf16.mxu0 0
      %4919 = vmatmul.mubr.bf16.gmra.mrb[0].mxu0 %v3943
      %v4920 = vpop.f32.mrb[0].mxu0
      %v4921 = vadd.f32 0.0, %v4920
      %v4922 = vpop.f32.mrb[0].mxu0
      %v4923 = vpop.f32.mrb[0].mxu0
      %v4924 = vadd.f32 0.0, %v4923
      %v4925 = vpop.f32.mrb[0].mxu0
      %4926 = vmatprep.mubr.bf16.mxu0 0
      %4927 = vmatmul.mubr.bf16.gmra.mrb[0].mxu0 %v3946
      %v4928 = vpop.f32.mrb[0].mxu0
      %v4929 = vadd.f32 0.0, %v4928
      %v4930 = vpop.f32.mrb[0].mxu0
      %v4931 = vpop.f32.mrb[0].mxu0
      %v4932 = vadd.f32 0.0, %v4931
      %v4933 = vpop.f32.mrb[0].mxu0
      %4934 = vmatprep.mubr.bf16.mxu0 0
      %4935 = vmatmul.mubr.bf16.gmra.mrb[0].mxu0 %v3946
      %v4936 = vpop.f32.mrb[0].mxu0
      %v4937 = vadd.f32 0.0, %v4936
      %v4938 = vpop.f32.mrb[0].mxu0
      %v4939 = vpop.f32.mrb[0].mxu0
      %v4940 = vadd.f32 0.0, %v4939
      %v4941 = vpop.f32.mrb[0].mxu0
      %4942 = vmatprep.mubr.bf16.mxu0 0
      %4943 = vmatmul.mubr.bf16.gmra.mrb[0].mxu0 %v3949
      %v4944 = vpop.f32.mrb[0].mxu0
      %v4945 = vadd.f32 0.0, %v4944
      %v4946 = vpop.f32.mrb[0].mxu0
      %v4947 = vpop.f32.mrb[0].mxu0
      %v4948 = vadd.f32 0.0, %v4947
      %v4949 = vpop.f32.mrb[0].mxu0
      %4950 = vmatprep.mubr.bf16.mxu0 0
      %4951 = vmatmul.mubr.bf16.gmra.mrb[0].mxu0 %v3949
      %v4952 = vpop.f32.mrb[0].mxu0
      %v4953 = vadd.f32 0.0, %v4952
      %v4954 = vpop.f32.mrb[0].mxu0
      %v4955 = vpop.f32.mrb[0].mxu0
      %v4956 = vadd.f32 0.0, %v4955
      %v4957 = vpop.f32.mrb[0].mxu0
      %4958 = vmatprep.mubr.bf16.mxu0 0
      %4959 = vmatmul.mubr.bf16.gmra.mrb[0].mxu0 %v3952
      %v4960 = vpop.f32.mrb[0].mxu0
      %v4961 = vadd.f32 0.0, %v4960
      %v4962 = vpop.f32.mrb[0].mxu0
      %v4963 = vpop.f32.mrb[0].mxu0
      %v4964 = vadd.f32 0.0, %v4963
      %v4965 = vpop.f32.mrb[0].mxu0
      %4966 = vmatprep.mubr.bf16.mxu0 0
      %4967 = vmatmul.mubr.bf16.gmra.mrb[0].mxu0 %v3952
      %v4968 = vpop.f32.mrb[0].mxu0
      %v4969 = vadd.f32 0.0, %v4968
      %v4970 = vpop.f32.mrb[0].mxu0
      %v4971 = vpop.f32.mrb[0].mxu0
      %v4972 = vadd.f32 0.0, %v4971
      %v4973 = vpop.f32.mrb[0].mxu0
      %4974 = vmatprep.mubr.bf16.mxu0 0
      %4975 = vmatmul.mubr.bf16.gmra.mrb[0].mxu0 %v3955
      %v4976 = vpop.f32.mrb[0].mxu0
      %v4977 = vadd.f32 0.0, %v4976
      %v4978 = vpop.f32.mrb[0].mxu0
      %v4979 = vpop.f32.mrb[0].mxu0
      %v4980 = vadd.f32 0.0, %v4979
      %v4981 = vpop.f32.mrb[0].mxu0
      %4982 = vmatprep.mubr.bf16.mxu0 0
      %4983 = vmatmul.mubr.bf16.gmra.mrb[0].mxu0 %v3955
      %v4984 = vpop.f32.mrb[0].mxu0
      %v4985 = vadd.f32 0.0, %v4984
      %v4986 = vpop.f32.mrb[0].mxu0
      %v4987 = vpop.f32.mrb[0].mxu0
      %v4988 = vadd.f32 0.0, %v4987
      %v4989 = vpop.f32.mrb[0].mxu0
      %4990 = vmatprep.mubr.bf16.mxu0 0
      %4991 = vmatmul.mubr.bf16.gmra.mrb[0].mxu0 %v3958
      %v4992 = vpop.f32.mrb[0].mxu0
      %v4993 = vadd.f32 0.0, %v4992
      %v4994 = vpop.f32.mrb[0].mxu0
      %v4995 = vpop.f32.mrb[0].mxu0
      %v4996 = vadd.f32 0.0, %v4995
      %v4997 = vpop.f32.mrb[0].mxu0
      %4998 = vmatprep.mubr.bf16.mxu0 0
      %4999 = vmatmul.mubr.bf16.gmra.mrb[0].mxu0 %v3958
      %v5000 = vpop.f32.mrb[0].mxu0
      %v5001 = vadd.f32 0.0, %v5000
      %v5002 = vpop.f32.mrb[0].mxu0
      %v5003 = vpop.f32.mrb[0].mxu0
      %v5004 = vadd.f32 0.0, %v5003
      %v5005 = vpop.f32.mrb[0].mxu0
      %5006 = vmatprep.mubr.bf16.mxu0 0
      %5007 = vmatmul.mubr.bf16.gmra.mrb[0].mxu0 %v3961
      %v5008 = vpop.f32.mrb[0].mxu0
      %v5009 = vadd.f32 0.0, %v5008
      %v5010 = vpop.f32.mrb[0].mxu0
      %v5011 = vpop.f32.mrb[0].mxu0
      %v5012 = vadd.f32 0.0, %v5011
      %v5013 = vpop.f32.mrb[0].mxu0
      %5014 = vmatprep.mubr.bf16.mxu0 0
      %5015 = vmatmul.mubr.bf16.gmra.mrb[0].mxu0 %v3961
      %v5016 = vpop.f32.mrb[0].mxu0
      %v5017 = vadd.f32 0.0, %v5016
      %v5018 = vpop.f32.mrb[0].mxu0
      %v5019 = vpop.f32.mrb[0].mxu0
      %v5020 = vadd.f32 0.0, %v5019
      %v5021 = vpop.f32.mrb[0].mxu0
      %5022 = vmatprep.mubr.bf16.mxu0 0
      %5023 = vmatmul.mubr.bf16.gmra.mrb[0].mxu0 %v3964
      %v5024 = vpop.f32.mrb[0].mxu0
      %v5025 = vadd.f32 0.0, %v5024
      %v5026 = vpop.f32.mrb[0].mxu0
      %v5027 = vpop.f32.mrb[0].mxu0
      %v5028 = vadd.f32 0.0, %v5027
      %v5029 = vpop.f32.mrb[0].mxu0
      %5030 = vmatprep.mubr.bf16.mxu0 0
      %5031 = vmatmul.mubr.bf16.gmra.mrb[0].mxu0 %v3964
      %v5032 = vpop.f32.mrb[0].mxu0
      %v5033 = vadd.f32 0.0, %v5032
      %v5034 = vpop.f32.mrb[0].mxu0
      %v5035 = vpop.f32.mrb[0].mxu0
      %v5036 = vadd.f32 0.0, %v5035
      %v5037 = vpop.f32.mrb[0].mxu0
      %5038 = vdwg.mxu0
      %v5039 = vadd.f32 %v4813, %v4913
      %v5040 = vadd.f32 %v4814, %v4916
      %v5041 = vadd.f32 %v4815, %v4921
      %v5042 = vadd.f32 %v4816, %v4924
      %v5043 = vadd.f32 %v4817, %v4929
      %v5044 = vadd.f32 %v4818, %v4932
      %v5045 = vadd.f32 %v4819, %v4937
      %v5046 = vadd.f32 %v4820, %v4940
      %v5047 = vadd.f32 %v4821, %v4945
      %v5048 = vadd.f32 %v4822, %v4948
      %v5049 = vadd.f32 %v4823, %v4953
      %v5050 = vadd.f32 %v4824, %v4956
      %v5051 = vadd.f32 %v4825, %v4961
      %v5052 = vadd.f32 %v4826, %v4964
      %v5053 = vadd.f32 %v4827, %v4969
      %v5054 = vadd.f32 %v4828, %v4972
      %v5055 = vadd.f32 %v4829, %v4977
      %v5056 = vadd.f32 %v4830, %v4980
      %v5057 = vadd.f32 %v4831, %v4985
      %v5058 = vadd.f32 %v4832, %v4988
      %v5059 = vadd.f32 %v4833, %v4993
      %v5060 = vadd.f32 %v4834, %v4996
      %v5061 = vadd.f32 %v4835, %v5001
      %v5062 = vadd.f32 %v4836, %v5004
      %v5063 = vadd.f32 %v4837, %v5009
      %v5064 = vadd.f32 %v4838, %v5012
      %v5065 = vadd.f32 %v4839, %v5017
      %v5066 = vadd.f32 %v4840, %v5020
      %v5067 = vadd.f32 %v4841, %v5025
      %v5068 = vadd.f32 %v4842, %v5028
      %v5069 = vadd.f32 %v4843, %v5033
      %v5070 = vadd.f32 %v4844, %v5036
      %s5071 = scalar_lea.vmem %s3, 160
      %v5072 = vld [vmem:[%s5071] sm:$0xf]
      %v5073 = vld [vmem:[%s5071 + $0x4] sm:$0xf]
      %v5074 = vld [vmem:[%s5071 + $0x8] sm:$0xf]
      %v5075 = vld [vmem:[%s5071 + $0xc] sm:$0xf]
      %v5076 = vld [vmem:[%s5071 + $0x10] sm:$0xf]
      %v5077 = vld [vmem:[%s5071 + $0x14] sm:$0xf]
      %v5078 = vld [vmem:[%s5071 + $0x18] sm:$0xf]
      %v5079 = vld [vmem:[%s5071 + $0x1c] sm:$0xf]
      %v5088 = vunpack.c.l.b16 %v5072
      %v5089 = vunpack.c.l.b16 %v5073
      %v5090 = vunpack.c.l.b16 %v5074
      %v5091 = vunpack.c.l.b16 %v5075
      %v5092 = vunpack.c.l.b16 %v5076
      %v5093 = vunpack.c.l.b16 %v5077
      %v5094 = vunpack.c.l.b16 %v5078
      %v5095 = vunpack.c.l.b16 %v5079
      %v5096 = vpack.c.b16 %v5089, %v5088
      %v5097 = vpack.c.b16 %v5091, %v5090
      %v5098 = vpack.c.b16 %v5093, %v5092
      %v5099 = vpack.c.b16 %v5095, %v5094
      %5104 = vmatprep.subr.bf16.mxu0 0
      %5105 = vmatpush1.bf16.msra.mxu0 %v5096
      %5106 = vmatprep.subr.bf16.mxu0 0
      %5107 = vmatpush1.bf16.msra.mxu0 %v5097
      %5108 = vmatprep.subr.bf16.mxu0 0
      %5109 = vmatpush1.bf16.msra.mxu0 %v5098
      %5110 = vmatprep.subr.bf16.mxu0 0
      %5111 = vmatpush1.bf16.msra.mxu0 %v5099
      %5112 = vmatprep.subr.bf16.mxu0 0
      %5113 = vmatpush1.bf16.msra.mxu0 0
      %5114 = vmatprep.subr.bf16.mxu0 0
      %5115 = vmatpush1.bf16.msra.mxu0 0
      %5116 = vmatprep.subr.bf16.mxu0 0
      %5117 = vmatpush1.bf16.msra.mxu0 0
      %5118 = vmatprep.subr.bf16.mxu0 0
      %5119 = vmatpush1.bf16.msra.mxu0 0
      %5120 = vmatprep.subr.bf16.mxu0 0
      %5121 = vmatpush1.bf16.msra.mxu0 0
      %5122 = vmatprep.subr.bf16.mxu0 0
      %5123 = vmatpush1.bf16.msra.mxu0 0
      %5124 = vmatprep.subr.bf16.mxu0 0
      %5125 = vmatpush1.bf16.msra.mxu0 0
      %5126 = vmatprep.subr.bf16.mxu0 0
      %5127 = vmatpush1.bf16.msra.mxu0 0
      %5128 = vmatprep.subr.bf16.mxu0 0
      %5129 = vmatpush1.bf16.msra.mxu0 0
      %5130 = vmatprep.subr.bf16.mxu0 0
      %5131 = vmatpush1.bf16.msra.mxu0 0
      %5132 = vmatprep.subr.bf16.mxu0 0
      %5133 = vmatpush1.bf16.msra.mxu0 0
      %5134 = vmatprep.subr.bf16.mxu0 0
      %5135 = vmatpush1.bf16.msra.mxu0 0
      %5136 = vmatprep.mubr.bf16.mxu0 0
      %5137 = vmatmul.mubr.bf16.gmra.mrb[0].mxu0 %v4403
      %v5138 = vpop.f32.mrb[0].mxu0
      %v5139 = vadd.f32 0.0, %v5138
      %v5140 = vpop.f32.mrb[0].mxu0
      %v5141 = vpop.f32.mrb[0].mxu0
      %v5142 = vadd.f32 0.0, %v5141
      %v5143 = vpop.f32.mrb[0].mxu0
      %5144 = vmatprep.mubr.bf16.mxu0 0
      %5145 = vmatmul.mubr.bf16.gmra.mrb[0].mxu0 %v4403
      %v5146 = vpop.f32.mrb[0].mxu0
      %v5147 = vadd.f32 0.0, %v5146
      %v5148 = vpop.f32.mrb[0].mxu0
      %v5149 = vpop.f32.mrb[0].mxu0
      %v5150 = vadd.f32 0.0, %v5149
      %v5151 = vpop.f32.mrb[0].mxu0
      %5152 = vmatprep.mubr.bf16.mxu0 0
      %5153 = vmatmul.mubr.bf16.gmra.mrb[0].mxu0 %v4406
      %v5154 = vpop.f32.mrb[0].mxu0
      %v5155 = vadd.f32 0.0, %v5154
      %v5156 = vpop.f32.mrb[0].mxu0
      %v5157 = vpop.f32.mrb[0].mxu0
      %v5158 = vadd.f32 0.0, %v5157
      %v5159 = vpop.f32.mrb[0].mxu0
      %5160 = vmatprep.mubr.bf16.mxu0 0
      %5161 = vmatmul.mubr.bf16.gmra.mrb[0].mxu0 %v4406
      %v5162 = vpop.f32.mrb[0].mxu0
      %v5163 = vadd.f32 0.0, %v5162
      %v5164 = vpop.f32.mrb[0].mxu0
      %v5165 = vpop.f32.mrb[0].mxu0
      %v5166 = vadd.f32 0.0, %v5165
      %v5167 = vpop.f32.mrb[0].mxu0
      %5168 = vmatprep.mubr.bf16.mxu0 0
      %5169 = vmatmul.mubr.bf16.gmra.mrb[0].mxu0 %v4409
      %v5170 = vpop.f32.mrb[0].mxu0
      %v5171 = vadd.f32 0.0, %v5170
      %v5172 = vpop.f32.mrb[0].mxu0
      %v5173 = vpop.f32.mrb[0].mxu0
      %v5174 = vadd.f32 0.0, %v5173
      %v5175 = vpop.f32.mrb[0].mxu0
      %5176 = vmatprep.mubr.bf16.mxu0 0
      %5177 = vmatmul.mubr.bf16.gmra.mrb[0].mxu0 %v4409
      %v5178 = vpop.f32.mrb[0].mxu0
      %v5179 = vadd.f32 0.0, %v5178
      %v5180 = vpop.f32.mrb[0].mxu0
      %v5181 = vpop.f32.mrb[0].mxu0
      %v5182 = vadd.f32 0.0, %v5181
      %v5183 = vpop.f32.mrb[0].mxu0
      %5184 = vmatprep.mubr.bf16.mxu0 0
      %5185 = vmatmul.mubr.bf16.gmra.mrb[0].mxu0 %v4412
      %v5186 = vpop.f32.mrb[0].mxu0
      %v5187 = vadd.f32 0.0, %v5186
      %v5188 = vpop.f32.mrb[0].mxu0
      %v5189 = vpop.f32.mrb[0].mxu0
      %v5190 = vadd.f32 0.0, %v5189
      %v5191 = vpop.f32.mrb[0].mxu0
      %5192 = vmatprep.mubr.bf16.mxu0 0
      %5193 = vmatmul.mubr.bf16.gmra.mrb[0].mxu0 %v4412
      %v5194 = vpop.f32.mrb[0].mxu0
      %v5195 = vadd.f32 0.0, %v5194
      %v5196 = vpop.f32.mrb[0].mxu0
      %v5197 = vpop.f32.mrb[0].mxu0
      %v5198 = vadd.f32 0.0, %v5197
      %v5199 = vpop.f32.mrb[0].mxu0
      %5200 = vmatprep.mubr.bf16.mxu0 0
      %5201 = vmatmul.mubr.bf16.gmra.mrb[0].mxu0 %v4415
      %v5202 = vpop.f32.mrb[0].mxu0
      %v5203 = vadd.f32 0.0, %v5202
      %v5204 = vpop.f32.mrb[0].mxu0
      %v5205 = vpop.f32.mrb[0].mxu0
      %v5206 = vadd.f32 0.0, %v5205
      %v5207 = vpop.f32.mrb[0].mxu0
      %5208 = vmatprep.mubr.bf16.mxu0 0
      %5209 = vmatmul.mubr.bf16.gmra.mrb[0].mxu0 %v4415
      %v5210 = vpop.f32.mrb[0].mxu0
      %v5211 = vadd.f32 0.0, %v5210
      %v5212 = vpop.f32.mrb[0].mxu0
      %v5213 = vpop.f32.mrb[0].mxu0
      %v5214 = vadd.f32 0.0, %v5213
      %v5215 = vpop.f32.mrb[0].mxu0
      %5216 = vmatprep.mubr.bf16.mxu0 0
      %5217 = vmatmul.mubr.bf16.gmra.mrb[0].mxu0 %v4418
      %v5218 = vpop.f32.mrb[0].mxu0
      %v5219 = vadd.f32 0.0, %v5218
      %v5220 = vpop.f32.mrb[0].mxu0
      %v5221 = vpop.f32.mrb[0].mxu0
      %v5222 = vadd.f32 0.0, %v5221
      %v5223 = vpop.f32.mrb[0].mxu0
      %5224 = vmatprep.mubr.bf16.mxu0 0
      %5225 = vmatmul.mubr.bf16.gmra.mrb[0].mxu0 %v4418
      %v5226 = vpop.f32.mrb[0].mxu0
      %v5227 = vadd.f32 0.0, %v5226
      %v5228 = vpop.f32.mrb[0].mxu0
      %v5229 = vpop.f32.mrb[0].mxu0
      %v5230 = vadd.f32 0.0, %v5229
      %v5231 = vpop.f32.mrb[0].mxu0
      %5232 = vmatprep.mubr.bf16.mxu0 0
      %5233 = vmatmul.mubr.bf16.gmra.mrb[0].mxu0 %v4421
      %v5234 = vpop.f32.mrb[0].mxu0
      %v5235 = vadd.f32 0.0, %v5234
      %v5236 = vpop.f32.mrb[0].mxu0
      %v5237 = vpop.f32.mrb[0].mxu0
      %v5238 = vadd.f32 0.0, %v5237
      %v5239 = vpop.f32.mrb[0].mxu0
      %5240 = vmatprep.mubr.bf16.mxu0 0
      %5241 = vmatmul.mubr.bf16.gmra.mrb[0].mxu0 %v4421
      %v5242 = vpop.f32.mrb[0].mxu0
      %v5243 = vadd.f32 0.0, %v5242
      %v5244 = vpop.f32.mrb[0].mxu0
      %v5245 = vpop.f32.mrb[0].mxu0
      %v5246 = vadd.f32 0.0, %v5245
      %v5247 = vpop.f32.mrb[0].mxu0
      %5248 = vmatprep.mubr.bf16.mxu0 0
      %5249 = vmatmul.mubr.bf16.gmra.mrb[0].mxu0 %v4424
      %v5250 = vpop.f32.mrb[0].mxu0
      %v5251 = vadd.f32 0.0, %v5250
      %v5252 = vpop.f32.mrb[0].mxu0
      %v5253 = vpop.f32.mrb[0].mxu0
      %v5254 = vadd.f32 0.0, %v5253
      %v5255 = vpop.f32.mrb[0].mxu0
      %5256 = vmatprep.mubr.bf16.mxu0 0
      %5257 = vmatmul.mubr.bf16.gmra.mrb[0].mxu0 %v4424
      %v5258 = vpop.f32.mrb[0].mxu0
      %v5259 = vadd.f32 0.0, %v5258
      %v5260 = vpop.f32.mrb[0].mxu0
      %v5261 = vpop.f32.mrb[0].mxu0
      %v5262 = vadd.f32 0.0, %v5261
      %v5263 = vpop.f32.mrb[0].mxu0
      %5264 = vdwg.mxu0
      %v5265 = vadd.f32 %v5039, %v5139
      %v5266 = vadd.f32 %v5040, %v5142
      %v5267 = vadd.f32 %v5041, %v5147
      %v5268 = vadd.f32 %v5042, %v5150
      %v5269 = vadd.f32 %v5043, %v5155
      %v5270 = vadd.f32 %v5044, %v5158
      %v5271 = vadd.f32 %v5045, %v5163
      %v5272 = vadd.f32 %v5046, %v5166
      %v5273 = vadd.f32 %v5047, %v5171
      %v5274 = vadd.f32 %v5048, %v5174
      %v5275 = vadd.f32 %v5049, %v5179
      %v5276 = vadd.f32 %v5050, %v5182
      %v5277 = vadd.f32 %v5051, %v5187
      %v5278 = vadd.f32 %v5052, %v5190
      %v5279 = vadd.f32 %v5053, %v5195
      %v5280 = vadd.f32 %v5054, %v5198
      %v5281 = vadd.f32 %v5055, %v5203
      %v5282 = vadd.f32 %v5056, %v5206
      %v5283 = vadd.f32 %v5057, %v5211
      %v5284 = vadd.f32 %v5058, %v5214
      %v5285 = vadd.f32 %v5059, %v5219
      %v5286 = vadd.f32 %v5060, %v5222
      %v5287 = vadd.f32 %v5061, %v5227
      %v5288 = vadd.f32 %v5062, %v5230
      %v5289 = vadd.f32 %v5063, %v5235
      %v5290 = vadd.f32 %v5064, %v5238
      %v5291 = vadd.f32 %v5065, %v5243
      %v5292 = vadd.f32 %v5066, %v5246
      %v5293 = vadd.f32 %v5067, %v5251
      %v5294 = vadd.f32 %v5068, %v5254
      %v5295 = vadd.f32 %v5069, %v5259
      %v5296 = vadd.f32 %v5070, %v5262
      %s5297 = scalar_lea.vmem %s3, 192
      %v5298 = vld [vmem:[%s5297] sm:$0xf]
      %v5299 = vld [vmem:[%s5297 + $0x4] sm:$0xf]
      %v5300 = vld [vmem:[%s5297 + $0x8] sm:$0xf]
      %v5301 = vld [vmem:[%s5297 + $0xc] sm:$0xf]
      %v5302 = vld [vmem:[%s5297 + $0x10] sm:$0xf]
      %v5303 = vld [vmem:[%s5297 + $0x14] sm:$0xf]
      %v5304 = vld [vmem:[%s5297 + $0x18] sm:$0xf]
      %v5305 = vld [vmem:[%s5297 + $0x1c] sm:$0xf]
      %v5314 = vunpack.c.l.b16 %v5298
      %v5315 = vunpack.c.l.b16 %v5299
      %v5316 = vunpack.c.l.b16 %v5300
      %v5317 = vunpack.c.l.b16 %v5301
      %v5318 = vunpack.c.l.b16 %v5302
      %v5319 = vunpack.c.l.b16 %v5303
      %v5320 = vunpack.c.l.b16 %v5304
      %v5321 = vunpack.c.l.b16 %v5305
      %v5322 = vpack.c.b16 %v5315, %v5314
      %v5323 = vpack.c.b16 %v5317, %v5316
      %v5324 = vpack.c.b16 %v5319, %v5318
      %v5325 = vpack.c.b16 %v5321, %v5320
      %5330 = vmatprep.subr.bf16.mxu0 0
      %5331 = vmatpush1.bf16.msra.mxu0 %v5322
      %5332 = vmatprep.subr.bf16.mxu0 0
      %5333 = vmatpush1.bf16.msra.mxu0 %v5323
      %5334 = vmatprep.subr.bf16.mxu0 0
      %5335 = vmatpush1.bf16.msra.mxu0 %v5324
      %5336 = vmatprep.subr.bf16.mxu0 0
      %5337 = vmatpush1.bf16.msra.mxu0 %v5325
      %5338 = vmatprep.subr.bf16.mxu0 0
      %5339 = vmatpush1.bf16.msra.mxu0 0
      %5340 = vmatprep.subr.bf16.mxu0 0
      %5341 = vmatpush1.bf16.msra.mxu0 0
      %5342 = vmatprep.subr.bf16.mxu0 0
      %5343 = vmatpush1.bf16.msra.mxu0 0
      %5344 = vmatprep.subr.bf16.mxu0 0
      %5345 = vmatpush1.bf16.msra.mxu0 0
      %5346 = vmatprep.subr.bf16.mxu0 0
      %5347 = vmatpush1.bf16.msra.mxu0 0
      %5348 = vmatprep.subr.bf16.mxu0 0
      %5349 = vmatpush1.bf16.msra.mxu0 0
      %5350 = vmatprep.subr.bf16.mxu0 0
      %5351 = vmatpush1.bf16.msra.mxu0 0
      %5352 = vmatprep.subr.bf16.mxu0 0
      %5353 = vmatpush1.bf16.msra.mxu0 0
      %5354 = vmatprep.subr.bf16.mxu0 0
      %5355 = vmatpush1.bf16.msra.mxu0 0
      %5356 = vmatprep.subr.bf16.mxu0 0
      %5357 = vmatpush1.bf16.msra.mxu0 0
      %5358 = vmatprep.subr.bf16.mxu0 0
      %5359 = vmatpush1.bf16.msra.mxu0 0
      %5360 = vmatprep.subr.bf16.mxu0 0
      %5361 = vmatpush1.bf16.msra.mxu0 0
      %5362 = vmatprep.mubr.bf16.mxu0 0
      %5363 = vmatmul.mubr.bf16.gmra.mrb[0].mxu0 %v4151
      %v5364 = vpop.f32.mrb[0].mxu0
      %v5365 = vadd.f32 0.0, %v5364
      %v5366 = vpop.f32.mrb[0].mxu0
      %v5367 = vpop.f32.mrb[0].mxu0
      %v5368 = vadd.f32 0.0, %v5367
      %v5369 = vpop.f32.mrb[0].mxu0
      %5370 = vmatprep.mubr.bf16.mxu0 0
      %5371 = vmatmul.mubr.bf16.gmra.mrb[0].mxu0 %v4153
      %v5372 = vpop.f32.mrb[0].mxu0
      %v5373 = vadd.f32 0.0, %v5372
      %v5374 = vpop.f32.mrb[0].mxu0
      %v5375 = vpop.f32.mrb[0].mxu0
      %v5376 = vadd.f32 0.0, %v5375
      %v5377 = vpop.f32.mrb[0].mxu0
      %5378 = vmatprep.mubr.bf16.mxu0 0
      %5379 = vmatmul.mubr.bf16.gmra.mrb[0].mxu0 %v4153
      %v5380 = vpop.f32.mrb[0].mxu0
      %v5381 = vadd.f32 0.0, %v5380
      %v5382 = vpop.f32.mrb[0].mxu0
      %v5383 = vpop.f32.mrb[0].mxu0
      %v5384 = vadd.f32 0.0, %v5383
      %v5385 = vpop.f32.mrb[0].mxu0
      %5386 = vmatprep.mubr.bf16.mxu0 0
      %5387 = vmatmul.mubr.bf16.gmra.mrb[0].mxu0 %v4155
      %v5388 = vpop.f32.mrb[0].mxu0
      %v5389 = vadd.f32 0.0, %v5388
      %v5390 = vpop.f32.mrb[0].mxu0
      %v5391 = vpop.f32.mrb[0].mxu0
      %v5392 = vadd.f32 0.0, %v5391
      %v5393 = vpop.f32.mrb[0].mxu0
      %5394 = vmatprep.mubr.bf16.mxu0 0
      %5395 = vmatmul.mubr.bf16.gmra.mrb[0].mxu0 %v4155
      %v5396 = vpop.f32.mrb[0].mxu0
      %v5397 = vadd.f32 0.0, %v5396
      %v5398 = vpop.f32.mrb[0].mxu0
      %v5399 = vpop.f32.mrb[0].mxu0
      %v5400 = vadd.f32 0.0, %v5399
      %v5401 = vpop.f32.mrb[0].mxu0
      %5402 = vmatprep.mubr.bf16.mxu0 0
      %5403 = vmatmul.mubr.bf16.gmra.mrb[0].mxu0 %v4157
      %v5404 = vpop.f32.mrb[0].mxu0
      %v5405 = vadd.f32 0.0, %v5404
      %v5406 = vpop.f32.mrb[0].mxu0
      %v5407 = vpop.f32.mrb[0].mxu0
      %v5408 = vadd.f32 0.0, %v5407
      %v5409 = vpop.f32.mrb[0].mxu0
      %5410 = vmatprep.mubr.bf16.mxu0 0
      %5411 = vmatmul.mubr.bf16.gmra.mrb[0].mxu0 %v4157
      %v5412 = vpop.f32.mrb[0].mxu0
      %v5413 = vadd.f32 0.0, %v5412
      %v5414 = vpop.f32.mrb[0].mxu0
      %v5415 = vpop.f32.mrb[0].mxu0
      %v5416 = vadd.f32 0.0, %v5415
      %v5417 = vpop.f32.mrb[0].mxu0
      %5418 = vmatprep.mubr.bf16.mxu0 0
      %5419 = vmatmul.mubr.bf16.gmra.mrb[0].mxu0 %v4159
      %v5420 = vpop.f32.mrb[0].mxu0
      %v5421 = vadd.f32 0.0, %v5420
      %v5422 = vpop.f32.mrb[0].mxu0
      %v5423 = vpop.f32.mrb[0].mxu0
      %v5424 = vadd.f32 0.0, %v5423
      %v5425 = vpop.f32.mrb[0].mxu0
      %5426 = vmatprep.mubr.bf16.mxu0 0
      %5427 = vmatmul.mubr.bf16.gmra.mrb[0].mxu0 %v4159
      %v5428 = vpop.f32.mrb[0].mxu0
      %v5429 = vadd.f32 0.0, %v5428
      %v5430 = vpop.f32.mrb[0].mxu0
      %v5431 = vpop.f32.mrb[0].mxu0
      %v5432 = vadd.f32 0.0, %v5431
      %v5433 = vpop.f32.mrb[0].mxu0
      %5434 = vmatprep.mubr.bf16.mxu0 0
      %5435 = vmatmul.mubr.bf16.gmra.mrb[0].mxu0 %v4161
      %v5436 = vpop.f32.mrb[0].mxu0
      %v5437 = vadd.f32 0.0, %v5436
      %v5438 = vpop.f32.mrb[0].mxu0
      %v5439 = vpop.f32.mrb[0].mxu0
      %v5440 = vadd.f32 0.0, %v5439
      %v5441 = vpop.f32.mrb[0].mxu0
      %5442 = vmatprep.mubr.bf16.mxu0 0
      %5443 = vmatmul.mubr.bf16.gmra.mrb[0].mxu0 %v4161
      %v5444 = vpop.f32.mrb[0].mxu0
      %v5445 = vadd.f32 0.0, %v5444
      %v5446 = vpop.f32.mrb[0].mxu0
      %v5447 = vpop.f32.mrb[0].mxu0
      %v5448 = vadd.f32 0.0, %v5447
      %v5449 = vpop.f32.mrb[0].mxu0
      %5450 = vmatprep.mubr.bf16.mxu0 0
      %5451 = vmatmul.mubr.bf16.gmra.mrb[0].mxu0 %v4163
      %v5452 = vpop.f32.mrb[0].mxu0
      %v5453 = vadd.f32 0.0, %v5452
      %v5454 = vpop.f32.mrb[0].mxu0
      %v5455 = vpop.f32.mrb[0].mxu0
      %v5456 = vadd.f32 0.0, %v5455
      %v5457 = vpop.f32.mrb[0].mxu0
      %5458 = vmatprep.mubr.bf16.mxu0 0
      %5459 = vmatmul.mubr.bf16.gmra.mrb[0].mxu0 %v4163
      %v5460 = vpop.f32.mrb[0].mxu0
      %v5461 = vadd.f32 0.0, %v5460
      %v5462 = vpop.f32.mrb[0].mxu0
      %v5463 = vpop.f32.mrb[0].mxu0
      %v5464 = vadd.f32 0.0, %v5463
      %v5465 = vpop.f32.mrb[0].mxu0
      %5466 = vmatprep.mubr.bf16.mxu0 0
      %5467 = vmatmul.mubr.bf16.gmra.mrb[0].mxu0 %v4165
      %v5468 = vpop.f32.mrb[0].mxu0
      %v5469 = vadd.f32 0.0, %v5468
      %v5470 = vpop.f32.mrb[0].mxu0
      %v5471 = vpop.f32.mrb[0].mxu0
      %v5472 = vadd.f32 0.0, %v5471
      %v5473 = vpop.f32.mrb[0].mxu0
      %5474 = vmatprep.mubr.bf16.mxu0 0
      %5475 = vmatmul.mubr.bf16.gmra.mrb[0].mxu0 %v4165
      %v5476 = vpop.f32.mrb[0].mxu0
      %v5477 = vadd.f32 0.0, %v5476
      %v5478 = vpop.f32.mrb[0].mxu0
      %v5479 = vpop.f32.mrb[0].mxu0
      %v5480 = vadd.f32 0.0, %v5479
      %v5481 = vpop.f32.mrb[0].mxu0
      %5482 = vmatprep.mubr.bf16.mxu0 0
      %5483 = vmatmul.mubr.bf16.gmra.mrb[0].mxu0 %v4165
      %v5484 = vpop.f32.mrb[0].mxu0
      %v5485 = vadd.f32 0.0, %v5484
      %v5486 = vpop.f32.mrb[0].mxu0
      %v5487 = vpop.f32.mrb[0].mxu0
      %v5488 = vadd.f32 0.0, %v5487
      %v5489 = vpop.f32.mrb[0].mxu0
      %5490 = vdwg.mxu0
      %v5491 = vadd.f32 %v5265, %v5365
      %v5492 = vadd.f32 %v5266, %v5368
      %v5493 = vadd.f32 %v5267, %v5373
      %v5494 = vadd.f32 %v5268, %v5376
      %v5495 = vadd.f32 %v5269, %v5381
      %v5496 = vadd.f32 %v5270, %v5384
      %v5497 = vadd.f32 %v5271, %v5389
      %v5498 = vadd.f32 %v5272, %v5392
      %v5499 = vadd.f32 %v5273, %v5397
      %v5500 = vadd.f32 %v5274, %v5400
      %v5501 = vadd.f32 %v5275, %v5405
      %v5502 = vadd.f32 %v5276, %v5408
      %v5503 = vadd.f32 %v5277, %v5413
      %v5504 = vadd.f32 %v5278, %v5416
      %v5505 = vadd.f32 %v5279, %v5421
      %v5506 = vadd.f32 %v5280, %v5424
      %v5507 = vadd.f32 %v5281, %v5429
      %v5508 = vadd.f32 %v5282, %v5432
      %v5509 = vadd.f32 %v5283, %v5437
      %v5510 = vadd.f32 %v5284, %v5440
      %v5511 = vadd.f32 %v5285, %v5445
      %v5512 = vadd.f32 %v5286, %v5448
      %v5513 = vadd.f32 %v5287, %v5453
      %v5514 = vadd.f32 %v5288, %v5456
      %v5515 = vadd.f32 %v5289, %v5461
      %v5516 = vadd.f32 %v5290, %v5464
      %v5517 = vadd.f32 %v5291, %v5469
      %v5518 = vadd.f32 %v5292, %v5472
      %v5519 = vadd.f32 %v5293, %v5477
      %v5520 = vadd.f32 %v5294, %v5480
      %v5521 = vadd.f32 %v5295, %v5485
      %v5522 = vadd.f32 %v5296, %v5488
      %s5523 = scalar_lea.vmem %s3, 224
      %v5524 = vld [vmem:[%s5523] sm:$0xf]
      %v5525 = vld [vmem:[%s5523 + $0x4] sm:$0xf]
      %v5526 = vld [vmem:[%s5523 + $0x8] sm:$0xf]
      %v5527 = vld [vmem:[%s5523 + $0xc] sm:$0xf]
      %v5528 = vld [vmem:[%s5523 + $0x10] sm:$0xf]
      %v5529 = vld [vmem:[%s5523 + $0x14] sm:$0xf]
      %v5530 = vld [vmem:[%s5523 + $0x18] sm:$0xf]
      %v5531 = vld [vmem:[%s5523 + $0x1c] sm:$0xf]
      %v5540 = vunpack.c.l.b16 %v5524
      %v5541 = vunpack.c.l.b16 %v5525
      %v5542 = vunpack.c.l.b16 %v5526
      %v5543 = vunpack.c.l.b16 %v5527
      %v5544 = vunpack.c.l.b16 %v5528
      %v5545 = vunpack.c.l.b16 %v5529
      %v5546 = vunpack.c.l.b16 %v5530
      %v5547 = vunpack.c.l.b16 %v5531
      %v5548 = vpack.c.b16 %v5541, %v5540
      %v5549 = vpack.c.b16 %v5543, %v5542
      %v5550 = vpack.c.b16 %v5545, %v5544
      %v5551 = vpack.c.b16 %v5547, %v5546
      %5556 = vmatprep.subr.bf16.mxu0 0
      %5557 = vmatpush1.bf16.msra.mxu0 %v5548
      %5558 = vmatprep.subr.bf16.mxu0 0
      %5559 = vmatpush1.bf16.msra.mxu0 %v5549
      %5560 = vmatprep.subr.bf16.mxu0 0
      %5561 = vmatpush1.bf16.msra.mxu0 %v5550
      %5562 = vmatprep.subr.bf16.mxu0 0
      %5563 = vmatpush1.bf16.msra.mxu0 %v5551
      %5564 = vmatprep.subr.bf16.mxu0 0
      %5565 = vmatpush1.bf16.msra.mxu0 0
      %5566 = vmatprep.subr.bf16.mxu0 0
      %5567 = vmatpush1.bf16.msra.mxu0 0
      %5568 = vmatprep.subr.bf16.mxu0 0
      %5569 = vmatpush1.bf16.msra.mxu0 0
      %5570 = vmatprep.subr.bf16.mxu0 0
      %5571 = vmatpush1.bf16.msra.mxu0 0
      %5572 = vmatprep.subr.bf16.mxu0 0
      %5573 = vmatpush1.bf16.msra.mxu0 0
      %5574 = vmatprep.subr.bf16.mxu0 0
      %5575 = vmatpush1.bf16.msra.mxu0 0
      %5576 = vmatprep.subr.bf16.mxu0 0
      %5577 = vmatpush1.bf16.msra.mxu0 0
      %5578 = vmatprep.subr.bf16.mxu0 0
      %5579 = vmatpush1.bf16.msra.mxu0 0
      %5580 = vmatprep.subr.bf16.mxu0 0
      %5581 = vmatpush1.bf16.msra.mxu0 0
      %5582 = vmatprep.subr.bf16.mxu0 0
      %5583 = vmatpush1.bf16.msra.mxu0 0
      %5584 = vmatprep.subr.bf16.mxu0 0
      %5585 = vmatpush1.bf16.msra.mxu0 0
      %5586 = vmatprep.subr.bf16.mxu0 0
      %5587 = vmatpush1.bf16.msra.mxu0 0
      %5588 = vmatprep.mubr.bf16.mxu0 0
      %5589 = vmatmul.mubr.bf16.gmra.mrb[0].mxu0 %v3943
      %v5590 = vpop.f32.mrb[0].mxu0
      %v5591 = vadd.f32 0.0, %v5590
      %v5592 = vpop.f32.mrb[0].mxu0
      %v5593 = vpop.f32.mrb[0].mxu0
      %v5594 = vadd.f32 0.0, %v5593
      %v5595 = vpop.f32.mrb[0].mxu0
      %5596 = vmatprep.mubr.bf16.mxu0 0
      %5597 = vmatmul.mubr.bf16.gmra.mrb[0].mxu0 %v3946
      %v5598 = vpop.f32.mrb[0].mxu0
      %v5599 = vadd.f32 0.0, %v5598
      %v5600 = vpop.f32.mrb[0].mxu0
      %v5601 = vpop.f32.mrb[0].mxu0
      %v5602 = vadd.f32 0.0, %v5601
      %v5603 = vpop.f32.mrb[0].mxu0
      %5604 = vmatprep.mubr.bf16.mxu0 0
      %5605 = vmatmul.mubr.bf16.gmra.mrb[0].mxu0 %v3946
      %v5606 = vpop.f32.mrb[0].mxu0
      %v5607 = vadd.f32 0.0, %v5606
      %v5608 = vpop.f32.mrb[0].mxu0
      %v5609 = vpop.f32.mrb[0].mxu0
      %v5610 = vadd.f32 0.0, %v5609
      %v5611 = vpop.f32.mrb[0].mxu0
      %5612 = vmatprep.mubr.bf16.mxu0 0
      %5613 = vmatmul.mubr.bf16.gmra.mrb[0].mxu0 %v3949
      %v5614 = vpop.f32.mrb[0].mxu0
      %v5615 = vadd.f32 0.0, %v5614
      %v5616 = vpop.f32.mrb[0].mxu0
      %v5617 = vpop.f32.mrb[0].mxu0
      %v5618 = vadd.f32 0.0, %v5617
      %v5619 = vpop.f32.mrb[0].mxu0
      %5620 = vmatprep.mubr.bf16.mxu0 0
      %5621 = vmatmul.mubr.bf16.gmra.mrb[0].mxu0 %v3949
      %v5622 = vpop.f32.mrb[0].mxu0
      %v5623 = vadd.f32 0.0, %v5622
      %v5624 = vpop.f32.mrb[0].mxu0
      %v5625 = vpop.f32.mrb[0].mxu0
      %v5626 = vadd.f32 0.0, %v5625
      %v5627 = vpop.f32.mrb[0].mxu0
      %5628 = vmatprep.mubr.bf16.mxu0 0
      %5629 = vmatmul.mubr.bf16.gmra.mrb[0].mxu0 %v3952
      %v5630 = vpop.f32.mrb[0].mxu0
      %v5631 = vadd.f32 0.0, %v5630
      %v5632 = vpop.f32.mrb[0].mxu0
      %v5633 = vpop.f32.mrb[0].mxu0
      %v5634 = vadd.f32 0.0, %v5633
      %v5635 = vpop.f32.mrb[0].mxu0
      %5636 = vmatprep.mubr.bf16.mxu0 0
      %5637 = vmatmul.mubr.bf16.gmra.mrb[0].mxu0 %v3952
      %v5638 = vpop.f32.mrb[0].mxu0
      %v5639 = vadd.f32 0.0, %v5638
      %v5640 = vpop.f32.mrb[0].mxu0
      %v5641 = vpop.f32.mrb[0].mxu0
      %v5642 = vadd.f32 0.0, %v5641
      %v5643 = vpop.f32.mrb[0].mxu0
      %5644 = vmatprep.mubr.bf16.mxu0 0
      %5645 = vmatmul.mubr.bf16.gmra.mrb[0].mxu0 %v3955
      %v5646 = vpop.f32.mrb[0].mxu0
      %v5647 = vadd.f32 0.0, %v5646
      %v5648 = vpop.f32.mrb[0].mxu0
      %v5649 = vpop.f32.mrb[0].mxu0
      %v5650 = vadd.f32 0.0, %v5649
      %v5651 = vpop.f32.mrb[0].mxu0
      %5652 = vmatprep.mubr.bf16.mxu0 0
      %5653 = vmatmul.mubr.bf16.gmra.mrb[0].mxu0 %v3955
      %v5654 = vpop.f32.mrb[0].mxu0
      %v5655 = vadd.f32 0.0, %v5654
      %v5656 = vpop.f32.mrb[0].mxu0
      %v5657 = vpop.f32.mrb[0].mxu0
      %v5658 = vadd.f32 0.0, %v5657
      %v5659 = vpop.f32.mrb[0].mxu0
      %5660 = vmatprep.mubr.bf16.mxu0 0
      %5661 = vmatmul.mubr.bf16.gmra.mrb[0].mxu0 %v3958
      %v5662 = vpop.f32.mrb[0].mxu0
      %v5663 = vadd.f32 0.0, %v5662
      %v5664 = vpop.f32.mrb[0].mxu0
      %v5665 = vpop.f32.mrb[0].mxu0
      %v5666 = vadd.f32 0.0, %v5665
      %v5667 = vpop.f32.mrb[0].mxu0
      %5668 = vmatprep.mubr.bf16.mxu0 0
      %5669 = vmatmul.mubr.bf16.gmra.mrb[0].mxu0 %v3958
      %v5670 = vpop.f32.mrb[0].mxu0
      %v5671 = vadd.f32 0.0, %v5670
      %v5672 = vpop.f32.mrb[0].mxu0
      %v5673 = vpop.f32.mrb[0].mxu0
      %v5674 = vadd.f32 0.0, %v5673
      %v5675 = vpop.f32.mrb[0].mxu0
      %5676 = vmatprep.mubr.bf16.mxu0 0
      %5677 = vmatmul.mubr.bf16.gmra.mrb[0].mxu0 %v3961
      %v5678 = vpop.f32.mrb[0].mxu0
      %v5679 = vadd.f32 0.0, %v5678
      %v5680 = vpop.f32.mrb[0].mxu0
      %v5681 = vpop.f32.mrb[0].mxu0
      %v5682 = vadd.f32 0.0, %v5681
      %v5683 = vpop.f32.mrb[0].mxu0
      %5684 = vmatprep.mubr.bf16.mxu0 0
      %5685 = vmatmul.mubr.bf16.gmra.mrb[0].mxu0 %v3961
      %v5686 = vpop.f32.mrb[0].mxu0
      %v5687 = vadd.f32 0.0, %v5686
      %v5688 = vpop.f32.mrb[0].mxu0
      %v5689 = vpop.f32.mrb[0].mxu0
      %v5690 = vadd.f32 0.0, %v5689
      %v5691 = vpop.f32.mrb[0].mxu0
      %5692 = vmatprep.mubr.bf16.mxu0 0
      %5693 = vmatmul.mubr.bf16.gmra.mrb[0].mxu0 %v3964
      %v5694 = vpop.f32.mrb[0].mxu0
      %v5695 = vadd.f32 0.0, %v5694
      %v5696 = vpop.f32.mrb[0].mxu0
      %v5697 = vpop.f32.mrb[0].mxu0
      %v5698 = vadd.f32 0.0, %v5697
      %v5699 = vpop.f32.mrb[0].mxu0
      %5700 = vmatprep.mubr.bf16.mxu0 0
      %5701 = vmatmul.mubr.bf16.gmra.mrb[0].mxu0 %v3964
      %v5702 = vpop.f32.mrb[0].mxu0
      %v5703 = vadd.f32 0.0, %v5702
      %v5704 = vpop.f32.mrb[0].mxu0
      %v5705 = vpop.f32.mrb[0].mxu0
      %v5706 = vadd.f32 0.0, %v5705
      %v5707 = vpop.f32.mrb[0].mxu0
      %5708 = vmatprep.mubr.bf16.mxu0 0
      %5709 = vmatmul.mubr.bf16.gmra.mrb[0].mxu0 %v3964
      %v5710 = vpop.f32.mrb[0].mxu0
      %v5711 = vadd.f32 0.0, %v5710
      %v5712 = vpop.f32.mrb[0].mxu0
      %v5713 = vpop.f32.mrb[0].mxu0
      %v5714 = vadd.f32 0.0, %v5713
      %v5715 = vpop.f32.mrb[0].mxu0
      %5716 = vdwg.mxu0
      %v5717 = vadd.f32 %v5491, %v5591
      %v5718 = vadd.f32 %v5492, %v5594
      %v5719 = vadd.f32 %v5493, %v5599
      %v5720 = vadd.f32 %v5494, %v5602
      %v5721 = vadd.f32 %v5495, %v5607
      %v5722 = vadd.f32 %v5496, %v5610
      %v5723 = vadd.f32 %v5497, %v5615
      %v5724 = vadd.f32 %v5498, %v5618
      %v5725 = vadd.f32 %v5499, %v5623
      %v5726 = vadd.f32 %v5500, %v5626
      %v5727 = vadd.f32 %v5501, %v5631
      %v5728 = vadd.f32 %v5502, %v5634
      %v5729 = vadd.f32 %v5503, %v5639
      %v5730 = vadd.f32 %v5504, %v5642
      %v5731 = vadd.f32 %v5505, %v5647
      %v5732 = vadd.f32 %v5506, %v5650
      %v5733 = vadd.f32 %v5507, %v5655
      %v5734 = vadd.f32 %v5508, %v5658
      %v5735 = vadd.f32 %v5509, %v5663
      %v5736 = vadd.f32 %v5510, %v5666
      %v5737 = vadd.f32 %v5511, %v5671
      %v5738 = vadd.f32 %v5512, %v5674
      %v5739 = vadd.f32 %v5513, %v5679
      %v5740 = vadd.f32 %v5514, %v5682
      %v5741 = vadd.f32 %v5515, %v5687
      %v5742 = vadd.f32 %v5516, %v5690
      %v5743 = vadd.f32 %v5517, %v5695
      %v5744 = vadd.f32 %v5518, %v5698
      %v5745 = vadd.f32 %v5519, %v5703
      %v5746 = vadd.f32 %v5520, %v5706
      %v5747 = vadd.f32 %v5521, %v5711
      %v5748 = vadd.f32 %v5522, %v5714
      %s5749 = scalar_lea.vmem %s3, 256
      %v5750 = vld [vmem:[%s5749] sm:$0xf]
      %v5751 = vld [vmem:[%s5749 + $0x4] sm:$0xf]
      %v5752 = vld [vmem:[%s5749 + $0x8] sm:$0xf]
      %v5753 = vld [vmem:[%s5749 + $0xc] sm:$0xf]
      %v5754 = vld [vmem:[%s5749 + $0x10] sm:$0xf]
      %v5755 = vld [vmem:[%s5749 + $0x14] sm:$0xf]
      %v5756 = vld [vmem:[%s5749 + $0x18] sm:$0xf]
      %v5757 = vld [vmem:[%s5749 + $0x1c] sm:$0xf]
      %v5766 = vunpack.c.l.b16 %v5750
      %v5767 = vunpack.c.l.b16 %v5751
      %v5768 = vunpack.c.l.b16 %v5752
      %v5769 = vunpack.c.l.b16 %v5753
      %v5770 = vunpack.c.l.b16 %v5754
      %v5771 = vunpack.c.l.b16 %v5755
      %v5772 = vunpack.c.l.b16 %v5756
      %v5773 = vunpack.c.l.b16 %v5757
      %v5774 = vpack.c.b16 %v5767, %v5766
      %v5775 = vpack.c.b16 %v5769, %v5768
      %v5776 = vpack.c.b16 %v5771, %v5770
      %v5777 = vpack.c.b16 %v5773, %v5772
      %5782 = vmatprep.subr.bf16.mxu0 0
      %5783 = vmatpush1.bf16.msra.mxu0 %v5774
      %5784 = vmatprep.subr.bf16.mxu0 0
      %5785 = vmatpush1.bf16.msra.mxu0 %v5775
      %5786 = vmatprep.subr.bf16.mxu0 0
      %5787 = vmatpush1.bf16.msra.mxu0 %v5776
      %5788 = vmatprep.subr.bf16.mxu0 0
      %5789 = vmatpush1.bf16.msra.mxu0 %v5777
      %5790 = vmatprep.subr.bf16.mxu0 0
      %5791 = vmatpush1.bf16.msra.mxu0 0
      %5792 = vmatprep.subr.bf16.mxu0 0
      %5793 = vmatpush1.bf16.msra.mxu0 0
      %5794 = vmatprep.subr.bf16.mxu0 0
      %5795 = vmatpush1.bf16.msra.mxu0 0
      %5796 = vmatprep.subr.bf16.mxu0 0
      %5797 = vmatpush1.bf16.msra.mxu0 0
      %5798 = vmatprep.subr.bf16.mxu0 0
      %5799 = vmatpush1.bf16.msra.mxu0 0
      %5800 = vmatprep.subr.bf16.mxu0 0
      %5801 = vmatpush1.bf16.msra.mxu0 0
      %5802 = vmatprep.subr.bf16.mxu0 0
      %5803 = vmatpush1.bf16.msra.mxu0 0
      %5804 = vmatprep.subr.bf16.mxu0 0
      %5805 = vmatpush1.bf16.msra.mxu0 0
      %5806 = vmatprep.subr.bf16.mxu0 0
      %5807 = vmatpush1.bf16.msra.mxu0 0
      %5808 = vmatprep.subr.bf16.mxu0 0
      %5809 = vmatpush1.bf16.msra.mxu0 0
      %5810 = vmatprep.subr.bf16.mxu0 0
      %5811 = vmatpush1.bf16.msra.mxu0 0
      %5812 = vmatprep.subr.bf16.mxu0 0
      %5813 = vmatpush1.bf16.msra.mxu0 0
      %5814 = vmatprep.mubr.bf16.mxu0 0
      %5815 = vmatmul.mubr.bf16.gmra.mrb[0].mxu0 %v4403
      %v5816 = vpop.f32.mrb[0].mxu0
      %v5817 = vadd.f32 0.0, %v5816
      %v5818 = vpop.f32.mrb[0].mxu0
      %v5819 = vpop.f32.mrb[0].mxu0
      %v5820 = vadd.f32 0.0, %v5819
      %v5821 = vpop.f32.mrb[0].mxu0
      %5822 = vmatprep.mubr.bf16.mxu0 0
      %5823 = vmatmul.mubr.bf16.gmra.mrb[0].mxu0 %v4406
      %v5824 = vpop.f32.mrb[0].mxu0
      %v5825 = vadd.f32 0.0, %v5824
      %v5826 = vpop.f32.mrb[0].mxu0
      %v5827 = vpop.f32.mrb[0].mxu0
      %v5828 = vadd.f32 0.0, %v5827
      %v5829 = vpop.f32.mrb[0].mxu0
      %5830 = vmatprep.mubr.bf16.mxu0 0
      %5831 = vmatmul.mubr.bf16.gmra.mrb[0].mxu0 %v4406
      %v5832 = vpop.f32.mrb[0].mxu0
      %v5833 = vadd.f32 0.0, %v5832
      %v5834 = vpop.f32.mrb[0].mxu0
      %v5835 = vpop.f32.mrb[0].mxu0
      %v5836 = vadd.f32 0.0, %v5835
      %v5837 = vpop.f32.mrb[0].mxu0
      %5838 = vmatprep.mubr.bf16.mxu0 0
      %5839 = vmatmul.mubr.bf16.gmra.mrb[0].mxu0 %v4409
      %v5840 = vpop.f32.mrb[0].mxu0
      %v5841 = vadd.f32 0.0, %v5840
      %v5842 = vpop.f32.mrb[0].mxu0
      %v5843 = vpop.f32.mrb[0].mxu0
      %v5844 = vadd.f32 0.0, %v5843
      %v5845 = vpop.f32.mrb[0].mxu0
      %5846 = vmatprep.mubr.bf16.mxu0 0
      %5847 = vmatmul.mubr.bf16.gmra.mrb[0].mxu0 %v4409
      %v5848 = vpop.f32.mrb[0].mxu0
      %v5849 = vadd.f32 0.0, %v5848
      %v5850 = vpop.f32.mrb[0].mxu0
      %v5851 = vpop.f32.mrb[0].mxu0
      %v5852 = vadd.f32 0.0, %v5851
      %v5853 = vpop.f32.mrb[0].mxu0
      %5854 = vmatprep.mubr.bf16.mxu0 0
      %5855 = vmatmul.mubr.bf16.gmra.mrb[0].mxu0 %v4412
      %v5856 = vpop.f32.mrb[0].mxu0
      %v5857 = vadd.f32 0.0, %v5856
      %v5858 = vpop.f32.mrb[0].mxu0
      %v5859 = vpop.f32.mrb[0].mxu0
      %v5860 = vadd.f32 0.0, %v5859
      %v5861 = vpop.f32.mrb[0].mxu0
      %5862 = vmatprep.mubr.bf16.mxu0 0
      %5863 = vmatmul.mubr.bf16.gmra.mrb[0].mxu0 %v4412
      %v5864 = vpop.f32.mrb[0].mxu0
      %v5865 = vadd.f32 0.0, %v5864
      %v5866 = vpop.f32.mrb[0].mxu0
      %v5867 = vpop.f32.mrb[0].mxu0
      %v5868 = vadd.f32 0.0, %v5867
      %v5869 = vpop.f32.mrb[0].mxu0
      %5870 = vmatprep.mubr.bf16.mxu0 0
      %5871 = vmatmul.mubr.bf16.gmra.mrb[0].mxu0 %v4415
      %v5872 = vpop.f32.mrb[0].mxu0
      %v5873 = vadd.f32 0.0, %v5872
      %v5874 = vpop.f32.mrb[0].mxu0
      %v5875 = vpop.f32.mrb[0].mxu0
      %v5876 = vadd.f32 0.0, %v5875
      %v5877 = vpop.f32.mrb[0].mxu0
      %5878 = vmatprep.mubr.bf16.mxu0 0
      %5879 = vmatmul.mubr.bf16.gmra.mrb[0].mxu0 %v4415
      %v5880 = vpop.f32.mrb[0].mxu0
      %v5881 = vadd.f32 0.0, %v5880
      %v5882 = vpop.f32.mrb[0].mxu0
      %v5883 = vpop.f32.mrb[0].mxu0
      %v5884 = vadd.f32 0.0, %v5883
      %v5885 = vpop.f32.mrb[0].mxu0
      %5886 = vmatprep.mubr.bf16.mxu0 0
      %5887 = vmatmul.mubr.bf16.gmra.mrb[0].mxu0 %v4418
      %v5888 = vpop.f32.mrb[0].mxu0
      %v5889 = vadd.f32 0.0, %v5888
      %v5890 = vpop.f32.mrb[0].mxu0
      %v5891 = vpop.f32.mrb[0].mxu0
      %v5892 = vadd.f32 0.0, %v5891
      %v5893 = vpop.f32.mrb[0].mxu0
      %5894 = vmatprep.mubr.bf16.mxu0 0
      %5895 = vmatmul.mubr.bf16.gmra.mrb[0].mxu0 %v4418
      %v5896 = vpop.f32.mrb[0].mxu0
      %v5897 = vadd.f32 0.0, %v5896
      %v5898 = vpop.f32.mrb[0].mxu0
      %v5899 = vpop.f32.mrb[0].mxu0
      %v5900 = vadd.f32 0.0, %v5899
      %v5901 = vpop.f32.mrb[0].mxu0
      %5902 = vmatprep.mubr.bf16.mxu0 0
      %5903 = vmatmul.mubr.bf16.gmra.mrb[0].mxu0 %v4421
      %v5904 = vpop.f32.mrb[0].mxu0
      %v5905 = vadd.f32 0.0, %v5904
      %v5906 = vpop.f32.mrb[0].mxu0
      %v5907 = vpop.f32.mrb[0].mxu0
      %v5908 = vadd.f32 0.0, %v5907
      %v5909 = vpop.f32.mrb[0].mxu0
      %5910 = vmatprep.mubr.bf16.mxu0 0
      %5911 = vmatmul.mubr.bf16.gmra.mrb[0].mxu0 %v4421
      %v5912 = vpop.f32.mrb[0].mxu0
      %v5913 = vadd.f32 0.0, %v5912
      %v5914 = vpop.f32.mrb[0].mxu0
      %v5915 = vpop.f32.mrb[0].mxu0
      %v5916 = vadd.f32 0.0, %v5915
      %v5917 = vpop.f32.mrb[0].mxu0
      %5918 = vmatprep.mubr.bf16.mxu0 0
      %5919 = vmatmul.mubr.bf16.gmra.mrb[0].mxu0 %v4424
      %v5920 = vpop.f32.mrb[0].mxu0
      %v5921 = vadd.f32 0.0, %v5920
      %v5922 = vpop.f32.mrb[0].mxu0
      %v5923 = vpop.f32.mrb[0].mxu0
      %v5924 = vadd.f32 0.0, %v5923
      %v5925 = vpop.f32.mrb[0].mxu0
      %5926 = vmatprep.mubr.bf16.mxu0 0
      %5927 = vmatmul.mubr.bf16.gmra.mrb[0].mxu0 %v4424
      %v5928 = vpop.f32.mrb[0].mxu0
      %v5929 = vadd.f32 0.0, %v5928
      %v5930 = vpop.f32.mrb[0].mxu0
      %v5931 = vpop.f32.mrb[0].mxu0
      %v5932 = vadd.f32 0.0, %v5931
      %v5933 = vpop.f32.mrb[0].mxu0
      %5934 = vmatprep.mubr.bf16.mxu0 0
      %5935 = vmatmul.mubr.bf16.gmra.mrb[0].mxu0 %v4424
      %v5936 = vpop.f32.mrb[0].mxu0
      %v5937 = vadd.f32 0.0, %v5936
      %v5938 = vpop.f32.mrb[0].mxu0
      %v5939 = vpop.f32.mrb[0].mxu0
      %v5940 = vadd.f32 0.0, %v5939
      %v5941 = vpop.f32.mrb[0].mxu0
      %5942 = vdwg.mxu0
      %v5943 = vadd.f32 %v5717, %v5817
      %v5944 = vadd.f32 %v5718, %v5820
      %v5945 = vadd.f32 %v5719, %v5825
      %v5946 = vadd.f32 %v5720, %v5828
      %v5947 = vadd.f32 %v5721, %v5833
      %v5948 = vadd.f32 %v5722, %v5836
      %v5949 = vadd.f32 %v5723, %v5841
      %v5950 = vadd.f32 %v5724, %v5844
      %v5951 = vadd.f32 %v5725, %v5849
      %v5952 = vadd.f32 %v5726, %v5852
      %v5953 = vadd.f32 %v5727, %v5857
      %v5954 = vadd.f32 %v5728, %v5860
      %v5955 = vadd.f32 %v5729, %v5865
      %v5956 = vadd.f32 %v5730, %v5868
      %v5957 = vadd.f32 %v5731, %v5873
      %v5958 = vadd.f32 %v5732, %v5876
      %v5959 = vadd.f32 %v5733, %v5881
      %v5960 = vadd.f32 %v5734, %v5884
      %v5961 = vadd.f32 %v5735, %v5889
      %v5962 = vadd.f32 %v5736, %v5892
      %v5963 = vadd.f32 %v5737, %v5897
      %v5964 = vadd.f32 %v5738, %v5900
      %v5965 = vadd.f32 %v5739, %v5905
      %v5966 = vadd.f32 %v5740, %v5908
      %v5967 = vadd.f32 %v5741, %v5913
      %v5968 = vadd.f32 %v5742, %v5916
      %v5969 = vadd.f32 %v5743, %v5921
      %v5970 = vadd.f32 %v5744, %v5924
      %v5971 = vadd.f32 %v5745, %v5929
      %v5972 = vadd.f32 %v5746, %v5932
      %v5973 = vadd.f32 %v5747, %v5937
      %v5974 = vadd.f32 %v5748, %v5940
      %v5976 = vlaneseq
      %v5977 = vshrl.u32 %v5976, 7
      %v5978 = vsub.s32 0, %v5977
      %v5979 = vrot.slane %v3802, %v5978
      %v5981 = vadd.f32 %v5943, %v5979
      %v5982 = vadd.f32 %v5944, %v5979
      %v5983 = vadd.f32 %v5945, %v5979
      %v5984 = vadd.f32 %v5946, %v5979
      %v5985 = vadd.f32 %v5947, %v5979
      %v5986 = vadd.f32 %v5948, %v5979
      %v5987 = vadd.f32 %v5949, %v5979
      %v5988 = vadd.f32 %v5950, %v5979
      %v5989 = vadd.f32 %v5951, %v5979
      %v5990 = vadd.f32 %v5952, %v5979
      %v5991 = vadd.f32 %v5953, %v5979
      %v5992 = vadd.f32 %v5954, %v5979
      %v5993 = vadd.f32 %v5955, %v5979
      %v5994 = vadd.f32 %v5956, %v5979
      %v5995 = vadd.f32 %v5957, %v5979
      %v5996 = vadd.f32 %v5958, %v5979
      %v5997 = vadd.f32 %v5959, %v5979
      %v5998 = vadd.f32 %v5960, %v5979
      %v5999 = vadd.f32 %v5961, %v5979
      %v6000 = vadd.f32 %v5962, %v5979
      %v6001 = vadd.f32 %v5963, %v5979
      %v6002 = vadd.f32 %v5964, %v5979
      %v6003 = vadd.f32 %v5965, %v5979
      %v6004 = vadd.f32 %v5966, %v5979
      %v6005 = vadd.f32 %v5967, %v5979
      %v6006 = vadd.f32 %v5968, %v5979
      %v6007 = vadd.f32 %v5969, %v5979
      %v6008 = vadd.f32 %v5970, %v5979
      %v6009 = vadd.f32 %v5971, %v5979
      %v6010 = vadd.f32 %v5972, %v5979
      %v6011 = vadd.f32 %v5973, %v5979
      %v6012 = vadd.f32 %v5974, %v5979
      %v6013 = vmax.f32 %v5981, 0.0
      %v6014 = vmax.f32 %v5982, 0.0
      %v6015 = vmax.f32 %v5983, 0.0
      %v6016 = vmax.f32 %v5984, 0.0
      %v6017 = vmax.f32 %v5985, 0.0
      %v6018 = vmax.f32 %v5986, 0.0
      %v6019 = vmax.f32 %v5987, 0.0
      %v6020 = vmax.f32 %v5988, 0.0
      %v6021 = vmax.f32 %v5989, 0.0
      %v6022 = vmax.f32 %v5990, 0.0
      %v6023 = vmax.f32 %v5991, 0.0
      %v6024 = vmax.f32 %v5992, 0.0
      %v6025 = vmax.f32 %v5993, 0.0
      %v6026 = vmax.f32 %v5994, 0.0
      %v6027 = vmax.f32 %v5995, 0.0
      %v6028 = vmax.f32 %v5996, 0.0
      %v6029 = vmax.f32 %v5997, 0.0
      %v6030 = vmax.f32 %v5998, 0.0
      %v6031 = vmax.f32 %v5999, 0.0
      %v6032 = vmax.f32 %v6000, 0.0
      %v6033 = vmax.f32 %v6001, 0.0
      %v6034 = vmax.f32 %v6002, 0.0
      %v6035 = vmax.f32 %v6003, 0.0
      %v6036 = vmax.f32 %v6004, 0.0
      %v6037 = vmax.f32 %v6005, 0.0
      %v6038 = vmax.f32 %v6006, 0.0
      %v6039 = vmax.f32 %v6007, 0.0
      %v6040 = vmax.f32 %v6008, 0.0
      %v6041 = vmax.f32 %v6009, 0.0
      %v6042 = vmax.f32 %v6010, 0.0
      %v6043 = vmax.f32 %v6011, 0.0
      %v6044 = vmax.f32 %v6012, 0.0
      %v6045 = vpack.c.bf16 %v6014, %v6013
      %v6046 = vpack.c.bf16 %v6016, %v6015
      %v6047 = vpack.c.bf16 %v6018, %v6017
      %v6048 = vpack.c.bf16 %v6020, %v6019
      %v6049 = vpack.c.bf16 %v6022, %v6021
      %v6050 = vpack.c.bf16 %v6024, %v6023
      %v6051 = vpack.c.bf16 %v6026, %v6025
      %v6052 = vpack.c.bf16 %v6028, %v6027
      %v6053 = vpack.c.bf16 %v6030, %v6029
      %v6054 = vpack.c.bf16 %v6032, %v6031
      %v6055 = vpack.c.bf16 %v6034, %v6033
      %v6056 = vpack.c.bf16 %v6036, %v6035
      %v6057 = vpack.c.bf16 %v6038, %v6037
      %v6058 = vpack.c.bf16 %v6040, %v6039
      %v6059 = vpack.c.bf16 %v6042, %v6041
      %v6060 = vpack.c.bf16 %v6044, %v6043
      %v6062 = vshrl.u32 %v6046, 16
      %v6065 = vshrl.u32 %v6045, 16
      %v6068 = vshrl.u32 %v6047, 16
      %v6071 = vshrl.u32 %v6048, 16
      %v6074 = vshrl.u32 %v6049, 16
      %v6077 = vshrl.u32 %v6050, 16
      %v6080 = vshrl.u32 %v6051, 16
      %v6083 = vshrl.u32 %v6052, 16
      %v6086 = vshrl.u32 %v6053, 16
      %v6089 = vshrl.u32 %v6054, 16
      %v6092 = vshrl.u32 %v6055, 16
      %v6095 = vshrl.u32 %v6056, 16
      %v6098 = vshrl.u32 %v6057, 16
      %v6101 = vshrl.u32 %v6058, 16
      %v6104 = vshrl.u32 %v6059, 16
      %v6107 = vshrl.u32 %v6060, 16
      %v6125 = vrot.slane %v6062, 7
      %v6126 = vshll.u32 %v6046, 16
      %v6128 = vor.u32 %v6125, %v6126
      %v6129 = vrot.slane %v6065, 7
      %v6130 = vshll.u32 %v6045, 16
      %v6132 = vor.u32 %v6129, %v6130
      %v6133 = vrot.slane %v6068, 7
      %v6134 = vshll.u32 %v6047, 16
      %v6136 = vor.u32 %v6133, %v6134
      %v6137 = vrot.slane %v6071, 7
      %v6138 = vshll.u32 %v6048, 16
      %v6140 = vor.u32 %v6137, %v6138
      %v6141 = vrot.slane %v6074, 7
      %v6142 = vshll.u32 %v6049, 16
      %v6144 = vor.u32 %v6141, %v6142
      %v6145 = vrot.slane %v6077, 7
      %v6146 = vshll.u32 %v6050, 16
      %v6148 = vor.u32 %v6145, %v6146
      %v6149 = vrot.slane %v6080, 7
      %v6150 = vshll.u32 %v6051, 16
      %v6152 = vor.u32 %v6149, %v6150
      %v6153 = vrot.slane %v6083, 7
      %v6154 = vshll.u32 %v6052, 16
      %v6156 = vor.u32 %v6153, %v6154
      %v6157 = vrot.slane %v6086, 7
      %v6158 = vshll.u32 %v6053, 16
      %v6160 = vor.u32 %v6157, %v6158
      %v6161 = vrot.slane %v6089, 7
      %v6162 = vshll.u32 %v6054, 16
      %v6164 = vor.u32 %v6161, %v6162
      %v6165 = vrot.slane %v6092, 7
      %v6166 = vshll.u32 %v6055, 16
      %v6168 = vor.u32 %v6165, %v6166
      %v6169 = vrot.slane %v6095, 7
      %v6170 = vshll.u32 %v6056, 16
      %v6172 = vor.u32 %v6169, %v6170
      %v6173 = vrot.slane %v6098, 7
      %v6174 = vshll.u32 %v6057, 16
      %v6176 = vor.u32 %v6173, %v6174
      %v6177 = vrot.slane %v6101, 7
      %v6178 = vshll.u32 %v6058, 16
      %v6180 = vor.u32 %v6177, %v6178
      %v6181 = vrot.slane %v6104, 7
      %v6182 = vshll.u32 %v6059, 16
      %v6184 = vor.u32 %v6181, %v6182
      %v6185 = vrot.slane %v6107, 7
      %v6186 = vshll.u32 %v6060, 16
      %v6188 = vor.u32 %v6185, %v6186
      %v6221 = vrot.slane %v6126, 7
      %v6222 = vrot.slane %v6130, 7
      %v6223 = vrot.slane %v6134, 7
      %v6224 = vrot.slane %v6138, 7
      %v6225 = vrot.slane %v6142, 7
      %v6226 = vrot.slane %v6146, 7
      %v6227 = vrot.slane %v6150, 7
      %v6228 = vrot.slane %v6154, 7
      %v6229 = vrot.slane %v6158, 7
      %v6230 = vrot.slane %v6162, 7
      %v6231 = vrot.slane %v6166, 7
      %v6232 = vrot.slane %v6170, 7
      %v6233 = vrot.slane %v6174, 7
      %v6234 = vrot.slane %v6178, 7
      %v6235 = vrot.slane %v6182, 7
      %v6236 = vrot.slane %v6186, 7
      %v6253 = vsel %vm402, %v6062, %v6128
      %v6254 = vsel %vm402, %v6065, %v6132
      %v6255 = vsel %vm402, %v6068, %v6136
      %v6256 = vsel %vm402, %v6071, %v6140
      %v6257 = vsel %vm402, %v6074, %v6144
      %v6258 = vsel %vm402, %v6077, %v6148
      %v6259 = vsel %vm402, %v6080, %v6152
      %v6260 = vsel %vm402, %v6083, %v6156
      %v6261 = vsel %vm402, %v6086, %v6160
      %v6262 = vsel %vm402, %v6089, %v6164
      %v6263 = vsel %vm402, %v6092, %v6168
      %v6264 = vsel %vm402, %v6095, %v6172
      %v6265 = vsel %vm402, %v6098, %v6176
      %v6266 = vsel %vm402, %v6101, %v6180
      %v6267 = vsel %vm402, %v6104, %v6184
      %v6268 = vsel %vm402, %v6107, %v6188
      %v6269 = vsel %vm402, %v6125, %v6221
      %v6270 = vsel %vm402, %v6129, %v6222
      %v6271 = vsel %vm402, %v6133, %v6223
      %v6272 = vsel %vm402, %v6137, %v6224
      %v6273 = vsel %vm402, %v6141, %v6225
      %v6274 = vsel %vm402, %v6145, %v6226
      %v6275 = vsel %vm402, %v6149, %v6227
      %v6276 = vsel %vm402, %v6153, %v6228
      %v6277 = vsel %vm402, %v6157, %v6229
      %v6278 = vsel %vm402, %v6161, %v6230
      %v6279 = vsel %vm402, %v6165, %v6231
      %v6280 = vsel %vm402, %v6169, %v6232
      %v6281 = vsel %vm402, %v6173, %v6233
      %v6282 = vsel %vm402, %v6177, %v6234
      %v6283 = vsel %vm402, %v6181, %v6235
      %v6284 = vsel %vm402, %v6185, %v6236
      %v6285 = vld [vmem:[%s6] sm:$0x1]
      %v6286 = vld [vmem:[%s5] sm:$0xf]
      %v6287 = vld [vmem:[%s5 + $0x4] sm:$0xf]
      %v6288 = vld [vmem:[%s5 + $0x8] sm:$0xf]
      %v6289 = vld [vmem:[%s5 + $0xc] sm:$0xf]
      %v6290 = vld [vmem:[%s5 + $0x10] sm:$0xf]
      %v6291 = vld [vmem:[%s5 + $0x14] sm:$0xf]
      %v6292 = vld [vmem:[%s5 + $0x18] sm:$0xf]
      %v6293 = vld [vmem:[%s5 + $0x1c] sm:$0xf]
      %v6295 = vshrl.u32 %v6253, 16
      %v6297 = vshll.u32 %v6253, 16
      %v6299 = vrot.slane %v6297, 1
      %v6300 = vor.u32 %v6295, %v6299
      %v6302 = vshll.u32 %v6269, 16
      %v6304 = vrot.slane %v6302, 1
      %v6305 = vsel %vm3811, %v6300, %v6304
      %v6307 = vshrl.u32 %v6254, 16
      %v6309 = vshll.u32 %v6254, 16
      %v6311 = vrot.slane %v6309, 1
      %v6312 = vor.u32 %v6307, %v6311
      %v6314 = vshll.u32 %v6270, 16
      %v6316 = vrot.slane %v6314, 1
      %v6317 = vsel %vm3811, %v6312, %v6316
      %v6319 = vshrl.u32 %v6255, 16
      %v6321 = vshll.u32 %v6255, 16
      %v6323 = vrot.slane %v6321, 1
      %v6324 = vor.u32 %v6319, %v6323
      %v6326 = vshll.u32 %v6271, 16
      %v6328 = vrot.slane %v6326, 1
      %v6329 = vsel %vm3811, %v6324, %v6328
      %v6331 = vshrl.u32 %v6256, 16
      %v6333 = vshll.u32 %v6256, 16
      %v6335 = vrot.slane %v6333, 1
      %v6336 = vor.u32 %v6331, %v6335
      %v6338 = vshll.u32 %v6272, 16
      %v6340 = vrot.slane %v6338, 1
      %v6341 = vsel %vm3811, %v6336, %v6340
      %v6343 = vshrl.u32 %v6257, 16
      %v6345 = vshll.u32 %v6257, 16
      %v6347 = vrot.slane %v6345, 1
      %v6348 = vor.u32 %v6343, %v6347
      %v6350 = vshll.u32 %v6273, 16
      %v6352 = vrot.slane %v6350, 1
      %v6353 = vsel %vm3811, %v6348, %v6352
      %v6355 = vshrl.u32 %v6258, 16
      %v6357 = vshll.u32 %v6258, 16
      %v6359 = vrot.slane %v6357, 1
      %v6360 = vor.u32 %v6355, %v6359
      %v6362 = vshll.u32 %v6274, 16
      %v6364 = vrot.slane %v6362, 1
      %v6365 = vsel %vm3811, %v6360, %v6364
      %v6367 = vshrl.u32 %v6259, 16
      %v6369 = vshll.u32 %v6259, 16
      %v6371 = vrot.slane %v6369, 1
      %v6372 = vor.u32 %v6367, %v6371
      %v6374 = vshll.u32 %v6275, 16
      %v6376 = vrot.slane %v6374, 1
      %v6377 = vsel %vm3811, %v6372, %v6376
      %v6379 = vshrl.u32 %v6260, 16
      %v6381 = vshll.u32 %v6260, 16
      %v6383 = vrot.slane %v6381, 1
      %v6384 = vor.u32 %v6379, %v6383
      %v6386 = vshll.u32 %v6276, 16
      %v6388 = vrot.slane %v6386, 1
      %v6389 = vsel %vm3811, %v6384, %v6388
      %v6391 = vshrl.u32 %v6261, 16
      %v6393 = vshll.u32 %v6261, 16
      %v6395 = vrot.slane %v6393, 1
      %v6396 = vor.u32 %v6391, %v6395
      %v6398 = vshll.u32 %v6277, 16
      %v6400 = vrot.slane %v6398, 1
      %v6401 = vsel %vm3811, %v6396, %v6400
      %v6403 = vshrl.u32 %v6262, 16
      %v6405 = vshll.u32 %v6262, 16
      %v6407 = vrot.slane %v6405, 1
      %v6408 = vor.u32 %v6403, %v6407
      %v6410 = vshll.u32 %v6278, 16
      %v6412 = vrot.slane %v6410, 1
      %v6413 = vsel %vm3811, %v6408, %v6412
      %v6415 = vshrl.u32 %v6263, 16
      %v6417 = vshll.u32 %v6263, 16
      %v6419 = vrot.slane %v6417, 1
      %v6420 = vor.u32 %v6415, %v6419
      %v6422 = vshll.u32 %v6279, 16
      %v6424 = vrot.slane %v6422, 1
      %v6425 = vsel %vm3811, %v6420, %v6424
      %v6427 = vshrl.u32 %v6264, 16
      %v6429 = vshll.u32 %v6264, 16
      %v6431 = vrot.slane %v6429, 1
      %v6432 = vor.u32 %v6427, %v6431
      %v6434 = vshll.u32 %v6280, 16
      %v6436 = vrot.slane %v6434, 1
      %v6437 = vsel %vm3811, %v6432, %v6436
      %v6439 = vshrl.u32 %v6265, 16
      %v6441 = vshll.u32 %v6265, 16
      %v6443 = vrot.slane %v6441, 1
      %v6444 = vor.u32 %v6439, %v6443
      %v6446 = vshll.u32 %v6281, 16
      %v6448 = vrot.slane %v6446, 1
      %v6449 = vsel %vm3811, %v6444, %v6448
      %v6451 = vshrl.u32 %v6266, 16
      %v6453 = vshll.u32 %v6266, 16
      %v6455 = vrot.slane %v6453, 1
      %v6456 = vor.u32 %v6451, %v6455
      %v6458 = vshll.u32 %v6282, 16
      %v6460 = vrot.slane %v6458, 1
      %v6461 = vsel %vm3811, %v6456, %v6460
      %v6463 = vshrl.u32 %v6267, 16
      %v6465 = vshll.u32 %v6267, 16
      %v6467 = vrot.slane %v6465, 1
      %v6468 = vor.u32 %v6463, %v6467
      %v6470 = vshll.u32 %v6283, 16
      %v6472 = vrot.slane %v6470, 1
      %v6473 = vsel %vm3811, %v6468, %v6472
      %s6474 = scalar_lea.vmem %s5, 32
      %v6475 = vld [vmem:[%s6474] sm:$0xf]
      %v6476 = vld [vmem:[%s6474 + $0x4] sm:$0xf]
      %v6477 = vld [vmem:[%s6474 + $0x8] sm:$0xf]
      %v6478 = vld [vmem:[%s6474 + $0xc] sm:$0xf]
      %v6479 = vld [vmem:[%s6474 + $0x10] sm:$0xf]
      %v6480 = vld [vmem:[%s6474 + $0x14] sm:$0xf]
      %v6481 = vld [vmem:[%s6474 + $0x18] sm:$0xf]
      %v6482 = vld [vmem:[%s6474 + $0x1c] sm:$0xf]
      %v6491 = vunpack.c.l.b16 %v6475
      %v6492 = vunpack.c.l.b16 %v6476
      %v6493 = vunpack.c.l.b16 %v6477
      %v6494 = vunpack.c.l.b16 %v6478
      %v6495 = vunpack.c.l.b16 %v6479
      %v6496 = vunpack.c.l.b16 %v6480
      %v6497 = vunpack.c.l.b16 %v6481
      %v6498 = vunpack.c.l.b16 %v6482
      %v6499 = vpack.c.b16 %v6492, %v6491
      %v6500 = vpack.c.b16 %v6494, %v6493
      %v6501 = vpack.c.b16 %v6496, %v6495
      %v6502 = vpack.c.b16 %v6498, %v6497
      %v6508 = vsel %vm3941, %v6305, 0
      %v6511 = vsel %vm3941, %v6317, 0
      %v6514 = vsel %vm3941, %v6329, 0
      %v6517 = vsel %vm3941, %v6341, 0
      %v6520 = vsel %vm3941, %v6353, 0
      %v6523 = vsel %vm3941, %v6365, 0
      %v6526 = vsel %vm3941, %v6377, 0
      %v6529 = vsel %vm3941, %v6389, 0
      %v6532 = vsel %vm3941, %v6401, 0
      %v6535 = vsel %vm3941, %v6413, 0
      %v6538 = vsel %vm3941, %v6425, 0
      %v6541 = vsel %vm3941, %v6437, 0
      %v6544 = vsel %vm3941, %v6449, 0
      %v6547 = vsel %vm3941, %v6461, 0
      %v6550 = vsel %vm3941, %v6473, 0
      %6552 = vmatprep.subr.bf16.mxu0 0
      %6553 = vmatpush1.bf16.msra.mxu0 %v6499
      %6554 = vmatprep.subr.bf16.mxu0 0
      %6555 = vmatpush1.bf16.msra.mxu0 %v6500
      %6556 = vmatprep.subr.bf16.mxu0 0
      %6557 = vmatpush1.bf16.msra.mxu0 %v6501
      %6558 = vmatprep.subr.bf16.mxu0 0
      %6559 = vmatpush1.bf16.msra.mxu0 %v6502
      %6560 = vmatprep.subr.bf16.mxu0 0
      %6561 = vmatpush1.bf16.msra.mxu0 0
      %6562 = vmatprep.subr.bf16.mxu0 0
      %6563 = vmatpush1.bf16.msra.mxu0 0
      %6564 = vmatprep.subr.bf16.mxu0 0
      %6565 = vmatpush1.bf16.msra.mxu0 0
      %6566 = vmatprep.subr.bf16.mxu0 0
      %6567 = vmatpush1.bf16.msra.mxu0 0
      %6568 = vmatprep.subr.bf16.mxu0 0
      %6569 = vmatpush1.bf16.msra.mxu0 0
      %6570 = vmatprep.subr.bf16.mxu0 0
      %6571 = vmatpush1.bf16.msra.mxu0 0
      %6572 = vmatprep.subr.bf16.mxu0 0
      %6573 = vmatpush1.bf16.msra.mxu0 0
      %6574 = vmatprep.subr.bf16.mxu0 0
      %6575 = vmatpush1.bf16.msra.mxu0 0
      %6576 = vmatprep.subr.bf16.mxu0 0
      %6577 = vmatpush1.bf16.msra.mxu0 0
      %6578 = vmatprep.subr.bf16.mxu0 0
      %6579 = vmatpush1.bf16.msra.mxu0 0
      %6580 = vmatprep.subr.bf16.mxu0 0
      %6581 = vmatpush1.bf16.msra.mxu0 0
      %6582 = vmatprep.subr.bf16.mxu0 0
      %6583 = vmatpush1.bf16.msra.mxu0 0
      %6584 = vmatprep.mubr.bf16.mxu0 0
      %6585 = vmatmul.mubr.bf16.gmra.mrb[0].mxu0 %v6508
      %v6586 = vpop.f32.mrb[0].mxu0
      %v6587 = vadd.f32 0.0, %v6586
      %v6588 = vpop.f32.mrb[0].mxu0
      %v6589 = vpop.f32.mrb[0].mxu0
      %v6590 = vadd.f32 0.0, %v6589
      %v6591 = vpop.f32.mrb[0].mxu0
      %6592 = vmatprep.mubr.bf16.mxu0 0
      %6593 = vmatmul.mubr.bf16.gmra.mrb[0].mxu0 %v6511
      %v6594 = vpop.f32.mrb[0].mxu0
      %v6595 = vadd.f32 0.0, %v6594
      %v6596 = vpop.f32.mrb[0].mxu0
      %v6597 = vpop.f32.mrb[0].mxu0
      %v6598 = vadd.f32 0.0, %v6597
      %v6599 = vpop.f32.mrb[0].mxu0
      %6600 = vmatprep.mubr.bf16.mxu0 0
      %6601 = vmatmul.mubr.bf16.gmra.mrb[0].mxu0 %v6508
      %v6602 = vpop.f32.mrb[0].mxu0
      %v6603 = vadd.f32 0.0, %v6602
      %v6604 = vpop.f32.mrb[0].mxu0
      %v6605 = vpop.f32.mrb[0].mxu0
      %v6606 = vadd.f32 0.0, %v6605
      %v6607 = vpop.f32.mrb[0].mxu0
      %6608 = vmatprep.mubr.bf16.mxu0 0
      %6609 = vmatmul.mubr.bf16.gmra.mrb[0].mxu0 %v6514
      %v6610 = vpop.f32.mrb[0].mxu0
      %v6611 = vadd.f32 0.0, %v6610
      %v6612 = vpop.f32.mrb[0].mxu0
      %v6613 = vpop.f32.mrb[0].mxu0
      %v6614 = vadd.f32 0.0, %v6613
      %v6615 = vpop.f32.mrb[0].mxu0
      %6616 = vmatprep.mubr.bf16.mxu0 0
      %6617 = vmatmul.mubr.bf16.gmra.mrb[0].mxu0 %v6517
      %v6618 = vpop.f32.mrb[0].mxu0
      %v6619 = vadd.f32 0.0, %v6618
      %v6620 = vpop.f32.mrb[0].mxu0
      %v6621 = vpop.f32.mrb[0].mxu0
      %v6622 = vadd.f32 0.0, %v6621
      %v6623 = vpop.f32.mrb[0].mxu0
      %6624 = vmatprep.mubr.bf16.mxu0 0
      %6625 = vmatmul.mubr.bf16.gmra.mrb[0].mxu0 %v6520
      %v6626 = vpop.f32.mrb[0].mxu0
      %v6627 = vadd.f32 0.0, %v6626
      %v6628 = vpop.f32.mrb[0].mxu0
      %v6629 = vpop.f32.mrb[0].mxu0
      %v6630 = vadd.f32 0.0, %v6629
      %v6631 = vpop.f32.mrb[0].mxu0
      %6632 = vmatprep.mubr.bf16.mxu0 0
      %6633 = vmatmul.mubr.bf16.gmra.mrb[0].mxu0 %v6523
      %v6634 = vpop.f32.mrb[0].mxu0
      %v6635 = vadd.f32 0.0, %v6634
      %v6636 = vpop.f32.mrb[0].mxu0
      %v6637 = vpop.f32.mrb[0].mxu0
      %v6638 = vadd.f32 0.0, %v6637
      %v6639 = vpop.f32.mrb[0].mxu0
      %6640 = vmatprep.mubr.bf16.mxu0 0
      %6641 = vmatmul.mubr.bf16.gmra.mrb[0].mxu0 %v6526
      %v6642 = vpop.f32.mrb[0].mxu0
      %v6643 = vadd.f32 0.0, %v6642
      %v6644 = vpop.f32.mrb[0].mxu0
      %v6645 = vpop.f32.mrb[0].mxu0
      %v6646 = vadd.f32 0.0, %v6645
      %v6647 = vpop.f32.mrb[0].mxu0
      %6648 = vmatprep.mubr.bf16.mxu0 0
      %6649 = vmatmul.mubr.bf16.gmra.mrb[0].mxu0 %v6529
      %v6650 = vpop.f32.mrb[0].mxu0
      %v6651 = vadd.f32 0.0, %v6650
      %v6652 = vpop.f32.mrb[0].mxu0
      %v6653 = vpop.f32.mrb[0].mxu0
      %v6654 = vadd.f32 0.0, %v6653
      %v6655 = vpop.f32.mrb[0].mxu0
      %6656 = vmatprep.mubr.bf16.mxu0 0
      %6657 = vmatmul.mubr.bf16.gmra.mrb[0].mxu0 %v6532
      %v6658 = vpop.f32.mrb[0].mxu0
      %v6659 = vadd.f32 0.0, %v6658
      %v6660 = vpop.f32.mrb[0].mxu0
      %v6661 = vpop.f32.mrb[0].mxu0
      %v6662 = vadd.f32 0.0, %v6661
      %v6663 = vpop.f32.mrb[0].mxu0
      %6664 = vmatprep.mubr.bf16.mxu0 0
      %6665 = vmatmul.mubr.bf16.gmra.mrb[0].mxu0 %v6535
      %v6666 = vpop.f32.mrb[0].mxu0
      %v6667 = vadd.f32 0.0, %v6666
      %v6668 = vpop.f32.mrb[0].mxu0
      %v6669 = vpop.f32.mrb[0].mxu0
      %v6670 = vadd.f32 0.0, %v6669
      %v6671 = vpop.f32.mrb[0].mxu0
      %6672 = vmatprep.mubr.bf16.mxu0 0
      %6673 = vmatmul.mubr.bf16.gmra.mrb[0].mxu0 %v6538
      %v6674 = vpop.f32.mrb[0].mxu0
      %v6675 = vadd.f32 0.0, %v6674
      %v6676 = vpop.f32.mrb[0].mxu0
      %v6677 = vpop.f32.mrb[0].mxu0
      %v6678 = vadd.f32 0.0, %v6677
      %v6679 = vpop.f32.mrb[0].mxu0
      %6680 = vmatprep.mubr.bf16.mxu0 0
      %6681 = vmatmul.mubr.bf16.gmra.mrb[0].mxu0 %v6541
      %v6682 = vpop.f32.mrb[0].mxu0
      %v6683 = vadd.f32 0.0, %v6682
      %v6684 = vpop.f32.mrb[0].mxu0
      %v6685 = vpop.f32.mrb[0].mxu0
      %v6686 = vadd.f32 0.0, %v6685
      %v6687 = vpop.f32.mrb[0].mxu0
      %6688 = vmatprep.mubr.bf16.mxu0 0
      %6689 = vmatmul.mubr.bf16.gmra.mrb[0].mxu0 %v6544
      %v6690 = vpop.f32.mrb[0].mxu0
      %v6691 = vadd.f32 0.0, %v6690
      %v6692 = vpop.f32.mrb[0].mxu0
      %v6693 = vpop.f32.mrb[0].mxu0
      %v6694 = vadd.f32 0.0, %v6693
      %v6695 = vpop.f32.mrb[0].mxu0
      %6696 = vmatprep.mubr.bf16.mxu0 0
      %6697 = vmatmul.mubr.bf16.gmra.mrb[0].mxu0 %v6547
      %v6698 = vpop.f32.mrb[0].mxu0
      %v6699 = vadd.f32 0.0, %v6698
      %v6700 = vpop.f32.mrb[0].mxu0
      %v6701 = vpop.f32.mrb[0].mxu0
      %v6702 = vadd.f32 0.0, %v6701
      %v6703 = vpop.f32.mrb[0].mxu0
      %6704 = vmatprep.mubr.bf16.mxu0 0
      %6705 = vmatmul.mubr.bf16.gmra.mrb[0].mxu0 %v6550
      %v6706 = vpop.f32.mrb[0].mxu0
      %v6707 = vadd.f32 0.0, %v6706
      %v6708 = vpop.f32.mrb[0].mxu0
      %v6709 = vpop.f32.mrb[0].mxu0
      %v6710 = vadd.f32 0.0, %v6709
      %v6711 = vpop.f32.mrb[0].mxu0
      %6712 = vdwg.mxu0
      %v6721 = vunpack.c.l.b16 %v6286
      %v6722 = vunpack.c.l.b16 %v6287
      %v6723 = vunpack.c.l.b16 %v6288
      %v6724 = vunpack.c.l.b16 %v6289
      %v6725 = vunpack.c.l.b16 %v6290
      %v6726 = vunpack.c.l.b16 %v6291
      %v6727 = vunpack.c.l.b16 %v6292
      %v6728 = vunpack.c.l.b16 %v6293
      %v6729 = vpack.c.b16 %v6722, %v6721
      %v6730 = vpack.c.b16 %v6724, %v6723
      %v6731 = vpack.c.b16 %v6726, %v6725
      %v6732 = vpack.c.b16 %v6728, %v6727
      %v6737 = vsel %vm3941, %v6253, 0
      %v6739 = vsel %vm3941, %v6254, 0
      %v6741 = vsel %vm3941, %v6255, 0
      %v6743 = vsel %vm3941, %v6256, 0
      %v6745 = vsel %vm3941, %v6257, 0
      %v6747 = vsel %vm3941, %v6258, 0
      %v6749 = vsel %vm3941, %v6259, 0
      %v6751 = vsel %vm3941, %v6260, 0
      %v6753 = vsel %vm3941, %v6261, 0
      %v6755 = vsel %vm3941, %v6262, 0
      %v6757 = vsel %vm3941, %v6263, 0
      %v6759 = vsel %vm3941, %v6264, 0
      %v6761 = vsel %vm3941, %v6265, 0
      %v6763 = vsel %vm3941, %v6266, 0
      %v6765 = vsel %vm3941, %v6267, 0
      %6767 = vmatprep.subr.bf16.mxu0 0
      %6768 = vmatpush1.bf16.msra.mxu0 %v6729
      %6769 = vmatprep.subr.bf16.mxu0 0
      %6770 = vmatpush1.bf16.msra.mxu0 %v6730
      %6771 = vmatprep.subr.bf16.mxu0 0
      %6772 = vmatpush1.bf16.msra.mxu0 %v6731
      %6773 = vmatprep.subr.bf16.mxu0 0
      %6774 = vmatpush1.bf16.msra.mxu0 %v6732
      %6775 = vmatprep.subr.bf16.mxu0 0
      %6776 = vmatpush1.bf16.msra.mxu0 0
      %6777 = vmatprep.subr.bf16.mxu0 0
      %6778 = vmatpush1.bf16.msra.mxu0 0
      %6779 = vmatprep.subr.bf16.mxu0 0
      %6780 = vmatpush1.bf16.msra.mxu0 0
      %6781 = vmatprep.subr.bf16.mxu0 0
      %6782 = vmatpush1.bf16.msra.mxu0 0
      %6783 = vmatprep.subr.bf16.mxu0 0
      %6784 = vmatpush1.bf16.msra.mxu0 0
      %6785 = vmatprep.subr.bf16.mxu0 0
      %6786 = vmatpush1.bf16.msra.mxu0 0
      %6787 = vmatprep.subr.bf16.mxu0 0
      %6788 = vmatpush1.bf16.msra.mxu0 0
      %6789 = vmatprep.subr.bf16.mxu0 0
      %6790 = vmatpush1.bf16.msra.mxu0 0
      %6791 = vmatprep.subr.bf16.mxu0 0
      %6792 = vmatpush1.bf16.msra.mxu0 0
      %6793 = vmatprep.subr.bf16.mxu0 0
      %6794 = vmatpush1.bf16.msra.mxu0 0
      %6795 = vmatprep.subr.bf16.mxu0 0
      %6796 = vmatpush1.bf16.msra.mxu0 0
      %6797 = vmatprep.subr.bf16.mxu0 0
      %6798 = vmatpush1.bf16.msra.mxu0 0
      %6799 = vmatprep.mubr.bf16.mxu0 0
      %6800 = vmatmul.mubr.bf16.gmra.mrb[0].mxu0 %v6737
      %v6801 = vpop.f32.mrb[0].mxu0
      %v6802 = vadd.f32 %v6587, %v6801
      %v6803 = vpop.f32.mrb[0].mxu0
      %v6804 = vpop.f32.mrb[0].mxu0
      %v6805 = vadd.f32 %v6590, %v6804
      %v6806 = vpop.f32.mrb[0].mxu0
      %6807 = vmatprep.mubr.bf16.mxu0 0
      %6808 = vmatmul.mubr.bf16.gmra.mrb[0].mxu0 %v6739
      %v6809 = vpop.f32.mrb[0].mxu0
      %v6810 = vadd.f32 %v6595, %v6809
      %v6811 = vpop.f32.mrb[0].mxu0
      %v6812 = vpop.f32.mrb[0].mxu0
      %v6813 = vadd.f32 %v6598, %v6812
      %v6814 = vpop.f32.mrb[0].mxu0
      %6815 = vmatprep.mubr.bf16.mxu0 0
      %6816 = vmatmul.mubr.bf16.gmra.mrb[0].mxu0 %v6737
      %v6817 = vpop.f32.mrb[0].mxu0
      %v6818 = vadd.f32 %v6603, %v6817
      %v6819 = vpop.f32.mrb[0].mxu0
      %v6820 = vpop.f32.mrb[0].mxu0
      %v6821 = vadd.f32 %v6606, %v6820
      %v6822 = vpop.f32.mrb[0].mxu0
      %6823 = vmatprep.mubr.bf16.mxu0 0
      %6824 = vmatmul.mubr.bf16.gmra.mrb[0].mxu0 %v6741
      %v6825 = vpop.f32.mrb[0].mxu0
      %v6826 = vadd.f32 %v6611, %v6825
      %v6827 = vpop.f32.mrb[0].mxu0
      %v6828 = vpop.f32.mrb[0].mxu0
      %v6829 = vadd.f32 %v6614, %v6828
      %v6830 = vpop.f32.mrb[0].mxu0
      %6831 = vmatprep.mubr.bf16.mxu0 0
      %6832 = vmatmul.mubr.bf16.gmra.mrb[0].mxu0 %v6743
      %v6833 = vpop.f32.mrb[0].mxu0
      %v6834 = vadd.f32 %v6619, %v6833
      %v6835 = vpop.f32.mrb[0].mxu0
      %v6836 = vpop.f32.mrb[0].mxu0
      %v6837 = vadd.f32 %v6622, %v6836
      %v6838 = vpop.f32.mrb[0].mxu0
      %6839 = vmatprep.mubr.bf16.mxu0 0
      %6840 = vmatmul.mubr.bf16.gmra.mrb[0].mxu0 %v6745
      %v6841 = vpop.f32.mrb[0].mxu0
      %v6842 = vadd.f32 %v6627, %v6841
      %v6843 = vpop.f32.mrb[0].mxu0
      %v6844 = vpop.f32.mrb[0].mxu0
      %v6845 = vadd.f32 %v6630, %v6844
      %v6846 = vpop.f32.mrb[0].mxu0
      %6847 = vmatprep.mubr.bf16.mxu0 0
      %6848 = vmatmul.mubr.bf16.gmra.mrb[0].mxu0 %v6747
      %v6849 = vpop.f32.mrb[0].mxu0
      %v6850 = vadd.f32 %v6635, %v6849
      %v6851 = vpop.f32.mrb[0].mxu0
      %v6852 = vpop.f32.mrb[0].mxu0
      %v6853 = vadd.f32 %v6638, %v6852
      %v6854 = vpop.f32.mrb[0].mxu0
      %6855 = vmatprep.mubr.bf16.mxu0 0
      %6856 = vmatmul.mubr.bf16.gmra.mrb[0].mxu0 %v6749
      %v6857 = vpop.f32.mrb[0].mxu0
      %v6858 = vadd.f32 %v6643, %v6857
      %v6859 = vpop.f32.mrb[0].mxu0
      %v6860 = vpop.f32.mrb[0].mxu0
      %v6861 = vadd.f32 %v6646, %v6860
      %v6862 = vpop.f32.mrb[0].mxu0
      %6863 = vmatprep.mubr.bf16.mxu0 0
      %6864 = vmatmul.mubr.bf16.gmra.mrb[0].mxu0 %v6751
      %v6865 = vpop.f32.mrb[0].mxu0
      %v6866 = vadd.f32 %v6651, %v6865
      %v6867 = vpop.f32.mrb[0].mxu0
      %v6868 = vpop.f32.mrb[0].mxu0
      %v6869 = vadd.f32 %v6654, %v6868
      %v6870 = vpop.f32.mrb[0].mxu0
      %6871 = vmatprep.mubr.bf16.mxu0 0
      %6872 = vmatmul.mubr.bf16.gmra.mrb[0].mxu0 %v6753
      %v6873 = vpop.f32.mrb[0].mxu0
      %v6874 = vadd.f32 %v6659, %v6873
      %v6875 = vpop.f32.mrb[0].mxu0
      %v6876 = vpop.f32.mrb[0].mxu0
      %v6877 = vadd.f32 %v6662, %v6876
      %v6878 = vpop.f32.mrb[0].mxu0
      %6879 = vmatprep.mubr.bf16.mxu0 0
      %6880 = vmatmul.mubr.bf16.gmra.mrb[0].mxu0 %v6755
      %v6881 = vpop.f32.mrb[0].mxu0
      %v6882 = vadd.f32 %v6667, %v6881
      %v6883 = vpop.f32.mrb[0].mxu0
      %v6884 = vpop.f32.mrb[0].mxu0
      %v6885 = vadd.f32 %v6670, %v6884
      %v6886 = vpop.f32.mrb[0].mxu0
      %6887 = vmatprep.mubr.bf16.mxu0 0
      %6888 = vmatmul.mubr.bf16.gmra.mrb[0].mxu0 %v6757
      %v6889 = vpop.f32.mrb[0].mxu0
      %v6890 = vadd.f32 %v6675, %v6889
      %v6891 = vpop.f32.mrb[0].mxu0
      %v6892 = vpop.f32.mrb[0].mxu0
      %v6893 = vadd.f32 %v6678, %v6892
      %v6894 = vpop.f32.mrb[0].mxu0
      %6895 = vmatprep.mubr.bf16.mxu0 0
      %6896 = vmatmul.mubr.bf16.gmra.mrb[0].mxu0 %v6759
      %v6897 = vpop.f32.mrb[0].mxu0
      %v6898 = vadd.f32 %v6683, %v6897
      %v6899 = vpop.f32.mrb[0].mxu0
      %v6900 = vpop.f32.mrb[0].mxu0
      %v6901 = vadd.f32 %v6686, %v6900
      %v6902 = vpop.f32.mrb[0].mxu0
      %6903 = vmatprep.mubr.bf16.mxu0 0
      %6904 = vmatmul.mubr.bf16.gmra.mrb[0].mxu0 %v6761
      %v6905 = vpop.f32.mrb[0].mxu0
      %v6906 = vadd.f32 %v6691, %v6905
      %v6907 = vpop.f32.mrb[0].mxu0
      %v6908 = vpop.f32.mrb[0].mxu0
      %v6909 = vadd.f32 %v6694, %v6908
      %v6910 = vpop.f32.mrb[0].mxu0
      %6911 = vmatprep.mubr.bf16.mxu0 0
      %6912 = vmatmul.mubr.bf16.gmra.mrb[0].mxu0 %v6763
      %v6913 = vpop.f32.mrb[0].mxu0
      %v6914 = vadd.f32 %v6699, %v6913
      %v6915 = vpop.f32.mrb[0].mxu0
      %v6916 = vpop.f32.mrb[0].mxu0
      %v6917 = vadd.f32 %v6702, %v6916
      %v6918 = vpop.f32.mrb[0].mxu0
      %6919 = vmatprep.mubr.bf16.mxu0 0
      %6920 = vmatmul.mubr.bf16.gmra.mrb[0].mxu0 %v6765
      %v6921 = vpop.f32.mrb[0].mxu0
      %v6922 = vadd.f32 %v6707, %v6921
      %v6923 = vpop.f32.mrb[0].mxu0
      %v6924 = vpop.f32.mrb[0].mxu0
      %v6925 = vadd.f32 %v6710, %v6924
      %v6926 = vpop.f32.mrb[0].mxu0
      %6927 = vdwg.mxu0
      %v6958 = vrot.slane %v6253, 1
      %v6959 = vrot.slane %v6269, 1
      %v6960 = vsel %vm4344, %v6958, %v6959
      %v6961 = vrot.slane %v6254, 1
      %v6962 = vrot.slane %v6270, 1
      %v6963 = vsel %vm4344, %v6961, %v6962
      %v6964 = vrot.slane %v6255, 1
      %v6965 = vrot.slane %v6271, 1
      %v6966 = vsel %vm4344, %v6964, %v6965
      %v6967 = vrot.slane %v6256, 1
      %v6968 = vrot.slane %v6272, 1
      %v6969 = vsel %vm4344, %v6967, %v6968
      %v6970 = vrot.slane %v6257, 1
      %v6971 = vrot.slane %v6273, 1
      %v6972 = vsel %vm4344, %v6970, %v6971
      %v6973 = vrot.slane %v6258, 1
      %v6974 = vrot.slane %v6274, 1
      %v6975 = vsel %vm4344, %v6973, %v6974
      %v6976 = vrot.slane %v6259, 1
      %v6977 = vrot.slane %v6275, 1
      %v6978 = vsel %vm4344, %v6976, %v6977
      %v6979 = vrot.slane %v6260, 1
      %v6980 = vrot.slane %v6276, 1
      %v6981 = vsel %vm4344, %v6979, %v6980
      %v6982 = vrot.slane %v6261, 1
      %v6983 = vrot.slane %v6277, 1
      %v6984 = vsel %vm4344, %v6982, %v6983
      %v6985 = vrot.slane %v6262, 1
      %v6986 = vrot.slane %v6278, 1
      %v6987 = vsel %vm4344, %v6985, %v6986
      %v6988 = vrot.slane %v6263, 1
      %v6989 = vrot.slane %v6279, 1
      %v6990 = vsel %vm4344, %v6988, %v6989
      %v6991 = vrot.slane %v6264, 1
      %v6992 = vrot.slane %v6280, 1
      %v6993 = vsel %vm4344, %v6991, %v6992
      %v6994 = vrot.slane %v6265, 1
      %v6995 = vrot.slane %v6281, 1
      %v6996 = vsel %vm4344, %v6994, %v6995
      %v6997 = vrot.slane %v6266, 1
      %v6998 = vrot.slane %v6282, 1
      %v6999 = vsel %vm4344, %v6997, %v6998
      %v7000 = vrot.slane %v6267, 1
      %v7001 = vrot.slane %v6283, 1
      %v7002 = vsel %vm4344, %v7000, %v7001
      %s7003 = scalar_lea.vmem %s5, 64
      %v7004 = vld [vmem:[%s7003] sm:$0xf]
      %v7005 = vld [vmem:[%s7003 + $0x4] sm:$0xf]
      %v7006 = vld [vmem:[%s7003 + $0x8] sm:$0xf]
      %v7007 = vld [vmem:[%s7003 + $0xc] sm:$0xf]
      %v7008 = vld [vmem:[%s7003 + $0x10] sm:$0xf]
      %v7009 = vld [vmem:[%s7003 + $0x14] sm:$0xf]
      %v7010 = vld [vmem:[%s7003 + $0x18] sm:$0xf]
      %v7011 = vld [vmem:[%s7003 + $0x1c] sm:$0xf]
      %v7020 = vunpack.c.l.b16 %v7004
      %v7021 = vunpack.c.l.b16 %v7005
      %v7022 = vunpack.c.l.b16 %v7006
      %v7023 = vunpack.c.l.b16 %v7007
      %v7024 = vunpack.c.l.b16 %v7008
      %v7025 = vunpack.c.l.b16 %v7009
      %v7026 = vunpack.c.l.b16 %v7010
      %v7027 = vunpack.c.l.b16 %v7011
      %v7028 = vpack.c.b16 %v7021, %v7020
      %v7029 = vpack.c.b16 %v7023, %v7022
      %v7030 = vpack.c.b16 %v7025, %v7024
      %v7031 = vpack.c.b16 %v7027, %v7026
      %v7037 = vsel %vm3941, %v6960, 0
      %v7040 = vsel %vm3941, %v6963, 0
      %v7043 = vsel %vm3941, %v6966, 0
      %v7046 = vsel %vm3941, %v6969, 0
      %v7049 = vsel %vm3941, %v6972, 0
      %v7052 = vsel %vm3941, %v6975, 0
      %v7055 = vsel %vm3941, %v6978, 0
      %v7058 = vsel %vm3941, %v6981, 0
      %v7061 = vsel %vm3941, %v6984, 0
      %v7064 = vsel %vm3941, %v6987, 0
      %v7067 = vsel %vm3941, %v6990, 0
      %v7070 = vsel %vm3941, %v6993, 0
      %v7073 = vsel %vm3941, %v6996, 0
      %v7076 = vsel %vm3941, %v6999, 0
      %v7079 = vsel %vm3941, %v7002, 0
      %7081 = vmatprep.subr.bf16.mxu0 0
      %7082 = vmatpush1.bf16.msra.mxu0 %v7028
      %7083 = vmatprep.subr.bf16.mxu0 0
      %7084 = vmatpush1.bf16.msra.mxu0 %v7029
      %7085 = vmatprep.subr.bf16.mxu0 0
      %7086 = vmatpush1.bf16.msra.mxu0 %v7030
      %7087 = vmatprep.subr.bf16.mxu0 0
      %7088 = vmatpush1.bf16.msra.mxu0 %v7031
      %7089 = vmatprep.subr.bf16.mxu0 0
      %7090 = vmatpush1.bf16.msra.mxu0 0
      %7091 = vmatprep.subr.bf16.mxu0 0
      %7092 = vmatpush1.bf16.msra.mxu0 0
      %7093 = vmatprep.subr.bf16.mxu0 0
      %7094 = vmatpush1.bf16.msra.mxu0 0
      %7095 = vmatprep.subr.bf16.mxu0 0
      %7096 = vmatpush1.bf16.msra.mxu0 0
      %7097 = vmatprep.subr.bf16.mxu0 0
      %7098 = vmatpush1.bf16.msra.mxu0 0
      %7099 = vmatprep.subr.bf16.mxu0 0
      %7100 = vmatpush1.bf16.msra.mxu0 0
      %7101 = vmatprep.subr.bf16.mxu0 0
      %7102 = vmatpush1.bf16.msra.mxu0 0
      %7103 = vmatprep.subr.bf16.mxu0 0
      %7104 = vmatpush1.bf16.msra.mxu0 0
      %7105 = vmatprep.subr.bf16.mxu0 0
      %7106 = vmatpush1.bf16.msra.mxu0 0
      %7107 = vmatprep.subr.bf16.mxu0 0
      %7108 = vmatpush1.bf16.msra.mxu0 0
      %7109 = vmatprep.subr.bf16.mxu0 0
      %7110 = vmatpush1.bf16.msra.mxu0 0
      %7111 = vmatprep.subr.bf16.mxu0 0
      %7112 = vmatpush1.bf16.msra.mxu0 0
      %7113 = vmatprep.mubr.bf16.mxu0 0
      %7114 = vmatmul.mubr.bf16.gmra.mrb[0].mxu0 %v7037
      %v7115 = vpop.f32.mrb[0].mxu0
      %v7116 = vadd.f32 0.0, %v7115
      %v7117 = vpop.f32.mrb[0].mxu0
      %v7118 = vpop.f32.mrb[0].mxu0
      %v7119 = vadd.f32 0.0, %v7118
      %v7120 = vpop.f32.mrb[0].mxu0
      %7121 = vmatprep.mubr.bf16.mxu0 0
      %7122 = vmatmul.mubr.bf16.gmra.mrb[0].mxu0 %v7040
      %v7123 = vpop.f32.mrb[0].mxu0
      %v7124 = vadd.f32 0.0, %v7123
      %v7125 = vpop.f32.mrb[0].mxu0
      %v7126 = vpop.f32.mrb[0].mxu0
      %v7127 = vadd.f32 0.0, %v7126
      %v7128 = vpop.f32.mrb[0].mxu0
      %7129 = vmatprep.mubr.bf16.mxu0 0
      %7130 = vmatmul.mubr.bf16.gmra.mrb[0].mxu0 %v7037
      %v7131 = vpop.f32.mrb[0].mxu0
      %v7132 = vadd.f32 0.0, %v7131
      %v7133 = vpop.f32.mrb[0].mxu0
      %v7134 = vpop.f32.mrb[0].mxu0
      %v7135 = vadd.f32 0.0, %v7134
      %v7136 = vpop.f32.mrb[0].mxu0
      %7137 = vmatprep.mubr.bf16.mxu0 0
      %7138 = vmatmul.mubr.bf16.gmra.mrb[0].mxu0 %v7043
      %v7139 = vpop.f32.mrb[0].mxu0
      %v7140 = vadd.f32 0.0, %v7139
      %v7141 = vpop.f32.mrb[0].mxu0
      %v7142 = vpop.f32.mrb[0].mxu0
      %v7143 = vadd.f32 0.0, %v7142
      %v7144 = vpop.f32.mrb[0].mxu0
      %7145 = vmatprep.mubr.bf16.mxu0 0
      %7146 = vmatmul.mubr.bf16.gmra.mrb[0].mxu0 %v7046
      %v7147 = vpop.f32.mrb[0].mxu0
      %v7148 = vadd.f32 0.0, %v7147
      %v7149 = vpop.f32.mrb[0].mxu0
      %v7150 = vpop.f32.mrb[0].mxu0
      %v7151 = vadd.f32 0.0, %v7150
      %v7152 = vpop.f32.mrb[0].mxu0
      %7153 = vmatprep.mubr.bf16.mxu0 0
      %7154 = vmatmul.mubr.bf16.gmra.mrb[0].mxu0 %v7049
      %v7155 = vpop.f32.mrb[0].mxu0
      %v7156 = vadd.f32 0.0, %v7155
      %v7157 = vpop.f32.mrb[0].mxu0
      %v7158 = vpop.f32.mrb[0].mxu0
      %v7159 = vadd.f32 0.0, %v7158
      %v7160 = vpop.f32.mrb[0].mxu0
      %7161 = vmatprep.mubr.bf16.mxu0 0
      %7162 = vmatmul.mubr.bf16.gmra.mrb[0].mxu0 %v7052
      %v7163 = vpop.f32.mrb[0].mxu0
      %v7164 = vadd.f32 0.0, %v7163
      %v7165 = vpop.f32.mrb[0].mxu0
      %v7166 = vpop.f32.mrb[0].mxu0
      %v7167 = vadd.f32 0.0, %v7166
      %v7168 = vpop.f32.mrb[0].mxu0
      %7169 = vmatprep.mubr.bf16.mxu0 0
      %7170 = vmatmul.mubr.bf16.gmra.mrb[0].mxu0 %v7055
      %v7171 = vpop.f32.mrb[0].mxu0
      %v7172 = vadd.f32 0.0, %v7171
      %v7173 = vpop.f32.mrb[0].mxu0
      %v7174 = vpop.f32.mrb[0].mxu0
      %v7175 = vadd.f32 0.0, %v7174
      %v7176 = vpop.f32.mrb[0].mxu0
      %7177 = vmatprep.mubr.bf16.mxu0 0
      %7178 = vmatmul.mubr.bf16.gmra.mrb[0].mxu0 %v7058
      %v7179 = vpop.f32.mrb[0].mxu0
      %v7180 = vadd.f32 0.0, %v7179
      %v7181 = vpop.f32.mrb[0].mxu0
      %v7182 = vpop.f32.mrb[0].mxu0
      %v7183 = vadd.f32 0.0, %v7182
      %v7184 = vpop.f32.mrb[0].mxu0
      %7185 = vmatprep.mubr.bf16.mxu0 0
      %7186 = vmatmul.mubr.bf16.gmra.mrb[0].mxu0 %v7061
      %v7187 = vpop.f32.mrb[0].mxu0
      %v7188 = vadd.f32 0.0, %v7187
      %v7189 = vpop.f32.mrb[0].mxu0
      %v7190 = vpop.f32.mrb[0].mxu0
      %v7191 = vadd.f32 0.0, %v7190
      %v7192 = vpop.f32.mrb[0].mxu0
      %7193 = vmatprep.mubr.bf16.mxu0 0
      %7194 = vmatmul.mubr.bf16.gmra.mrb[0].mxu0 %v7064
      %v7195 = vpop.f32.mrb[0].mxu0
      %v7196 = vadd.f32 0.0, %v7195
      %v7197 = vpop.f32.mrb[0].mxu0
      %v7198 = vpop.f32.mrb[0].mxu0
      %v7199 = vadd.f32 0.0, %v7198
      %v7200 = vpop.f32.mrb[0].mxu0
      %7201 = vmatprep.mubr.bf16.mxu0 0
      %7202 = vmatmul.mubr.bf16.gmra.mrb[0].mxu0 %v7067
      %v7203 = vpop.f32.mrb[0].mxu0
      %v7204 = vadd.f32 0.0, %v7203
      %v7205 = vpop.f32.mrb[0].mxu0
      %v7206 = vpop.f32.mrb[0].mxu0
      %v7207 = vadd.f32 0.0, %v7206
      %v7208 = vpop.f32.mrb[0].mxu0
      %7209 = vmatprep.mubr.bf16.mxu0 0
      %7210 = vmatmul.mubr.bf16.gmra.mrb[0].mxu0 %v7070
      %v7211 = vpop.f32.mrb[0].mxu0
      %v7212 = vadd.f32 0.0, %v7211
      %v7213 = vpop.f32.mrb[0].mxu0
      %v7214 = vpop.f32.mrb[0].mxu0
      %v7215 = vadd.f32 0.0, %v7214
      %v7216 = vpop.f32.mrb[0].mxu0
      %7217 = vmatprep.mubr.bf16.mxu0 0
      %7218 = vmatmul.mubr.bf16.gmra.mrb[0].mxu0 %v7073
      %v7219 = vpop.f32.mrb[0].mxu0
      %v7220 = vadd.f32 0.0, %v7219
      %v7221 = vpop.f32.mrb[0].mxu0
      %v7222 = vpop.f32.mrb[0].mxu0
      %v7223 = vadd.f32 0.0, %v7222
      %v7224 = vpop.f32.mrb[0].mxu0
      %7225 = vmatprep.mubr.bf16.mxu0 0
      %7226 = vmatmul.mubr.bf16.gmra.mrb[0].mxu0 %v7076
      %v7227 = vpop.f32.mrb[0].mxu0
      %v7228 = vadd.f32 0.0, %v7227
      %v7229 = vpop.f32.mrb[0].mxu0
      %v7230 = vpop.f32.mrb[0].mxu0
      %v7231 = vadd.f32 0.0, %v7230
      %v7232 = vpop.f32.mrb[0].mxu0
      %7233 = vmatprep.mubr.bf16.mxu0 0
      %7234 = vmatmul.mubr.bf16.gmra.mrb[0].mxu0 %v7079
      %v7235 = vpop.f32.mrb[0].mxu0
      %v7236 = vadd.f32 0.0, %v7235
      %v7237 = vpop.f32.mrb[0].mxu0
      %v7238 = vpop.f32.mrb[0].mxu0
      %v7239 = vadd.f32 0.0, %v7238
      %v7240 = vpop.f32.mrb[0].mxu0
      %7241 = vdwg.mxu0
      %v7242 = vadd.f32 %v6802, %v7116
      %v7243 = vadd.f32 %v6805, %v7119
      %v7244 = vadd.f32 %v6810, %v7124
      %v7245 = vadd.f32 %v6813, %v7127
      %v7246 = vadd.f32 %v6818, %v7132
      %v7247 = vadd.f32 %v6821, %v7135
      %v7248 = vadd.f32 %v6826, %v7140
      %v7249 = vadd.f32 %v6829, %v7143
      %v7250 = vadd.f32 %v6834, %v7148
      %v7251 = vadd.f32 %v6837, %v7151
      %v7252 = vadd.f32 %v6842, %v7156
      %v7253 = vadd.f32 %v6845, %v7159
      %v7254 = vadd.f32 %v6850, %v7164
      %v7255 = vadd.f32 %v6853, %v7167
      %v7256 = vadd.f32 %v6858, %v7172
      %v7257 = vadd.f32 %v6861, %v7175
      %v7258 = vadd.f32 %v6866, %v7180
      %v7259 = vadd.f32 %v6869, %v7183
      %v7260 = vadd.f32 %v6874, %v7188
      %v7261 = vadd.f32 %v6877, %v7191
      %v7262 = vadd.f32 %v6882, %v7196
      %v7263 = vadd.f32 %v6885, %v7199
      %v7264 = vadd.f32 %v6890, %v7204
      %v7265 = vadd.f32 %v6893, %v7207
      %v7266 = vadd.f32 %v6898, %v7212
      %v7267 = vadd.f32 %v6901, %v7215
      %v7268 = vadd.f32 %v6906, %v7220
      %v7269 = vadd.f32 %v6909, %v7223
      %v7270 = vadd.f32 %v6914, %v7228
      %v7271 = vadd.f32 %v6917, %v7231
      %v7272 = vadd.f32 %v6922, %v7236
      %v7273 = vadd.f32 %v6925, %v7239
      %s7274 = scalar_lea.vmem %s5, 96
      %v7275 = vld [vmem:[%s7274] sm:$0xf]
      %v7276 = vld [vmem:[%s7274 + $0x4] sm:$0xf]
      %v7277 = vld [vmem:[%s7274 + $0x8] sm:$0xf]
      %v7278 = vld [vmem:[%s7274 + $0xc] sm:$0xf]
      %v7279 = vld [vmem:[%s7274 + $0x10] sm:$0xf]
      %v7280 = vld [vmem:[%s7274 + $0x14] sm:$0xf]
      %v7281 = vld [vmem:[%s7274 + $0x18] sm:$0xf]
      %v7282 = vld [vmem:[%s7274 + $0x1c] sm:$0xf]
      %v7291 = vunpack.c.l.b16 %v7275
      %v7292 = vunpack.c.l.b16 %v7276
      %v7293 = vunpack.c.l.b16 %v7277
      %v7294 = vunpack.c.l.b16 %v7278
      %v7295 = vunpack.c.l.b16 %v7279
      %v7296 = vunpack.c.l.b16 %v7280
      %v7297 = vunpack.c.l.b16 %v7281
      %v7298 = vunpack.c.l.b16 %v7282
      %v7299 = vpack.c.b16 %v7292, %v7291
      %v7300 = vpack.c.b16 %v7294, %v7293
      %v7301 = vpack.c.b16 %v7296, %v7295
      %v7302 = vpack.c.b16 %v7298, %v7297
      %v7308 = vsel %vm3941, %v6268, 0
      %7310 = vmatprep.subr.bf16.mxu0 0
      %7311 = vmatpush1.bf16.msra.mxu0 %v7299
      %7312 = vmatprep.subr.bf16.mxu0 0
      %7313 = vmatpush1.bf16.msra.mxu0 %v7300
      %7314 = vmatprep.subr.bf16.mxu0 0
      %7315 = vmatpush1.bf16.msra.mxu0 %v7301
      %7316 = vmatprep.subr.bf16.mxu0 0
      %7317 = vmatpush1.bf16.msra.mxu0 %v7302
      %7318 = vmatprep.subr.bf16.mxu0 0
      %7319 = vmatpush1.bf16.msra.mxu0 0
      %7320 = vmatprep.subr.bf16.mxu0 0
      %7321 = vmatpush1.bf16.msra.mxu0 0
      %7322 = vmatprep.subr.bf16.mxu0 0
      %7323 = vmatpush1.bf16.msra.mxu0 0
      %7324 = vmatprep.subr.bf16.mxu0 0
      %7325 = vmatpush1.bf16.msra.mxu0 0
      %7326 = vmatprep.subr.bf16.mxu0 0
      %7327 = vmatpush1.bf16.msra.mxu0 0
      %7328 = vmatprep.subr.bf16.mxu0 0
      %7329 = vmatpush1.bf16.msra.mxu0 0
      %7330 = vmatprep.subr.bf16.mxu0 0
      %7331 = vmatpush1.bf16.msra.mxu0 0
      %7332 = vmatprep.subr.bf16.mxu0 0
      %7333 = vmatpush1.bf16.msra.mxu0 0
      %7334 = vmatprep.subr.bf16.mxu0 0
      %7335 = vmatpush1.bf16.msra.mxu0 0
      %7336 = vmatprep.subr.bf16.mxu0 0
      %7337 = vmatpush1.bf16.msra.mxu0 0
      %7338 = vmatprep.subr.bf16.mxu0 0
      %7339 = vmatpush1.bf16.msra.mxu0 0
      %7340 = vmatprep.subr.bf16.mxu0 0
      %7341 = vmatpush1.bf16.msra.mxu0 0
      %7342 = vmatprep.mubr.bf16.mxu0 0
      %7343 = vmatmul.mubr.bf16.gmra.mrb[0].mxu0 %v6739
      %v7344 = vpop.f32.mrb[0].mxu0
      %v7345 = vadd.f32 0.0, %v7344
      %v7346 = vpop.f32.mrb[0].mxu0
      %v7347 = vpop.f32.mrb[0].mxu0
      %v7348 = vadd.f32 0.0, %v7347
      %v7349 = vpop.f32.mrb[0].mxu0
      %7350 = vmatprep.mubr.bf16.mxu0 0
      %7351 = vmatmul.mubr.bf16.gmra.mrb[0].mxu0 %v6737
      %v7352 = vpop.f32.mrb[0].mxu0
      %v7353 = vadd.f32 0.0, %v7352
      %v7354 = vpop.f32.mrb[0].mxu0
      %v7355 = vpop.f32.mrb[0].mxu0
      %v7356 = vadd.f32 0.0, %v7355
      %v7357 = vpop.f32.mrb[0].mxu0
      %7358 = vmatprep.mubr.bf16.mxu0 0
      %7359 = vmatmul.mubr.bf16.gmra.mrb[0].mxu0 %v6741
      %v7360 = vpop.f32.mrb[0].mxu0
      %v7361 = vadd.f32 0.0, %v7360
      %v7362 = vpop.f32.mrb[0].mxu0
      %v7363 = vpop.f32.mrb[0].mxu0
      %v7364 = vadd.f32 0.0, %v7363
      %v7365 = vpop.f32.mrb[0].mxu0
      %7366 = vmatprep.mubr.bf16.mxu0 0
      %7367 = vmatmul.mubr.bf16.gmra.mrb[0].mxu0 %v6743
      %v7368 = vpop.f32.mrb[0].mxu0
      %v7369 = vadd.f32 0.0, %v7368
      %v7370 = vpop.f32.mrb[0].mxu0
      %v7371 = vpop.f32.mrb[0].mxu0
      %v7372 = vadd.f32 0.0, %v7371
      %v7373 = vpop.f32.mrb[0].mxu0
      %7374 = vmatprep.mubr.bf16.mxu0 0
      %7375 = vmatmul.mubr.bf16.gmra.mrb[0].mxu0 %v6745
      %v7376 = vpop.f32.mrb[0].mxu0
      %v7377 = vadd.f32 0.0, %v7376
      %v7378 = vpop.f32.mrb[0].mxu0
      %v7379 = vpop.f32.mrb[0].mxu0
      %v7380 = vadd.f32 0.0, %v7379
      %v7381 = vpop.f32.mrb[0].mxu0
      %7382 = vmatprep.mubr.bf16.mxu0 0
      %7383 = vmatmul.mubr.bf16.gmra.mrb[0].mxu0 %v6747
      %v7384 = vpop.f32.mrb[0].mxu0
      %v7385 = vadd.f32 0.0, %v7384
      %v7386 = vpop.f32.mrb[0].mxu0
      %v7387 = vpop.f32.mrb[0].mxu0
      %v7388 = vadd.f32 0.0, %v7387
      %v7389 = vpop.f32.mrb[0].mxu0
      %7390 = vmatprep.mubr.bf16.mxu0 0
      %7391 = vmatmul.mubr.bf16.gmra.mrb[0].mxu0 %v6749
      %v7392 = vpop.f32.mrb[0].mxu0
      %v7393 = vadd.f32 0.0, %v7392
      %v7394 = vpop.f32.mrb[0].mxu0
      %v7395 = vpop.f32.mrb[0].mxu0
      %v7396 = vadd.f32 0.0, %v7395
      %v7397 = vpop.f32.mrb[0].mxu0
      %7398 = vmatprep.mubr.bf16.mxu0 0
      %7399 = vmatmul.mubr.bf16.gmra.mrb[0].mxu0 %v6751
      %v7400 = vpop.f32.mrb[0].mxu0
      %v7401 = vadd.f32 0.0, %v7400
      %v7402 = vpop.f32.mrb[0].mxu0
      %v7403 = vpop.f32.mrb[0].mxu0
      %v7404 = vadd.f32 0.0, %v7403
      %v7405 = vpop.f32.mrb[0].mxu0
      %7406 = vmatprep.mubr.bf16.mxu0 0
      %7407 = vmatmul.mubr.bf16.gmra.mrb[0].mxu0 %v6753
      %v7408 = vpop.f32.mrb[0].mxu0
      %v7409 = vadd.f32 0.0, %v7408
      %v7410 = vpop.f32.mrb[0].mxu0
      %v7411 = vpop.f32.mrb[0].mxu0
      %v7412 = vadd.f32 0.0, %v7411
      %v7413 = vpop.f32.mrb[0].mxu0
      %7414 = vmatprep.mubr.bf16.mxu0 0
      %7415 = vmatmul.mubr.bf16.gmra.mrb[0].mxu0 %v6755
      %v7416 = vpop.f32.mrb[0].mxu0
      %v7417 = vadd.f32 0.0, %v7416
      %v7418 = vpop.f32.mrb[0].mxu0
      %v7419 = vpop.f32.mrb[0].mxu0
      %v7420 = vadd.f32 0.0, %v7419
      %v7421 = vpop.f32.mrb[0].mxu0
      %7422 = vmatprep.mubr.bf16.mxu0 0
      %7423 = vmatmul.mubr.bf16.gmra.mrb[0].mxu0 %v6757
      %v7424 = vpop.f32.mrb[0].mxu0
      %v7425 = vadd.f32 0.0, %v7424
      %v7426 = vpop.f32.mrb[0].mxu0
      %v7427 = vpop.f32.mrb[0].mxu0
      %v7428 = vadd.f32 0.0, %v7427
      %v7429 = vpop.f32.mrb[0].mxu0
      %7430 = vmatprep.mubr.bf16.mxu0 0
      %7431 = vmatmul.mubr.bf16.gmra.mrb[0].mxu0 %v6759
      %v7432 = vpop.f32.mrb[0].mxu0
      %v7433 = vadd.f32 0.0, %v7432
      %v7434 = vpop.f32.mrb[0].mxu0
      %v7435 = vpop.f32.mrb[0].mxu0
      %v7436 = vadd.f32 0.0, %v7435
      %v7437 = vpop.f32.mrb[0].mxu0
      %7438 = vmatprep.mubr.bf16.mxu0 0
      %7439 = vmatmul.mubr.bf16.gmra.mrb[0].mxu0 %v6761
      %v7440 = vpop.f32.mrb[0].mxu0
      %v7441 = vadd.f32 0.0, %v7440
      %v7442 = vpop.f32.mrb[0].mxu0
      %v7443 = vpop.f32.mrb[0].mxu0
      %v7444 = vadd.f32 0.0, %v7443
      %v7445 = vpop.f32.mrb[0].mxu0
      %7446 = vmatprep.mubr.bf16.mxu0 0
      %7447 = vmatmul.mubr.bf16.gmra.mrb[0].mxu0 %v6763
      %v7448 = vpop.f32.mrb[0].mxu0
      %v7449 = vadd.f32 0.0, %v7448
      %v7450 = vpop.f32.mrb[0].mxu0
      %v7451 = vpop.f32.mrb[0].mxu0
      %v7452 = vadd.f32 0.0, %v7451
      %v7453 = vpop.f32.mrb[0].mxu0
      %7454 = vmatprep.mubr.bf16.mxu0 0
      %7455 = vmatmul.mubr.bf16.gmra.mrb[0].mxu0 %v6765
      %v7456 = vpop.f32.mrb[0].mxu0
      %v7457 = vadd.f32 0.0, %v7456
      %v7458 = vpop.f32.mrb[0].mxu0
      %v7459 = vpop.f32.mrb[0].mxu0
      %v7460 = vadd.f32 0.0, %v7459
      %v7461 = vpop.f32.mrb[0].mxu0
      %7462 = vmatprep.mubr.bf16.mxu0 0
      %7463 = vmatmul.mubr.bf16.gmra.mrb[0].mxu0 %v7308
      %v7464 = vpop.f32.mrb[0].mxu0
      %v7465 = vadd.f32 0.0, %v7464
      %v7466 = vpop.f32.mrb[0].mxu0
      %v7467 = vpop.f32.mrb[0].mxu0
      %v7468 = vadd.f32 0.0, %v7467
      %v7469 = vpop.f32.mrb[0].mxu0
      %7470 = vdwg.mxu0
      %v7471 = vadd.f32 %v7242, %v7345
      %v7472 = vadd.f32 %v7243, %v7348
      %v7473 = vadd.f32 %v7244, %v7353
      %v7474 = vadd.f32 %v7245, %v7356
      %v7475 = vadd.f32 %v7246, %v7361
      %v7476 = vadd.f32 %v7247, %v7364
      %v7477 = vadd.f32 %v7248, %v7369
      %v7478 = vadd.f32 %v7249, %v7372
      %v7479 = vadd.f32 %v7250, %v7377
      %v7480 = vadd.f32 %v7251, %v7380
      %v7481 = vadd.f32 %v7252, %v7385
      %v7482 = vadd.f32 %v7253, %v7388
      %v7483 = vadd.f32 %v7254, %v7393
      %v7484 = vadd.f32 %v7255, %v7396
      %v7485 = vadd.f32 %v7256, %v7401
      %v7486 = vadd.f32 %v7257, %v7404
      %v7487 = vadd.f32 %v7258, %v7409
      %v7488 = vadd.f32 %v7259, %v7412
      %v7489 = vadd.f32 %v7260, %v7417
      %v7490 = vadd.f32 %v7261, %v7420
      %v7491 = vadd.f32 %v7262, %v7425
      %v7492 = vadd.f32 %v7263, %v7428
      %v7493 = vadd.f32 %v7264, %v7433
      %v7494 = vadd.f32 %v7265, %v7436
      %v7495 = vadd.f32 %v7266, %v7441
      %v7496 = vadd.f32 %v7267, %v7444
      %v7497 = vadd.f32 %v7268, %v7449
      %v7498 = vadd.f32 %v7269, %v7452
      %v7499 = vadd.f32 %v7270, %v7457
      %v7500 = vadd.f32 %v7271, %v7460
      %v7501 = vadd.f32 %v7272, %v7465
      %v7502 = vadd.f32 %v7273, %v7468
      %v7503 = vshrl.u32 %v6268, 16
      %v7505 = vshll.u32 %v6268, 16
      %v7507 = vrot.slane %v7505, 1
      %v7508 = vor.u32 %v7503, %v7507
      %v7510 = vshll.u32 %v6284, 16
      %v7512 = vrot.slane %v7510, 1
      %v7513 = vsel %vm3811, %v7508, %v7512
      %s7514 = scalar_lea.vmem %s5, 128
      %v7515 = vld [vmem:[%s7514] sm:$0xf]
      %v7516 = vld [vmem:[%s7514 + $0x4] sm:$0xf]
      %v7517 = vld [vmem:[%s7514 + $0x8] sm:$0xf]
      %v7518 = vld [vmem:[%s7514 + $0xc] sm:$0xf]
      %v7519 = vld [vmem:[%s7514 + $0x10] sm:$0xf]
      %v7520 = vld [vmem:[%s7514 + $0x14] sm:$0xf]
      %v7521 = vld [vmem:[%s7514 + $0x18] sm:$0xf]
      %v7522 = vld [vmem:[%s7514 + $0x1c] sm:$0xf]
      %v7531 = vunpack.c.l.b16 %v7515
      %v7532 = vunpack.c.l.b16 %v7516
      %v7533 = vunpack.c.l.b16 %v7517
      %v7534 = vunpack.c.l.b16 %v7518
      %v7535 = vunpack.c.l.b16 %v7519
      %v7536 = vunpack.c.l.b16 %v7520
      %v7537 = vunpack.c.l.b16 %v7521
      %v7538 = vunpack.c.l.b16 %v7522
      %v7539 = vpack.c.b16 %v7532, %v7531
      %v7540 = vpack.c.b16 %v7534, %v7533
      %v7541 = vpack.c.b16 %v7536, %v7535
      %v7542 = vpack.c.b16 %v7538, %v7537
      %v7548 = vsel %vm3941, %v7513, 0
      %7550 = vmatprep.subr.bf16.mxu0 0
      %7551 = vmatpush1.bf16.msra.mxu0 %v7539
      %7552 = vmatprep.subr.bf16.mxu0 0
      %7553 = vmatpush1.bf16.msra.mxu0 %v7540
      %7554 = vmatprep.subr.bf16.mxu0 0
      %7555 = vmatpush1.bf16.msra.mxu0 %v7541
      %7556 = vmatprep.subr.bf16.mxu0 0
      %7557 = vmatpush1.bf16.msra.mxu0 %v7542
      %7558 = vmatprep.subr.bf16.mxu0 0
      %7559 = vmatpush1.bf16.msra.mxu0 0
      %7560 = vmatprep.subr.bf16.mxu0 0
      %7561 = vmatpush1.bf16.msra.mxu0 0
      %7562 = vmatprep.subr.bf16.mxu0 0
      %7563 = vmatpush1.bf16.msra.mxu0 0
      %7564 = vmatprep.subr.bf16.mxu0 0
      %7565 = vmatpush1.bf16.msra.mxu0 0
      %7566 = vmatprep.subr.bf16.mxu0 0
      %7567 = vmatpush1.bf16.msra.mxu0 0
      %7568 = vmatprep.subr.bf16.mxu0 0
      %7569 = vmatpush1.bf16.msra.mxu0 0
      %7570 = vmatprep.subr.bf16.mxu0 0
      %7571 = vmatpush1.bf16.msra.mxu0 0
      %7572 = vmatprep.subr.bf16.mxu0 0
      %7573 = vmatpush1.bf16.msra.mxu0 0
      %7574 = vmatprep.subr.bf16.mxu0 0
      %7575 = vmatpush1.bf16.msra.mxu0 0
      %7576 = vmatprep.subr.bf16.mxu0 0
      %7577 = vmatpush1.bf16.msra.mxu0 0
      %7578 = vmatprep.subr.bf16.mxu0 0
      %7579 = vmatpush1.bf16.msra.mxu0 0
      %7580 = vmatprep.subr.bf16.mxu0 0
      %7581 = vmatpush1.bf16.msra.mxu0 0
      %7582 = vmatprep.mubr.bf16.mxu0 0
      %7583 = vmatmul.mubr.bf16.gmra.mrb[0].mxu0 %v6511
      %v7584 = vpop.f32.mrb[0].mxu0
      %v7585 = vadd.f32 0.0, %v7584
      %v7586 = vpop.f32.mrb[0].mxu0
      %v7587 = vpop.f32.mrb[0].mxu0
      %v7588 = vadd.f32 0.0, %v7587
      %v7589 = vpop.f32.mrb[0].mxu0
      %7590 = vmatprep.mubr.bf16.mxu0 0
      %7591 = vmatmul.mubr.bf16.gmra.mrb[0].mxu0 %v6508
      %v7592 = vpop.f32.mrb[0].mxu0
      %v7593 = vadd.f32 0.0, %v7592
      %v7594 = vpop.f32.mrb[0].mxu0
      %v7595 = vpop.f32.mrb[0].mxu0
      %v7596 = vadd.f32 0.0, %v7595
      %v7597 = vpop.f32.mrb[0].mxu0
      %7598 = vmatprep.mubr.bf16.mxu0 0
      %7599 = vmatmul.mubr.bf16.gmra.mrb[0].mxu0 %v6514
      %v7600 = vpop.f32.mrb[0].mxu0
      %v7601 = vadd.f32 0.0, %v7600
      %v7602 = vpop.f32.mrb[0].mxu0
      %v7603 = vpop.f32.mrb[0].mxu0
      %v7604 = vadd.f32 0.0, %v7603
      %v7605 = vpop.f32.mrb[0].mxu0
      %7606 = vmatprep.mubr.bf16.mxu0 0
      %7607 = vmatmul.mubr.bf16.gmra.mrb[0].mxu0 %v6517
      %v7608 = vpop.f32.mrb[0].mxu0
      %v7609 = vadd.f32 0.0, %v7608
      %v7610 = vpop.f32.mrb[0].mxu0
      %v7611 = vpop.f32.mrb[0].mxu0
      %v7612 = vadd.f32 0.0, %v7611
      %v7613 = vpop.f32.mrb[0].mxu0
      %7614 = vmatprep.mubr.bf16.mxu0 0
      %7615 = vmatmul.mubr.bf16.gmra.mrb[0].mxu0 %v6520
      %v7616 = vpop.f32.mrb[0].mxu0
      %v7617 = vadd.f32 0.0, %v7616
      %v7618 = vpop.f32.mrb[0].mxu0
      %v7619 = vpop.f32.mrb[0].mxu0
      %v7620 = vadd.f32 0.0, %v7619
      %v7621 = vpop.f32.mrb[0].mxu0
      %7622 = vmatprep.mubr.bf16.mxu0 0
      %7623 = vmatmul.mubr.bf16.gmra.mrb[0].mxu0 %v6523
      %v7624 = vpop.f32.mrb[0].mxu0
      %v7625 = vadd.f32 0.0, %v7624
      %v7626 = vpop.f32.mrb[0].mxu0
      %v7627 = vpop.f32.mrb[0].mxu0
      %v7628 = vadd.f32 0.0, %v7627
      %v7629 = vpop.f32.mrb[0].mxu0
      %7630 = vmatprep.mubr.bf16.mxu0 0
      %7631 = vmatmul.mubr.bf16.gmra.mrb[0].mxu0 %v6526
      %v7632 = vpop.f32.mrb[0].mxu0
      %v7633 = vadd.f32 0.0, %v7632
      %v7634 = vpop.f32.mrb[0].mxu0
      %v7635 = vpop.f32.mrb[0].mxu0
      %v7636 = vadd.f32 0.0, %v7635
      %v7637 = vpop.f32.mrb[0].mxu0
      %7638 = vmatprep.mubr.bf16.mxu0 0
      %7639 = vmatmul.mubr.bf16.gmra.mrb[0].mxu0 %v6529
      %v7640 = vpop.f32.mrb[0].mxu0
      %v7641 = vadd.f32 0.0, %v7640
      %v7642 = vpop.f32.mrb[0].mxu0
      %v7643 = vpop.f32.mrb[0].mxu0
      %v7644 = vadd.f32 0.0, %v7643
      %v7645 = vpop.f32.mrb[0].mxu0
      %7646 = vmatprep.mubr.bf16.mxu0 0
      %7647 = vmatmul.mubr.bf16.gmra.mrb[0].mxu0 %v6532
      %v7648 = vpop.f32.mrb[0].mxu0
      %v7649 = vadd.f32 0.0, %v7648
      %v7650 = vpop.f32.mrb[0].mxu0
      %v7651 = vpop.f32.mrb[0].mxu0
      %v7652 = vadd.f32 0.0, %v7651
      %v7653 = vpop.f32.mrb[0].mxu0
      %7654 = vmatprep.mubr.bf16.mxu0 0
      %7655 = vmatmul.mubr.bf16.gmra.mrb[0].mxu0 %v6535
      %v7656 = vpop.f32.mrb[0].mxu0
      %v7657 = vadd.f32 0.0, %v7656
      %v7658 = vpop.f32.mrb[0].mxu0
      %v7659 = vpop.f32.mrb[0].mxu0
      %v7660 = vadd.f32 0.0, %v7659
      %v7661 = vpop.f32.mrb[0].mxu0
      %7662 = vmatprep.mubr.bf16.mxu0 0
      %7663 = vmatmul.mubr.bf16.gmra.mrb[0].mxu0 %v6538
      %v7664 = vpop.f32.mrb[0].mxu0
      %v7665 = vadd.f32 0.0, %v7664
      %v7666 = vpop.f32.mrb[0].mxu0
      %v7667 = vpop.f32.mrb[0].mxu0
      %v7668 = vadd.f32 0.0, %v7667
      %v7669 = vpop.f32.mrb[0].mxu0
      %7670 = vmatprep.mubr.bf16.mxu0 0
      %7671 = vmatmul.mubr.bf16.gmra.mrb[0].mxu0 %v6541
      %v7672 = vpop.f32.mrb[0].mxu0
      %v7673 = vadd.f32 0.0, %v7672
      %v7674 = vpop.f32.mrb[0].mxu0
      %v7675 = vpop.f32.mrb[0].mxu0
      %v7676 = vadd.f32 0.0, %v7675
      %v7677 = vpop.f32.mrb[0].mxu0
      %7678 = vmatprep.mubr.bf16.mxu0 0
      %7679 = vmatmul.mubr.bf16.gmra.mrb[0].mxu0 %v6544
      %v7680 = vpop.f32.mrb[0].mxu0
      %v7681 = vadd.f32 0.0, %v7680
      %v7682 = vpop.f32.mrb[0].mxu0
      %v7683 = vpop.f32.mrb[0].mxu0
      %v7684 = vadd.f32 0.0, %v7683
      %v7685 = vpop.f32.mrb[0].mxu0
      %7686 = vmatprep.mubr.bf16.mxu0 0
      %7687 = vmatmul.mubr.bf16.gmra.mrb[0].mxu0 %v6547
      %v7688 = vpop.f32.mrb[0].mxu0
      %v7689 = vadd.f32 0.0, %v7688
      %v7690 = vpop.f32.mrb[0].mxu0
      %v7691 = vpop.f32.mrb[0].mxu0
      %v7692 = vadd.f32 0.0, %v7691
      %v7693 = vpop.f32.mrb[0].mxu0
      %7694 = vmatprep.mubr.bf16.mxu0 0
      %7695 = vmatmul.mubr.bf16.gmra.mrb[0].mxu0 %v6550
      %v7696 = vpop.f32.mrb[0].mxu0
      %v7697 = vadd.f32 0.0, %v7696
      %v7698 = vpop.f32.mrb[0].mxu0
      %v7699 = vpop.f32.mrb[0].mxu0
      %v7700 = vadd.f32 0.0, %v7699
      %v7701 = vpop.f32.mrb[0].mxu0
      %7702 = vmatprep.mubr.bf16.mxu0 0
      %7703 = vmatmul.mubr.bf16.gmra.mrb[0].mxu0 %v7548
      %v7704 = vpop.f32.mrb[0].mxu0
      %v7705 = vadd.f32 0.0, %v7704
      %v7706 = vpop.f32.mrb[0].mxu0
      %v7707 = vpop.f32.mrb[0].mxu0
      %v7708 = vadd.f32 0.0, %v7707
      %v7709 = vpop.f32.mrb[0].mxu0
      %7710 = vdwg.mxu0
      %v7711 = vadd.f32 %v7471, %v7585
      %v7712 = vadd.f32 %v7472, %v7588
      %v7713 = vadd.f32 %v7473, %v7593
      %v7714 = vadd.f32 %v7474, %v7596
      %v7715 = vadd.f32 %v7475, %v7601
      %v7716 = vadd.f32 %v7476, %v7604
      %v7717 = vadd.f32 %v7477, %v7609
      %v7718 = vadd.f32 %v7478, %v7612
      %v7719 = vadd.f32 %v7479, %v7617
      %v7720 = vadd.f32 %v7480, %v7620
      %v7721 = vadd.f32 %v7481, %v7625
      %v7722 = vadd.f32 %v7482, %v7628
      %v7723 = vadd.f32 %v7483, %v7633
      %v7724 = vadd.f32 %v7484, %v7636
      %v7725 = vadd.f32 %v7485, %v7641
      %v7726 = vadd.f32 %v7486, %v7644
      %v7727 = vadd.f32 %v7487, %v7649
      %v7728 = vadd.f32 %v7488, %v7652
      %v7729 = vadd.f32 %v7489, %v7657
      %v7730 = vadd.f32 %v7490, %v7660
      %v7731 = vadd.f32 %v7491, %v7665
      %v7732 = vadd.f32 %v7492, %v7668
      %v7733 = vadd.f32 %v7493, %v7673
      %v7734 = vadd.f32 %v7494, %v7676
      %v7735 = vadd.f32 %v7495, %v7681
      %v7736 = vadd.f32 %v7496, %v7684
      %v7737 = vadd.f32 %v7497, %v7689
      %v7738 = vadd.f32 %v7498, %v7692
      %v7739 = vadd.f32 %v7499, %v7697
      %v7740 = vadd.f32 %v7500, %v7700
      %v7741 = vadd.f32 %v7501, %v7705
      %v7742 = vadd.f32 %v7502, %v7708
      %v7745 = vrot.slane %v6268, 1
      %v7746 = vrot.slane %v6284, 1
      %v7747 = vsel %vm4344, %v7745, %v7746
      %s7748 = scalar_lea.vmem %s5, 160
      %v7749 = vld [vmem:[%s7748] sm:$0xf]
      %v7750 = vld [vmem:[%s7748 + $0x4] sm:$0xf]
      %v7751 = vld [vmem:[%s7748 + $0x8] sm:$0xf]
      %v7752 = vld [vmem:[%s7748 + $0xc] sm:$0xf]
      %v7753 = vld [vmem:[%s7748 + $0x10] sm:$0xf]
      %v7754 = vld [vmem:[%s7748 + $0x14] sm:$0xf]
      %v7755 = vld [vmem:[%s7748 + $0x18] sm:$0xf]
      %v7756 = vld [vmem:[%s7748 + $0x1c] sm:$0xf]
      %v7765 = vunpack.c.l.b16 %v7749
      %v7766 = vunpack.c.l.b16 %v7750
      %v7767 = vunpack.c.l.b16 %v7751
      %v7768 = vunpack.c.l.b16 %v7752
      %v7769 = vunpack.c.l.b16 %v7753
      %v7770 = vunpack.c.l.b16 %v7754
      %v7771 = vunpack.c.l.b16 %v7755
      %v7772 = vunpack.c.l.b16 %v7756
      %v7773 = vpack.c.b16 %v7766, %v7765
      %v7774 = vpack.c.b16 %v7768, %v7767
      %v7775 = vpack.c.b16 %v7770, %v7769
      %v7776 = vpack.c.b16 %v7772, %v7771
      %v7782 = vsel %vm3941, %v7747, 0
      %7784 = vmatprep.subr.bf16.mxu0 0
      %7785 = vmatpush1.bf16.msra.mxu0 %v7773
      %7786 = vmatprep.subr.bf16.mxu0 0
      %7787 = vmatpush1.bf16.msra.mxu0 %v7774
      %7788 = vmatprep.subr.bf16.mxu0 0
      %7789 = vmatpush1.bf16.msra.mxu0 %v7775
      %7790 = vmatprep.subr.bf16.mxu0 0
      %7791 = vmatpush1.bf16.msra.mxu0 %v7776
      %7792 = vmatprep.subr.bf16.mxu0 0
      %7793 = vmatpush1.bf16.msra.mxu0 0
      %7794 = vmatprep.subr.bf16.mxu0 0
      %7795 = vmatpush1.bf16.msra.mxu0 0
      %7796 = vmatprep.subr.bf16.mxu0 0
      %7797 = vmatpush1.bf16.msra.mxu0 0
      %7798 = vmatprep.subr.bf16.mxu0 0
      %7799 = vmatpush1.bf16.msra.mxu0 0
      %7800 = vmatprep.subr.bf16.mxu0 0
      %7801 = vmatpush1.bf16.msra.mxu0 0
      %7802 = vmatprep.subr.bf16.mxu0 0
      %7803 = vmatpush1.bf16.msra.mxu0 0
      %7804 = vmatprep.subr.bf16.mxu0 0
      %7805 = vmatpush1.bf16.msra.mxu0 0
      %7806 = vmatprep.subr.bf16.mxu0 0
      %7807 = vmatpush1.bf16.msra.mxu0 0
      %7808 = vmatprep.subr.bf16.mxu0 0
      %7809 = vmatpush1.bf16.msra.mxu0 0
      %7810 = vmatprep.subr.bf16.mxu0 0
      %7811 = vmatpush1.bf16.msra.mxu0 0
      %7812 = vmatprep.subr.bf16.mxu0 0
      %7813 = vmatpush1.bf16.msra.mxu0 0
      %7814 = vmatprep.subr.bf16.mxu0 0
      %7815 = vmatpush1.bf16.msra.mxu0 0
      %7816 = vmatprep.mubr.bf16.mxu0 0
      %7817 = vmatmul.mubr.bf16.gmra.mrb[0].mxu0 %v7040
      %v7818 = vpop.f32.mrb[0].mxu0
      %v7819 = vadd.f32 0.0, %v7818
      %v7820 = vpop.f32.mrb[0].mxu0
      %v7821 = vpop.f32.mrb[0].mxu0
      %v7822 = vadd.f32 0.0, %v7821
      %v7823 = vpop.f32.mrb[0].mxu0
      %7824 = vmatprep.mubr.bf16.mxu0 0
      %7825 = vmatmul.mubr.bf16.gmra.mrb[0].mxu0 %v7037
      %v7826 = vpop.f32.mrb[0].mxu0
      %v7827 = vadd.f32 0.0, %v7826
      %v7828 = vpop.f32.mrb[0].mxu0
      %v7829 = vpop.f32.mrb[0].mxu0
      %v7830 = vadd.f32 0.0, %v7829
      %v7831 = vpop.f32.mrb[0].mxu0
      %7832 = vmatprep.mubr.bf16.mxu0 0
      %7833 = vmatmul.mubr.bf16.gmra.mrb[0].mxu0 %v7043
      %v7834 = vpop.f32.mrb[0].mxu0
      %v7835 = vadd.f32 0.0, %v7834
      %v7836 = vpop.f32.mrb[0].mxu0
      %v7837 = vpop.f32.mrb[0].mxu0
      %v7838 = vadd.f32 0.0, %v7837
      %v7839 = vpop.f32.mrb[0].mxu0
      %7840 = vmatprep.mubr.bf16.mxu0 0
      %7841 = vmatmul.mubr.bf16.gmra.mrb[0].mxu0 %v7046
      %v7842 = vpop.f32.mrb[0].mxu0
      %v7843 = vadd.f32 0.0, %v7842
      %v7844 = vpop.f32.mrb[0].mxu0
      %v7845 = vpop.f32.mrb[0].mxu0
      %v7846 = vadd.f32 0.0, %v7845
      %v7847 = vpop.f32.mrb[0].mxu0
      %7848 = vmatprep.mubr.bf16.mxu0 0
      %7849 = vmatmul.mubr.bf16.gmra.mrb[0].mxu0 %v7049
      %v7850 = vpop.f32.mrb[0].mxu0
      %v7851 = vadd.f32 0.0, %v7850
      %v7852 = vpop.f32.mrb[0].mxu0
      %v7853 = vpop.f32.mrb[0].mxu0
      %v7854 = vadd.f32 0.0, %v7853
      %v7855 = vpop.f32.mrb[0].mxu0
      %7856 = vmatprep.mubr.bf16.mxu0 0
      %7857 = vmatmul.mubr.bf16.gmra.mrb[0].mxu0 %v7052
      %v7858 = vpop.f32.mrb[0].mxu0
      %v7859 = vadd.f32 0.0, %v7858
      %v7860 = vpop.f32.mrb[0].mxu0
      %v7861 = vpop.f32.mrb[0].mxu0
      %v7862 = vadd.f32 0.0, %v7861
      %v7863 = vpop.f32.mrb[0].mxu0
      %7864 = vmatprep.mubr.bf16.mxu0 0
      %7865 = vmatmul.mubr.bf16.gmra.mrb[0].mxu0 %v7055
      %v7866 = vpop.f32.mrb[0].mxu0
      %v7867 = vadd.f32 0.0, %v7866
      %v7868 = vpop.f32.mrb[0].mxu0
      %v7869 = vpop.f32.mrb[0].mxu0
      %v7870 = vadd.f32 0.0, %v7869
      %v7871 = vpop.f32.mrb[0].mxu0
      %7872 = vmatprep.mubr.bf16.mxu0 0
      %7873 = vmatmul.mubr.bf16.gmra.mrb[0].mxu0 %v7058
      %v7874 = vpop.f32.mrb[0].mxu0
      %v7875 = vadd.f32 0.0, %v7874
      %v7876 = vpop.f32.mrb[0].mxu0
      %v7877 = vpop.f32.mrb[0].mxu0
      %v7878 = vadd.f32 0.0, %v7877
      %v7879 = vpop.f32.mrb[0].mxu0
      %7880 = vmatprep.mubr.bf16.mxu0 0
      %7881 = vmatmul.mubr.bf16.gmra.mrb[0].mxu0 %v7061
      %v7882 = vpop.f32.mrb[0].mxu0
      %v7883 = vadd.f32 0.0, %v7882
      %v7884 = vpop.f32.mrb[0].mxu0
      %v7885 = vpop.f32.mrb[0].mxu0
      %v7886 = vadd.f32 0.0, %v7885
      %v7887 = vpop.f32.mrb[0].mxu0
      %7888 = vmatprep.mubr.bf16.mxu0 0
      %7889 = vmatmul.mubr.bf16.gmra.mrb[0].mxu0 %v7064
      %v7890 = vpop.f32.mrb[0].mxu0
      %v7891 = vadd.f32 0.0, %v7890
      %v7892 = vpop.f32.mrb[0].mxu0
      %v7893 = vpop.f32.mrb[0].mxu0
      %v7894 = vadd.f32 0.0, %v7893
      %v7895 = vpop.f32.mrb[0].mxu0
      %7896 = vmatprep.mubr.bf16.mxu0 0
      %7897 = vmatmul.mubr.bf16.gmra.mrb[0].mxu0 %v7067
      %v7898 = vpop.f32.mrb[0].mxu0
      %v7899 = vadd.f32 0.0, %v7898
      %v7900 = vpop.f32.mrb[0].mxu0
      %v7901 = vpop.f32.mrb[0].mxu0
      %v7902 = vadd.f32 0.0, %v7901
      %v7903 = vpop.f32.mrb[0].mxu0
      %7904 = vmatprep.mubr.bf16.mxu0 0
      %7905 = vmatmul.mubr.bf16.gmra.mrb[0].mxu0 %v7070
      %v7906 = vpop.f32.mrb[0].mxu0
      %v7907 = vadd.f32 0.0, %v7906
      %v7908 = vpop.f32.mrb[0].mxu0
      %v7909 = vpop.f32.mrb[0].mxu0
      %v7910 = vadd.f32 0.0, %v7909
      %v7911 = vpop.f32.mrb[0].mxu0
      %7912 = vmatprep.mubr.bf16.mxu0 0
      %7913 = vmatmul.mubr.bf16.gmra.mrb[0].mxu0 %v7073
      %v7914 = vpop.f32.mrb[0].mxu0
      %v7915 = vadd.f32 0.0, %v7914
      %v7916 = vpop.f32.mrb[0].mxu0
      %v7917 = vpop.f32.mrb[0].mxu0
      %v7918 = vadd.f32 0.0, %v7917
      %v7919 = vpop.f32.mrb[0].mxu0
      %7920 = vmatprep.mubr.bf16.mxu0 0
      %7921 = vmatmul.mubr.bf16.gmra.mrb[0].mxu0 %v7076
      %v7922 = vpop.f32.mrb[0].mxu0
      %v7923 = vadd.f32 0.0, %v7922
      %v7924 = vpop.f32.mrb[0].mxu0
      %v7925 = vpop.f32.mrb[0].mxu0
      %v7926 = vadd.f32 0.0, %v7925
      %v7927 = vpop.f32.mrb[0].mxu0
      %7928 = vmatprep.mubr.bf16.mxu0 0
      %7929 = vmatmul.mubr.bf16.gmra.mrb[0].mxu0 %v7079
      %v7930 = vpop.f32.mrb[0].mxu0
      %v7931 = vadd.f32 0.0, %v7930
      %v7932 = vpop.f32.mrb[0].mxu0
      %v7933 = vpop.f32.mrb[0].mxu0
      %v7934 = vadd.f32 0.0, %v7933
      %v7935 = vpop.f32.mrb[0].mxu0
      %7936 = vmatprep.mubr.bf16.mxu0 0
      %7937 = vmatmul.mubr.bf16.gmra.mrb[0].mxu0 %v7782
      %v7938 = vpop.f32.mrb[0].mxu0
      %v7939 = vadd.f32 0.0, %v7938
      %v7940 = vpop.f32.mrb[0].mxu0
      %v7941 = vpop.f32.mrb[0].mxu0
      %v7942 = vadd.f32 0.0, %v7941
      %v7943 = vpop.f32.mrb[0].mxu0
      %7944 = vdwg.mxu0
      %v7945 = vadd.f32 %v7711, %v7819
      %v7946 = vadd.f32 %v7712, %v7822
      %v7947 = vadd.f32 %v7713, %v7827
      %v7948 = vadd.f32 %v7714, %v7830
      %v7949 = vadd.f32 %v7715, %v7835
      %v7950 = vadd.f32 %v7716, %v7838
      %v7951 = vadd.f32 %v7717, %v7843
      %v7952 = vadd.f32 %v7718, %v7846
      %v7953 = vadd.f32 %v7719, %v7851
      %v7954 = vadd.f32 %v7720, %v7854
      %v7955 = vadd.f32 %v7721, %v7859
      %v7956 = vadd.f32 %v7722, %v7862
      %v7957 = vadd.f32 %v7723, %v7867
      %v7958 = vadd.f32 %v7724, %v7870
      %v7959 = vadd.f32 %v7725, %v7875
      %v7960 = vadd.f32 %v7726, %v7878
      %v7961 = vadd.f32 %v7727, %v7883
      %v7962 = vadd.f32 %v7728, %v7886
      %v7963 = vadd.f32 %v7729, %v7891
      %v7964 = vadd.f32 %v7730, %v7894
      %v7965 = vadd.f32 %v7731, %v7899
      %v7966 = vadd.f32 %v7732, %v7902
      %v7967 = vadd.f32 %v7733, %v7907
      %v7968 = vadd.f32 %v7734, %v7910
      %v7969 = vadd.f32 %v7735, %v7915
      %v7970 = vadd.f32 %v7736, %v7918
      %v7971 = vadd.f32 %v7737, %v7923
      %v7972 = vadd.f32 %v7738, %v7926
      %v7973 = vadd.f32 %v7739, %v7931
      %v7974 = vadd.f32 %v7740, %v7934
      %v7975 = vadd.f32 %v7741, %v7939
      %v7976 = vadd.f32 %v7742, %v7942
      %s7977 = scalar_lea.vmem %s5, 192
      %v7978 = vld [vmem:[%s7977] sm:$0xf]
      %v7979 = vld [vmem:[%s7977 + $0x4] sm:$0xf]
      %v7980 = vld [vmem:[%s7977 + $0x8] sm:$0xf]
      %v7981 = vld [vmem:[%s7977 + $0xc] sm:$0xf]
      %v7982 = vld [vmem:[%s7977 + $0x10] sm:$0xf]
      %v7983 = vld [vmem:[%s7977 + $0x14] sm:$0xf]
      %v7984 = vld [vmem:[%s7977 + $0x18] sm:$0xf]
      %v7985 = vld [vmem:[%s7977 + $0x1c] sm:$0xf]
      %v7994 = vunpack.c.l.b16 %v7978
      %v7995 = vunpack.c.l.b16 %v7979
      %v7996 = vunpack.c.l.b16 %v7980
      %v7997 = vunpack.c.l.b16 %v7981
      %v7998 = vunpack.c.l.b16 %v7982
      %v7999 = vunpack.c.l.b16 %v7983
      %v8000 = vunpack.c.l.b16 %v7984
      %v8001 = vunpack.c.l.b16 %v7985
      %v8002 = vpack.c.b16 %v7995, %v7994
      %v8003 = vpack.c.b16 %v7997, %v7996
      %v8004 = vpack.c.b16 %v7999, %v7998
      %v8005 = vpack.c.b16 %v8001, %v8000
      %8010 = vmatprep.subr.bf16.mxu0 0
      %8011 = vmatpush1.bf16.msra.mxu0 %v8002
      %8012 = vmatprep.subr.bf16.mxu0 0
      %8013 = vmatpush1.bf16.msra.mxu0 %v8003
      %8014 = vmatprep.subr.bf16.mxu0 0
      %8015 = vmatpush1.bf16.msra.mxu0 %v8004
      %8016 = vmatprep.subr.bf16.mxu0 0
      %8017 = vmatpush1.bf16.msra.mxu0 %v8005
      %8018 = vmatprep.subr.bf16.mxu0 0
      %8019 = vmatpush1.bf16.msra.mxu0 0
      %8020 = vmatprep.subr.bf16.mxu0 0
      %8021 = vmatpush1.bf16.msra.mxu0 0
      %8022 = vmatprep.subr.bf16.mxu0 0
      %8023 = vmatpush1.bf16.msra.mxu0 0
      %8024 = vmatprep.subr.bf16.mxu0 0
      %8025 = vmatpush1.bf16.msra.mxu0 0
      %8026 = vmatprep.subr.bf16.mxu0 0
      %8027 = vmatpush1.bf16.msra.mxu0 0
      %8028 = vmatprep.subr.bf16.mxu0 0
      %8029 = vmatpush1.bf16.msra.mxu0 0
      %8030 = vmatprep.subr.bf16.mxu0 0
      %8031 = vmatpush1.bf16.msra.mxu0 0
      %8032 = vmatprep.subr.bf16.mxu0 0
      %8033 = vmatpush1.bf16.msra.mxu0 0
      %8034 = vmatprep.subr.bf16.mxu0 0
      %8035 = vmatpush1.bf16.msra.mxu0 0
      %8036 = vmatprep.subr.bf16.mxu0 0
      %8037 = vmatpush1.bf16.msra.mxu0 0
      %8038 = vmatprep.subr.bf16.mxu0 0
      %8039 = vmatpush1.bf16.msra.mxu0 0
      %8040 = vmatprep.subr.bf16.mxu0 0
      %8041 = vmatpush1.bf16.msra.mxu0 0
      %8042 = vmatprep.mubr.bf16.mxu0 0
      %8043 = vmatmul.mubr.bf16.gmra.mrb[0].mxu0 %v6737
      %v8044 = vpop.f32.mrb[0].mxu0
      %v8045 = vadd.f32 0.0, %v8044
      %v8046 = vpop.f32.mrb[0].mxu0
      %v8047 = vpop.f32.mrb[0].mxu0
      %v8048 = vadd.f32 0.0, %v8047
      %v8049 = vpop.f32.mrb[0].mxu0
      %8050 = vmatprep.mubr.bf16.mxu0 0
      %8051 = vmatmul.mubr.bf16.gmra.mrb[0].mxu0 %v6741
      %v8052 = vpop.f32.mrb[0].mxu0
      %v8053 = vadd.f32 0.0, %v8052
      %v8054 = vpop.f32.mrb[0].mxu0
      %v8055 = vpop.f32.mrb[0].mxu0
      %v8056 = vadd.f32 0.0, %v8055
      %v8057 = vpop.f32.mrb[0].mxu0
      %8058 = vmatprep.mubr.bf16.mxu0 0
      %8059 = vmatmul.mubr.bf16.gmra.mrb[0].mxu0 %v6743
      %v8060 = vpop.f32.mrb[0].mxu0
      %v8061 = vadd.f32 0.0, %v8060
      %v8062 = vpop.f32.mrb[0].mxu0
      %v8063 = vpop.f32.mrb[0].mxu0
      %v8064 = vadd.f32 0.0, %v8063
      %v8065 = vpop.f32.mrb[0].mxu0
      %8066 = vmatprep.mubr.bf16.mxu0 0
      %8067 = vmatmul.mubr.bf16.gmra.mrb[0].mxu0 %v6745
      %v8068 = vpop.f32.mrb[0].mxu0
      %v8069 = vadd.f32 0.0, %v8068
      %v8070 = vpop.f32.mrb[0].mxu0
      %v8071 = vpop.f32.mrb[0].mxu0
      %v8072 = vadd.f32 0.0, %v8071
      %v8073 = vpop.f32.mrb[0].mxu0
      %8074 = vmatprep.mubr.bf16.mxu0 0
      %8075 = vmatmul.mubr.bf16.gmra.mrb[0].mxu0 %v6747
      %v8076 = vpop.f32.mrb[0].mxu0
      %v8077 = vadd.f32 0.0, %v8076
      %v8078 = vpop.f32.mrb[0].mxu0
      %v8079 = vpop.f32.mrb[0].mxu0
      %v8080 = vadd.f32 0.0, %v8079
      %v8081 = vpop.f32.mrb[0].mxu0
      %8082 = vmatprep.mubr.bf16.mxu0 0
      %8083 = vmatmul.mubr.bf16.gmra.mrb[0].mxu0 %v6749
      %v8084 = vpop.f32.mrb[0].mxu0
      %v8085 = vadd.f32 0.0, %v8084
      %v8086 = vpop.f32.mrb[0].mxu0
      %v8087 = vpop.f32.mrb[0].mxu0
      %v8088 = vadd.f32 0.0, %v8087
      %v8089 = vpop.f32.mrb[0].mxu0
      %8090 = vmatprep.mubr.bf16.mxu0 0
      %8091 = vmatmul.mubr.bf16.gmra.mrb[0].mxu0 %v6751
      %v8092 = vpop.f32.mrb[0].mxu0
      %v8093 = vadd.f32 0.0, %v8092
      %v8094 = vpop.f32.mrb[0].mxu0
      %v8095 = vpop.f32.mrb[0].mxu0
      %v8096 = vadd.f32 0.0, %v8095
      %v8097 = vpop.f32.mrb[0].mxu0
      %8098 = vmatprep.mubr.bf16.mxu0 0
      %8099 = vmatmul.mubr.bf16.gmra.mrb[0].mxu0 %v6753
      %v8100 = vpop.f32.mrb[0].mxu0
      %v8101 = vadd.f32 0.0, %v8100
      %v8102 = vpop.f32.mrb[0].mxu0
      %v8103 = vpop.f32.mrb[0].mxu0
      %v8104 = vadd.f32 0.0, %v8103
      %v8105 = vpop.f32.mrb[0].mxu0
      %8106 = vmatprep.mubr.bf16.mxu0 0
      %8107 = vmatmul.mubr.bf16.gmra.mrb[0].mxu0 %v6755
      %v8108 = vpop.f32.mrb[0].mxu0
      %v8109 = vadd.f32 0.0, %v8108
      %v8110 = vpop.f32.mrb[0].mxu0
      %v8111 = vpop.f32.mrb[0].mxu0
      %v8112 = vadd.f32 0.0, %v8111
      %v8113 = vpop.f32.mrb[0].mxu0
      %8114 = vmatprep.mubr.bf16.mxu0 0
      %8115 = vmatmul.mubr.bf16.gmra.mrb[0].mxu0 %v6757
      %v8116 = vpop.f32.mrb[0].mxu0
      %v8117 = vadd.f32 0.0, %v8116
      %v8118 = vpop.f32.mrb[0].mxu0
      %v8119 = vpop.f32.mrb[0].mxu0
      %v8120 = vadd.f32 0.0, %v8119
      %v8121 = vpop.f32.mrb[0].mxu0
      %8122 = vmatprep.mubr.bf16.mxu0 0
      %8123 = vmatmul.mubr.bf16.gmra.mrb[0].mxu0 %v6759
      %v8124 = vpop.f32.mrb[0].mxu0
      %v8125 = vadd.f32 0.0, %v8124
      %v8126 = vpop.f32.mrb[0].mxu0
      %v8127 = vpop.f32.mrb[0].mxu0
      %v8128 = vadd.f32 0.0, %v8127
      %v8129 = vpop.f32.mrb[0].mxu0
      %8130 = vmatprep.mubr.bf16.mxu0 0
      %8131 = vmatmul.mubr.bf16.gmra.mrb[0].mxu0 %v6761
      %v8132 = vpop.f32.mrb[0].mxu0
      %v8133 = vadd.f32 0.0, %v8132
      %v8134 = vpop.f32.mrb[0].mxu0
      %v8135 = vpop.f32.mrb[0].mxu0
      %v8136 = vadd.f32 0.0, %v8135
      %v8137 = vpop.f32.mrb[0].mxu0
      %8138 = vmatprep.mubr.bf16.mxu0 0
      %8139 = vmatmul.mubr.bf16.gmra.mrb[0].mxu0 %v6763
      %v8140 = vpop.f32.mrb[0].mxu0
      %v8141 = vadd.f32 0.0, %v8140
      %v8142 = vpop.f32.mrb[0].mxu0
      %v8143 = vpop.f32.mrb[0].mxu0
      %v8144 = vadd.f32 0.0, %v8143
      %v8145 = vpop.f32.mrb[0].mxu0
      %8146 = vmatprep.mubr.bf16.mxu0 0
      %8147 = vmatmul.mubr.bf16.gmra.mrb[0].mxu0 %v6765
      %v8148 = vpop.f32.mrb[0].mxu0
      %v8149 = vadd.f32 0.0, %v8148
      %v8150 = vpop.f32.mrb[0].mxu0
      %v8151 = vpop.f32.mrb[0].mxu0
      %v8152 = vadd.f32 0.0, %v8151
      %v8153 = vpop.f32.mrb[0].mxu0
      %8154 = vmatprep.mubr.bf16.mxu0 0
      %8155 = vmatmul.mubr.bf16.gmra.mrb[0].mxu0 %v7308
      %v8156 = vpop.f32.mrb[0].mxu0
      %v8157 = vadd.f32 0.0, %v8156
      %v8158 = vpop.f32.mrb[0].mxu0
      %v8159 = vpop.f32.mrb[0].mxu0
      %v8160 = vadd.f32 0.0, %v8159
      %v8161 = vpop.f32.mrb[0].mxu0
      %8162 = vmatprep.mubr.bf16.mxu0 0
      %8163 = vmatmul.mubr.bf16.gmra.mrb[0].mxu0 %v6765
      %v8164 = vpop.f32.mrb[0].mxu0
      %v8165 = vadd.f32 0.0, %v8164
      %v8166 = vpop.f32.mrb[0].mxu0
      %v8167 = vpop.f32.mrb[0].mxu0
      %v8168 = vadd.f32 0.0, %v8167
      %v8169 = vpop.f32.mrb[0].mxu0
      %8170 = vdwg.mxu0
      %v8171 = vadd.f32 %v7945, %v8045
      %v8172 = vadd.f32 %v7946, %v8048
      %v8173 = vadd.f32 %v7947, %v8053
      %v8174 = vadd.f32 %v7948, %v8056
      %v8175 = vadd.f32 %v7949, %v8061
      %v8176 = vadd.f32 %v7950, %v8064
      %v8177 = vadd.f32 %v7951, %v8069
      %v8178 = vadd.f32 %v7952, %v8072
      %v8179 = vadd.f32 %v7953, %v8077
      %v8180 = vadd.f32 %v7954, %v8080
      %v8181 = vadd.f32 %v7955, %v8085
      %v8182 = vadd.f32 %v7956, %v8088
      %v8183 = vadd.f32 %v7957, %v8093
      %v8184 = vadd.f32 %v7958, %v8096
      %v8185 = vadd.f32 %v7959, %v8101
      %v8186 = vadd.f32 %v7960, %v8104
      %v8187 = vadd.f32 %v7961, %v8109
      %v8188 = vadd.f32 %v7962, %v8112
      %v8189 = vadd.f32 %v7963, %v8117
      %v8190 = vadd.f32 %v7964, %v8120
      %v8191 = vadd.f32 %v7965, %v8125
      %v8192 = vadd.f32 %v7966, %v8128
      %v8193 = vadd.f32 %v7967, %v8133
      %v8194 = vadd.f32 %v7968, %v8136
      %v8195 = vadd.f32 %v7969, %v8141
      %v8196 = vadd.f32 %v7970, %v8144
      %v8197 = vadd.f32 %v7971, %v8149
      %v8198 = vadd.f32 %v7972, %v8152
      %v8199 = vadd.f32 %v7973, %v8157
      %v8200 = vadd.f32 %v7974, %v8160
      %v8201 = vadd.f32 %v7975, %v8165
      %v8202 = vadd.f32 %v7976, %v8168
      %s8203 = scalar_lea.vmem %s5, 224
      %v8204 = vld [vmem:[%s8203] sm:$0xf]
      %v8205 = vld [vmem:[%s8203 + $0x4] sm:$0xf]
      %v8206 = vld [vmem:[%s8203 + $0x8] sm:$0xf]
      %v8207 = vld [vmem:[%s8203 + $0xc] sm:$0xf]
      %v8208 = vld [vmem:[%s8203 + $0x10] sm:$0xf]
      %v8209 = vld [vmem:[%s8203 + $0x14] sm:$0xf]
      %v8210 = vld [vmem:[%s8203 + $0x18] sm:$0xf]
      %v8211 = vld [vmem:[%s8203 + $0x1c] sm:$0xf]
      %v8220 = vunpack.c.l.b16 %v8204
      %v8221 = vunpack.c.l.b16 %v8205
      %v8222 = vunpack.c.l.b16 %v8206
      %v8223 = vunpack.c.l.b16 %v8207
      %v8224 = vunpack.c.l.b16 %v8208
      %v8225 = vunpack.c.l.b16 %v8209
      %v8226 = vunpack.c.l.b16 %v8210
      %v8227 = vunpack.c.l.b16 %v8211
      %v8228 = vpack.c.b16 %v8221, %v8220
      %v8229 = vpack.c.b16 %v8223, %v8222
      %v8230 = vpack.c.b16 %v8225, %v8224
      %v8231 = vpack.c.b16 %v8227, %v8226
      %8236 = vmatprep.subr.bf16.mxu0 0
      %8237 = vmatpush1.bf16.msra.mxu0 %v8228
      %8238 = vmatprep.subr.bf16.mxu0 0
      %8239 = vmatpush1.bf16.msra.mxu0 %v8229
      %8240 = vmatprep.subr.bf16.mxu0 0
      %8241 = vmatpush1.bf16.msra.mxu0 %v8230
      %8242 = vmatprep.subr.bf16.mxu0 0
      %8243 = vmatpush1.bf16.msra.mxu0 %v8231
      %8244 = vmatprep.subr.bf16.mxu0 0
      %8245 = vmatpush1.bf16.msra.mxu0 0
      %8246 = vmatprep.subr.bf16.mxu0 0
      %8247 = vmatpush1.bf16.msra.mxu0 0
      %8248 = vmatprep.subr.bf16.mxu0 0
      %8249 = vmatpush1.bf16.msra.mxu0 0
      %8250 = vmatprep.subr.bf16.mxu0 0
      %8251 = vmatpush1.bf16.msra.mxu0 0
      %8252 = vmatprep.subr.bf16.mxu0 0
      %8253 = vmatpush1.bf16.msra.mxu0 0
      %8254 = vmatprep.subr.bf16.mxu0 0
      %8255 = vmatpush1.bf16.msra.mxu0 0
      %8256 = vmatprep.subr.bf16.mxu0 0
      %8257 = vmatpush1.bf16.msra.mxu0 0
      %8258 = vmatprep.subr.bf16.mxu0 0
      %8259 = vmatpush1.bf16.msra.mxu0 0
      %8260 = vmatprep.subr.bf16.mxu0 0
      %8261 = vmatpush1.bf16.msra.mxu0 0
      %8262 = vmatprep.subr.bf16.mxu0 0
      %8263 = vmatpush1.bf16.msra.mxu0 0
      %8264 = vmatprep.subr.bf16.mxu0 0
      %8265 = vmatpush1.bf16.msra.mxu0 0
      %8266 = vmatprep.subr.bf16.mxu0 0
      %8267 = vmatpush1.bf16.msra.mxu0 0
      %8268 = vmatprep.mubr.bf16.mxu0 0
      %8269 = vmatmul.mubr.bf16.gmra.mrb[0].mxu0 %v6508
      %v8270 = vpop.f32.mrb[0].mxu0
      %v8271 = vadd.f32 0.0, %v8270
      %v8272 = vpop.f32.mrb[0].mxu0
      %v8273 = vpop.f32.mrb[0].mxu0
      %v8274 = vadd.f32 0.0, %v8273
      %v8275 = vpop.f32.mrb[0].mxu0
      %8276 = vmatprep.mubr.bf16.mxu0 0
      %8277 = vmatmul.mubr.bf16.gmra.mrb[0].mxu0 %v6514
      %v8278 = vpop.f32.mrb[0].mxu0
      %v8279 = vadd.f32 0.0, %v8278
      %v8280 = vpop.f32.mrb[0].mxu0
      %v8281 = vpop.f32.mrb[0].mxu0
      %v8282 = vadd.f32 0.0, %v8281
      %v8283 = vpop.f32.mrb[0].mxu0
      %8284 = vmatprep.mubr.bf16.mxu0 0
      %8285 = vmatmul.mubr.bf16.gmra.mrb[0].mxu0 %v6517
      %v8286 = vpop.f32.mrb[0].mxu0
      %v8287 = vadd.f32 0.0, %v8286
      %v8288 = vpop.f32.mrb[0].mxu0
      %v8289 = vpop.f32.mrb[0].mxu0
      %v8290 = vadd.f32 0.0, %v8289
      %v8291 = vpop.f32.mrb[0].mxu0
      %8292 = vmatprep.mubr.bf16.mxu0 0
      %8293 = vmatmul.mubr.bf16.gmra.mrb[0].mxu0 %v6520
      %v8294 = vpop.f32.mrb[0].mxu0
      %v8295 = vadd.f32 0.0, %v8294
      %v8296 = vpop.f32.mrb[0].mxu0
      %v8297 = vpop.f32.mrb[0].mxu0
      %v8298 = vadd.f32 0.0, %v8297
      %v8299 = vpop.f32.mrb[0].mxu0
      %8300 = vmatprep.mubr.bf16.mxu0 0
      %8301 = vmatmul.mubr.bf16.gmra.mrb[0].mxu0 %v6523
      %v8302 = vpop.f32.mrb[0].mxu0
      %v8303 = vadd.f32 0.0, %v8302
      %v8304 = vpop.f32.mrb[0].mxu0
      %v8305 = vpop.f32.mrb[0].mxu0
      %v8306 = vadd.f32 0.0, %v8305
      %v8307 = vpop.f32.mrb[0].mxu0
      %8308 = vmatprep.mubr.bf16.mxu0 0
      %8309 = vmatmul.mubr.bf16.gmra.mrb[0].mxu0 %v6526
      %v8310 = vpop.f32.mrb[0].mxu0
      %v8311 = vadd.f32 0.0, %v8310
      %v8312 = vpop.f32.mrb[0].mxu0
      %v8313 = vpop.f32.mrb[0].mxu0
      %v8314 = vadd.f32 0.0, %v8313
      %v8315 = vpop.f32.mrb[0].mxu0
      %8316 = vmatprep.mubr.bf16.mxu0 0
      %8317 = vmatmul.mubr.bf16.gmra.mrb[0].mxu0 %v6529
      %v8318 = vpop.f32.mrb[0].mxu0
      %v8319 = vadd.f32 0.0, %v8318
      %v8320 = vpop.f32.mrb[0].mxu0
      %v8321 = vpop.f32.mrb[0].mxu0
      %v8322 = vadd.f32 0.0, %v8321
      %v8323 = vpop.f32.mrb[0].mxu0
      %8324 = vmatprep.mubr.bf16.mxu0 0
      %8325 = vmatmul.mubr.bf16.gmra.mrb[0].mxu0 %v6532
      %v8326 = vpop.f32.mrb[0].mxu0
      %v8327 = vadd.f32 0.0, %v8326
      %v8328 = vpop.f32.mrb[0].mxu0
      %v8329 = vpop.f32.mrb[0].mxu0
      %v8330 = vadd.f32 0.0, %v8329
      %v8331 = vpop.f32.mrb[0].mxu0
      %8332 = vmatprep.mubr.bf16.mxu0 0
      %8333 = vmatmul.mubr.bf16.gmra.mrb[0].mxu0 %v6535
      %v8334 = vpop.f32.mrb[0].mxu0
      %v8335 = vadd.f32 0.0, %v8334
      %v8336 = vpop.f32.mrb[0].mxu0
      %v8337 = vpop.f32.mrb[0].mxu0
      %v8338 = vadd.f32 0.0, %v8337
      %v8339 = vpop.f32.mrb[0].mxu0
      %8340 = vmatprep.mubr.bf16.mxu0 0
      %8341 = vmatmul.mubr.bf16.gmra.mrb[0].mxu0 %v6538
      %v8342 = vpop.f32.mrb[0].mxu0
      %v8343 = vadd.f32 0.0, %v8342
      %v8344 = vpop.f32.mrb[0].mxu0
      %v8345 = vpop.f32.mrb[0].mxu0
      %v8346 = vadd.f32 0.0, %v8345
      %v8347 = vpop.f32.mrb[0].mxu0
      %8348 = vmatprep.mubr.bf16.mxu0 0
      %8349 = vmatmul.mubr.bf16.gmra.mrb[0].mxu0 %v6541
      %v8350 = vpop.f32.mrb[0].mxu0
      %v8351 = vadd.f32 0.0, %v8350
      %v8352 = vpop.f32.mrb[0].mxu0
      %v8353 = vpop.f32.mrb[0].mxu0
      %v8354 = vadd.f32 0.0, %v8353
      %v8355 = vpop.f32.mrb[0].mxu0
      %8356 = vmatprep.mubr.bf16.mxu0 0
      %8357 = vmatmul.mubr.bf16.gmra.mrb[0].mxu0 %v6544
      %v8358 = vpop.f32.mrb[0].mxu0
      %v8359 = vadd.f32 0.0, %v8358
      %v8360 = vpop.f32.mrb[0].mxu0
      %v8361 = vpop.f32.mrb[0].mxu0
      %v8362 = vadd.f32 0.0, %v8361
      %v8363 = vpop.f32.mrb[0].mxu0
      %8364 = vmatprep.mubr.bf16.mxu0 0
      %8365 = vmatmul.mubr.bf16.gmra.mrb[0].mxu0 %v6547
      %v8366 = vpop.f32.mrb[0].mxu0
      %v8367 = vadd.f32 0.0, %v8366
      %v8368 = vpop.f32.mrb[0].mxu0
      %v8369 = vpop.f32.mrb[0].mxu0
      %v8370 = vadd.f32 0.0, %v8369
      %v8371 = vpop.f32.mrb[0].mxu0
      %8372 = vmatprep.mubr.bf16.mxu0 0
      %8373 = vmatmul.mubr.bf16.gmra.mrb[0].mxu0 %v6550
      %v8374 = vpop.f32.mrb[0].mxu0
      %v8375 = vadd.f32 0.0, %v8374
      %v8376 = vpop.f32.mrb[0].mxu0
      %v8377 = vpop.f32.mrb[0].mxu0
      %v8378 = vadd.f32 0.0, %v8377
      %v8379 = vpop.f32.mrb[0].mxu0
      %8380 = vmatprep.mubr.bf16.mxu0 0
      %8381 = vmatmul.mubr.bf16.gmra.mrb[0].mxu0 %v7548
      %v8382 = vpop.f32.mrb[0].mxu0
      %v8383 = vadd.f32 0.0, %v8382
      %v8384 = vpop.f32.mrb[0].mxu0
      %v8385 = vpop.f32.mrb[0].mxu0
      %v8386 = vadd.f32 0.0, %v8385
      %v8387 = vpop.f32.mrb[0].mxu0
      %8388 = vmatprep.mubr.bf16.mxu0 0
      %8389 = vmatmul.mubr.bf16.gmra.mrb[0].mxu0 %v6550
      %v8390 = vpop.f32.mrb[0].mxu0
      %v8391 = vadd.f32 0.0, %v8390
      %v8392 = vpop.f32.mrb[0].mxu0
      %v8393 = vpop.f32.mrb[0].mxu0
      %v8394 = vadd.f32 0.0, %v8393
      %v8395 = vpop.f32.mrb[0].mxu0
      %8396 = vdwg.mxu0
      %v8397 = vadd.f32 %v8171, %v8271
      %v8398 = vadd.f32 %v8172, %v8274
      %v8399 = vadd.f32 %v8173, %v8279
      %v8400 = vadd.f32 %v8174, %v8282
      %v8401 = vadd.f32 %v8175, %v8287
      %v8402 = vadd.f32 %v8176, %v8290
      %v8403 = vadd.f32 %v8177, %v8295
      %v8404 = vadd.f32 %v8178, %v8298
      %v8405 = vadd.f32 %v8179, %v8303
      %v8406 = vadd.f32 %v8180, %v8306
      %v8407 = vadd.f32 %v8181, %v8311
      %v8408 = vadd.f32 %v8182, %v8314
      %v8409 = vadd.f32 %v8183, %v8319
      %v8410 = vadd.f32 %v8184, %v8322
      %v8411 = vadd.f32 %v8185, %v8327
      %v8412 = vadd.f32 %v8186, %v8330
      %v8413 = vadd.f32 %v8187, %v8335
      %v8414 = vadd.f32 %v8188, %v8338
      %v8415 = vadd.f32 %v8189, %v8343
      %v8416 = vadd.f32 %v8190, %v8346
      %v8417 = vadd.f32 %v8191, %v8351
      %v8418 = vadd.f32 %v8192, %v8354
      %v8419 = vadd.f32 %v8193, %v8359
      %v8420 = vadd.f32 %v8194, %v8362
      %v8421 = vadd.f32 %v8195, %v8367
      %v8422 = vadd.f32 %v8196, %v8370
      %v8423 = vadd.f32 %v8197, %v8375
      %v8424 = vadd.f32 %v8198, %v8378
      %v8425 = vadd.f32 %v8199, %v8383
      %v8426 = vadd.f32 %v8200, %v8386
      %v8427 = vadd.f32 %v8201, %v8391
      %v8428 = vadd.f32 %v8202, %v8394
      %s8429 = scalar_lea.vmem %s5, 256
      %v8430 = vld [vmem:[%s8429] sm:$0xf]
      %v8431 = vld [vmem:[%s8429 + $0x4] sm:$0xf]
      %v8432 = vld [vmem:[%s8429 + $0x8] sm:$0xf]
      %v8433 = vld [vmem:[%s8429 + $0xc] sm:$0xf]
      %v8434 = vld [vmem:[%s8429 + $0x10] sm:$0xf]
      %v8435 = vld [vmem:[%s8429 + $0x14] sm:$0xf]
      %v8436 = vld [vmem:[%s8429 + $0x18] sm:$0xf]
      %v8437 = vld [vmem:[%s8429 + $0x1c] sm:$0xf]
      %v8446 = vunpack.c.l.b16 %v8430
      %v8447 = vunpack.c.l.b16 %v8431
      %v8448 = vunpack.c.l.b16 %v8432
      %v8449 = vunpack.c.l.b16 %v8433
      %v8450 = vunpack.c.l.b16 %v8434
      %v8451 = vunpack.c.l.b16 %v8435
      %v8452 = vunpack.c.l.b16 %v8436
      %v8453 = vunpack.c.l.b16 %v8437
      %v8454 = vpack.c.b16 %v8447, %v8446
      %v8455 = vpack.c.b16 %v8449, %v8448
      %v8456 = vpack.c.b16 %v8451, %v8450
      %v8457 = vpack.c.b16 %v8453, %v8452
      %8462 = vmatprep.subr.bf16.mxu0 0
      %8463 = vmatpush1.bf16.msra.mxu0 %v8454
      %8464 = vmatprep.subr.bf16.mxu0 0
      %8465 = vmatpush1.bf16.msra.mxu0 %v8455
      %8466 = vmatprep.subr.bf16.mxu0 0
      %8467 = vmatpush1.bf16.msra.mxu0 %v8456
      %8468 = vmatprep.subr.bf16.mxu0 0
      %8469 = vmatpush1.bf16.msra.mxu0 %v8457
      %8470 = vmatprep.subr.bf16.mxu0 0
      %8471 = vmatpush1.bf16.msra.mxu0 0
      %8472 = vmatprep.subr.bf16.mxu0 0
      %8473 = vmatpush1.bf16.msra.mxu0 0
      %8474 = vmatprep.subr.bf16.mxu0 0
      %8475 = vmatpush1.bf16.msra.mxu0 0
      %8476 = vmatprep.subr.bf16.mxu0 0
      %8477 = vmatpush1.bf16.msra.mxu0 0
      %8478 = vmatprep.subr.bf16.mxu0 0
      %8479 = vmatpush1.bf16.msra.mxu0 0
      %8480 = vmatprep.subr.bf16.mxu0 0
      %8481 = vmatpush1.bf16.msra.mxu0 0
      %8482 = vmatprep.subr.bf16.mxu0 0
      %8483 = vmatpush1.bf16.msra.mxu0 0
      %8484 = vmatprep.subr.bf16.mxu0 0
      %8485 = vmatpush1.bf16.msra.mxu0 0
      %8486 = vmatprep.subr.bf16.mxu0 0
      %8487 = vmatpush1.bf16.msra.mxu0 0
      %8488 = vmatprep.subr.bf16.mxu0 0
      %8489 = vmatpush1.bf16.msra.mxu0 0
      %8490 = vmatprep.subr.bf16.mxu0 0
      %8491 = vmatpush1.bf16.msra.mxu0 0
      %8492 = vmatprep.subr.bf16.mxu0 0
      %8493 = vmatpush1.bf16.msra.mxu0 0
      %8494 = vmatprep.mubr.bf16.mxu0 0
      %8495 = vmatmul.mubr.bf16.gmra.mrb[0].mxu0 %v7037
      %v8496 = vpop.f32.mrb[0].mxu0
      %v8497 = vadd.f32 0.0, %v8496
      %v8498 = vpop.f32.mrb[0].mxu0
      %v8499 = vpop.f32.mrb[0].mxu0
      %v8500 = vadd.f32 0.0, %v8499
      %v8501 = vpop.f32.mrb[0].mxu0
      %8502 = vmatprep.mubr.bf16.mxu0 0
      %8503 = vmatmul.mubr.bf16.gmra.mrb[0].mxu0 %v7043
      %v8504 = vpop.f32.mrb[0].mxu0
      %v8505 = vadd.f32 0.0, %v8504
      %v8506 = vpop.f32.mrb[0].mxu0
      %v8507 = vpop.f32.mrb[0].mxu0
      %v8508 = vadd.f32 0.0, %v8507
      %v8509 = vpop.f32.mrb[0].mxu0
      %8510 = vmatprep.mubr.bf16.mxu0 0
      %8511 = vmatmul.mubr.bf16.gmra.mrb[0].mxu0 %v7046
      %v8512 = vpop.f32.mrb[0].mxu0
      %v8513 = vadd.f32 0.0, %v8512
      %v8514 = vpop.f32.mrb[0].mxu0
      %v8515 = vpop.f32.mrb[0].mxu0
      %v8516 = vadd.f32 0.0, %v8515
      %v8517 = vpop.f32.mrb[0].mxu0
      %8518 = vmatprep.mubr.bf16.mxu0 0
      %8519 = vmatmul.mubr.bf16.gmra.mrb[0].mxu0 %v7049
      %v8520 = vpop.f32.mrb[0].mxu0
      %v8521 = vadd.f32 0.0, %v8520
      %v8522 = vpop.f32.mrb[0].mxu0
      %v8523 = vpop.f32.mrb[0].mxu0
      %v8524 = vadd.f32 0.0, %v8523
      %v8525 = vpop.f32.mrb[0].mxu0
      %8526 = vmatprep.mubr.bf16.mxu0 0
      %8527 = vmatmul.mubr.bf16.gmra.mrb[0].mxu0 %v7052
      %v8528 = vpop.f32.mrb[0].mxu0
      %v8529 = vadd.f32 0.0, %v8528
      %v8530 = vpop.f32.mrb[0].mxu0
      %v8531 = vpop.f32.mrb[0].mxu0
      %v8532 = vadd.f32 0.0, %v8531
      %v8533 = vpop.f32.mrb[0].mxu0
      %8534 = vmatprep.mubr.bf16.mxu0 0
      %8535 = vmatmul.mubr.bf16.gmra.mrb[0].mxu0 %v7055
      %v8536 = vpop.f32.mrb[0].mxu0
      %v8537 = vadd.f32 0.0, %v8536
      %v8538 = vpop.f32.mrb[0].mxu0
      %v8539 = vpop.f32.mrb[0].mxu0
      %v8540 = vadd.f32 0.0, %v8539
      %v8541 = vpop.f32.mrb[0].mxu0
      %8542 = vmatprep.mubr.bf16.mxu0 0
      %8543 = vmatmul.mubr.bf16.gmra.mrb[0].mxu0 %v7058
      %v8544 = vpop.f32.mrb[0].mxu0
      %v8545 = vadd.f32 0.0, %v8544
      %v8546 = vpop.f32.mrb[0].mxu0
      %v8547 = vpop.f32.mrb[0].mxu0
      %v8548 = vadd.f32 0.0, %v8547
      %v8549 = vpop.f32.mrb[0].mxu0
      %8550 = vmatprep.mubr.bf16.mxu0 0
      %8551 = vmatmul.mubr.bf16.gmra.mrb[0].mxu0 %v7061
      %v8552 = vpop.f32.mrb[0].mxu0
      %v8553 = vadd.f32 0.0, %v8552
      %v8554 = vpop.f32.mrb[0].mxu0
      %v8555 = vpop.f32.mrb[0].mxu0
      %v8556 = vadd.f32 0.0, %v8555
      %v8557 = vpop.f32.mrb[0].mxu0
      %8558 = vmatprep.mubr.bf16.mxu0 0
      %8559 = vmatmul.mubr.bf16.gmra.mrb[0].mxu0 %v7064
      %v8560 = vpop.f32.mrb[0].mxu0
      %v8561 = vadd.f32 0.0, %v8560
      %v8562 = vpop.f32.mrb[0].mxu0
      %v8563 = vpop.f32.mrb[0].mxu0
      %v8564 = vadd.f32 0.0, %v8563
      %v8565 = vpop.f32.mrb[0].mxu0
      %8566 = vmatprep.mubr.bf16.mxu0 0
      %8567 = vmatmul.mubr.bf16.gmra.mrb[0].mxu0 %v7067
      %v8568 = vpop.f32.mrb[0].mxu0
      %v8569 = vadd.f32 0.0, %v8568
      %v8570 = vpop.f32.mrb[0].mxu0
      %v8571 = vpop.f32.mrb[0].mxu0
      %v8572 = vadd.f32 0.0, %v8571
      %v8573 = vpop.f32.mrb[0].mxu0
      %8574 = vmatprep.mubr.bf16.mxu0 0
      %8575 = vmatmul.mubr.bf16.gmra.mrb[0].mxu0 %v7070
      %v8576 = vpop.f32.mrb[0].mxu0
      %v8577 = vadd.f32 0.0, %v8576
      %v8578 = vpop.f32.mrb[0].mxu0
      %v8579 = vpop.f32.mrb[0].mxu0
      %v8580 = vadd.f32 0.0, %v8579
      %v8581 = vpop.f32.mrb[0].mxu0
      %8582 = vmatprep.mubr.bf16.mxu0 0
      %8583 = vmatmul.mubr.bf16.gmra.mrb[0].mxu0 %v7073
      %v8584 = vpop.f32.mrb[0].mxu0
      %v8585 = vadd.f32 0.0, %v8584
      %v8586 = vpop.f32.mrb[0].mxu0
      %v8587 = vpop.f32.mrb[0].mxu0
      %v8588 = vadd.f32 0.0, %v8587
      %v8589 = vpop.f32.mrb[0].mxu0
      %8590 = vmatprep.mubr.bf16.mxu0 0
      %8591 = vmatmul.mubr.bf16.gmra.mrb[0].mxu0 %v7076
      %v8592 = vpop.f32.mrb[0].mxu0
      %v8593 = vadd.f32 0.0, %v8592
      %v8594 = vpop.f32.mrb[0].mxu0
      %v8595 = vpop.f32.mrb[0].mxu0
      %v8596 = vadd.f32 0.0, %v8595
      %v8597 = vpop.f32.mrb[0].mxu0
      %8598 = vmatprep.mubr.bf16.mxu0 0
      %8599 = vmatmul.mubr.bf16.gmra.mrb[0].mxu0 %v7079
      %v8600 = vpop.f32.mrb[0].mxu0
      %v8601 = vadd.f32 0.0, %v8600
      %v8602 = vpop.f32.mrb[0].mxu0
      %v8603 = vpop.f32.mrb[0].mxu0
      %v8604 = vadd.f32 0.0, %v8603
      %v8605 = vpop.f32.mrb[0].mxu0
      %8606 = vmatprep.mubr.bf16.mxu0 0
      %8607 = vmatmul.mubr.bf16.gmra.mrb[0].mxu0 %v7782
      %v8608 = vpop.f32.mrb[0].mxu0
      %v8609 = vadd.f32 0.0, %v8608
      %v8610 = vpop.f32.mrb[0].mxu0
      %v8611 = vpop.f32.mrb[0].mxu0
      %v8612 = vadd.f32 0.0, %v8611
      %v8613 = vpop.f32.mrb[0].mxu0
      %8614 = vmatprep.mubr.bf16.mxu0 0
      %8615 = vmatmul.mubr.bf16.gmra.mrb[0].mxu0 %v7079
      %v8616 = vpop.f32.mrb[0].mxu0
      %v8617 = vadd.f32 0.0, %v8616
      %v8618 = vpop.f32.mrb[0].mxu0
      %v8619 = vpop.f32.mrb[0].mxu0
      %v8620 = vadd.f32 0.0, %v8619
      %v8621 = vpop.f32.mrb[0].mxu0
      %8622 = vdwg.mxu0
      %v8623 = vadd.f32 %v8397, %v8497
      %v8624 = vadd.f32 %v8398, %v8500
      %v8625 = vadd.f32 %v8399, %v8505
      %v8626 = vadd.f32 %v8400, %v8508
      %v8627 = vadd.f32 %v8401, %v8513
      %v8628 = vadd.f32 %v8402, %v8516
      %v8629 = vadd.f32 %v8403, %v8521
      %v8630 = vadd.f32 %v8404, %v8524
      %v8631 = vadd.f32 %v8405, %v8529
      %v8632 = vadd.f32 %v8406, %v8532
      %v8633 = vadd.f32 %v8407, %v8537
      %v8634 = vadd.f32 %v8408, %v8540
      %v8635 = vadd.f32 %v8409, %v8545
      %v8636 = vadd.f32 %v8410, %v8548
      %v8637 = vadd.f32 %v8411, %v8553
      %v8638 = vadd.f32 %v8412, %v8556
      %v8639 = vadd.f32 %v8413, %v8561
      %v8640 = vadd.f32 %v8414, %v8564
      %v8641 = vadd.f32 %v8415, %v8569
      %v8642 = vadd.f32 %v8416, %v8572
      %v8643 = vadd.f32 %v8417, %v8577
      %v8644 = vadd.f32 %v8418, %v8580
      %v8645 = vadd.f32 %v8419, %v8585
      %v8646 = vadd.f32 %v8420, %v8588
      %v8647 = vadd.f32 %v8421, %v8593
      %v8648 = vadd.f32 %v8422, %v8596
      %v8649 = vadd.f32 %v8423, %v8601
      %v8650 = vadd.f32 %v8424, %v8604
      %v8651 = vadd.f32 %v8425, %v8609
      %v8652 = vadd.f32 %v8426, %v8612
      %v8653 = vadd.f32 %v8427, %v8617
      %v8654 = vadd.f32 %v8428, %v8620
      %v8656 = vlaneseq
      %v8657 = vshrl.u32 %v8656, 7
      %v8658 = vsub.s32 0, %v8657
      %v8659 = vrot.slane %v6285, %v8658
      %v8661 = vadd.f32 %v8623, %v8659
      %v8662 = vadd.f32 %v8624, %v8659
      %v8663 = vadd.f32 %v8625, %v8659
      %v8664 = vadd.f32 %v8626, %v8659
      %v8665 = vadd.f32 %v8627, %v8659
      %v8666 = vadd.f32 %v8628, %v8659
      %v8667 = vadd.f32 %v8629, %v8659
      %v8668 = vadd.f32 %v8630, %v8659
      %v8669 = vadd.f32 %v8631, %v8659
      %v8670 = vadd.f32 %v8632, %v8659
      %v8671 = vadd.f32 %v8633, %v8659
      %v8672 = vadd.f32 %v8634, %v8659
      %v8673 = vadd.f32 %v8635, %v8659
      %v8674 = vadd.f32 %v8636, %v8659
      %v8675 = vadd.f32 %v8637, %v8659
      %v8676 = vadd.f32 %v8638, %v8659
      %v8677 = vadd.f32 %v8639, %v8659
      %v8678 = vadd.f32 %v8640, %v8659
      %v8679 = vadd.f32 %v8641, %v8659
      %v8680 = vadd.f32 %v8642, %v8659
      %v8681 = vadd.f32 %v8643, %v8659
      %v8682 = vadd.f32 %v8644, %v8659
      %v8683 = vadd.f32 %v8645, %v8659
      %v8684 = vadd.f32 %v8646, %v8659
      %v8685 = vadd.f32 %v8647, %v8659
      %v8686 = vadd.f32 %v8648, %v8659
      %v8687 = vadd.f32 %v8649, %v8659
      %v8688 = vadd.f32 %v8650, %v8659
      %v8689 = vadd.f32 %v8651, %v8659
      %v8690 = vadd.f32 %v8652, %v8659
      %v8691 = vadd.f32 %v8653, %v8659
      %v8692 = vadd.f32 %v8654, %v8659
      %8693 = vxpose.xlu0.b32.start [1/16] %v8661, 128
      %8694 = vxpose.xlu0.b32.cont [2/16] %v8662, 128
      %8695 = vxpose.xlu0.b32.cont [3/16] %v8663, 128
      %8696 = vxpose.xlu0.b32.cont [4/16] %v8664, 128
      %8697 = vxpose.xlu0.b32.cont [5/16] %v8665, 128
      %8698 = vxpose.xlu0.b32.cont [6/16] %v8666, 128
      %8699 = vxpose.xlu0.b32.cont [7/16] %v8667, 128
      %8700 = vxpose.xlu0.b32.cont [8/16] %v8668, 128
      %8701 = vxpose.xlu0.b32.cont [9/16] %v8669, 128
      %8702 = vxpose.xlu0.b32.cont [10/16] %v8670, 128
      %8703 = vxpose.xlu0.b32.cont [11/16] %v8671, 128
      %8704 = vxpose.xlu0.b32.cont [12/16] %v8672, 128
      %8705 = vxpose.xlu0.b32.cont [13/16] %v8673, 128
      %8706 = vxpose.xlu0.b32.cont [14/16] %v8674, 128
      %8707 = vxpose.xlu0.b32.cont [15/16] %v8675, 128
      %8708 = vxpose.xlu0.b32.end [16/16] %v8676, 128
      %v8709 = vpop.trf.xlu0
      %v8710 = vpop.trf.xlu0
      %v8711 = vpop.trf.xlu0
      %v8712 = vpop.trf.xlu0
      %v8713 = vpop.trf.xlu0
      %v8714 = vpop.trf.xlu0
      %v8715 = vpop.trf.xlu0
      %v8716 = vpop.trf.xlu0
      %v8717 = vpop.trf.xlu0
      %v8718 = vpop.trf.xlu0
      %v8719 = vpop.trf.xlu0
      %v8720 = vpop.trf.xlu0
      %v8721 = vpop.trf.xlu0
      %v8722 = vpop.trf.xlu0
      %v8723 = vpop.trf.xlu0
      %v8724 = vpop.trf.xlu0
      %8725 = vxpose.xlu0.b32.start [1/16] %v8677, 128
      %8726 = vxpose.xlu0.b32.cont [2/16] %v8678, 128
      %8727 = vxpose.xlu0.b32.cont [3/16] %v8679, 128
      %8728 = vxpose.xlu0.b32.cont [4/16] %v8680, 128
      %8729 = vxpose.xlu0.b32.cont [5/16] %v8681, 128
      %8730 = vxpose.xlu0.b32.cont [6/16] %v8682, 128
      %8731 = vxpose.xlu0.b32.cont [7/16] %v8683, 128
      %8732 = vxpose.xlu0.b32.cont [8/16] %v8684, 128
      %8733 = vxpose.xlu0.b32.cont [9/16] %v8685, 128
      %8734 = vxpose.xlu0.b32.cont [10/16] %v8686, 128
      %8735 = vxpose.xlu0.b32.cont [11/16] %v8687, 128
      %8736 = vxpose.xlu0.b32.cont [12/16] %v8688, 128
      %8737 = vxpose.xlu0.b32.cont [13/16] %v8689, 128
      %8738 = vxpose.xlu0.b32.cont [14/16] %v8690, 128
      %8739 = vxpose.xlu0.b32.cont [15/16] %v8691, 128
      %8740 = vxpose.xlu0.b32.end [16/16] %v8692, 128
      %v8741 = vpop.trf.xlu0
      %v8742 = vpop.trf.xlu0
      %v8743 = vpop.trf.xlu0
      %v8744 = vpop.trf.xlu0
      %v8745 = vpop.trf.xlu0
      %v8746 = vpop.trf.xlu0
      %v8747 = vpop.trf.xlu0
      %v8748 = vpop.trf.xlu0
      %v8749 = vpop.trf.xlu0
      %v8750 = vpop.trf.xlu0
      %v8751 = vpop.trf.xlu0
      %v8752 = vpop.trf.xlu0
      %v8753 = vpop.trf.xlu0
      %v8754 = vpop.trf.xlu0
      %v8755 = vpop.trf.xlu0
      %v8756 = vpop.trf.xlu0
      %8757 = vst [vmem:[%s278] sm:$0xff] %v8709
      %8758 = vst [vmem:[%s278 + $0x8] sm:$0xff] %v8741
      %p8759 = scmp.lt.s32.totalorder %s18, 1
      %s8760 = scalar_select %p8759, %s18, 1
      %s8761 = smul.addr %s8760, 2
      %s8762 = smul.addr %s8761, 8
      %s8763 = scalar_lea.vmem %s7, %s8762
      // Predicated region
      $region49: #{decoder2_forward.1} parent=47 // pred_check
        %p8764 = pneg %p188
      $region50: #{decoder2_forward.1} parent=47 // pred_check_branch
        %8766 = sbr.rel (%p8764) target = $region52
      $region51: #{decoder2_forward.1} parent=47 // pred_region
        _
      $region52: #{decoder2_forward.1} parent=47 // pred_fallthru
        _
    $region48: #{decoder2_forward.1} parent=5 // pred_fallthru
      _
    %p8767 = scmp.le.s32.totalorder 2, %s13
    // Predicated region
    $region53: #{decoder2_forward.1} parent=5 // pred_check
      %p8768 = pneg %p8767
    $region54: #{decoder2_forward.1} parent=5 // pred_check_branch
      %8770 = sbr.rel (%p8768) target = $region56
    $region55: #{decoder2_forward.1} parent=5 // pred_region
      %s8771 = ssub.s32 %s13, 2
      // Predicated region
      $region57: #{decoder2_forward.1} parent=55 // pred_check
        %p8772 = pneg %p194
      $region58: #{decoder2_forward.1} parent=55 // pred_check_branch
        %8774 = sbr.rel (%p8772) target = $region60
      $region59: #{decoder2_forward.1} parent=55 // pred_region
        %p8775 = scmp.lt.s32.totalorder %s19, 1
        %s8776 = scalar_select %p8775, %s19, 1
        %s8777 = smul.addr %s8776, 2
        %s8778 = smul.addr %s8777, 8
        %s8779 = scalar_lea.vmem %s7, %s8778
      $region60: #{decoder2_forward.1} parent=55 // pred_fallthru
        _
    $region56: #{decoder2_forward.1} parent=5 // pred_fallthru
      _
  $region6: #{decoder2_forward.1} parent=0 // loop_footer
    %s17 = sadd.s32 1, %s13
  $region7: #{decoder2_forward.1} parent=0 // loop_footer_branch
    %12 = sbr.rel target = $region3
  $region8: #{decoder2_forward.1} parent=0 // loop_exit
    _

</llo_original>
